<compile_context>
chip_gen: v6e
topology: v6e:2x2x1
jax: 0.10.0
libtpu: 0.0.40
codegen_flags: <defaults>
</compile_context>

<pallas_src>
import functools

import jax
import jax.numpy as jnp
from jax.experimental import pallas as pl
from jax.experimental.pallas import tpu as pltpu


# -----------------------------------------------------------------------------
# VMEM budget helper (review: derive from footprint instead of a blanket 48 MiB)
# -----------------------------------------------------------------------------
def _vmem_limit_bytes(block_bytes, scratch_bytes):
    # double-buffered pipeline blocks + scratch + headroom; floor 16 MiB,
    # cap 48 MiB so the same setting stays inside v7x's 64 MiB physical VMEM.
    need = 2 * block_bytes + scratch_bytes + (4 << 20)
    return int(min(max(need, 16 << 20), 48 << 20))


# -----------------------------------------------------------------------------
# Kernel 1: ConvTranspose2d(k=2, s=2) as a per-sample GEMM (K fully collapsed)
# -----------------------------------------------------------------------------
def _convt_gemm_kernel(a_ref, b_ref, bias_ref, o_ref):
    y = jnp.dot(a_ref[0], b_ref[...], preferred_element_type=jnp.float32)
    o_ref[0] = (y + bias_ref[...]).astype(o_ref.dtype)


def convt_gemm(a, b, bias, out_dtype=jnp.bfloat16):
    """out[n] = a[n] @ b + bias.   a:(N,M,K) bf16, b:(K,Nc) bf16, bias:(1,Nc) f32."""
    n, m, k = a.shape
    k2, nc = b.shape
    assert k == k2
    block_bytes = (m * k + k * nc + m * nc) * 2 + nc * 4
    return pl.pallas_call(
        _convt_gemm_kernel,
        out_shape=jax.ShapeDtypeStruct((n, m, nc), out_dtype),
        grid_spec=pltpu.PrefetchScalarGridSpec(
            num_scalar_prefetch=0,
            grid=(n,),
            in_specs=[
                pl.BlockSpec((1, m, k), lambda i: (i, 0, 0)),
                pl.BlockSpec((k, nc), lambda i: (0, 0)),
                pl.BlockSpec((1, nc), lambda i: (0, 0)),
            ],
            out_specs=pl.BlockSpec((1, m, nc), lambda i: (i, 0, 0)),
        ),
        compiler_params=pltpu.CompilerParams(
            dimension_semantics=("parallel",),
            vmem_limit_bytes=_vmem_limit_bytes(block_bytes, 0)),
    )(a, b, bias)


# -----------------------------------------------------------------------------
# Kernel 2: fused [channel concat -> Conv3x3+BN+ReLU -> Conv3x3+BN+ReLU]
#   * implicit im2col: the (tm, 9*Cin) patch matrix is never materialized in
#     HBM — 9 shifted VMEM windows feed the MXU directly.
#   * the conv1 activation stays in a VMEM scratch (never written to HBM).
# -----------------------------------------------------------------------------
def _fused_conv_blocks_kernel(ups_ref, down_ref, w1_ref, b1_ref, w2_ref, b2_ref,
                              out_ref, cat_pad, mid_pad, *, hd, wd, cu, cd, c1, c2):
    # 1) zero-padded concatenated map in VMEM (halo = 1 for the padding=1 convs).
    #    Writing the two channel groups into one scratch realizes torch.cat.
    cat_pad[...] = jnp.zeros_like(cat_pad)
    cat_pad[1:hd + 1, 1:wd + 1, 0:cu] = ups_ref[0]
    cat_pad[1:hd + 1, 1:wd + 1, cu:cu + cd] = down_ref[0]

    # 2) conv_block_1 (BN folded into w1/b1): implicit im2col, f32 accumulation.
    acc1 = jnp.zeros((hd * wd, c1), jnp.float32)
    for t in range(9):
        dy, dx = t // 3, t % 3
        a = cat_pad[dy:dy + hd, dx:dx + wd, :].reshape(hd * wd, cu + cd)
        acc1 = acc1 + jnp.dot(a, w1_ref[t], preferred_element_type=jnp.float32)
    h1 = jnp.maximum(acc1 + b1_ref[...], 0.0)

    # 3) conv1 activation stays in VMEM, zero-padded for conv2's halo.
    mid_pad[...] = jnp.zeros_like(mid_pad)
    mid_pad[1:hd + 1, 1:wd + 1, :] = h1.reshape(hd, wd, c1).astype(mid_pad.dtype)

    # 4) conv_block_2 (BN folded into w2/b2).
    acc2 = jnp.zeros((hd * wd, c2), jnp.float32)
    for t in range(9):
        dy, dx = t // 3, t % 3
        a = mid_pad[dy:dy + hd, dx:dx + wd, :].reshape(hd * wd, c1)
        acc2 = acc2 + jnp.dot(a, w2_ref[t], preferred_element_type=jnp.float32)
    out = jnp.maximum(acc2 + b2_ref[...], 0.0)
    out_ref[0] = out.reshape(hd, wd, c2).astype(out_ref.dtype)


def fused_conv_blocks(ups, down, w1, b1, w2, b2, out_dtype=jnp.float32):
    """ups:(N,H,W,Cu) bf16, down:(N,H,W,Cd) bf16, w1:(9,Cu+Cd,C1), w2:(9,C1,C2)."""
    n, hd, wd, cu = ups.shape
    cd = down.shape[-1]
    c1 = w1.shape[-1]
    c2 = w2.shape[-1]
    assert w1.shape == (9, cu + cd, c1)
    assert w2.shape == (9, c1, c2)

    kernel = functools.partial(_fused_conv_blocks_kernel,
                               hd=hd, wd=wd, cu=cu, cd=cd, c1=c1, c2=c2)

    block_bytes = (hd * wd * (cu + cd) * 2                      # ups + down blocks
                   + 9 * (cu + cd) * c1 * 2 + 9 * c1 * c2 * 2   # weights
                   + (c1 + c2) * 4                              # biases
                   + hd * wd * c2 * 4)                          # output block (f32)
    scratch_bytes = (hd + 2) * (wd + 2) * (cu + cd + c1) * 2

    return pl.pallas_call(
        kernel,
        out_shape=jax.ShapeDtypeStruct((n, hd, wd, c2), out_dtype),
        grid_spec=pltpu.PrefetchScalarGridSpec(
            num_scalar_prefetch=0,
            grid=(n,),
            in_specs=[
                pl.BlockSpec((1, hd, wd, cu), lambda i: (i, 0, 0, 0)),
                pl.BlockSpec((1, hd, wd, cd), lambda i: (i, 0, 0, 0)),
                pl.BlockSpec((9, cu + cd, c1), lambda i: (0, 0, 0)),
                pl.BlockSpec((1, c1), lambda i: (0, 0)),
                pl.BlockSpec((9, c1, c2), lambda i: (0, 0, 0)),
                pl.BlockSpec((1, c2), lambda i: (0, 0)),
            ],
            out_specs=pl.BlockSpec((1, hd, wd, c2), lambda i: (i, 0, 0, 0)),
            scratch_shapes=[
                pltpu.VMEM((hd + 2, wd + 2, cu + cd), jnp.bfloat16),
                pltpu.VMEM((hd + 2, wd + 2, c1), jnp.bfloat16),
            ],
        ),
        compiler_params=pltpu.CompilerParams(
            dimension_semantics=("parallel",),
            vmem_limit_bytes=_vmem_limit_bytes(block_bytes, scratch_bytes)),
    )(ups, down, w1, b1, w2, b2)


# -----------------------------------------------------------------------------
# Parameters (deterministic synthetic init) and one-time GEMM-ready prep
# -----------------------------------------------------------------------------
def init_params(key, in_channels, out_channels,
                up_conv_in_channels=None, up_conv_out_channels=None):
    if up_conv_in_channels is None:
        up_conv_in_channels = in_channels
    if up_conv_out_channels is None:
        up_conv_out_channels = out_channels

    keys = list(jax.random.split(key, 16))
    ki = iter(keys)

    def conv_w(cout, cin, k):
        fan_in = cin * k * k
        return jax.random.normal(next(ki), (cout, cin, k, k),
                                 jnp.float32) * (2.0 / fan_in) ** 0.5

    def bn(c):
        return {'gamma': 1.0 + 0.1 * jax.random.normal(next(ki), (c,), jnp.float32),
                'beta': 0.1 * jax.random.normal(next(ki), (c,), jnp.float32),
                'mean': 0.05 * jax.random.normal(next(ki), (c,), jnp.float32),
                'var': 1.0 + 0.1 * jax.random.uniform(next(ki), (c,), jnp.float32)}

    params = {
        'up_w': jax.random.normal(next(ki),
                                  (up_conv_in_channels, up_conv_out_channels, 2, 2),
                                  jnp.float32) * (1.0 / (up_conv_in_channels * 4)) ** 0.5,
        'up_b': 0.01 * jax.random.normal(next(ki), (up_conv_out_channels,), jnp.float32),
        'cb1_w': conv_w(out_channels, in_channels, 3),
        'cb1_b': 0.01 * jax.random.normal(next(ki), (out_channels,), jnp.float32),
        'cb1_bn': bn(out_channels),
        'cb2_w': conv_w(out_channels, out_channels, 3),
        'cb2_b': 0.01 * jax.random.normal(next(ki), (out_channels,), jnp.float32),
        'cb2_bn': bn(out_channels),
    }
    return params


def _fold_bn_into_conv(w, b, bn, eps=1e-5):
    """BN(conv(x)+b) == conv_{w*s}(x) + ((b-mean)*s + beta), s = gamma/sqrt(var+eps)."""
    s = bn['gamma'] * jax.lax.rsqrt(bn['var'] + eps)
    w_f = w * s[:, None, None, None]
    b_f = (b - bn['mean']) * s + bn['beta']
    return w_f, b_f


def prepare_params(p):
    """Fold BN + lay weights out GEMM-ready (bf16) once; no per-forward prep."""
    prep = {}
    # ConvTranspose2d(k=2,s=2): (Cin, Cout, 2, 2) -> (Cin, Cout*4), cols = (c, dy, dx)
    cin, cou = p['up_w'].shape[0], p['up_w'].shape[1]
    prep['up_B'] = p['up_w'].reshape(cin, cou * 4).astype(jnp.bfloat16)
    prep['up_bias'] = jnp.repeat(p['up_b'], 4).reshape(1, cou * 4).astype(jnp.float32)
    # ConvBlock 1: fold BN, (Cout,Cin,3,3) -> (kh,kw,Cin,Cout) -> (9, Cin, Cout)
    w1, b1 = _fold_bn_into_conv(p['cb1_w'], p['cb1_b'], p['cb1_bn'])
    c1, cin1 = w1.shape[0], w1.shape[1]
    prep['cb1_W'] = jnp.transpose(w1, (2, 3, 1, 0)).reshape(9, cin1, c1).astype(jnp.bfloat16)
    prep['cb1_bias'] = b1.reshape(1, c1).astype(jnp.float32)
    # ConvBlock 2
    w2, b2 = _fold_bn_into_conv(p['cb2_w'], p['cb2_b'], p['cb2_bn'])
    c2, cin2 = w2.shape[0], w2.shape[1]
    prep['cb2_W'] = jnp.transpose(w2, (2, 3, 1, 0)).reshape(9, cin2, c2).astype(jnp.bfloat16)
    prep['cb2_bias'] = b2.reshape(1, c2).astype(jnp.float32)
    return prep


# -----------------------------------------------------------------------------
# Forward pass (mirrors UpBlockForUNetWithResNet.forward)
# -----------------------------------------------------------------------------
@jax.jit
def up_block_forward(prep, up_x_nchw, down_x_nchw):
    # NCHW -> NHWC at the module boundary; bf16 activations internally.
    up_x = jnp.transpose(up_x_nchw, (0, 2, 3, 1)).astype(jnp.bfloat16)
    down_x = jnp.transpose(down_x_nchw, (0, 2, 3, 1)).astype(jnp.bfloat16)
    n, hu, wu, ciu = up_x.shape
    _, hd, wd, cd = down_x.shape
    cou = prep['up_B'].shape[1] // 4

    # upsample = ConvTranspose2d(kernel=2, stride=2): per-sample Pallas GEMM.
    y4 = convt_gemm(up_x.reshape(n, hu * wu, ciu), prep['up_B'], prep['up_bias'])

    # pixel shuffle (dy,dx interleave) + _remove_extra_pad crop (XLA glue).
    ups = y4.reshape(n, hu, wu, cou, 2, 2)
    ups = jnp.transpose(ups, (0, 1, 4, 2, 5, 3)).reshape(n, 2 * hu, 2 * wu, cou)
    ups = ups[:, :hd, :wd, :]

    # torch.cat + conv_block_1 + conv_block_2 fused in a single pallas_call.
    out_nhwc = fused_conv_blocks(ups, down_x,
                                 prep['cb1_W'], prep['cb1_bias'],
                                 prep['cb2_W'], prep['cb2_bias'])

    # NHWC -> NCHW, f32 at the module boundary.
    return jnp.transpose(out_nhwc, (0, 3, 1, 2)).astype(jnp.float32)


if __name__ == "__main__":
    in_channels, out_channels = 64, 32        # concat channels / block output channels
    batch = 2
    up_spatial = 8                            # up_x spatial; upsampled to 16
    down_spatial = 16

    key = jax.random.PRNGKey(0)
    params = init_params(key, in_channels, out_channels)
    prep = prepare_params(params)

    k1, k2 = jax.random.split(jax.random.PRNGKey(0))
    # up_x has up_conv_in_channels (= in_channels by default) channels.
    up_x = jax.random.normal(k1, (batch, in_channels, up_spatial, up_spatial), jnp.float32)
    # down_x channels = in_channels - up_conv_out_channels so the concat has in_channels.
    down_x = jax.random.normal(
        k2, (batch, in_channels - out_channels, down_spatial, down_spatial), jnp.float32)

    out = up_block_forward(prep, up_x, down_x)
    out = jax.block_until_ready(out)

    assert out.shape == (batch, out_channels, down_spatial, down_spatial), out.shape
    assert bool(jnp.all(jnp.isfinite(out)))
    assert bool(jnp.all(out >= 0.0))   # final ConvBlock ends in ReLU
    print("KERNEL_OK")
</pallas_src>

<mosaic_0001>
module attributes {stable_mosaic.version = 11 : i64} {
  func.func @_convt_gemm_kernel(%arg0: i32, %arg1: memref<1x64x64xbf16, #tpu.memory_space<vmem>>, %arg2: memref<64x128xbf16, #tpu.memory_space<vmem>>, %arg3: memref<1x128xf32, #tpu.memory_space<vmem>>, %arg4: memref<1x64x128xbf16, #tpu.memory_space<vmem>>) attributes {dimension_semantics = [#tpu.dimension_semantics<parallel>], iteration_bounds = array<i64: 2>, scalar_prefetch = 0 : i64, scratch_operands = 0 : i64, tpu.core_type = #tpu.core_type<tc>, window_params = [{transform_indices = @transform_0, window_bounds = array<i64: 1, 64, 64>}, {pipeline_mode = #tpu.pipeline_mode<synchronous>, transform_indices = @transform_1, window_bounds = array<i64: 64, 128>}, {pipeline_mode = #tpu.pipeline_mode<synchronous>, transform_indices = @transform_2, window_bounds = array<i64: 1, 128>}, {transform_indices = @transform_3, window_bounds = array<i64: 1, 64, 128>}]} {
    %c0 = arith.constant 0 : index
    %c0_0 = arith.constant 0 : index
    %c0_1 = arith.constant 0 : index
    %0 = vector.load %arg1[%c0, %c0_0, %c0_1] : memref<1x64x64xbf16, #tpu.memory_space<vmem>>, vector<1x64x64xbf16>
    %1 = vector.shape_cast %0 : vector<1x64x64xbf16> to vector<64x64xbf16>
    %c0_2 = arith.constant 0 : index
    %c0_3 = arith.constant 0 : index
    %2 = vector.load %arg2[%c0_2, %c0_3] : memref<64x128xbf16, #tpu.memory_space<vmem>>, vector<64x128xbf16>
    %cst = arith.constant dense<0.000000e+00> : vector<64x128xf32>
    %3 = tpu.matmul %1, %2, %cst {dimension_numbers = #tpu.dot_dimension_numbers<[1], [0], [0], [1], [0, 0, 1, 1], [], []>} : vector<64x64xbf16>, vector<64x128xbf16>, vector<64x128xf32> -> vector<64x128xf32>
    %c0_4 = arith.constant 0 : index
    %c0_5 = arith.constant 0 : index
    %4 = vector.load %arg3[%c0_4, %c0_5] : memref<1x128xf32, #tpu.memory_space<vmem>>, vector<1x128xf32>
    %5 = vector.broadcast %4 : vector<1x128xf32> to vector<64x128xf32>
    %6 = arith.addf %3, %5 : vector<64x128xf32>
    %7 = arith.truncf %6 : vector<64x128xf32> to vector<64x128xbf16>
    %c0_6 = arith.constant 0 : index
    %c0_7 = arith.constant 0 : index
    %c0_8 = arith.constant 0 : index
    %8 = vector.load %arg4[%c0_6, %c0_7, %c0_8] : memref<1x64x128xbf16, #tpu.memory_space<vmem>>, vector<1x64x128xbf16>
    %9 = vector.shape_cast %8 : vector<1x64x128xbf16> to vector<64x128xbf16>
    %10 = vector.shape_cast %7 : vector<64x128xbf16> to vector<1x64x128xbf16>
    tpu.vector_store %arg4[%c0_6, %c0_7, %c0_8], %10 {strides = array<i32>} : memref<1x64x128xbf16, #tpu.memory_space<vmem>>, vector<1x64x128xbf16>,
    return
  }
  func.func @transform_0(%arg0: i32) -> (i32, i32, i32) {
    %c0_i32 = arith.constant 0 : i32
    %c0_i32_0 = arith.constant 0 : i32
    %c0_i32_1 = arith.constant 0 : i32
    return %arg0, %c0_i32, %c0_i32_0 : i32, i32, i32
  }
  func.func @transform_1(%arg0: i32) -> (i32, i32) {
    %c0_i32 = arith.constant 0 : i32
    %c0_i32_0 = arith.constant 0 : i32
    %c0_i32_1 = arith.constant 0 : i32
    return %c0_i32, %c0_i32_0 : i32, i32
  }
  func.func @transform_2(%arg0: i32) -> (i32, i32) {
    %c0_i32 = arith.constant 0 : i32
    %c0_i32_0 = arith.constant 0 : i32
    %c0_i32_1 = arith.constant 0 : i32
    return %c0_i32, %c0_i32_0 : i32, i32
  }
  func.func @transform_3(%arg0: i32) -> (i32, i32, i32) {
    %c0_i32 = arith.constant 0 : i32
    %c0_i32_0 = arith.constant 0 : i32
    %c0_i32_1 = arith.constant 0 : i32
    return %arg0, %c0_i32, %c0_i32_0 : i32, i32, i32
  }
}

module attributes {stable_mosaic.version = 11 : i64} {
  func.func @_fused_conv_blocks_kernel(%arg0: i32, %arg1: memref<1x16x16x32xbf16, #tpu.memory_space<vmem>>, %arg2: memref<1x16x16x32xbf16, #tpu.memory_space<vmem>>, %arg3: memref<9x64x32xbf16, #tpu.memory_space<vmem>>, %arg4: memref<1x32xf32, #tpu.memory_space<vmem>>, %arg5: memref<9x32x32xbf16, #tpu.memory_space<vmem>>, %arg6: memref<1x32xf32, #tpu.memory_space<vmem>>, %arg7: memref<1x16x16x32xf32, #tpu.memory_space<vmem>>, %arg8: memref<18x18x64xbf16, #tpu.memory_space<vmem>>, %arg9: memref<18x18x32xbf16, #tpu.memory_space<vmem>>) attributes {dimension_semantics = [#tpu.dimension_semantics<parallel>], iteration_bounds = array<i64: 2>, scalar_prefetch = 0 : i64, scratch_operands = 2 : i64, tpu.core_type = #tpu.core_type<tc>, window_params = [{transform_indices = @transform_0, window_bounds = array<i64: 1, 16, 16, 32>}, {transform_indices = @transform_1, window_bounds = array<i64: 1, 16, 16, 32>}, {pipeline_mode = #tpu.pipeline_mode<synchronous>, transform_indices = @transform_2, window_bounds = array<i64: 9, 64, 32>}, {pipeline_mode = #tpu.pipeline_mode<synchronous>, transform_indices = @transform_3, window_bounds = array<i64: 1, 32>}, {pipeline_mode = #tpu.pipeline_mode<synchronous>, transform_indices = @transform_4, window_bounds = array<i64: 9, 32, 32>}, {pipeline_mode = #tpu.pipeline_mode<synchronous>, transform_indices = @transform_5, window_bounds = array<i64: 1, 32>}, {transform_indices = @transform_6, window_bounds = array<i64: 1, 16, 16, 32>}]} {
    %cst = arith.constant 0.000000e+00 : bf16
    %0 = vector.broadcast %cst : bf16 to vector<18x18x64xbf16>
    %c0 = arith.constant 0 : index
    %c0_0 = arith.constant 0 : index
    %c0_1 = arith.constant 0 : index
    %1 = vector.load %arg8[%c0, %c0_0, %c0_1] : memref<18x18x64xbf16, #tpu.memory_space<vmem>>, vector<18x18x64xbf16>
    tpu.vector_store %arg8[%c0, %c0_0, %c0_1], %0 {strides = array<i32>} : memref<18x18x64xbf16, #tpu.memory_space<vmem>>, vector<18x18x64xbf16>,
    %c0_2 = arith.constant 0 : index
    %c0_3 = arith.constant 0 : index
    %c0_4 = arith.constant 0 : index
    %c0_5 = arith.constant 0 : index
    %2 = vector.load %arg1[%c0_2, %c0_3, %c0_4, %c0_5] : memref<1x16x16x32xbf16, #tpu.memory_space<vmem>>, vector<1x16x16x32xbf16>
    %3 = vector.shape_cast %2 : vector<1x16x16x32xbf16> to vector<16x16x32xbf16>
    %c1 = arith.constant 1 : index
    %c1_6 = arith.constant 1 : index
    %c0_7 = arith.constant 0 : index
    %4 = vector.load %arg8[%c1, %c1_6, %c0_7] : memref<18x18x64xbf16, #tpu.memory_space<vmem>>, vector<16x16x32xbf16>
    tpu.vector_store %arg8[%c1, %c1_6, %c0_7], %3 {strides = array<i32>} : memref<18x18x64xbf16, #tpu.memory_space<vmem>>, vector<16x16x32xbf16>,
    %c0_8 = arith.constant 0 : index
    %c0_9 = arith.constant 0 : index
    %c0_10 = arith.constant 0 : index
    %c0_11 = arith.constant 0 : index
    %5 = vector.load %arg2[%c0_8, %c0_9, %c0_10, %c0_11] : memref<1x16x16x32xbf16, #tpu.memory_space<vmem>>, vector<1x16x16x32xbf16>
    %6 = vector.shape_cast %5 : vector<1x16x16x32xbf16> to vector<16x16x32xbf16>
    %c1_12 = arith.constant 1 : index
    %c1_13 = arith.constant 1 : index
    %c32 = arith.constant 32 : index
    %7 = vector.load %arg8[%c1_12, %c1_13, %c32] : memref<18x18x64xbf16, #tpu.memory_space<vmem>>, vector<16x16x32xbf16>
    tpu.vector_store %arg8[%c1_12, %c1_13, %c32], %6 {strides = array<i32>} : memref<18x18x64xbf16, #tpu.memory_space<vmem>>, vector<16x16x32xbf16>,
    %cst_14 = arith.constant 0.000000e+00 : f32
    %8 = vector.broadcast %cst_14 : f32 to vector<256x32xf32>
    %c0_15 = arith.constant 0 : index
    %c0_16 = arith.constant 0 : index
    %c0_17 = arith.constant 0 : index
    %9 = vector.load %arg8[%c0_15, %c0_16, %c0_17] : memref<18x18x64xbf16, #tpu.memory_space<vmem>>, vector<16x16x64xbf16>
    %10 = vector.shape_cast %9 : vector<16x16x64xbf16> to vector<256x64xbf16>
    %c0_18 = arith.constant 0 : index
    %c0_19 = arith.constant 0 : index
    %c0_20 = arith.constant 0 : index
    %11 = vector.load %arg3[%c0_18, %c0_19, %c0_20] : memref<9x64x32xbf16, #tpu.memory_space<vmem>>, vector<1x64x32xbf16>
    %12 = vector.shape_cast %11 : vector<1x64x32xbf16> to vector<64x32xbf16>
    %cst_21 = arith.constant dense<0.000000e+00> : vector<256x32xf32>
    %13 = tpu.matmul %10, %12, %cst_21 {dimension_numbers = #tpu.dot_dimension_numbers<[1], [0], [0], [1], [0, 0, 1, 1], [], []>} : vector<256x64xbf16>, vector<64x32xbf16>, vector<256x32xf32> -> vector<256x32xf32>
    %14 = arith.addf %8, %13 : vector<256x32xf32>
    %c0_22 = arith.constant 0 : index
    %c1_23 = arith.constant 1 : index
    %c0_24 = arith.constant 0 : index
    %15 = vector.load %arg8[%c0_22, %c1_23, %c0_24] : memref<18x18x64xbf16, #tpu.memory_space<vmem>>, vector<16x16x64xbf16>
    %16 = vector.shape_cast %15 : vector<16x16x64xbf16> to vector<256x64xbf16>
    %c1_25 = arith.constant 1 : index
    %c0_26 = arith.constant 0 : index
    %c0_27 = arith.constant 0 : index
    %17 = vector.load %arg3[%c1_25, %c0_26, %c0_27] : memref<9x64x32xbf16, #tpu.memory_space<vmem>>, vector<1x64x32xbf16>
    %18 = vector.shape_cast %17 : vector<1x64x32xbf16> to vector<64x32xbf16>
    %cst_28 = arith.constant dense<0.000000e+00> : vector<256x32xf32>
    %19 = tpu.matmul %16, %18, %cst_28 {dimension_numbers = #tpu.dot_dimension_numbers<[1], [0], [0], [1], [0, 0, 1, 1], [], []>} : vector<256x64xbf16>, vector<64x32xbf16>, vector<256x32xf32> -> vector<256x32xf32>
    %20 = arith.addf %14, %19 : vector<256x32xf32>
    %c0_29 = arith.constant 0 : index
    %c2 = arith.constant 2 : index
    %c0_30 = arith.constant 0 : index
    %21 = vector.load %arg8[%c0_29, %c2, %c0_30] : memref<18x18x64xbf16, #tpu.memory_space<vmem>>, vector<16x16x64xbf16>
    %22 = vector.shape_cast %21 : vector<16x16x64xbf16> to vector<256x64xbf16>
    %c2_31 = arith.constant 2 : index
    %c0_32 = arith.constant 0 : index
    %c0_33 = arith.constant 0 : index
    %23 = vector.load %arg3[%c2_31, %c0_32, %c0_33] : memref<9x64x32xbf16, #tpu.memory_space<vmem>>, vector<1x64x32xbf16>
    %24 = vector.shape_cast %23 : vector<1x64x32xbf16> to vector<64x32xbf16>
    %cst_34 = arith.constant dense<0.000000e+00> : vector<256x32xf32>
    %25 = tpu.matmul %22, %24, %cst_34 {dimension_numbers = #tpu.dot_dimension_numbers<[1], [0], [0], [1], [0, 0, 1, 1], [], []>} : vector<256x64xbf16>, vector<64x32xbf16>, vector<256x32xf32> -> vector<256x32xf32>
    %26 = arith.addf %20, %25 : vector<256x32xf32>
    %c1_35 = arith.constant 1 : index
    %c0_36 = arith.constant 0 : index
    %c0_37 = arith.constant 0 : index
    %27 = vector.load %arg8[%c1_35, %c0_36, %c0_37] : memref<18x18x64xbf16, #tpu.memory_space<vmem>>, vector<16x16x64xbf16>
    %28 = vector.shape_cast %27 : vector<16x16x64xbf16> to vector<256x64xbf16>
    %c3 = arith.constant 3 : index
    %c0_38 = arith.constant 0 : index
    %c0_39 = arith.constant 0 : index
    %29 = vector.load %arg3[%c3, %c0_38, %c0_39] : memref<9x64x32xbf16, #tpu.memory_space<vmem>>, vector<1x64x32xbf16>
    %30 = vector.shape_cast %29 : vector<1x64x32xbf16> to vector<64x32xbf16>
    %cst_40 = arith.constant dense<0.000000e+00> : vector<256x32xf32>
    %31 = tpu.matmul %28, %30, %cst_40 {dimension_numbers = #tpu.dot_dimension_numbers<[1], [0], [0], [1], [0, 0, 1, 1], [], []>} : vector<256x64xbf16>, vector<64x32xbf16>, vector<256x32xf32> -> vector<256x32xf32>
    %32 = arith.addf %26, %31 : vector<256x32xf32>
    %c1_41 = arith.constant 1 : index
    %c1_42 = arith.constant 1 : index
    %c0_43 = arith.constant 0 : index
    %33 = vector.load %arg8[%c1_41, %c1_42, %c0_43] : memref<18x18x64xbf16, #tpu.memory_space<vmem>>, vector<16x16x64xbf16>
    %34 = vector.shape_cast %33 : vector<16x16x64xbf16> to vector<256x64xbf16>
    %c4 = arith.constant 4 : index
    %c0_44 = arith.constant 0 : index
    %c0_45 = arith.constant 0 : index
    %35 = vector.load %arg3[%c4, %c0_44, %c0_45] : memref<9x64x32xbf16, #tpu.memory_space<vmem>>, vector<1x64x32xbf16>
    %36 = vector.shape_cast %35 : vector<1x64x32xbf16> to vector<64x32xbf16>
    %cst_46 = arith.constant dense<0.000000e+00> : vector<256x32xf32>
    %37 = tpu.matmul %34, %36, %cst_46 {dimension_numbers = #tpu.dot_dimension_numbers<[1], [0], [0], [1], [0, 0, 1, 1], [], []>} : vector<256x64xbf16>, vector<64x32xbf16>, vector<256x32xf32> -> vector<256x32xf32>
    %38 = arith.addf %32, %37 : vector<256x32xf32>
    %c1_47 = arith.constant 1 : index
    %c2_48 = arith.constant 2 : index
    %c0_49 = arith.constant 0 : index
    %39 = vector.load %arg8[%c1_47, %c2_48, %c0_49] : memref<18x18x64xbf16, #tpu.memory_space<vmem>>, vector<16x16x64xbf16>
    %40 = vector.shape_cast %39 : vector<16x16x64xbf16> to vector<256x64xbf16>
    %c5 = arith.constant 5 : index
    %c0_50 = arith.constant 0 : index
    %c0_51 = arith.constant 0 : index
    %41 = vector.load %arg3[%c5, %c0_50, %c0_51] : memref<9x64x32xbf16, #tpu.memory_space<vmem>>, vector<1x64x32xbf16>
    %42 = vector.shape_cast %41 : vector<1x64x32xbf16> to vector<64x32xbf16>
    %cst_52 = arith.constant dense<0.000000e+00> : vector<256x32xf32>
    %43 = tpu.matmul %40, %42, %cst_52 {dimension_numbers = #tpu.dot_dimension_numbers<[1], [0], [0], [1], [0, 0, 1, 1], [], []>} : vector<256x64xbf16>, vector<64x32xbf16>, vector<256x32xf32> -> vector<256x32xf32>
    %44 = arith.addf %38, %43 : vector<256x32xf32>
    %c2_53 = arith.constant 2 : index
    %c0_54 = arith.constant 0 : index
    %c0_55 = arith.constant 0 : index
    %45 = vector.load %arg8[%c2_53, %c0_54, %c0_55] : memref<18x18x64xbf16, #tpu.memory_space<vmem>>, vector<16x16x64xbf16>
    %46 = vector.shape_cast %45 : vector<16x16x64xbf16> to vector<256x64xbf16>
    %c6 = arith.constant 6 : index
    %c0_56 = arith.constant 0 : index
    %c0_57 = arith.constant 0 : index
    %47 = vector.load %arg3[%c6, %c0_56, %c0_57] : memref<9x64x32xbf16, #tpu.memory_space<vmem>>, vector<1x64x32xbf16>
    %48 = vector.shape_cast %47 : vector<1x64x32xbf16> to vector<64x32xbf16>
    %cst_58 = arith.constant dense<0.000000e+00> : vector<256x32xf32>
    %49 = tpu.matmul %46, %48, %cst_58 {dimension_numbers = #tpu.dot_dimension_numbers<[1], [0], [0], [1], [0, 0, 1, 1], [], []>} : vector<256x64xbf16>, vector<64x32xbf16>, vector<256x32xf32> -> vector<256x32xf32>
    %50 = arith.addf %44, %49 : vector<256x32xf32>
    %c2_59 = arith.constant 2 : index
    %c1_60 = arith.constant 1 : index
    %c0_61 = arith.constant 0 : index
    %51 = vector.load %arg8[%c2_59, %c1_60, %c0_61] : memref<18x18x64xbf16, #tpu.memory_space<vmem>>, vector<16x16x64xbf16>
    %52 = vector.shape_cast %51 : vector<16x16x64xbf16> to vector<256x64xbf16>
    %c7 = arith.constant 7 : index
    %c0_62 = arith.constant 0 : index
    %c0_63 = arith.constant 0 : index
    %53 = vector.load %arg3[%c7, %c0_62, %c0_63] : memref<9x64x32xbf16, #tpu.memory_space<vmem>>, vector<1x64x32xbf16>
    %54 = vector.shape_cast %53 : vector<1x64x32xbf16> to vector<64x32xbf16>
    %cst_64 = arith.constant dense<0.000000e+00> : vector<256x32xf32>
    %55 = tpu.matmul %52, %54, %cst_64 {dimension_numbers = #tpu.dot_dimension_numbers<[1], [0], [0], [1], [0, 0, 1, 1], [], []>} : vector<256x64xbf16>, vector<64x32xbf16>, vector<256x32xf32> -> vector<256x32xf32>
    %56 = arith.addf %50, %55 : vector<256x32xf32>
    %c2_65 = arith.constant 2 : index
    %c2_66 = arith.constant 2 : index
    %c0_67 = arith.constant 0 : index
    %57 = vector.load %arg8[%c2_65, %c2_66, %c0_67] : memref<18x18x64xbf16, #tpu.memory_space<vmem>>, vector<16x16x64xbf16>
    %58 = vector.shape_cast %57 : vector<16x16x64xbf16> to vector<256x64xbf16>
    %c8 = arith.constant 8 : index
    %c0_68 = arith.constant 0 : index
    %c0_69 = arith.constant 0 : index
    %59 = vector.load %arg3[%c8, %c0_68, %c0_69] : memref<9x64x32xbf16, #tpu.memory_space<vmem>>, vector<1x64x32xbf16>
    %60 = vector.shape_cast %59 : vector<1x64x32xbf16> to vector<64x32xbf16>
    %cst_70 = arith.constant dense<0.000000e+00> : vector<256x32xf32>
    %61 = tpu.matmul %58, %60, %cst_70 {dimension_numbers = #tpu.dot_dimension_numbers<[1], [0], [0], [1], [0, 0, 1, 1], [], []>} : vector<256x64xbf16>, vector<64x32xbf16>, vector<256x32xf32> -> vector<256x32xf32>
    %62 = arith.addf %56, %61 : vector<256x32xf32>
    %c0_71 = arith.constant 0 : index
    %c0_72 = arith.constant 0 : index
    %63 = vector.load %arg4[%c0_71, %c0_72] : memref<1x32xf32, #tpu.memory_space<vmem>>, vector<1x32xf32>
    %64 = vector.broadcast %63 : vector<1x32xf32> to vector<256x32xf32>
    %65 = arith.addf %62, %64 : vector<256x32xf32>
    %cst_73 = arith.constant 0.000000e+00 : f32
    %66 = vector.broadcast %cst_73 : f32 to vector<256x32xf32>
    %67 = arith.maximumf %65, %66 : vector<256x32xf32>
    %cst_74 = arith.constant 0.000000e+00 : bf16
    %68 = vector.broadcast %cst_74 : bf16 to vector<18x18x32xbf16>
    %c0_75 = arith.constant 0 : index
    %c0_76 = arith.constant 0 : index
    %c0_77 = arith.constant 0 : index
    %69 = vector.load %arg9[%c0_75, %c0_76, %c0_77] : memref<18x18x32xbf16, #tpu.memory_space<vmem>>, vector<18x18x32xbf16>
    tpu.vector_store %arg9[%c0_75, %c0_76, %c0_77], %68 {strides = array<i32>} : memref<18x18x32xbf16, #tpu.memory_space<vmem>>, vector<18x18x32xbf16>,
    %70 = vector.shape_cast %67 : vector<256x32xf32> to vector<16x16x32xf32>
    %71 = arith.truncf %70 : vector<16x16x32xf32> to vector<16x16x32xbf16>
    %c1_78 = arith.constant 1 : index
    %c1_79 = arith.constant 1 : index
    %c0_80 = arith.constant 0 : index
    %72 = vector.load %arg9[%c1_78, %c1_79, %c0_80] : memref<18x18x32xbf16, #tpu.memory_space<vmem>>, vector<16x16x32xbf16>
    tpu.vector_store %arg9[%c1_78, %c1_79, %c0_80], %71 {strides = array<i32>} : memref<18x18x32xbf16, #tpu.memory_space<vmem>>, vector<16x16x32xbf16>,
    %cst_81 = arith.constant 0.000000e+00 : f32
    %73 = vector.broadcast %cst_81 : f32 to vector<256x32xf32>
    %c0_82 = arith.constant 0 : index
    %c0_83 = arith.constant 0 : index
    %c0_84 = arith.constant 0 : index
    %74 = vector.load %arg9[%c0_82, %c0_83, %c0_84] : memref<18x18x32xbf16, #tpu.memory_space<vmem>>, vector<16x16x32xbf16>
    %75 = vector.shape_cast %74 : vector<16x16x32xbf16> to vector<256x32xbf16>
    %c0_85 = arith.constant 0 : index
    %c0_86 = arith.constant 0 : index
    %c0_87 = arith.constant 0 : index
    %76 = vector.load %arg5[%c0_85, %c0_86, %c0_87] : memref<9x32x32xbf16, #tpu.memory_space<vmem>>, vector<1x32x32xbf16>
    %77 = vector.shape_cast %76 : vector<1x32x32xbf16> to vector<32x32xbf16>
    %cst_88 = arith.constant dense<0.000000e+00> : vector<256x32xf32>
    %78 = tpu.matmul %75, %77, %cst_88 {dimension_numbers = #tpu.dot_dimension_numbers<[1], [0], [0], [1], [0, 0, 1, 1], [], []>} : vector<256x32xbf16>, vector<32x32xbf16>, vector<256x32xf32> -> vector<256x32xf32>
    %79 = arith.addf %73, %78 : vector<256x32xf32>
    %c0_89 = arith.constant 0 : index
    %c1_90 = arith.constant 1 : index
    %c0_91 = arith.constant 0 : index
    %80 = vector.load %arg9[%c0_89, %c1_90, %c0_91] : memref<18x18x32xbf16, #tpu.memory_space<vmem>>, vector<16x16x32xbf16>
    %81 = vector.shape_cast %80 : vector<16x16x32xbf16> to vector<256x32xbf16>
    %c1_92 = arith.constant 1 : index
    %c0_93 = arith.constant 0 : index
    %c0_94 = arith.constant 0 : index
    %82 = vector.load %arg5[%c1_92, %c0_93, %c0_94] : memref<9x32x32xbf16, #tpu.memory_space<vmem>>, vector<1x32x32xbf16>
    %83 = vector.shape_cast %82 : vector<1x32x32xbf16> to vector<32x32xbf16>
    %cst_95 = arith.constant dense<0.000000e+00> : vector<256x32xf32>
    %84 = tpu.matmul %81, %83, %cst_95 {dimension_numbers = #tpu.dot_dimension_numbers<[1], [0], [0], [1], [0, 0, 1, 1], [], []>} : vector<256x32xbf16>, vector<32x32xbf16>, vector<256x32xf32> -> vector<256x32xf32>
    %85 = arith.addf %79, %84 : vector<256x32xf32>
    %c0_96 = arith.constant 0 : index
    %c2_97 = arith.constant 2 : index
    %c0_98 = arith.constant 0 : index
    %86 = vector.load %arg9[%c0_96, %c2_97, %c0_98] : memref<18x18x32xbf16, #tpu.memory_space<vmem>>, vector<16x16x32xbf16>
    %87 = vector.shape_cast %86 : vector<16x16x32xbf16> to vector<256x32xbf16>
    %c2_99 = arith.constant 2 : index
    %c0_100 = arith.constant 0 : index
    %c0_101 = arith.constant 0 : index
    %88 = vector.load %arg5[%c2_99, %c0_100, %c0_101] : memref<9x32x32xbf16, #tpu.memory_space<vmem>>, vector<1x32x32xbf16>
    %89 = vector.shape_cast %88 : vector<1x32x32xbf16> to vector<32x32xbf16>
    %cst_102 = arith.constant dense<0.000000e+00> : vector<256x32xf32>
    %90 = tpu.matmul %87, %89, %cst_102 {dimension_numbers = #tpu.dot_dimension_numbers<[1], [0], [0], [1], [0, 0, 1, 1], [], []>} : vector<256x32xbf16>, vector<32x32xbf16>, vector<256x32xf32> -> vector<256x32xf32>
    %91 = arith.addf %85, %90 : vector<256x32xf32>
    %c1_103 = arith.constant 1 : index
    %c0_104 = arith.constant 0 : index
    %c0_105 = arith.constant 0 : index
    %92 = vector.load %arg9[%c1_103, %c0_104, %c0_105] : memref<18x18x32xbf16, #tpu.memory_space<vmem>>, vector<16x16x32xbf16>
    %93 = vector.shape_cast %92 : vector<16x16x32xbf16> to vector<256x32xbf16>
    %c3_106 = arith.constant 3 : index
    %c0_107 = arith.constant 0 : index
    %c0_108 = arith.constant 0 : index
    %94 = vector.load %arg5[%c3_106, %c0_107, %c0_108] : memref<9x32x32xbf16, #tpu.memory_space<vmem>>, vector<1x32x32xbf16>
    %95 = vector.shape_cast %94 : vector<1x32x32xbf16> to vector<32x32xbf16>
    %cst_109 = arith.constant dense<0.000000e+00> : vector<256x32xf32>
    %96 = tpu.matmul %93, %95, %cst_109 {dimension_numbers = #tpu.dot_dimension_numbers<[1], [0], [0], [1], [0, 0, 1, 1], [], []>} : vector<256x32xbf16>, vector<32x32xbf16>, vector<256x32xf32> -> vector<256x32xf32>
    %97 = arith.addf %91, %96 : vector<256x32xf32>
    %c1_110 = arith.constant 1 : index
    %c1_111 = arith.constant 1 : index
    %c0_112 = arith.constant 0 : index
    %98 = vector.load %arg9[%c1_110, %c1_111, %c0_112] : memref<18x18x32xbf16, #tpu.memory_space<vmem>>, vector<16x16x32xbf16>
    %99 = vector.shape_cast %98 : vector<16x16x32xbf16> to vector<256x32xbf16>
    %c4_113 = arith.constant 4 : index
    %c0_114 = arith.constant 0 : index
    %c0_115 = arith.constant 0 : index
    %100 = vector.load %arg5[%c4_113, %c0_114, %c0_115] : memref<9x32x32xbf16, #tpu.memory_space<vmem>>, vector<1x32x32xbf16>
    %101 = vector.shape_cast %100 : vector<1x32x32xbf16> to vector<32x32xbf16>
    %cst_116 = arith.constant dense<0.000000e+00> : vector<256x32xf32>
    %102 = tpu.matmul %99, %101, %cst_116 {dimension_numbers = #tpu.dot_dimension_numbers<[1], [0], [0], [1], [0, 0, 1, 1], [], []>} : vector<256x32xbf16>, vector<32x32xbf16>, vector<256x32xf32> -> vector<256x32xf32>
    %103 = arith.addf %97, %102 : vector<256x32xf32>
    %c1_117 = arith.constant 1 : index
    %c2_118 = arith.constant 2 : index
    %c0_119 = arith.constant 0 : index
    %104 = vector.load %arg9[%c1_117, %c2_118, %c0_119] : memref<18x18x32xbf16, #tpu.memory_space<vmem>>, vector<16x16x32xbf16>
    %105 = vector.shape_cast %104 : vector<16x16x32xbf16> to vector<256x32xbf16>
    %c5_120 = arith.constant 5 : index
    %c0_121 = arith.constant 0 : index
    %c0_122 = arith.constant 0 : index
    %106 = vector.load %arg5[%c5_120, %c0_121, %c0_122] : memref<9x32x32xbf16, #tpu.memory_space<vmem>>, vector<1x32x32xbf16>
    %107 = vector.shape_cast %106 : vector<1x32x32xbf16> to vector<32x32xbf16>
    %cst_123 = arith.constant dense<0.000000e+00> : vector<256x32xf32>
    %108 = tpu.matmul %105, %107, %cst_123 {dimension_numbers = #tpu.dot_dimension_numbers<[1], [0], [0], [1], [0, 0, 1, 1], [], []>} : vector<256x32xbf16>, vector<32x32xbf16>, vector<256x32xf32> -> vector<256x32xf32>
    %109 = arith.addf %103, %108 : vector<256x32xf32>
    %c2_124 = arith.constant 2 : index
    %c0_125 = arith.constant 0 : index
    %c0_126 = arith.constant 0 : index
    %110 = vector.load %arg9[%c2_124, %c0_125, %c0_126] : memref<18x18x32xbf16, #tpu.memory_space<vmem>>, vector<16x16x32xbf16>
    %111 = vector.shape_cast %110 : vector<16x16x32xbf16> to vector<256x32xbf16>
    %c6_127 = arith.constant 6 : index
    %c0_128 = arith.constant 0 : index
    %c0_129 = arith.constant 0 : index
    %112 = vector.load %arg5[%c6_127, %c0_128, %c0_129] : memref<9x32x32xbf16, #tpu.memory_space<vmem>>, vector<1x32x32xbf16>
    %113 = vector.shape_cast %112 : vector<1x32x32xbf16> to vector<32x32xbf16>
    %cst_130 = arith.constant dense<0.000000e+00> : vector<256x32xf32>
    %114 = tpu.matmul %111, %113, %cst_130 {dimension_numbers = #tpu.dot_dimension_numbers<[1], [0], [0], [1], [0, 0, 1, 1], [], []>} : vector<256x32xbf16>, vector<32x32xbf16>, vector<256x32xf32> -> vector<256x32xf32>
    %115 = arith.addf %109, %114 : vector<256x32xf32>
    %c2_131 = arith.constant 2 : index
    %c1_132 = arith.constant 1 : index
    %c0_133 = arith.constant 0 : index
    %116 = vector.load %arg9[%c2_131, %c1_132, %c0_133] : memref<18x18x32xbf16, #tpu.memory_space<vmem>>, vector<16x16x32xbf16>
    %117 = vector.shape_cast %116 : vector<16x16x32xbf16> to vector<256x32xbf16>
    %c7_134 = arith.constant 7 : index
    %c0_135 = arith.constant 0 : index
    %c0_136 = arith.constant 0 : index
    %118 = vector.load %arg5[%c7_134, %c0_135, %c0_136] : memref<9x32x32xbf16, #tpu.memory_space<vmem>>, vector<1x32x32xbf16>
    %119 = vector.shape_cast %118 : vector<1x32x32xbf16> to vector<32x32xbf16>
    %cst_137 = arith.constant dense<0.000000e+00> : vector<256x32xf32>
    %120 = tpu.matmul %117, %119, %cst_137 {dimension_numbers = #tpu.dot_dimension_numbers<[1], [0], [0], [1], [0, 0, 1, 1], [], []>} : vector<256x32xbf16>, vector<32x32xbf16>, vector<256x32xf32> -> vector<256x32xf32>
    %121 = arith.addf %115, %120 : vector<256x32xf32>
    %c2_138 = arith.constant 2 : index
    %c2_139 = arith.constant 2 : index
    %c0_140 = arith.constant 0 : index
    %122 = vector.load %arg9[%c2_138, %c2_139, %c0_140] : memref<18x18x32xbf16, #tpu.memory_space<vmem>>, vector<16x16x32xbf16>
    %123 = vector.shape_cast %122 : vector<16x16x32xbf16> to vector<256x32xbf16>
    %c8_141 = arith.constant 8 : index
    %c0_142 = arith.constant 0 : index
    %c0_143 = arith.constant 0 : index
    %124 = vector.load %arg5[%c8_141, %c0_142, %c0_143] : memref<9x32x32xbf16, #tpu.memory_space<vmem>>, vector<1x32x32xbf16>
    %125 = vector.shape_cast %124 : vector<1x32x32xbf16> to vector<32x32xbf16>
    %cst_144 = arith.constant dense<0.000000e+00> : vector<256x32xf32>
    %126 = tpu.matmul %123, %125, %cst_144 {dimension_numbers = #tpu.dot_dimension_numbers<[1], [0], [0], [1], [0, 0, 1, 1], [], []>} : vector<256x32xbf16>, vector<32x32xbf16>, vector<256x32xf32> -> vector<256x32xf32>
    %127 = arith.addf %121, %126 : vector<256x32xf32>
    %c0_145 = arith.constant 0 : index
    %c0_146 = arith.constant 0 : index
    %128 = vector.load %arg6[%c0_145, %c0_146] : memref<1x32xf32, #tpu.memory_space<vmem>>, vector<1x32xf32>
    %129 = vector.broadcast %128 : vector<1x32xf32> to vector<256x32xf32>
    %130 = arith.addf %127, %129 : vector<256x32xf32>
    %cst_147 = arith.constant 0.000000e+00 : f32
    %131 = vector.broadcast %cst_147 : f32 to vector<256x32xf32>
    %132 = arith.maximumf %130, %131 : vector<256x32xf32>
    %133 = vector.shape_cast %132 : vector<256x32xf32> to vector<16x16x32xf32>
    %c0_148 = arith.constant 0 : index
    %c0_149 = arith.constant 0 : index
    %c0_150 = arith.constant 0 : index
    %c0_151 = arith.constant 0 : index
    %134 = vector.load %arg7[%c0_148, %c0_149, %c0_150, %c0_151] : memref<1x16x16x32xf32, #tpu.memory_space<vmem>>, vector<1x16x16x32xf32>
    %135 = vector.shape_cast %134 : vector<1x16x16x32xf32> to vector<16x16x32xf32>
    %136 = vector.shape_cast %133 : vector<16x16x32xf32> to vector<1x16x16x32xf32>
    tpu.vector_store %arg7[%c0_148, %c0_149, %c0_150, %c0_151], %136 {strides = array<i32>} : memref<1x16x16x32xf32, #tpu.memory_space<vmem>>, vector<1x16x16x32xf32>,
    return
  }
  func.func @transform_0(%arg0: i32) -> (i32, i32, i32, i32) {
    %c0_i32 = arith.constant 0 : i32
    %c0_i32_0 = arith.constant 0 : i32
    %c0_i32_1 = arith.constant 0 : i32
    %c0_i32_2 = arith.constant 0 : i32
    return %arg0, %c0_i32, %c0_i32_0, %c0_i32_1 : i32, i32, i32, i32
  }
  func.func @transform_1(%arg0: i32) -> (i32, i32, i32, i32) {
    %c0_i32 = arith.constant 0 : i32
    %c0_i32_0 = arith.constant 0 : i32
    %c0_i32_1 = arith.constant 0 : i32
    %c0_i32_2 = arith.constant 0 : i32
    return %arg0, %c0_i32, %c0_i32_0, %c0_i32_1 : i32, i32, i32, i32
  }
  func.func @transform_2(%arg0: i32) -> (i32, i32, i32) {
    %c0_i32 = arith.constant 0 : i32
    %c0_i32_0 = arith.constant 0 : i32
    %c0_i32_1 = arith.constant 0 : i32
    %c0_i32_2 = arith.constant 0 : i32
    return %c0_i32, %c0_i32_0, %c0_i32_1 : i32, i32, i32
  }
  func.func @transform_3(%arg0: i32) -> (i32, i32) {
    %c0_i32 = arith.constant 0 : i32
    %c0_i32_0 = arith.constant 0 : i32
    %c0_i32_1 = arith.constant 0 : i32
    return %c0_i32, %c0_i32_0 : i32, i32
  }
  func.func @transform_4(%arg0: i32) -> (i32, i32, i32) {
    %c0_i32 = arith.constant 0 : i32
    %c0_i32_0 = arith.constant 0 : i32
    %c0_i32_1 = arith.constant 0 : i32
    %c0_i32_2 = arith.constant 0 : i32
    return %c0_i32, %c0_i32_0, %c0_i32_1 : i32, i32, i32
  }
  func.func @transform_5(%arg0: i32) -> (i32, i32) {
    %c0_i32 = arith.constant 0 : i32
    %c0_i32_0 = arith.constant 0 : i32
    %c0_i32_1 = arith.constant 0 : i32
    return %c0_i32, %c0_i32_0 : i32, i32
  }
  func.func @transform_6(%arg0: i32) -> (i32, i32, i32, i32) {
    %c0_i32 = arith.constant 0 : i32
    %c0_i32_0 = arith.constant 0 : i32
    %c0_i32_1 = arith.constant 0 : i32
    %c0_i32_2 = arith.constant 0 : i32
    return %arg0, %c0_i32, %c0_i32_0, %c0_i32_1 : i32, i32, i32, i32
  }
}

</mosaic_0001>

<llo_original>
// kernel: up_block_forward.2
$region0: #{up_block_forward.2}
  #allocation0 [shape = 'u32[]', space=smem, size = 0x4, offset = 0x4, fixed_abs, tag = 'smem constant byte address 0x4 - core index']
  #allocation1 [shape = 'u32[144,128]{1,0:T(1,128)}', space=vmem, size = 0x12000, scoped, tag = 'internal scratch']
  %s0 = inlined_call_operand.vmem [shape: bf16[2,64,64], index: 0, kind: input, shape index: {}]
  %s1 = inlined_call_operand.vmem [shape: bf16[64,128], index: 1, kind: input, shape index: {}]
  %s2 = inlined_call_operand.vmem [shape: f32[1,128], index: 2, kind: input, shape index: {}]
  %s3 = inlined_call_operand.vmem [shape: bf16[2,64,128], index: 3, kind: output, shape index: {}]
  %s4 = sld [smem:[#allocation0]]
  $region45: #{up_block_forward.2} parent=0
    _
  %s6 = ssub.s32 1, %s4
  %s7 = scalar_select 0, %s6, %s4
  loop: start=0, step=1, limit=4
  $region2: #{up_block_forward.2} parent=0 // loop_pre_header
    _
  $region3: #{up_block_forward.2} parent=0 // loop_header
    %s9 = sphi 0, %s13
    %p10 = scmp.ge.s32.totalorder %s9, 4
    %s19 = sphi 0, %s21
    %s22 = sphi 0, %s19
    %s23 = sphi 0, %s22
    %s39 = sphi 0, %s23
    %s43 = sphi 0, %s43
    %s45 = sphi 0, %s43
    %s46 = sphi 0, %s45
    %s60 = sphi 0, %s46
    %s64 = sphi 0, %s64
    %s66 = sphi 0, %s64
    %s67 = sphi 0, %s66
    %s81 = sphi 0, %s67
    %s87 = sphi 0, %s89
    %s90 = sphi 0, %s87
    %s91 = sphi 0, %s90
    %s107 = sphi 0, %s91
  $region4: #{up_block_forward.2} parent=0 // loop_header_branch
    %12 = sbr.rel (%p10) target = $region8
  $region5: #{up_block_forward.2} parent=0 // loop_body
    %s14 = ssub.s32 %s9, 1
    %s15 = ssub.s32 %s9, 2
    %s16 = sadd.s32 %s9, 1
    %s17 = ssub.s32 %s9, %s16
    %p18 = scmp.eq.s32.totalorder %s17, 0
    %s20 = sadd.s32 %s19, 1
    %s21 = scalar_select %p18, %s19, %s20
    %p24 = pneg %p18
    %p25 = scmp.eq.s32.totalorder %s9, 1
    %p26 = por %p24, %p25
    %p27 = scmp.ne.s32.totalorder %s19, %s22
    %p28 = scmp.eq.s32.totalorder %s9, 0
    %p29 = por %p27, %p28
    %p30 = scmp.ne.s32.totalorder %s19, %s22
    %p31 = scmp.eq.s32.totalorder %s14, 1
    %p32 = por %p30, %p31
    %p33 = scmp.ne.s32.totalorder %s22, %s23
    %p34 = scmp.eq.s32.totalorder %s14, 0
    %p35 = por %p33, %p34
    %p36 = scmp.ne.s32.totalorder %s22, %s23
    %p37 = scmp.eq.s32.totalorder %s15, 1
    %p38 = por %p36, %p37
    %p40 = scmp.ne.s32.totalorder %s23, %s39
    %p41 = scmp.eq.s32.totalorder %s15, 0
    %p42 = por %p40, %p41
    %s44 = sadd.s32 %s43, 1
    %p47 = scmp.eq.s32.totalorder %s9, 1
    %p48 = scmp.ne.s32.totalorder %s43, %s45
    %p49 = scmp.eq.s32.totalorder %s9, 0
    %p50 = por %p48, %p49
    %p51 = scmp.ne.s32.totalorder %s43, %s45
    %p52 = scmp.eq.s32.totalorder %s14, 1
    %p53 = por %p51, %p52
    %p54 = scmp.ne.s32.totalorder %s45, %s46
    %p55 = scmp.eq.s32.totalorder %s14, 0
    %p56 = por %p54, %p55
    %p57 = scmp.ne.s32.totalorder %s45, %s46
    %p58 = scmp.eq.s32.totalorder %s15, 1
    %p59 = por %p57, %p58
    %p61 = scmp.ne.s32.totalorder %s46, %s60
    %p62 = scmp.eq.s32.totalorder %s15, 0
    %p63 = por %p61, %p62
    %s65 = sadd.s32 %s64, 1
    %p68 = scmp.eq.s32.totalorder %s9, 1
    %p69 = scmp.ne.s32.totalorder %s64, %s66
    %p70 = scmp.eq.s32.totalorder %s9, 0
    %p71 = por %p69, %p70
    %p72 = scmp.ne.s32.totalorder %s64, %s66
    %p73 = scmp.eq.s32.totalorder %s14, 1
    %p74 = por %p72, %p73
    %p75 = scmp.ne.s32.totalorder %s66, %s67
    %p76 = scmp.eq.s32.totalorder %s14, 0
    %p77 = por %p75, %p76
    %p78 = scmp.ne.s32.totalorder %s66, %s67
    %p79 = scmp.eq.s32.totalorder %s15, 1
    %p80 = por %p78, %p79
    %p82 = scmp.ne.s32.totalorder %s67, %s81
    %p83 = scmp.eq.s32.totalorder %s15, 0
    %p84 = por %p82, %p83
    %s85 = ssub.s32 %s9, %s16
    %p86 = scmp.eq.s32.totalorder %s85, 0
    %s88 = sadd.s32 %s87, 1
    %s89 = scalar_select %p86, %s87, %s88
    %p92 = pneg %p86
    %p93 = scmp.eq.s32.totalorder %s9, 1
    %p94 = por %p92, %p93
    %p95 = scmp.ne.s32.totalorder %s87, %s90
    %p96 = scmp.eq.s32.totalorder %s9, 0
    %p97 = por %p95, %p96
    %p98 = scmp.ne.s32.totalorder %s87, %s90
    %p99 = scmp.eq.s32.totalorder %s14, 1
    %p100 = por %p98, %p99
    %p101 = scmp.ne.s32.totalorder %s90, %s91
    %p102 = scmp.eq.s32.totalorder %s14, 0
    %p103 = por %p101, %p102
    %p104 = scmp.ne.s32.totalorder %s90, %s91
    %p105 = scmp.eq.s32.totalorder %s15, 1
    %p106 = por %p104, %p105
    %p108 = scmp.ne.s32.totalorder %s91, %s107
    %p109 = scmp.eq.s32.totalorder %s15, 0
    %p110 = por %p108, %p109
    %p111 = scmp.le.s32.totalorder 1, %s9
    %p112 = scmp.lt.s32.totalorder %s9, 3
    %p113 = pnand %p111, %p112
    %p114 = pneg %p113
    // Predicated region
    $region9: #{up_block_forward.2} parent=5 // pred_check
      _
    $region10: #{up_block_forward.2} parent=5 // pred_check_branch
      %116 = sbr.rel (%p113) target = $region12
    $region11: #{up_block_forward.2} parent=5 // pred_region
      %s117 = ssub.s32 %s9, 1
      // Predicated region
      $region13: #{up_block_forward.2} parent=11 // pred_check
        %p118 = pneg %p56
      $region14: #{up_block_forward.2} parent=11 // pred_check_branch
        %120 = sbr.rel (%p118) target = $region16
      $region15: #{up_block_forward.2} parent=11 // pred_region
        _
      $region16: #{up_block_forward.2} parent=11 // pred_fallthru
        _
      // Predicated region
      $region17: #{up_block_forward.2} parent=11 // pred_check
        %p121 = pneg %p77
      $region18: #{up_block_forward.2} parent=11 // pred_check_branch
        %123 = sbr.rel (%p121) target = $region20
      $region19: #{up_block_forward.2} parent=11 // pred_region
        _
      $region20: #{up_block_forward.2} parent=11 // pred_fallthru
        _
    $region12: #{up_block_forward.2} parent=5 // pred_fallthru
      _
    %p124 = scmp.lt.s32.totalorder %s9, 2
    // Predicated region
    $region21: #{up_block_forward.2} parent=5 // pred_check
      %p125 = pneg %p124
    $region22: #{up_block_forward.2} parent=5 // pred_check_branch
      %127 = sbr.rel (%p125) target = $region24
    $region23: #{up_block_forward.2} parent=5 // pred_region
      // Predicated region
      $region25: #{up_block_forward.2} parent=23 // pred_check
        %p128 = pneg %p29
      $region26: #{up_block_forward.2} parent=23 // pred_check_branch
        %130 = sbr.rel (%p128) target = $region28
      $region27: #{up_block_forward.2} parent=23 // pred_region
        %p131 = scmp.lt.s32.totalorder %s9, 1
        %s132 = scalar_select %p131, %s9, 1
        %s133 = smul.addr %s132, 8
        %s134 = smul.addr %s133, 4
        %s135 = scalar_lea.vmem %s0, %s134
      $region28: #{up_block_forward.2} parent=23 // pred_fallthru
        _
    $region24: #{up_block_forward.2} parent=5 // pred_fallthru
      _
    %p136 = scmp.le.s32.totalorder 1, %s9
    %p137 = scmp.lt.s32.totalorder %s9, 3
    %p138 = pnand %p136, %p137
    %p139 = pneg %p138
    // Predicated region
    $region29: #{up_block_forward.2} parent=5 // pred_check
      _
    $region30: #{up_block_forward.2} parent=5 // pred_check_branch
      %141 = sbr.rel (%p138) target = $region32
    $region31: #{up_block_forward.2} parent=5 // pred_region
      %s142 = ssub.s32 %s9, 1
      %p143 = scmp.lt.s32.totalorder %s14, 1
      %s144 = scalar_select %p143, %s14, 1
      %s145 = smul.addr %s144, 8
      %s146 = smul.addr %s145, 4
      %s147 = scalar_lea.vmem %s0, %s146
      %p148 = pneg %p35
      %p149 = pneg %p32
      %p150 = pneg %p56
      %p151 = pneg %p53
      %p152 = pneg %p77
      %p153 = pneg %p74
      %p154 = pneg %p103
      %p155 = pneg %p100
      %p156 = scmp.lt.s32.totalorder %s14, 1
      %s157 = scalar_select %p156, %s14, 1
      %s158 = smul.addr %s157, 8
      %s159 = smul.addr %s158, 4
      %s160 = scalar_lea.vmem %s3, %s159
      %p161 = scmp.lt.s32.totalorder %s14, 1
      %s162 = scalar_select %p161, %s14, 1
      %s163 = smul.addr %s162, 8
      %s164 = smul.addr %s163, 4
      %s165 = scalar_lea.vmem %s0, %s164
      %p166 = scmp.lt.s32.totalorder %s14, 1
      %s167 = scalar_select %p166, %s14, 1
      %s168 = smul.addr %s167, 8
      %s169 = smul.addr %s168, 4
      %s170 = scalar_lea.vmem %s3, %s169
      %v172 = vld [vmem:[%s165] sm:$0xf]
      %v173 = vld [vmem:[%s165 + $0x4] sm:$0xf]
      %v174 = vld [vmem:[%s165 + $0x8] sm:$0xf]
      %v175 = vld [vmem:[%s165 + $0xc] sm:$0xf]
      %v176 = vld [vmem:[%s165 + $0x10] sm:$0xf]
      %v177 = vld [vmem:[%s165 + $0x14] sm:$0xf]
      %v178 = vld [vmem:[%s165 + $0x18] sm:$0xf]
      %v179 = vld [vmem:[%s165 + $0x1c] sm:$0xf]
      %v180 = vld [vmem:[%s1] sm:$0xf]
      %v181 = vld [vmem:[%s1 + $0x4] sm:$0xf]
      %v182 = vld [vmem:[%s1 + $0x8] sm:$0xf]
      %v183 = vld [vmem:[%s1 + $0xc] sm:$0xf]
      %v184 = vld [vmem:[%s1 + $0x10] sm:$0xf]
      %v185 = vld [vmem:[%s1 + $0x14] sm:$0xf]
      %v186 = vld [vmem:[%s1 + $0x18] sm:$0xf]
      %v187 = vld [vmem:[%s1 + $0x1c] sm:$0xf]
      %v188 = vld [vmem:[%s2] sm:$0x1]
      %v190 = vlaneseq
      %v191 = vshrl.u32 %v190, 7
      %v192 = vsub.s32 0, %v191
      %v193 = vrot.slane %v188, %v192
      %v203 = vunpack.c.l.b16 %v172
      %v204 = vunpack.c.l.b16 %v173
      %v205 = vunpack.c.l.b16 %v174
      %v206 = vunpack.c.l.b16 %v175
      %v207 = vunpack.c.l.b16 %v176
      %v208 = vunpack.c.l.b16 %v177
      %v209 = vunpack.c.l.b16 %v178
      %v210 = vunpack.c.l.b16 %v179
      %v211 = vpack.c.b16 %v204, %v203
      %v212 = vpack.c.b16 %v206, %v205
      %v213 = vpack.c.b16 %v208, %v207
      %v214 = vpack.c.b16 %v210, %v209
      %v223 = vunpack.c.l.b16 %v180
      %v224 = vunpack.c.l.b16 %v181
      %v225 = vunpack.c.l.b16 %v182
      %v226 = vunpack.c.l.b16 %v183
      %v227 = vunpack.c.l.b16 %v184
      %v228 = vunpack.c.l.b16 %v185
      %v229 = vunpack.c.l.b16 %v186
      %v230 = vunpack.c.l.b16 %v187
      %v231 = vpack.c.b16 %v224, %v223
      %v232 = vpack.c.b16 %v226, %v225
      %v233 = vpack.c.b16 %v228, %v227
      %v234 = vpack.c.b16 %v230, %v229
      %vm239 = vcmask 523264
      %v241 = vsel %vm239, %v211, 0
      %v244 = vsel %vm239, %v212, 0
      %v247 = vsel %vm239, %v213, 0
      %v250 = vsel %vm239, %v214, 0
      %252 = vmatprep.subr.bf16.mxu0 0
      %253 = vmatpush1.bf16.msra.mxu0 0
      %254 = vmatprep.subr.bf16.mxu0 0
      %255 = vmatpush1.bf16.msra.mxu0 0
      %256 = vmatprep.subr.bf16.mxu0 0
      %257 = vmatpush1.bf16.msra.mxu0 0
      %258 = vmatprep.subr.bf16.mxu0 0
      %259 = vmatpush1.bf16.msra.mxu0 0
      %260 = vmatprep.subr.bf16.mxu0 0
      %261 = vmatpush1.bf16.msra.mxu0 %v234
      %262 = vmatprep.subr.bf16.mxu0 0
      %263 = vmatpush1.bf16.msra.mxu0 %v233
      %264 = vmatprep.subr.bf16.mxu0 0
      %265 = vmatpush1.bf16.msra.mxu0 %v232
      %266 = vmatprep.subr.bf16.mxu0 0
      %267 = vmatpush1.bf16.msra.mxu0 %v231
      %268 = vmatprep.subr.bf16.mxu0 0
      %269 = vmatpush2.bf16.msra.mxu0 0
      %270 = vmatprep.subr.bf16.mxu0 0
      %271 = vmatpush2.bf16.msra.mxu0 0
      %272 = vmatprep.subr.bf16.mxu0 0
      %273 = vmatpush2.bf16.msra.mxu0 0
      %274 = vmatprep.subr.bf16.mxu0 0
      %275 = vmatpush2.bf16.msra.mxu0 0
      %276 = vmatprep.subr.bf16.mxu0 0
      %277 = vmatpush2.bf16.msra.mxu0 0
      %278 = vmatprep.subr.bf16.mxu0 0
      %279 = vmatpush2.bf16.msra.mxu0 0
      %280 = vmatprep.subr.bf16.mxu0 0
      %281 = vmatpush2.bf16.msra.mxu0 0
      %282 = vmatprep.subr.bf16.mxu0 0
      %283 = vmatpush2.bf16.msra.mxu0 0
      %284 = vmatprep.mubr.bf16.mxu0 0
      %285 = vmatmul.mubr.bf16.gmra.mxu0 %v241
      %v286 = vpop.f32.mrf.mxu0
      %v287 = vadd.f32 %v193, %v286
      %v288 = vpop.f32.mrf.mxu0
      %v289 = vpop.f32.mrf.mxu0
      %v290 = vadd.f32 %v193, %v289
      %v291 = vpop.f32.mrf.mxu0
      %292 = vmatprep.mubr.bf16.mxu0 0
      %293 = vmatmul.mubr.bf16.gmra.mxu0 %v244
      %v294 = vpop.f32.mrf.mxu0
      %v295 = vadd.f32 %v193, %v294
      %v296 = vpop.f32.mrf.mxu0
      %v297 = vpop.f32.mrf.mxu0
      %v298 = vadd.f32 %v193, %v297
      %v299 = vpop.f32.mrf.mxu0
      %300 = vmatprep.mubr.bf16.mxu0 0
      %301 = vmatmul.mubr.bf16.gmra.mxu0 %v247
      %v302 = vpop.f32.mrf.mxu0
      %v303 = vadd.f32 %v193, %v302
      %v304 = vpop.f32.mrf.mxu0
      %v305 = vpop.f32.mrf.mxu0
      %v306 = vadd.f32 %v193, %v305
      %v307 = vpop.f32.mrf.mxu0
      %308 = vmatprep.mubr.bf16.mxu0 0
      %309 = vmatmul.mubr.bf16.gmra.mxu0 %v250
      %v310 = vpop.f32.mrf.mxu0
      %v311 = vadd.f32 %v193, %v310
      %v312 = vpop.f32.mrf.mxu0
      %v313 = vpop.f32.mrf.mxu0
      %v314 = vadd.f32 %v193, %v313
      %v315 = vpop.f32.mrf.mxu0
      %316 = vdwg.mxu0
      %v317 = vpack.c.bf16 %v290, %v287
      %v318 = vpack.c.bf16 %v298, %v295
      %v319 = vpack.c.bf16 %v306, %v303
      %v320 = vpack.c.bf16 %v314, %v311
      %v325 = vunpack.c.l.b16 %v317
      %v326 = vunpack.c.h.b16 %v317
      %v327 = vunpack.c.l.b16 %v318
      %v328 = vunpack.c.h.b16 %v318
      %v329 = vunpack.c.l.b16 %v319
      %v330 = vunpack.c.h.b16 %v319
      %v331 = vunpack.c.l.b16 %v320
      %v332 = vunpack.c.h.b16 %v320
      %v333 = vpack.c.b16 %v325, %v325
      %v334 = vpack.c.b16 %v326, %v326
      %v335 = vpack.c.b16 %v327, %v327
      %v336 = vpack.c.b16 %v328, %v328
      %v337 = vpack.c.b16 %v329, %v329
      %v338 = vpack.c.b16 %v330, %v330
      %v339 = vpack.c.b16 %v331, %v331
      %v340 = vpack.c.b16 %v332, %v332
      %349 = vst [vmem:[%s170] sm:$0xf] %v333
      %350 = vst [vmem:[%s170 + $0x4] sm:$0xf] %v334
      %351 = vst [vmem:[%s170 + $0x8] sm:$0xf] %v335
      %352 = vst [vmem:[%s170 + $0xc] sm:$0xf] %v336
      %353 = vst [vmem:[%s170 + $0x10] sm:$0xf] %v337
      %354 = vst [vmem:[%s170 + $0x14] sm:$0xf] %v338
      %355 = vst [vmem:[%s170 + $0x18] sm:$0xf] %v339
      %356 = vst [vmem:[%s170 + $0x1c] sm:$0xf] %v340
      %p357 = scmp.lt.s32.totalorder %s14, 1
      %s358 = scalar_select %p357, %s14, 1
      %s359 = smul.addr %s358, 8
      %s360 = smul.addr %s359, 4
      %s361 = scalar_lea.vmem %s3, %s360
      // Predicated region
      $region33: #{up_block_forward.2} parent=31 // pred_check
        %p362 = pneg %p100
      $region34: #{up_block_forward.2} parent=31 // pred_check_branch
        %364 = sbr.rel (%p362) target = $region36
      $region35: #{up_block_forward.2} parent=31 // pred_region
        _
      $region36: #{up_block_forward.2} parent=31 // pred_fallthru
        _
    $region32: #{up_block_forward.2} parent=5 // pred_fallthru
      _
    %p365 = scmp.le.s32.totalorder 2, %s9
    // Predicated region
    $region37: #{up_block_forward.2} parent=5 // pred_check
      %p366 = pneg %p365
    $region38: #{up_block_forward.2} parent=5 // pred_check_branch
      %368 = sbr.rel (%p366) target = $region40
    $region39: #{up_block_forward.2} parent=5 // pred_region
      %s369 = ssub.s32 %s9, 2
      // Predicated region
      $region41: #{up_block_forward.2} parent=39 // pred_check
        %p370 = pneg %p106
      $region42: #{up_block_forward.2} parent=39 // pred_check_branch
        %372 = sbr.rel (%p370) target = $region44
      $region43: #{up_block_forward.2} parent=39 // pred_region
        %p373 = scmp.lt.s32.totalorder %s15, 1
        %s374 = scalar_select %p373, %s15, 1
        %s375 = smul.addr %s374, 8
        %s376 = smul.addr %s375, 4
        %s377 = scalar_lea.vmem %s3, %s376
      $region44: #{up_block_forward.2} parent=39 // pred_fallthru
        _
    $region40: #{up_block_forward.2} parent=5 // pred_fallthru
      _
  $region6: #{up_block_forward.2} parent=0 // loop_footer
    %s13 = sadd.s32 1, %s9
  $region7: #{up_block_forward.2} parent=0 // loop_footer_branch
    %8 = sbr.rel target = $region3
  $region8: #{up_block_forward.2} parent=0 // loop_exit
    _

// kernel: up_block_forward.3
$region0: #{up_block_forward.3}
  #allocation0 [shape = 'u32[]', space=smem, size = 0x4, offset = 0x4, fixed_abs, tag = 'smem constant byte address 0x4 - core index']
  #allocation1 [shape = 'u32[144,128]{1,0:T(1,128)}', space=vmem, size = 0x12000, scoped, tag = 'internal scratch']
  #allocation2 [shape = 'bf16[18,18,64]{2,1,0:T(8,128)(2,1)}', space=vmem, size = 0x1b000, scoped, tag = 'scratch operand']
  #allocation3 [shape = 'bf16[18,18,32]{2,1,0:T(8,128)(2,1)}', space=vmem, size = 0x1b000, scoped, tag = 'scratch operand']
  %s0 = inlined_call_operand.vmem [shape: bf16[2,16,16,32], index: 0, kind: input, shape index: {}]
  %s1 = inlined_call_operand.vmem [shape: bf16[2,16,16,32], index: 1, kind: input, shape index: {}]
  %s2 = inlined_call_operand.vmem [shape: bf16[9,64,32], index: 2, kind: input, shape index: {}]
  %s3 = inlined_call_operand.vmem [shape: f32[1,32], index: 3, kind: input, shape index: {}]
  %s4 = inlined_call_operand.vmem [shape: bf16[9,32,32], index: 4, kind: input, shape index: {}]
  %s5 = inlined_call_operand.vmem [shape: f32[1,32], index: 5, kind: input, shape index: {}]
  %s6 = inlined_call_operand.hbm [shape: f32[2,16,16,32], index: 6, kind: output, shape index: {}]
  %s7 = sld [smem:[#allocation0]]
  $region57: #{up_block_forward.3} parent=0
    _
  %s9 = ssub.s32 1, %s7
  %s10 = scalar_select 0, %s9, %s7
  $region1: #{up_block_forward.3} parent=0
    #allocation4 [shape = 'u8[262144]{0}', space=vmem, size = 0x40000, scoped, tag = 'output window, operand 0']
    #allocation5 [shape = 's32[2]{0}', space=sflag, size = 0x8, scoped, tag = 'scoped memory for up_block_forward.3']
    %11 = vsyncpa [#allocation5], 0
    %s12 = scalar_lea.sflag [#allocation5], 1
    %13 = vsyncpa %s12, 0
    loop: start=0, step=1, limit=4
    $region2: #{up_block_forward.3} parent=1 // loop_pre_header
      _
    $region3: #{up_block_forward.3} parent=1 // loop_header
      %s15 = sphi 0, %s19
      %p16 = scmp.ge.s32.totalorder %s15, 4
      %s25 = sphi 0, %s27
      %s28 = sphi 0, %s25
      %s29 = sphi 0, %s28
      %s45 = sphi 0, %s29
      %s51 = sphi 0, %s53
      %s54 = sphi 0, %s51
      %s55 = sphi 0, %s54
      %s71 = sphi 0, %s55
      %s75 = sphi 0, %s75
      %s77 = sphi 0, %s75
      %s78 = sphi 0, %s77
      %s92 = sphi 0, %s78
      %s96 = sphi 0, %s96
      %s98 = sphi 0, %s96
      %s99 = sphi 0, %s98
      %s113 = sphi 0, %s99
      %s117 = sphi 0, %s117
      %s119 = sphi 0, %s117
      %s120 = sphi 0, %s119
      %s134 = sphi 0, %s120
      %s138 = sphi 0, %s138
      %s140 = sphi 0, %s138
      %s141 = sphi 0, %s140
      %s155 = sphi 0, %s141
      %s161 = sphi 0, %s163
      %s164 = sphi 0, %s161
      %s165 = sphi 0, %s164
      %s181 = sphi 0, %s165
    $region4: #{up_block_forward.3} parent=1 // loop_header_branch
      %18 = sbr.rel (%p16) target = $region8
    $region5: #{up_block_forward.3} parent=1 // loop_body
      %s20 = ssub.s32 %s15, 1
      %s21 = ssub.s32 %s15, 2
      %s22 = sadd.s32 %s15, 1
      %s23 = ssub.s32 %s15, %s22
      %p24 = scmp.eq.s32.totalorder %s23, 0
      %s26 = sadd.s32 %s25, 1
      %s27 = scalar_select %p24, %s25, %s26
      %p30 = pneg %p24
      %p31 = scmp.eq.s32.totalorder %s15, 1
      %p32 = por %p30, %p31
      %p33 = scmp.ne.s32.totalorder %s25, %s28
      %p34 = scmp.eq.s32.totalorder %s15, 0
      %p35 = por %p33, %p34
      %p36 = scmp.ne.s32.totalorder %s25, %s28
      %p37 = scmp.eq.s32.totalorder %s20, 1
      %p38 = por %p36, %p37
      %p39 = scmp.ne.s32.totalorder %s28, %s29
      %p40 = scmp.eq.s32.totalorder %s20, 0
      %p41 = por %p39, %p40
      %p42 = scmp.ne.s32.totalorder %s28, %s29
      %p43 = scmp.eq.s32.totalorder %s21, 1
      %p44 = por %p42, %p43
      %p46 = scmp.ne.s32.totalorder %s29, %s45
      %p47 = scmp.eq.s32.totalorder %s21, 0
      %p48 = por %p46, %p47
      %s49 = ssub.s32 %s15, %s22
      %p50 = scmp.eq.s32.totalorder %s49, 0
      %s52 = sadd.s32 %s51, 1
      %s53 = scalar_select %p50, %s51, %s52
      %p56 = pneg %p50
      %p57 = scmp.eq.s32.totalorder %s15, 1
      %p58 = por %p56, %p57
      %p59 = scmp.ne.s32.totalorder %s51, %s54
      %p60 = scmp.eq.s32.totalorder %s15, 0
      %p61 = por %p59, %p60
      %p62 = scmp.ne.s32.totalorder %s51, %s54
      %p63 = scmp.eq.s32.totalorder %s20, 1
      %p64 = por %p62, %p63
      %p65 = scmp.ne.s32.totalorder %s54, %s55
      %p66 = scmp.eq.s32.totalorder %s20, 0
      %p67 = por %p65, %p66
      %p68 = scmp.ne.s32.totalorder %s54, %s55
      %p69 = scmp.eq.s32.totalorder %s21, 1
      %p70 = por %p68, %p69
      %p72 = scmp.ne.s32.totalorder %s55, %s71
      %p73 = scmp.eq.s32.totalorder %s21, 0
      %p74 = por %p72, %p73
      %s76 = sadd.s32 %s75, 1
      %p79 = scmp.eq.s32.totalorder %s15, 1
      %p80 = scmp.ne.s32.totalorder %s75, %s77
      %p81 = scmp.eq.s32.totalorder %s15, 0
      %p82 = por %p80, %p81
      %p83 = scmp.ne.s32.totalorder %s75, %s77
      %p84 = scmp.eq.s32.totalorder %s20, 1
      %p85 = por %p83, %p84
      %p86 = scmp.ne.s32.totalorder %s77, %s78
      %p87 = scmp.eq.s32.totalorder %s20, 0
      %p88 = por %p86, %p87
      %p89 = scmp.ne.s32.totalorder %s77, %s78
      %p90 = scmp.eq.s32.totalorder %s21, 1
      %p91 = por %p89, %p90
      %p93 = scmp.ne.s32.totalorder %s78, %s92
      %p94 = scmp.eq.s32.totalorder %s21, 0
      %p95 = por %p93, %p94
      %s97 = sadd.s32 %s96, 1
      %p100 = scmp.eq.s32.totalorder %s15, 1
      %p101 = scmp.ne.s32.totalorder %s96, %s98
      %p102 = scmp.eq.s32.totalorder %s15, 0
      %p103 = por %p101, %p102
      %p104 = scmp.ne.s32.totalorder %s96, %s98
      %p105 = scmp.eq.s32.totalorder %s20, 1
      %p106 = por %p104, %p105
      %p107 = scmp.ne.s32.totalorder %s98, %s99
      %p108 = scmp.eq.s32.totalorder %s20, 0
      %p109 = por %p107, %p108
      %p110 = scmp.ne.s32.totalorder %s98, %s99
      %p111 = scmp.eq.s32.totalorder %s21, 1
      %p112 = por %p110, %p111
      %p114 = scmp.ne.s32.totalorder %s99, %s113
      %p115 = scmp.eq.s32.totalorder %s21, 0
      %p116 = por %p114, %p115
      %s118 = sadd.s32 %s117, 1
      %p121 = scmp.eq.s32.totalorder %s15, 1
      %p122 = scmp.ne.s32.totalorder %s117, %s119
      %p123 = scmp.eq.s32.totalorder %s15, 0
      %p124 = por %p122, %p123
      %p125 = scmp.ne.s32.totalorder %s117, %s119
      %p126 = scmp.eq.s32.totalorder %s20, 1
      %p127 = por %p125, %p126
      %p128 = scmp.ne.s32.totalorder %s119, %s120
      %p129 = scmp.eq.s32.totalorder %s20, 0
      %p130 = por %p128, %p129
      %p131 = scmp.ne.s32.totalorder %s119, %s120
      %p132 = scmp.eq.s32.totalorder %s21, 1
      %p133 = por %p131, %p132
      %p135 = scmp.ne.s32.totalorder %s120, %s134
      %p136 = scmp.eq.s32.totalorder %s21, 0
      %p137 = por %p135, %p136
      %s139 = sadd.s32 %s138, 1
      %p142 = scmp.eq.s32.totalorder %s15, 1
      %p143 = scmp.ne.s32.totalorder %s138, %s140
      %p144 = scmp.eq.s32.totalorder %s15, 0
      %p145 = por %p143, %p144
      %p146 = scmp.ne.s32.totalorder %s138, %s140
      %p147 = scmp.eq.s32.totalorder %s20, 1
      %p148 = por %p146, %p147
      %p149 = scmp.ne.s32.totalorder %s140, %s141
      %p150 = scmp.eq.s32.totalorder %s20, 0
      %p151 = por %p149, %p150
      %p152 = scmp.ne.s32.totalorder %s140, %s141
      %p153 = scmp.eq.s32.totalorder %s21, 1
      %p154 = por %p152, %p153
      %p156 = scmp.ne.s32.totalorder %s141, %s155
      %p157 = scmp.eq.s32.totalorder %s21, 0
      %p158 = por %p156, %p157
      %s159 = ssub.s32 %s15, %s22
      %p160 = scmp.eq.s32.totalorder %s159, 0
      %s162 = sadd.s32 %s161, 1
      %s163 = scalar_select %p160, %s161, %s162
      %p166 = pneg %p160
      %p167 = scmp.eq.s32.totalorder %s15, 1
      %p168 = por %p166, %p167
      %p169 = scmp.ne.s32.totalorder %s161, %s164
      %p170 = scmp.eq.s32.totalorder %s15, 0
      %p171 = por %p169, %p170
      %p172 = scmp.ne.s32.totalorder %s161, %s164
      %p173 = scmp.eq.s32.totalorder %s20, 1
      %p174 = por %p172, %p173
      %p175 = scmp.ne.s32.totalorder %s164, %s165
      %p176 = scmp.eq.s32.totalorder %s20, 0
      %p177 = por %p175, %p176
      %p178 = scmp.ne.s32.totalorder %s164, %s165
      %p179 = scmp.eq.s32.totalorder %s21, 1
      %p180 = por %p178, %p179
      %p182 = scmp.ne.s32.totalorder %s165, %s181
      %p183 = scmp.eq.s32.totalorder %s21, 0
      %p184 = por %p182, %p183
      %p185 = scmp.le.s32.totalorder 1, %s15
      %p186 = scmp.lt.s32.totalorder %s15, 3
      %p187 = pnand %p185, %p186
      %p188 = pneg %p187
      // Predicated region
      $region9: #{up_block_forward.3} parent=5 // pred_check
        _
      $region10: #{up_block_forward.3} parent=5 // pred_check_branch
        %190 = sbr.rel (%p187) target = $region12
      $region11: #{up_block_forward.3} parent=5 // pred_region
        %s191 = ssub.s32 %s15, 1
        // Predicated region
        $region13: #{up_block_forward.3} parent=11 // pred_check
          %p192 = pneg %p88
        $region14: #{up_block_forward.3} parent=11 // pred_check_branch
          %194 = sbr.rel (%p192) target = $region16
        $region15: #{up_block_forward.3} parent=11 // pred_region
          _
        $region16: #{up_block_forward.3} parent=11 // pred_fallthru
          _
        // Predicated region
        $region17: #{up_block_forward.3} parent=11 // pred_check
          %p195 = pneg %p109
        $region18: #{up_block_forward.3} parent=11 // pred_check_branch
          %197 = sbr.rel (%p195) target = $region20
        $region19: #{up_block_forward.3} parent=11 // pred_region
          _
        $region20: #{up_block_forward.3} parent=11 // pred_fallthru
          _
        // Predicated region
        $region21: #{up_block_forward.3} parent=11 // pred_check
          %p198 = pneg %p130
        $region22: #{up_block_forward.3} parent=11 // pred_check_branch
          %200 = sbr.rel (%p198) target = $region24
        $region23: #{up_block_forward.3} parent=11 // pred_region
          _
        $region24: #{up_block_forward.3} parent=11 // pred_fallthru
          _
        // Predicated region
        $region25: #{up_block_forward.3} parent=11 // pred_check
          %p201 = pneg %p151
        $region26: #{up_block_forward.3} parent=11 // pred_check_branch
          %203 = sbr.rel (%p201) target = $region28
        $region27: #{up_block_forward.3} parent=11 // pred_region
          _
        $region28: #{up_block_forward.3} parent=11 // pred_fallthru
          _
      $region12: #{up_block_forward.3} parent=5 // pred_fallthru
        _
      %p204 = scmp.lt.s32.totalorder %s15, 2
      // Predicated region
      $region29: #{up_block_forward.3} parent=5 // pred_check
        %p205 = pneg %p204
      $region30: #{up_block_forward.3} parent=5 // pred_check_branch
        %207 = sbr.rel (%p205) target = $region32
      $region31: #{up_block_forward.3} parent=5 // pred_region
        // Predicated region
        $region33: #{up_block_forward.3} parent=31 // pred_check
          %p208 = pneg %p35
        $region34: #{up_block_forward.3} parent=31 // pred_check_branch
          %210 = sbr.rel (%p208) target = $region36
        $region35: #{up_block_forward.3} parent=31 // pred_region
          %p211 = scmp.lt.s32.totalorder %s15, 1
          %s212 = scalar_select %p211, %s15, 1
          %s213 = smul.addr %s212, 32
          %s214 = smul.addr %s213, 4
          %s215 = scalar_lea.vmem %s0, %s214
        $region36: #{up_block_forward.3} parent=31 // pred_fallthru
          _
        // Predicated region
        $region37: #{up_block_forward.3} parent=31 // pred_check
          %p216 = pneg %p61
        $region38: #{up_block_forward.3} parent=31 // pred_check_branch
          %218 = sbr.rel (%p216) target = $region40
        $region39: #{up_block_forward.3} parent=31 // pred_region
          %p219 = scmp.lt.s32.totalorder %s15, 1
          %s220 = scalar_select %p219, %s15, 1
          %s221 = smul.addr %s220, 32
          %s222 = smul.addr %s221, 4
          %s223 = scalar_lea.vmem %s1, %s222
        $region40: #{up_block_forward.3} parent=31 // pred_fallthru
          _
      $region32: #{up_block_forward.3} parent=5 // pred_fallthru
        _
      %p224 = scmp.le.s32.totalorder 1, %s15
      %p225 = scmp.lt.s32.totalorder %s15, 3
      %p226 = pnand %p224, %p225
      %p227 = pneg %p226
      // Predicated region
      $region41: #{up_block_forward.3} parent=5 // pred_check
        _
      $region42: #{up_block_forward.3} parent=5 // pred_check_branch
        %229 = sbr.rel (%p226) target = $region44
      $region43: #{up_block_forward.3} parent=5 // pred_region
        %s230 = ssub.s32 %s15, 1
        %p231 = scmp.lt.s32.totalorder %s20, 1
        %s232 = scalar_select %p231, %s20, 1
        %s233 = smul.addr %s232, 32
        %s234 = smul.addr %s233, 4
        %s235 = scalar_lea.vmem %s0, %s234
        %p236 = pneg %p41
        %p237 = pneg %p38
        %p238 = scmp.lt.s32.totalorder %s20, 1
        %s239 = scalar_select %p238, %s20, 1
        %s240 = smul.addr %s239, 32
        %s241 = smul.addr %s240, 4
        %s242 = scalar_lea.vmem %s1, %s241
        %p243 = pneg %p67
        %p244 = pneg %p64
        %p245 = pneg %p88
        %p246 = pneg %p85
        %p247 = pneg %p109
        %p248 = pneg %p106
        %p249 = pneg %p130
        %p250 = pneg %p127
        %p251 = pneg %p151
        %p252 = pneg %p148
        %p253 = pneg %p177
        %p254 = pneg %p174
        %s255 = sand.u32 %s164, 1
        %s256 = scalar_lea.sflag [#allocation5], %s255
        %s257 = sand.u32 %s164, 1
        %s258 = smul.addr %s257, 256
        %s259 = scalar_lea.vmem [#allocation4], %s258
        %p260 = scmp.lt.s32.totalorder %s20, 1
        %s261 = scalar_select %p260, %s20, 1
        %s262 = smul.addr %s261, 32
        %s263 = smul.addr %s262, 4
        %s264 = scalar_lea.vmem %s0, %s263
        %p265 = scmp.lt.s32.totalorder %s20, 1
        %s266 = scalar_select %p265, %s20, 1
        %s267 = smul.addr %s266, 32
        %s268 = smul.addr %s267, 4
        %s269 = scalar_lea.vmem %s1, %s268
        %vm271 = vcmask 519168
        %272 = vst.msk [vmem:[#allocation2] sm:$0xf] %vm271, 0
        %273 = vst.msk [vmem:[#allocation2 + $0x4] sm:$0xf] %vm271, 0
        %vm274 = vcmask 516096
        %275 = vst.msk [vmem:[#allocation2 + $0x8] sm:$0x1] %vm274, 0
        %276 = vst.msk [vmem:[#allocation2 + $0xc] sm:$0xf] %vm271, 0
        %277 = vst.msk [vmem:[#allocation2 + $0x10] sm:$0xf] %vm271, 0
        %278 = vst.msk [vmem:[#allocation2 + $0x14] sm:$0x1] %vm274, 0
        %279 = vst.msk [vmem:[#allocation2 + $0x18] sm:$0xf] %vm271, 0
        %280 = vst.msk [vmem:[#allocation2 + $0x1c] sm:$0xf] %vm271, 0
        %281 = vst.msk [vmem:[#allocation2 + $0x20] sm:$0x1] %vm274, 0
        %282 = vst.msk [vmem:[#allocation2 + $0x24] sm:$0xf] %vm271, 0
        %283 = vst.msk [vmem:[#allocation2 + $0x28] sm:$0xf] %vm271, 0
        %284 = vst.msk [vmem:[#allocation2 + $0x2c] sm:$0x1] %vm274, 0
        %285 = vst.msk [vmem:[#allocation2 + $0x30] sm:$0xf] %vm271, 0
        %286 = vst.msk [vmem:[#allocation2 + $0x34] sm:$0xf] %vm271, 0
        %287 = vst.msk [vmem:[#allocation2 + $0x38] sm:$0x1] %vm274, 0
        %288 = vst.msk [vmem:[#allocation2 + $0x3c] sm:$0xf] %vm271, 0
        %289 = vst.msk [vmem:[#allocation2 + $0x40] sm:$0xf] %vm271, 0
        %290 = vst.msk [vmem:[#allocation2 + $0x44] sm:$0x1] %vm274, 0
        %291 = vst.msk [vmem:[#allocation2 + $0x48] sm:$0xf] %vm271, 0
        %292 = vst.msk [vmem:[#allocation2 + $0x4c] sm:$0xf] %vm271, 0
        %293 = vst.msk [vmem:[#allocation2 + $0x50] sm:$0x1] %vm274, 0
        %294 = vst.msk [vmem:[#allocation2 + $0x54] sm:$0xf] %vm271, 0
        %295 = vst.msk [vmem:[#allocation2 + $0x58] sm:$0xf] %vm271, 0
        %296 = vst.msk [vmem:[#allocation2 + $0x5c] sm:$0x1] %vm274, 0
        %297 = vst.msk [vmem:[#allocation2 + $0x60] sm:$0xf] %vm271, 0
        %298 = vst.msk [vmem:[#allocation2 + $0x64] sm:$0xf] %vm271, 0
        %299 = vst.msk [vmem:[#allocation2 + $0x68] sm:$0x1] %vm274, 0
        %300 = vst.msk [vmem:[#allocation2 + $0x6c] sm:$0xf] %vm271, 0
        %301 = vst.msk [vmem:[#allocation2 + $0x70] sm:$0xf] %vm271, 0
        %302 = vst.msk [vmem:[#allocation2 + $0x74] sm:$0x1] %vm274, 0
        %303 = vst.msk [vmem:[#allocation2 + $0x78] sm:$0xf] %vm271, 0
        %304 = vst.msk [vmem:[#allocation2 + $0x7c] sm:$0xf] %vm271, 0
        %305 = vst.msk [vmem:[#allocation2 + $0x80] sm:$0x1] %vm274, 0
        %306 = vst.msk [vmem:[#allocation2 + $0x84] sm:$0xf] %vm271, 0
        %307 = vst.msk [vmem:[#allocation2 + $0x88] sm:$0xf] %vm271, 0
        %308 = vst.msk [vmem:[#allocation2 + $0x8c] sm:$0x1] %vm274, 0
        %309 = vst.msk [vmem:[#allocation2 + $0x90] sm:$0xf] %vm271, 0
        %310 = vst.msk [vmem:[#allocation2 + $0x94] sm:$0xf] %vm271, 0
        %311 = vst.msk [vmem:[#allocation2 + $0x98] sm:$0x1] %vm274, 0
        %312 = vst.msk [vmem:[#allocation2 + $0x9c] sm:$0xf] %vm271, 0
        %313 = vst.msk [vmem:[#allocation2 + $0xa0] sm:$0xf] %vm271, 0
        %314 = vst.msk [vmem:[#allocation2 + $0xa4] sm:$0x1] %vm274, 0
        %315 = vst.msk [vmem:[#allocation2 + $0xa8] sm:$0xf] %vm271, 0
        %316 = vst.msk [vmem:[#allocation2 + $0xac] sm:$0xf] %vm271, 0
        %317 = vst.msk [vmem:[#allocation2 + $0xb0] sm:$0x1] %vm274, 0
        %318 = vst.msk [vmem:[#allocation2 + $0xb4] sm:$0xf] %vm271, 0
        %319 = vst.msk [vmem:[#allocation2 + $0xb8] sm:$0xf] %vm271, 0
        %320 = vst.msk [vmem:[#allocation2 + $0xbc] sm:$0x1] %vm274, 0
        %321 = vst.msk [vmem:[#allocation2 + $0xc0] sm:$0xf] %vm271, 0
        %322 = vst.msk [vmem:[#allocation2 + $0xc4] sm:$0xf] %vm271, 0
        %323 = vst.msk [vmem:[#allocation2 + $0xc8] sm:$0x1] %vm274, 0
        %324 = vst.msk [vmem:[#allocation2 + $0xcc] sm:$0xf] %vm271, 0
        %325 = vst.msk [vmem:[#allocation2 + $0xd0] sm:$0xf] %vm271, 0
        %326 = vst.msk [vmem:[#allocation2 + $0xd4] sm:$0x1] %vm274, 0
        %v327 = vld [vmem:[%s264] sm:$0xf]
        %v328 = vld [vmem:[%s264 + $0x4] sm:$0xf]
        %v329 = vld [vmem:[%s264 + $0x8] sm:$0xf]
        %v330 = vld [vmem:[%s264 + $0xc] sm:$0xf]
        %v331 = vld [vmem:[%s264 + $0x10] sm:$0xf]
        %v332 = vld [vmem:[%s264 + $0x14] sm:$0xf]
        %v333 = vld [vmem:[%s264 + $0x18] sm:$0xf]
        %v334 = vld [vmem:[%s264 + $0x1c] sm:$0xf]
        %v335 = vld [vmem:[%s264 + $0x20] sm:$0xf]
        %v336 = vld [vmem:[%s264 + $0x24] sm:$0xf]
        %v337 = vld [vmem:[%s264 + $0x28] sm:$0xf]
        %v338 = vld [vmem:[%s264 + $0x2c] sm:$0xf]
        %v339 = vld [vmem:[%s264 + $0x30] sm:$0xf]
        %v340 = vld [vmem:[%s264 + $0x34] sm:$0xf]
        %v341 = vld [vmem:[%s264 + $0x38] sm:$0xf]
        %v342 = vld [vmem:[%s264 + $0x3c] sm:$0xf]
        %v343 = vld [vmem:[%s264 + $0x40] sm:$0xf]
        %v344 = vld [vmem:[%s264 + $0x44] sm:$0xf]
        %v345 = vld [vmem:[%s264 + $0x48] sm:$0xf]
        %v346 = vld [vmem:[%s264 + $0x4c] sm:$0xf]
        %v347 = vld [vmem:[%s264 + $0x50] sm:$0xf]
        %v348 = vld [vmem:[%s264 + $0x54] sm:$0xf]
        %v349 = vld [vmem:[%s264 + $0x58] sm:$0xf]
        %v350 = vld [vmem:[%s264 + $0x5c] sm:$0xf]
        %v351 = vld [vmem:[%s264 + $0x60] sm:$0xf]
        %v352 = vld [vmem:[%s264 + $0x64] sm:$0xf]
        %v353 = vld [vmem:[%s264 + $0x68] sm:$0xf]
        %v354 = vld [vmem:[%s264 + $0x6c] sm:$0xf]
        %v355 = vld [vmem:[%s264 + $0x70] sm:$0xf]
        %v356 = vld [vmem:[%s264 + $0x74] sm:$0xf]
        %v357 = vld [vmem:[%s264 + $0x78] sm:$0xf]
        %v358 = vld [vmem:[%s264 + $0x7c] sm:$0xf]
        %vm359 = vsmask.f32 256
        %vm360 = vsmask.f32 4368
        %vm361 = vmor %vm359, %vm360
        %v363 = vshrl.u32 %v327, 16
        %v365 = vrot.slane %v363, 7
        %v366 = vshll.u32 %v327, 16
        %v368 = vor.u32 %v365, %v366
        %v369 = vrot.slane %v365, 4
        %v371 = vshrl.u32 %v328, 16
        %v373 = vrot.slane %v371, 7
        %v374 = vshll.u32 %v328, 16
        %v376 = vor.u32 %v373, %v374
        %v377 = vsel %vm361, %v369, %v376
        %v378 = vrot.slane %v373, 4
        %v380 = vshrl.u32 %v329, 16
        %v382 = vrot.slane %v380, 7
        %v383 = vshll.u32 %v329, 16
        %v385 = vor.u32 %v382, %v383
        %v386 = vrot.slane %v382, 4
        %v388 = vshrl.u32 %v330, 16
        %v390 = vrot.slane %v388, 7
        %v391 = vshll.u32 %v330, 16
        %v393 = vor.u32 %v390, %v391
        %v394 = vsel %vm361, %v386, %v393
        %v395 = vrot.slane %v390, 4
        %v397 = vshrl.u32 %v331, 16
        %v399 = vrot.slane %v397, 7
        %v400 = vshll.u32 %v331, 16
        %v402 = vor.u32 %v399, %v400
        %v403 = vrot.slane %v399, 4
        %v405 = vshrl.u32 %v332, 16
        %v407 = vrot.slane %v405, 7
        %v408 = vshll.u32 %v332, 16
        %v410 = vor.u32 %v407, %v408
        %v411 = vsel %vm361, %v403, %v410
        %v412 = vrot.slane %v407, 4
        %v414 = vshrl.u32 %v333, 16
        %v416 = vrot.slane %v414, 7
        %v417 = vshll.u32 %v333, 16
        %v419 = vor.u32 %v416, %v417
        %v420 = vrot.slane %v416, 4
        %v422 = vshrl.u32 %v334, 16
        %v424 = vrot.slane %v422, 7
        %v425 = vshll.u32 %v334, 16
        %v427 = vor.u32 %v424, %v425
        %v428 = vsel %vm361, %v420, %v427
        %v429 = vrot.slane %v424, 4
        %v431 = vshrl.u32 %v335, 16
        %v433 = vrot.slane %v431, 7
        %v434 = vshll.u32 %v335, 16
        %v436 = vor.u32 %v433, %v434
        %v437 = vrot.slane %v433, 4
        %v439 = vshrl.u32 %v336, 16
        %v441 = vrot.slane %v439, 7
        %v442 = vshll.u32 %v336, 16
        %v444 = vor.u32 %v441, %v442
        %v445 = vsel %vm361, %v437, %v444
        %v446 = vrot.slane %v441, 4
        %v448 = vshrl.u32 %v337, 16
        %v450 = vrot.slane %v448, 7
        %v451 = vshll.u32 %v337, 16
        %v453 = vor.u32 %v450, %v451
        %v454 = vrot.slane %v450, 4
        %v456 = vshrl.u32 %v338, 16
        %v458 = vrot.slane %v456, 7
        %v459 = vshll.u32 %v338, 16
        %v461 = vor.u32 %v458, %v459
        %v462 = vsel %vm361, %v454, %v461
        %v463 = vrot.slane %v458, 4
        %v465 = vshrl.u32 %v339, 16
        %v467 = vrot.slane %v465, 7
        %v468 = vshll.u32 %v339, 16
        %v470 = vor.u32 %v467, %v468
        %v471 = vrot.slane %v467, 4
        %v473 = vshrl.u32 %v340, 16
        %v475 = vrot.slane %v473, 7
        %v476 = vshll.u32 %v340, 16
        %v478 = vor.u32 %v475, %v476
        %v479 = vsel %vm361, %v471, %v478
        %v480 = vrot.slane %v475, 4
        %v482 = vshrl.u32 %v341, 16
        %v484 = vrot.slane %v482, 7
        %v485 = vshll.u32 %v341, 16
        %v487 = vor.u32 %v484, %v485
        %v488 = vrot.slane %v484, 4
        %v490 = vshrl.u32 %v342, 16
        %v492 = vrot.slane %v490, 7
        %v493 = vshll.u32 %v342, 16
        %v495 = vor.u32 %v492, %v493
        %v496 = vsel %vm361, %v488, %v495
        %v497 = vrot.slane %v492, 4
        %v499 = vshrl.u32 %v343, 16
        %v501 = vrot.slane %v499, 7
        %v502 = vshll.u32 %v343, 16
        %v504 = vor.u32 %v501, %v502
        %v505 = vrot.slane %v501, 4
        %v507 = vshrl.u32 %v344, 16
        %v509 = vrot.slane %v507, 7
        %v510 = vshll.u32 %v344, 16
        %v512 = vor.u32 %v509, %v510
        %v513 = vsel %vm361, %v505, %v512
        %v514 = vrot.slane %v509, 4
        %v516 = vshrl.u32 %v345, 16
        %v518 = vrot.slane %v516, 7
        %v519 = vshll.u32 %v345, 16
        %v521 = vor.u32 %v518, %v519
        %v522 = vrot.slane %v518, 4
        %v524 = vshrl.u32 %v346, 16
        %v526 = vrot.slane %v524, 7
        %v527 = vshll.u32 %v346, 16
        %v529 = vor.u32 %v526, %v527
        %v530 = vsel %vm361, %v522, %v529
        %v531 = vrot.slane %v526, 4
        %v533 = vshrl.u32 %v347, 16
        %v535 = vrot.slane %v533, 7
        %v536 = vshll.u32 %v347, 16
        %v538 = vor.u32 %v535, %v536
        %v539 = vrot.slane %v535, 4
        %v541 = vshrl.u32 %v348, 16
        %v543 = vrot.slane %v541, 7
        %v544 = vshll.u32 %v348, 16
        %v546 = vor.u32 %v543, %v544
        %v547 = vsel %vm361, %v539, %v546
        %v548 = vrot.slane %v543, 4
        %v550 = vshrl.u32 %v349, 16
        %v552 = vrot.slane %v550, 7
        %v553 = vshll.u32 %v349, 16
        %v555 = vor.u32 %v552, %v553
        %v556 = vrot.slane %v552, 4
        %v558 = vshrl.u32 %v350, 16
        %v560 = vrot.slane %v558, 7
        %v561 = vshll.u32 %v350, 16
        %v563 = vor.u32 %v560, %v561
        %v564 = vsel %vm361, %v556, %v563
        %v565 = vrot.slane %v560, 4
        %v567 = vshrl.u32 %v351, 16
        %v569 = vrot.slane %v567, 7
        %v570 = vshll.u32 %v351, 16
        %v572 = vor.u32 %v569, %v570
        %v573 = vrot.slane %v569, 4
        %v575 = vshrl.u32 %v352, 16
        %v577 = vrot.slane %v575, 7
        %v578 = vshll.u32 %v352, 16
        %v580 = vor.u32 %v577, %v578
        %v581 = vsel %vm361, %v573, %v580
        %v582 = vrot.slane %v577, 4
        %v584 = vshrl.u32 %v353, 16
        %v586 = vrot.slane %v584, 7
        %v587 = vshll.u32 %v353, 16
        %v589 = vor.u32 %v586, %v587
        %v590 = vrot.slane %v586, 4
        %v592 = vshrl.u32 %v354, 16
        %v594 = vrot.slane %v592, 7
        %v595 = vshll.u32 %v354, 16
        %v597 = vor.u32 %v594, %v595
        %v598 = vsel %vm361, %v590, %v597
        %v599 = vrot.slane %v594, 4
        %v601 = vshrl.u32 %v355, 16
        %v603 = vrot.slane %v601, 7
        %v604 = vshll.u32 %v355, 16
        %v606 = vor.u32 %v603, %v604
        %v607 = vrot.slane %v603, 4
        %v609 = vshrl.u32 %v356, 16
        %v611 = vrot.slane %v609, 7
        %v612 = vshll.u32 %v356, 16
        %v614 = vor.u32 %v611, %v612
        %v615 = vsel %vm361, %v607, %v614
        %v616 = vrot.slane %v611, 4
        %v618 = vshrl.u32 %v357, 16
        %v620 = vrot.slane %v618, 7
        %v621 = vshll.u32 %v357, 16
        %v623 = vor.u32 %v620, %v621
        %v624 = vrot.slane %v620, 4
        %v626 = vshrl.u32 %v358, 16
        %v628 = vrot.slane %v626, 7
        %v629 = vshll.u32 %v358, 16
        %v631 = vor.u32 %v628, %v629
        %v632 = vsel %vm361, %v624, %v631
        %v633 = vrot.slane %v628, 4
        %s682 = scalar_lea.vmem [#allocation2], 12
        %vm683 = vcmask 257024
        %vm684 = vsmask.f32 7938
        %vm685 = vmand %vm683, %vm684
        %v686 = vld [vmem:[%s682] sm:$0xf]
        %v687 = vsel %vm685, %v368, %v686
        %688 = vst [vmem:[%s682] sm:$0xf] %v687
        %vm689 = vcmask 257024
        %690 = vst.msk [vmem:[%s682 + $0x4] sm:$0xf] %vm689, %v377
        %vm691 = vcmask 253952
        %vm692 = vmand %vm691, %vm359
        %v693 = vld [vmem:[%s682 + $0x8] sm:$0x1]
        %v694 = vsel %vm692, %v378, %v693
        %695 = vst [vmem:[%s682 + $0x8] sm:$0x1] %v694
        %v696 = vld [vmem:[%s682 + $0xc] sm:$0xf]
        %v697 = vsel %vm685, %v385, %v696
        %698 = vst [vmem:[%s682 + $0xc] sm:$0xf] %v697
        %699 = vst.msk [vmem:[%s682 + $0x10] sm:$0xf] %vm689, %v394
        %v700 = vld [vmem:[%s682 + $0x14] sm:$0x1]
        %v701 = vsel %vm692, %v395, %v700
        %702 = vst [vmem:[%s682 + $0x14] sm:$0x1] %v701
        %v703 = vld [vmem:[%s682 + $0x18] sm:$0xf]
        %v704 = vsel %vm685, %v402, %v703
        %705 = vst [vmem:[%s682 + $0x18] sm:$0xf] %v704
        %706 = vst.msk [vmem:[%s682 + $0x1c] sm:$0xf] %vm689, %v411
        %v707 = vld [vmem:[%s682 + $0x20] sm:$0x1]
        %v708 = vsel %vm692, %v412, %v707
        %709 = vst [vmem:[%s682 + $0x20] sm:$0x1] %v708
        %v710 = vld [vmem:[%s682 + $0x24] sm:$0xf]
        %v711 = vsel %vm685, %v419, %v710
        %712 = vst [vmem:[%s682 + $0x24] sm:$0xf] %v711
        %713 = vst.msk [vmem:[%s682 + $0x28] sm:$0xf] %vm689, %v428
        %v714 = vld [vmem:[%s682 + $0x2c] sm:$0x1]
        %v715 = vsel %vm692, %v429, %v714
        %716 = vst [vmem:[%s682 + $0x2c] sm:$0x1] %v715
        %v717 = vld [vmem:[%s682 + $0x30] sm:$0xf]
        %v718 = vsel %vm685, %v436, %v717
        %719 = vst [vmem:[%s682 + $0x30] sm:$0xf] %v718
        %720 = vst.msk [vmem:[%s682 + $0x34] sm:$0xf] %vm689, %v445
        %v721 = vld [vmem:[%s682 + $0x38] sm:$0x1]
        %v722 = vsel %vm692, %v446, %v721
        %723 = vst [vmem:[%s682 + $0x38] sm:$0x1] %v722
        %v724 = vld [vmem:[%s682 + $0x3c] sm:$0xf]
        %v725 = vsel %vm685, %v453, %v724
        %726 = vst [vmem:[%s682 + $0x3c] sm:$0xf] %v725
        %727 = vst.msk [vmem:[%s682 + $0x40] sm:$0xf] %vm689, %v462
        %v728 = vld [vmem:[%s682 + $0x44] sm:$0x1]
        %v729 = vsel %vm692, %v463, %v728
        %730 = vst [vmem:[%s682 + $0x44] sm:$0x1] %v729
        %v731 = vld [vmem:[%s682 + $0x48] sm:$0xf]
        %v732 = vsel %vm685, %v470, %v731
        %733 = vst [vmem:[%s682 + $0x48] sm:$0xf] %v732
        %734 = vst.msk [vmem:[%s682 + $0x4c] sm:$0xf] %vm689, %v479
        %v735 = vld [vmem:[%s682 + $0x50] sm:$0x1]
        %v736 = vsel %vm692, %v480, %v735
        %737 = vst [vmem:[%s682 + $0x50] sm:$0x1] %v736
        %v738 = vld [vmem:[%s682 + $0x54] sm:$0xf]
        %v739 = vsel %vm685, %v487, %v738
        %740 = vst [vmem:[%s682 + $0x54] sm:$0xf] %v739
        %741 = vst.msk [vmem:[%s682 + $0x58] sm:$0xf] %vm689, %v496
        %v742 = vld [vmem:[%s682 + $0x5c] sm:$0x1]
        %v743 = vsel %vm692, %v497, %v742
        %744 = vst [vmem:[%s682 + $0x5c] sm:$0x1] %v743
        %v745 = vld [vmem:[%s682 + $0x60] sm:$0xf]
        %v746 = vsel %vm685, %v504, %v745
        %747 = vst [vmem:[%s682 + $0x60] sm:$0xf] %v746
        %748 = vst.msk [vmem:[%s682 + $0x64] sm:$0xf] %vm689, %v513
        %v749 = vld [vmem:[%s682 + $0x68] sm:$0x1]
        %v750 = vsel %vm692, %v514, %v749
        %751 = vst [vmem:[%s682 + $0x68] sm:$0x1] %v750
        %v752 = vld [vmem:[%s682 + $0x6c] sm:$0xf]
        %v753 = vsel %vm685, %v521, %v752
        %754 = vst [vmem:[%s682 + $0x6c] sm:$0xf] %v753
        %755 = vst.msk [vmem:[%s682 + $0x70] sm:$0xf] %vm689, %v530
        %v756 = vld [vmem:[%s682 + $0x74] sm:$0x1]
        %v757 = vsel %vm692, %v531, %v756
        %758 = vst [vmem:[%s682 + $0x74] sm:$0x1] %v757
        %v759 = vld [vmem:[%s682 + $0x78] sm:$0xf]
        %v760 = vsel %vm685, %v538, %v759
        %761 = vst [vmem:[%s682 + $0x78] sm:$0xf] %v760
        %762 = vst.msk [vmem:[%s682 + $0x7c] sm:$0xf] %vm689, %v547
        %v763 = vld [vmem:[%s682 + $0x80] sm:$0x1]
        %v764 = vsel %vm692, %v548, %v763
        %765 = vst [vmem:[%s682 + $0x80] sm:$0x1] %v764
        %v766 = vld [vmem:[%s682 + $0x84] sm:$0xf]
        %v767 = vsel %vm685, %v555, %v766
        %768 = vst [vmem:[%s682 + $0x84] sm:$0xf] %v767
        %769 = vst.msk [vmem:[%s682 + $0x88] sm:$0xf] %vm689, %v564
        %v770 = vld [vmem:[%s682 + $0x8c] sm:$0x1]
        %v771 = vsel %vm692, %v565, %v770
        %772 = vst [vmem:[%s682 + $0x8c] sm:$0x1] %v771
        %v773 = vld [vmem:[%s682 + $0x90] sm:$0xf]
        %v774 = vsel %vm685, %v572, %v773
        %775 = vst [vmem:[%s682 + $0x90] sm:$0xf] %v774
        %776 = vst.msk [vmem:[%s682 + $0x94] sm:$0xf] %vm689, %v581
        %v777 = vld [vmem:[%s682 + $0x98] sm:$0x1]
        %v778 = vsel %vm692, %v582, %v777
        %779 = vst [vmem:[%s682 + $0x98] sm:$0x1] %v778
        %v780 = vld [vmem:[%s682 + $0x9c] sm:$0xf]
        %v781 = vsel %vm685, %v589, %v780
        %782 = vst [vmem:[%s682 + $0x9c] sm:$0xf] %v781
        %783 = vst.msk [vmem:[%s682 + $0xa0] sm:$0xf] %vm689, %v598
        %v784 = vld [vmem:[%s682 + $0xa4] sm:$0x1]
        %v785 = vsel %vm692, %v599, %v784
        %786 = vst [vmem:[%s682 + $0xa4] sm:$0x1] %v785
        %v787 = vld [vmem:[%s682 + $0xa8] sm:$0xf]
        %v788 = vsel %vm685, %v606, %v787
        %789 = vst [vmem:[%s682 + $0xa8] sm:$0xf] %v788
        %790 = vst.msk [vmem:[%s682 + $0xac] sm:$0xf] %vm689, %v615
        %v791 = vld [vmem:[%s682 + $0xb0] sm:$0x1]
        %v792 = vsel %vm692, %v616, %v791
        %793 = vst [vmem:[%s682 + $0xb0] sm:$0x1] %v792
        %v794 = vld [vmem:[%s682 + $0xb4] sm:$0xf]
        %v795 = vsel %vm685, %v623, %v794
        %796 = vst [vmem:[%s682 + $0xb4] sm:$0xf] %v795
        %797 = vst.msk [vmem:[%s682 + $0xb8] sm:$0xf] %vm689, %v632
        %v798 = vld [vmem:[%s682 + $0xbc] sm:$0x1]
        %v799 = vsel %vm692, %v633, %v798
        %800 = vst [vmem:[%s682 + $0xbc] sm:$0x1] %v799
        %v801 = vld [vmem:[%s269] sm:$0xf]
        %v802 = vld [vmem:[%s269 + $0x4] sm:$0xf]
        %v803 = vld [vmem:[%s269 + $0x8] sm:$0xf]
        %v804 = vld [vmem:[%s269 + $0xc] sm:$0xf]
        %v805 = vld [vmem:[%s269 + $0x10] sm:$0xf]
        %v806 = vld [vmem:[%s269 + $0x14] sm:$0xf]
        %v807 = vld [vmem:[%s269 + $0x18] sm:$0xf]
        %v808 = vld [vmem:[%s269 + $0x1c] sm:$0xf]
        %v809 = vld [vmem:[%s269 + $0x20] sm:$0xf]
        %v810 = vld [vmem:[%s269 + $0x24] sm:$0xf]
        %v811 = vld [vmem:[%s269 + $0x28] sm:$0xf]
        %v812 = vld [vmem:[%s269 + $0x2c] sm:$0xf]
        %v813 = vld [vmem:[%s269 + $0x30] sm:$0xf]
        %v814 = vld [vmem:[%s269 + $0x34] sm:$0xf]
        %v815 = vld [vmem:[%s269 + $0x38] sm:$0xf]
        %v816 = vld [vmem:[%s269 + $0x3c] sm:$0xf]
        %v817 = vld [vmem:[%s269 + $0x40] sm:$0xf]
        %v818 = vld [vmem:[%s269 + $0x44] sm:$0xf]
        %v819 = vld [vmem:[%s269 + $0x48] sm:$0xf]
        %v820 = vld [vmem:[%s269 + $0x4c] sm:$0xf]
        %v821 = vld [vmem:[%s269 + $0x50] sm:$0xf]
        %v822 = vld [vmem:[%s269 + $0x54] sm:$0xf]
        %v823 = vld [vmem:[%s269 + $0x58] sm:$0xf]
        %v824 = vld [vmem:[%s269 + $0x5c] sm:$0xf]
        %v825 = vld [vmem:[%s269 + $0x60] sm:$0xf]
        %v826 = vld [vmem:[%s269 + $0x64] sm:$0xf]
        %v827 = vld [vmem:[%s269 + $0x68] sm:$0xf]
        %v828 = vld [vmem:[%s269 + $0x6c] sm:$0xf]
        %v829 = vld [vmem:[%s269 + $0x70] sm:$0xf]
        %v830 = vld [vmem:[%s269 + $0x74] sm:$0xf]
        %v831 = vld [vmem:[%s269 + $0x78] sm:$0xf]
        %v832 = vld [vmem:[%s269 + $0x7c] sm:$0xf]
        %v834 = vshrl.u32 %v801, 16
        %v836 = vrot.slane %v834, 7
        %v837 = vshll.u32 %v801, 16
        %v839 = vor.u32 %v836, %v837
        %v840 = vrot.slane %v836, 4
        %v842 = vshrl.u32 %v802, 16
        %v844 = vrot.slane %v842, 7
        %v845 = vshll.u32 %v802, 16
        %v847 = vor.u32 %v844, %v845
        %v848 = vsel %vm361, %v840, %v847
        %v849 = vrot.slane %v844, 4
        %v851 = vshrl.u32 %v803, 16
        %v853 = vrot.slane %v851, 7
        %v854 = vshll.u32 %v803, 16
        %v856 = vor.u32 %v853, %v854
        %v857 = vrot.slane %v853, 4
        %v859 = vshrl.u32 %v804, 16
        %v861 = vrot.slane %v859, 7
        %v862 = vshll.u32 %v804, 16
        %v864 = vor.u32 %v861, %v862
        %v865 = vsel %vm361, %v857, %v864
        %v866 = vrot.slane %v861, 4
        %v868 = vshrl.u32 %v805, 16
        %v870 = vrot.slane %v868, 7
        %v871 = vshll.u32 %v805, 16
        %v873 = vor.u32 %v870, %v871
        %v874 = vrot.slane %v870, 4
        %v876 = vshrl.u32 %v806, 16
        %v878 = vrot.slane %v876, 7
        %v879 = vshll.u32 %v806, 16
        %v881 = vor.u32 %v878, %v879
        %v882 = vsel %vm361, %v874, %v881
        %v883 = vrot.slane %v878, 4
        %v885 = vshrl.u32 %v807, 16
        %v887 = vrot.slane %v885, 7
        %v888 = vshll.u32 %v807, 16
        %v890 = vor.u32 %v887, %v888
        %v891 = vrot.slane %v887, 4
        %v893 = vshrl.u32 %v808, 16
        %v895 = vrot.slane %v893, 7
        %v896 = vshll.u32 %v808, 16
        %v898 = vor.u32 %v895, %v896
        %v899 = vsel %vm361, %v891, %v898
        %v900 = vrot.slane %v895, 4
        %v902 = vshrl.u32 %v809, 16
        %v904 = vrot.slane %v902, 7
        %v905 = vshll.u32 %v809, 16
        %v907 = vor.u32 %v904, %v905
        %v908 = vrot.slane %v904, 4
        %v910 = vshrl.u32 %v810, 16
        %v912 = vrot.slane %v910, 7
        %v913 = vshll.u32 %v810, 16
        %v915 = vor.u32 %v912, %v913
        %v916 = vsel %vm361, %v908, %v915
        %v917 = vrot.slane %v912, 4
        %v919 = vshrl.u32 %v811, 16
        %v921 = vrot.slane %v919, 7
        %v922 = vshll.u32 %v811, 16
        %v924 = vor.u32 %v921, %v922
        %v925 = vrot.slane %v921, 4
        %v927 = vshrl.u32 %v812, 16
        %v929 = vrot.slane %v927, 7
        %v930 = vshll.u32 %v812, 16
        %v932 = vor.u32 %v929, %v930
        %v933 = vsel %vm361, %v925, %v932
        %v934 = vrot.slane %v929, 4
        %v936 = vshrl.u32 %v813, 16
        %v938 = vrot.slane %v936, 7
        %v939 = vshll.u32 %v813, 16
        %v941 = vor.u32 %v938, %v939
        %v942 = vrot.slane %v938, 4
        %v944 = vshrl.u32 %v814, 16
        %v946 = vrot.slane %v944, 7
        %v947 = vshll.u32 %v814, 16
        %v949 = vor.u32 %v946, %v947
        %v950 = vsel %vm361, %v942, %v949
        %v951 = vrot.slane %v946, 4
        %v953 = vshrl.u32 %v815, 16
        %v955 = vrot.slane %v953, 7
        %v956 = vshll.u32 %v815, 16
        %v958 = vor.u32 %v955, %v956
        %v959 = vrot.slane %v955, 4
        %v961 = vshrl.u32 %v816, 16
        %v963 = vrot.slane %v961, 7
        %v964 = vshll.u32 %v816, 16
        %v966 = vor.u32 %v963, %v964
        %v967 = vsel %vm361, %v959, %v966
        %v968 = vrot.slane %v963, 4
        %v970 = vshrl.u32 %v817, 16
        %v972 = vrot.slane %v970, 7
        %v973 = vshll.u32 %v817, 16
        %v975 = vor.u32 %v972, %v973
        %v976 = vrot.slane %v972, 4
        %v978 = vshrl.u32 %v818, 16
        %v980 = vrot.slane %v978, 7
        %v981 = vshll.u32 %v818, 16
        %v983 = vor.u32 %v980, %v981
        %v984 = vsel %vm361, %v976, %v983
        %v985 = vrot.slane %v980, 4
        %v987 = vshrl.u32 %v819, 16
        %v989 = vrot.slane %v987, 7
        %v990 = vshll.u32 %v819, 16
        %v992 = vor.u32 %v989, %v990
        %v993 = vrot.slane %v989, 4
        %v995 = vshrl.u32 %v820, 16
        %v997 = vrot.slane %v995, 7
        %v998 = vshll.u32 %v820, 16
        %v1000 = vor.u32 %v997, %v998
        %v1001 = vsel %vm361, %v993, %v1000
        %v1002 = vrot.slane %v997, 4
        %v1004 = vshrl.u32 %v821, 16
        %v1006 = vrot.slane %v1004, 7
        %v1007 = vshll.u32 %v821, 16
        %v1009 = vor.u32 %v1006, %v1007
        %v1010 = vrot.slane %v1006, 4
        %v1012 = vshrl.u32 %v822, 16
        %v1014 = vrot.slane %v1012, 7
        %v1015 = vshll.u32 %v822, 16
        %v1017 = vor.u32 %v1014, %v1015
        %v1018 = vsel %vm361, %v1010, %v1017
        %v1019 = vrot.slane %v1014, 4
        %v1021 = vshrl.u32 %v823, 16
        %v1023 = vrot.slane %v1021, 7
        %v1024 = vshll.u32 %v823, 16
        %v1026 = vor.u32 %v1023, %v1024
        %v1027 = vrot.slane %v1023, 4
        %v1029 = vshrl.u32 %v824, 16
        %v1031 = vrot.slane %v1029, 7
        %v1032 = vshll.u32 %v824, 16
        %v1034 = vor.u32 %v1031, %v1032
        %v1035 = vsel %vm361, %v1027, %v1034
        %v1036 = vrot.slane %v1031, 4
        %v1038 = vshrl.u32 %v825, 16
        %v1040 = vrot.slane %v1038, 7
        %v1041 = vshll.u32 %v825, 16
        %v1043 = vor.u32 %v1040, %v1041
        %v1044 = vrot.slane %v1040, 4
        %v1046 = vshrl.u32 %v826, 16
        %v1048 = vrot.slane %v1046, 7
        %v1049 = vshll.u32 %v826, 16
        %v1051 = vor.u32 %v1048, %v1049
        %v1052 = vsel %vm361, %v1044, %v1051
        %v1053 = vrot.slane %v1048, 4
        %v1055 = vshrl.u32 %v827, 16
        %v1057 = vrot.slane %v1055, 7
        %v1058 = vshll.u32 %v827, 16
        %v1060 = vor.u32 %v1057, %v1058
        %v1061 = vrot.slane %v1057, 4
        %v1063 = vshrl.u32 %v828, 16
        %v1065 = vrot.slane %v1063, 7
        %v1066 = vshll.u32 %v828, 16
        %v1068 = vor.u32 %v1065, %v1066
        %v1069 = vsel %vm361, %v1061, %v1068
        %v1070 = vrot.slane %v1065, 4
        %v1072 = vshrl.u32 %v829, 16
        %v1074 = vrot.slane %v1072, 7
        %v1075 = vshll.u32 %v829, 16
        %v1077 = vor.u32 %v1074, %v1075
        %v1078 = vrot.slane %v1074, 4
        %v1080 = vshrl.u32 %v830, 16
        %v1082 = vrot.slane %v1080, 7
        %v1083 = vshll.u32 %v830, 16
        %v1085 = vor.u32 %v1082, %v1083
        %v1086 = vsel %vm361, %v1078, %v1085
        %v1087 = vrot.slane %v1082, 4
        %v1089 = vshrl.u32 %v831, 16
        %v1091 = vrot.slane %v1089, 7
        %v1092 = vshll.u32 %v831, 16
        %v1094 = vor.u32 %v1091, %v1092
        %v1095 = vrot.slane %v1091, 4
        %v1097 = vshrl.u32 %v832, 16
        %v1099 = vrot.slane %v1097, 7
        %v1100 = vshll.u32 %v832, 16
        %v1102 = vor.u32 %v1099, %v1100
        %v1103 = vsel %vm361, %v1095, %v1102
        %v1104 = vrot.slane %v1099, 4
        %1105 = vrot.lane.b32.xlu0 %v839, 32
        %v1106 = vpop.permute.xlu0 %1105
        %1107 = vrot.lane.b32.xlu0 %v848, 32
        %v1108 = vpop.permute.xlu0 %1107
        %1109 = vrot.lane.b32.xlu0 %v849, 32
        %v1110 = vpop.permute.xlu0 %1109
        %1111 = vrot.lane.b32.xlu0 %v856, 32
        %v1112 = vpop.permute.xlu0 %1111
        %1113 = vrot.lane.b32.xlu0 %v865, 32
        %v1114 = vpop.permute.xlu0 %1113
        %1115 = vrot.lane.b32.xlu0 %v866, 32
        %v1116 = vpop.permute.xlu0 %1115
        %1117 = vrot.lane.b32.xlu0 %v873, 32
        %v1118 = vpop.permute.xlu0 %1117
        %1119 = vrot.lane.b32.xlu0 %v882, 32
        %v1120 = vpop.permute.xlu0 %1119
        %1121 = vrot.lane.b32.xlu0 %v883, 32
        %v1122 = vpop.permute.xlu0 %1121
        %1123 = vrot.lane.b32.xlu0 %v890, 32
        %v1124 = vpop.permute.xlu0 %1123
        %1125 = vrot.lane.b32.xlu0 %v899, 32
        %v1126 = vpop.permute.xlu0 %1125
        %1127 = vrot.lane.b32.xlu0 %v900, 32
        %v1128 = vpop.permute.xlu0 %1127
        %1129 = vrot.lane.b32.xlu0 %v907, 32
        %v1130 = vpop.permute.xlu0 %1129
        %1131 = vrot.lane.b32.xlu0 %v916, 32
        %v1132 = vpop.permute.xlu0 %1131
        %1133 = vrot.lane.b32.xlu0 %v917, 32
        %v1134 = vpop.permute.xlu0 %1133
        %1135 = vrot.lane.b32.xlu0 %v924, 32
        %v1136 = vpop.permute.xlu0 %1135
        %1137 = vrot.lane.b32.xlu0 %v933, 32
        %v1138 = vpop.permute.xlu0 %1137
        %1139 = vrot.lane.b32.xlu0 %v934, 32
        %v1140 = vpop.permute.xlu0 %1139
        %1141 = vrot.lane.b32.xlu0 %v941, 32
        %v1142 = vpop.permute.xlu0 %1141
        %1143 = vrot.lane.b32.xlu0 %v950, 32
        %v1144 = vpop.permute.xlu0 %1143
        %1145 = vrot.lane.b32.xlu0 %v951, 32
        %v1146 = vpop.permute.xlu0 %1145
        %1147 = vrot.lane.b32.xlu0 %v958, 32
        %v1148 = vpop.permute.xlu0 %1147
        %1149 = vrot.lane.b32.xlu0 %v967, 32
        %v1150 = vpop.permute.xlu0 %1149
        %1151 = vrot.lane.b32.xlu0 %v968, 32
        %v1152 = vpop.permute.xlu0 %1151
        %1153 = vrot.lane.b32.xlu0 %v975, 32
        %v1154 = vpop.permute.xlu0 %1153
        %1155 = vrot.lane.b32.xlu0 %v984, 32
        %v1156 = vpop.permute.xlu0 %1155
        %1157 = vrot.lane.b32.xlu0 %v985, 32
        %v1158 = vpop.permute.xlu0 %1157
        %1159 = vrot.lane.b32.xlu0 %v992, 32
        %v1160 = vpop.permute.xlu0 %1159
        %1161 = vrot.lane.b32.xlu0 %v1001, 32
        %v1162 = vpop.permute.xlu0 %1161
        %1163 = vrot.lane.b32.xlu0 %v1002, 32
        %v1164 = vpop.permute.xlu0 %1163
        %1165 = vrot.lane.b32.xlu0 %v1009, 32
        %v1166 = vpop.permute.xlu0 %1165
        %1167 = vrot.lane.b32.xlu0 %v1018, 32
        %v1168 = vpop.permute.xlu0 %1167
        %1169 = vrot.lane.b32.xlu0 %v1019, 32
        %v1170 = vpop.permute.xlu0 %1169
        %1171 = vrot.lane.b32.xlu0 %v1026, 32
        %v1172 = vpop.permute.xlu0 %1171
        %1173 = vrot.lane.b32.xlu0 %v1035, 32
        %v1174 = vpop.permute.xlu0 %1173
        %1175 = vrot.lane.b32.xlu0 %v1036, 32
        %v1176 = vpop.permute.xlu0 %1175
        %1177 = vrot.lane.b32.xlu0 %v1043, 32
        %v1178 = vpop.permute.xlu0 %1177
        %1179 = vrot.lane.b32.xlu0 %v1052, 32
        %v1180 = vpop.permute.xlu0 %1179
        %1181 = vrot.lane.b32.xlu0 %v1053, 32
        %v1182 = vpop.permute.xlu0 %1181
        %1183 = vrot.lane.b32.xlu0 %v1060, 32
        %v1184 = vpop.permute.xlu0 %1183
        %1185 = vrot.lane.b32.xlu0 %v1069, 32
        %v1186 = vpop.permute.xlu0 %1185
        %1187 = vrot.lane.b32.xlu0 %v1070, 32
        %v1188 = vpop.permute.xlu0 %1187
        %1189 = vrot.lane.b32.xlu0 %v1077, 32
        %v1190 = vpop.permute.xlu0 %1189
        %1191 = vrot.lane.b32.xlu0 %v1086, 32
        %v1192 = vpop.permute.xlu0 %1191
        %1193 = vrot.lane.b32.xlu0 %v1087, 32
        %v1194 = vpop.permute.xlu0 %1193
        %1195 = vrot.lane.b32.xlu0 %v1094, 32
        %v1196 = vpop.permute.xlu0 %1195
        %1197 = vrot.lane.b32.xlu0 %v1103, 32
        %v1198 = vpop.permute.xlu0 %1197
        %1199 = vrot.lane.b32.xlu0 %v1104, 32
        %v1200 = vpop.permute.xlu0 %1199
        %vm1249 = vcmask 519424
        %vm1250 = vmand %vm1249, %vm684
        %v1251 = vld [vmem:[%s682] sm:$0xf]
        %v1252 = vsel %vm1250, %v1106, %v1251
        %1253 = vst [vmem:[%s682] sm:$0xf] %v1252
        %vm1254 = vcmask 519424
        %1255 = vst.msk [vmem:[%s682 + $0x4] sm:$0xf] %vm1254, %v1108
        %vm1256 = vcmask 516352
        %vm1257 = vmand %vm1256, %vm359
        %v1258 = vld [vmem:[%s682 + $0x8] sm:$0x1]
        %v1259 = vsel %vm1257, %v1110, %v1258
        %1260 = vst [vmem:[%s682 + $0x8] sm:$0x1] %v1259
        %v1261 = vld [vmem:[%s682 + $0xc] sm:$0xf]
        %v1262 = vsel %vm1250, %v1112, %v1261
        %1263 = vst [vmem:[%s682 + $0xc] sm:$0xf] %v1262
        %1264 = vst.msk [vmem:[%s682 + $0x10] sm:$0xf] %vm1254, %v1114
        %v1265 = vld [vmem:[%s682 + $0x14] sm:$0x1]
        %v1266 = vsel %vm1257, %v1116, %v1265
        %1267 = vst [vmem:[%s682 + $0x14] sm:$0x1] %v1266
        %v1268 = vld [vmem:[%s682 + $0x18] sm:$0xf]
        %v1269 = vsel %vm1250, %v1118, %v1268
        %1270 = vst [vmem:[%s682 + $0x18] sm:$0xf] %v1269
        %1271 = vst.msk [vmem:[%s682 + $0x1c] sm:$0xf] %vm1254, %v1120
        %v1272 = vld [vmem:[%s682 + $0x20] sm:$0x1]
        %v1273 = vsel %vm1257, %v1122, %v1272
        %1274 = vst [vmem:[%s682 + $0x20] sm:$0x1] %v1273
        %v1275 = vld [vmem:[%s682 + $0x24] sm:$0xf]
        %v1276 = vsel %vm1250, %v1124, %v1275
        %1277 = vst [vmem:[%s682 + $0x24] sm:$0xf] %v1276
        %1278 = vst.msk [vmem:[%s682 + $0x28] sm:$0xf] %vm1254, %v1126
        %v1279 = vld [vmem:[%s682 + $0x2c] sm:$0x1]
        %v1280 = vsel %vm1257, %v1128, %v1279
        %1281 = vst [vmem:[%s682 + $0x2c] sm:$0x1] %v1280
        %v1282 = vld [vmem:[%s682 + $0x30] sm:$0xf]
        %v1283 = vsel %vm1250, %v1130, %v1282
        %1284 = vst [vmem:[%s682 + $0x30] sm:$0xf] %v1283
        %1285 = vst.msk [vmem:[%s682 + $0x34] sm:$0xf] %vm1254, %v1132
        %v1286 = vld [vmem:[%s682 + $0x38] sm:$0x1]
        %v1287 = vsel %vm1257, %v1134, %v1286
        %1288 = vst [vmem:[%s682 + $0x38] sm:$0x1] %v1287
        %v1289 = vld [vmem:[%s682 + $0x3c] sm:$0xf]
        %v1290 = vsel %vm1250, %v1136, %v1289
        %1291 = vst [vmem:[%s682 + $0x3c] sm:$0xf] %v1290
        %1292 = vst.msk [vmem:[%s682 + $0x40] sm:$0xf] %vm1254, %v1138
        %v1293 = vld [vmem:[%s682 + $0x44] sm:$0x1]
        %v1294 = vsel %vm1257, %v1140, %v1293
        %1295 = vst [vmem:[%s682 + $0x44] sm:$0x1] %v1294
        %v1296 = vld [vmem:[%s682 + $0x48] sm:$0xf]
        %v1297 = vsel %vm1250, %v1142, %v1296
        %1298 = vst [vmem:[%s682 + $0x48] sm:$0xf] %v1297
        %1299 = vst.msk [vmem:[%s682 + $0x4c] sm:$0xf] %vm1254, %v1144
        %v1300 = vld [vmem:[%s682 + $0x50] sm:$0x1]
        %v1301 = vsel %vm1257, %v1146, %v1300
        %1302 = vst [vmem:[%s682 + $0x50] sm:$0x1] %v1301
        %v1303 = vld [vmem:[%s682 + $0x54] sm:$0xf]
        %v1304 = vsel %vm1250, %v1148, %v1303
        %1305 = vst [vmem:[%s682 + $0x54] sm:$0xf] %v1304
        %1306 = vst.msk [vmem:[%s682 + $0x58] sm:$0xf] %vm1254, %v1150
        %v1307 = vld [vmem:[%s682 + $0x5c] sm:$0x1]
        %v1308 = vsel %vm1257, %v1152, %v1307
        %1309 = vst [vmem:[%s682 + $0x5c] sm:$0x1] %v1308
        %v1310 = vld [vmem:[%s682 + $0x60] sm:$0xf]
        %v1311 = vsel %vm1250, %v1154, %v1310
        %1312 = vst [vmem:[%s682 + $0x60] sm:$0xf] %v1311
        %1313 = vst.msk [vmem:[%s682 + $0x64] sm:$0xf] %vm1254, %v1156
        %v1314 = vld [vmem:[%s682 + $0x68] sm:$0x1]
        %v1315 = vsel %vm1257, %v1158, %v1314
        %1316 = vst [vmem:[%s682 + $0x68] sm:$0x1] %v1315
        %v1317 = vld [vmem:[%s682 + $0x6c] sm:$0xf]
        %v1318 = vsel %vm1250, %v1160, %v1317
        %1319 = vst [vmem:[%s682 + $0x6c] sm:$0xf] %v1318
        %1320 = vst.msk [vmem:[%s682 + $0x70] sm:$0xf] %vm1254, %v1162
        %v1321 = vld [vmem:[%s682 + $0x74] sm:$0x1]
        %v1322 = vsel %vm1257, %v1164, %v1321
        %1323 = vst [vmem:[%s682 + $0x74] sm:$0x1] %v1322
        %v1324 = vld [vmem:[%s682 + $0x78] sm:$0xf]
        %v1325 = vsel %vm1250, %v1166, %v1324
        %1326 = vst [vmem:[%s682 + $0x78] sm:$0xf] %v1325
        %1327 = vst.msk [vmem:[%s682 + $0x7c] sm:$0xf] %vm1254, %v1168
        %v1328 = vld [vmem:[%s682 + $0x80] sm:$0x1]
        %v1329 = vsel %vm1257, %v1170, %v1328
        %1330 = vst [vmem:[%s682 + $0x80] sm:$0x1] %v1329
        %v1331 = vld [vmem:[%s682 + $0x84] sm:$0xf]
        %v1332 = vsel %vm1250, %v1172, %v1331
        %1333 = vst [vmem:[%s682 + $0x84] sm:$0xf] %v1332
        %1334 = vst.msk [vmem:[%s682 + $0x88] sm:$0xf] %vm1254, %v1174
        %v1335 = vld [vmem:[%s682 + $0x8c] sm:$0x1]
        %v1336 = vsel %vm1257, %v1176, %v1335
        %1337 = vst [vmem:[%s682 + $0x8c] sm:$0x1] %v1336
        %v1338 = vld [vmem:[%s682 + $0x90] sm:$0xf]
        %v1339 = vsel %vm1250, %v1178, %v1338
        %1340 = vst [vmem:[%s682 + $0x90] sm:$0xf] %v1339
        %1341 = vst.msk [vmem:[%s682 + $0x94] sm:$0xf] %vm1254, %v1180
        %v1342 = vld [vmem:[%s682 + $0x98] sm:$0x1]
        %v1343 = vsel %vm1257, %v1182, %v1342
        %1344 = vst [vmem:[%s682 + $0x98] sm:$0x1] %v1343
        %v1345 = vld [vmem:[%s682 + $0x9c] sm:$0xf]
        %v1346 = vsel %vm1250, %v1184, %v1345
        %1347 = vst [vmem:[%s682 + $0x9c] sm:$0xf] %v1346
        %1348 = vst.msk [vmem:[%s682 + $0xa0] sm:$0xf] %vm1254, %v1186
        %v1349 = vld [vmem:[%s682 + $0xa4] sm:$0x1]
        %v1350 = vsel %vm1257, %v1188, %v1349
        %1351 = vst [vmem:[%s682 + $0xa4] sm:$0x1] %v1350
        %v1352 = vld [vmem:[%s682 + $0xa8] sm:$0xf]
        %v1353 = vsel %vm1250, %v1190, %v1352
        %1354 = vst [vmem:[%s682 + $0xa8] sm:$0xf] %v1353
        %1355 = vst.msk [vmem:[%s682 + $0xac] sm:$0xf] %vm1254, %v1192
        %v1356 = vld [vmem:[%s682 + $0xb0] sm:$0x1]
        %v1357 = vsel %vm1257, %v1194, %v1356
        %1358 = vst [vmem:[%s682 + $0xb0] sm:$0x1] %v1357
        %v1359 = vld [vmem:[%s682 + $0xb4] sm:$0xf]
        %v1360 = vsel %vm1250, %v1196, %v1359
        %1361 = vst [vmem:[%s682 + $0xb4] sm:$0xf] %v1360
        %1362 = vst.msk [vmem:[%s682 + $0xb8] sm:$0xf] %vm1254, %v1198
        %v1363 = vld [vmem:[%s682 + $0xbc] sm:$0x1]
        %v1364 = vsel %vm1257, %v1200, %v1363
        %1365 = vst [vmem:[%s682 + $0xbc] sm:$0x1] %v1364
        %v1366 = vld [vmem:[#allocation2] sm:$0xf]
        %v1367 = vld [vmem:[#allocation2 + $0x4] sm:$0xf]
        %v1368 = vld [vmem:[#allocation2 + $0xc] sm:$0xf]
        %v1369 = vld [vmem:[#allocation2 + $0x10] sm:$0xf]
        %v1370 = vld [vmem:[#allocation2 + $0x18] sm:$0xf]
        %v1371 = vld [vmem:[#allocation2 + $0x1c] sm:$0xf]
        %v1372 = vld [vmem:[#allocation2 + $0x24] sm:$0xf]
        %v1373 = vld [vmem:[#allocation2 + $0x28] sm:$0xf]
        %v1374 = vld [vmem:[#allocation2 + $0x30] sm:$0xf]
        %v1375 = vld [vmem:[#allocation2 + $0x34] sm:$0xf]
        %v1376 = vld [vmem:[#allocation2 + $0x3c] sm:$0xf]
        %v1377 = vld [vmem:[#allocation2 + $0x40] sm:$0xf]
        %v1378 = vld [vmem:[#allocation2 + $0x48] sm:$0xf]
        %v1379 = vld [vmem:[#allocation2 + $0x4c] sm:$0xf]
        %v1380 = vld [vmem:[#allocation2 + $0x54] sm:$0xf]
        %v1381 = vld [vmem:[#allocation2 + $0x58] sm:$0xf]
        %v1382 = vld [vmem:[#allocation2 + $0x60] sm:$0xf]
        %v1383 = vld [vmem:[#allocation2 + $0x64] sm:$0xf]
        %v1384 = vld [vmem:[#allocation2 + $0x6c] sm:$0xf]
        %v1385 = vld [vmem:[#allocation2 + $0x70] sm:$0xf]
        %v1386 = vld [vmem:[#allocation2 + $0x78] sm:$0xf]
        %v1387 = vld [vmem:[#allocation2 + $0x7c] sm:$0xf]
        %v1388 = vld [vmem:[#allocation2 + $0x84] sm:$0xf]
        %v1389 = vld [vmem:[#allocation2 + $0x88] sm:$0xf]
        %v1390 = vld [vmem:[#allocation2 + $0x90] sm:$0xf]
        %v1391 = vld [vmem:[#allocation2 + $0x94] sm:$0xf]
        %v1392 = vld [vmem:[#allocation2 + $0x9c] sm:$0xf]
        %v1393 = vld [vmem:[#allocation2 + $0xa0] sm:$0xf]
        %v1394 = vld [vmem:[#allocation2 + $0xa8] sm:$0xf]
        %v1395 = vld [vmem:[#allocation2 + $0xac] sm:$0xf]
        %v1396 = vld [vmem:[#allocation2 + $0xb4] sm:$0xf]
        %v1397 = vld [vmem:[#allocation2 + $0xb8] sm:$0xf]
        %v1398 = vld [vmem:[%s2] sm:$0xf]
        %v1399 = vld [vmem:[%s2 + $0x4] sm:$0xf]
        %v1400 = vld [vmem:[%s2 + $0x8] sm:$0xf]
        %v1401 = vld [vmem:[%s2 + $0xc] sm:$0xf]
        %v1402 = vld [vmem:[%s2 + $0x10] sm:$0xf]
        %v1403 = vld [vmem:[%s2 + $0x14] sm:$0xf]
        %v1404 = vld [vmem:[%s2 + $0x18] sm:$0xf]
        %v1405 = vld [vmem:[%s2 + $0x1c] sm:$0xf]
        %v1406 = vld [vmem:[#allocation2 + $0x8] sm:$0x1]
        %v1407 = vld [vmem:[#allocation2 + $0x14] sm:$0x1]
        %v1408 = vld [vmem:[#allocation2 + $0x20] sm:$0x1]
        %v1409 = vld [vmem:[#allocation2 + $0x2c] sm:$0x1]
        %v1410 = vld [vmem:[#allocation2 + $0x38] sm:$0x1]
        %v1411 = vld [vmem:[#allocation2 + $0x44] sm:$0x1]
        %v1412 = vld [vmem:[#allocation2 + $0x50] sm:$0x1]
        %v1413 = vld [vmem:[#allocation2 + $0x5c] sm:$0x1]
        %v1414 = vld [vmem:[#allocation2 + $0x68] sm:$0x1]
        %v1415 = vld [vmem:[#allocation2 + $0x74] sm:$0x1]
        %v1416 = vld [vmem:[#allocation2 + $0x80] sm:$0x1]
        %v1417 = vld [vmem:[#allocation2 + $0x8c] sm:$0x1]
        %v1418 = vld [vmem:[#allocation2 + $0x98] sm:$0x1]
        %v1419 = vld [vmem:[#allocation2 + $0xa4] sm:$0x1]
        %v1420 = vld [vmem:[#allocation2 + $0xb0] sm:$0x1]
        %v1421 = vld [vmem:[#allocation2 + $0xbc] sm:$0x1]
        %vm1422 = vsmask.f32 3328
        %vm1423 = vsmask.f32 7440
        %vm1424 = vmor %vm1422, %vm1423
        %v1426 = vshrl.u32 %v1366, 16
        %v1428 = vrot.slane %v1426, 4
        %v1429 = vshll.u32 %v1366, 16
        %v1431 = vrot.slane %v1429, 5
        %v1432 = vor.u32 %v1428, %v1431
        %v1433 = vrot.slane %v1432, 4
        %v1435 = vshll.u32 %v1367, 16
        %v1437 = vrot.slane %v1435, 5
        %v1438 = vsel %vm1424, %v1433, %v1437
        %v1439 = vshrl.u32 %v1367, 16
        %v1441 = vrot.slane %v1439, 4
        %v1442 = vor.u32 %v1441, %v1437
        %v1443 = vrot.slane %v1442, 4
        %v1445 = vshll.u32 %v1406, 16
        %v1447 = vrot.slane %v1445, 5
        %v1448 = vsel %vm1424, %v1443, %v1447
        %v1450 = vshrl.u32 %v1368, 16
        %v1452 = vrot.slane %v1450, 4
        %v1453 = vshll.u32 %v1368, 16
        %v1455 = vrot.slane %v1453, 5
        %v1456 = vor.u32 %v1452, %v1455
        %v1457 = vrot.slane %v1456, 4
        %v1459 = vshll.u32 %v1369, 16
        %v1461 = vrot.slane %v1459, 5
        %v1462 = vsel %vm1424, %v1457, %v1461
        %v1463 = vshrl.u32 %v1369, 16
        %v1465 = vrot.slane %v1463, 4
        %v1466 = vor.u32 %v1465, %v1461
        %v1467 = vrot.slane %v1466, 4
        %v1469 = vshll.u32 %v1407, 16
        %v1471 = vrot.slane %v1469, 5
        %v1472 = vsel %vm1424, %v1467, %v1471
        %v1474 = vshrl.u32 %v1370, 16
        %v1476 = vrot.slane %v1474, 4
        %v1477 = vshll.u32 %v1370, 16
        %v1479 = vrot.slane %v1477, 5
        %v1480 = vor.u32 %v1476, %v1479
        %v1481 = vrot.slane %v1480, 4
        %v1483 = vshll.u32 %v1371, 16
        %v1485 = vrot.slane %v1483, 5
        %v1486 = vsel %vm1424, %v1481, %v1485
        %v1487 = vshrl.u32 %v1371, 16
        %v1489 = vrot.slane %v1487, 4
        %v1490 = vor.u32 %v1489, %v1485
        %v1491 = vrot.slane %v1490, 4
        %v1493 = vshll.u32 %v1408, 16
        %v1495 = vrot.slane %v1493, 5
        %v1496 = vsel %vm1424, %v1491, %v1495
        %v1498 = vshrl.u32 %v1372, 16
        %v1500 = vrot.slane %v1498, 4
        %v1501 = vshll.u32 %v1372, 16
        %v1503 = vrot.slane %v1501, 5
        %v1504 = vor.u32 %v1500, %v1503
        %v1505 = vrot.slane %v1504, 4
        %v1507 = vshll.u32 %v1373, 16
        %v1509 = vrot.slane %v1507, 5
        %v1510 = vsel %vm1424, %v1505, %v1509
        %v1511 = vshrl.u32 %v1373, 16
        %v1513 = vrot.slane %v1511, 4
        %v1514 = vor.u32 %v1513, %v1509
        %v1515 = vrot.slane %v1514, 4
        %v1517 = vshll.u32 %v1409, 16
        %v1519 = vrot.slane %v1517, 5
        %v1520 = vsel %vm1424, %v1515, %v1519
        %v1522 = vshrl.u32 %v1374, 16
        %v1524 = vrot.slane %v1522, 4
        %v1525 = vshll.u32 %v1374, 16
        %v1527 = vrot.slane %v1525, 5
        %v1528 = vor.u32 %v1524, %v1527
        %v1529 = vrot.slane %v1528, 4
        %v1531 = vshll.u32 %v1375, 16
        %v1533 = vrot.slane %v1531, 5
        %v1534 = vsel %vm1424, %v1529, %v1533
        %v1535 = vshrl.u32 %v1375, 16
        %v1537 = vrot.slane %v1535, 4
        %v1538 = vor.u32 %v1537, %v1533
        %v1539 = vrot.slane %v1538, 4
        %v1541 = vshll.u32 %v1410, 16
        %v1543 = vrot.slane %v1541, 5
        %v1544 = vsel %vm1424, %v1539, %v1543
        %v1546 = vshrl.u32 %v1376, 16
        %v1548 = vrot.slane %v1546, 4
        %v1549 = vshll.u32 %v1376, 16
        %v1551 = vrot.slane %v1549, 5
        %v1552 = vor.u32 %v1548, %v1551
        %v1553 = vrot.slane %v1552, 4
        %v1555 = vshll.u32 %v1377, 16
        %v1557 = vrot.slane %v1555, 5
        %v1558 = vsel %vm1424, %v1553, %v1557
        %v1559 = vshrl.u32 %v1377, 16
        %v1561 = vrot.slane %v1559, 4
        %v1562 = vor.u32 %v1561, %v1557
        %v1563 = vrot.slane %v1562, 4
        %v1565 = vshll.u32 %v1411, 16
        %v1567 = vrot.slane %v1565, 5
        %v1568 = vsel %vm1424, %v1563, %v1567
        %v1570 = vshrl.u32 %v1378, 16
        %v1572 = vrot.slane %v1570, 4
        %v1573 = vshll.u32 %v1378, 16
        %v1575 = vrot.slane %v1573, 5
        %v1576 = vor.u32 %v1572, %v1575
        %v1577 = vrot.slane %v1576, 4
        %v1579 = vshll.u32 %v1379, 16
        %v1581 = vrot.slane %v1579, 5
        %v1582 = vsel %vm1424, %v1577, %v1581
        %v1583 = vshrl.u32 %v1379, 16
        %v1585 = vrot.slane %v1583, 4
        %v1586 = vor.u32 %v1585, %v1581
        %v1587 = vrot.slane %v1586, 4
        %v1589 = vshll.u32 %v1412, 16
        %v1591 = vrot.slane %v1589, 5
        %v1592 = vsel %vm1424, %v1587, %v1591
        %v1594 = vshrl.u32 %v1380, 16
        %v1596 = vrot.slane %v1594, 4
        %v1597 = vshll.u32 %v1380, 16
        %v1599 = vrot.slane %v1597, 5
        %v1600 = vor.u32 %v1596, %v1599
        %v1601 = vrot.slane %v1600, 4
        %v1603 = vshll.u32 %v1381, 16
        %v1605 = vrot.slane %v1603, 5
        %v1606 = vsel %vm1424, %v1601, %v1605
        %v1607 = vshrl.u32 %v1381, 16
        %v1609 = vrot.slane %v1607, 4
        %v1610 = vor.u32 %v1609, %v1605
        %v1611 = vrot.slane %v1610, 4
        %v1613 = vshll.u32 %v1413, 16
        %v1615 = vrot.slane %v1613, 5
        %v1616 = vsel %vm1424, %v1611, %v1615
        %v1618 = vshrl.u32 %v1382, 16
        %v1620 = vrot.slane %v1618, 4
        %v1621 = vshll.u32 %v1382, 16
        %v1623 = vrot.slane %v1621, 5
        %v1624 = vor.u32 %v1620, %v1623
        %v1625 = vrot.slane %v1624, 4
        %v1627 = vshll.u32 %v1383, 16
        %v1629 = vrot.slane %v1627, 5
        %v1630 = vsel %vm1424, %v1625, %v1629
        %v1631 = vshrl.u32 %v1383, 16
        %v1633 = vrot.slane %v1631, 4
        %v1634 = vor.u32 %v1633, %v1629
        %v1635 = vrot.slane %v1634, 4
        %v1637 = vshll.u32 %v1414, 16
        %v1639 = vrot.slane %v1637, 5
        %v1640 = vsel %vm1424, %v1635, %v1639
        %v1642 = vshrl.u32 %v1384, 16
        %v1644 = vrot.slane %v1642, 4
        %v1645 = vshll.u32 %v1384, 16
        %v1647 = vrot.slane %v1645, 5
        %v1648 = vor.u32 %v1644, %v1647
        %v1649 = vrot.slane %v1648, 4
        %v1651 = vshll.u32 %v1385, 16
        %v1653 = vrot.slane %v1651, 5
        %v1654 = vsel %vm1424, %v1649, %v1653
        %v1655 = vshrl.u32 %v1385, 16
        %v1657 = vrot.slane %v1655, 4
        %v1658 = vor.u32 %v1657, %v1653
        %v1659 = vrot.slane %v1658, 4
        %v1661 = vshll.u32 %v1415, 16
        %v1663 = vrot.slane %v1661, 5
        %v1664 = vsel %vm1424, %v1659, %v1663
        %v1666 = vshrl.u32 %v1386, 16
        %v1668 = vrot.slane %v1666, 4
        %v1669 = vshll.u32 %v1386, 16
        %v1671 = vrot.slane %v1669, 5
        %v1672 = vor.u32 %v1668, %v1671
        %v1673 = vrot.slane %v1672, 4
        %v1675 = vshll.u32 %v1387, 16
        %v1677 = vrot.slane %v1675, 5
        %v1678 = vsel %vm1424, %v1673, %v1677
        %v1679 = vshrl.u32 %v1387, 16
        %v1681 = vrot.slane %v1679, 4
        %v1682 = vor.u32 %v1681, %v1677
        %v1683 = vrot.slane %v1682, 4
        %v1685 = vshll.u32 %v1416, 16
        %v1687 = vrot.slane %v1685, 5
        %v1688 = vsel %vm1424, %v1683, %v1687
        %v1690 = vshrl.u32 %v1388, 16
        %v1692 = vrot.slane %v1690, 4
        %v1693 = vshll.u32 %v1388, 16
        %v1695 = vrot.slane %v1693, 5
        %v1696 = vor.u32 %v1692, %v1695
        %v1697 = vrot.slane %v1696, 4
        %v1699 = vshll.u32 %v1389, 16
        %v1701 = vrot.slane %v1699, 5
        %v1702 = vsel %vm1424, %v1697, %v1701
        %v1703 = vshrl.u32 %v1389, 16
        %v1705 = vrot.slane %v1703, 4
        %v1706 = vor.u32 %v1705, %v1701
        %v1707 = vrot.slane %v1706, 4
        %v1709 = vshll.u32 %v1417, 16
        %v1711 = vrot.slane %v1709, 5
        %v1712 = vsel %vm1424, %v1707, %v1711
        %v1714 = vshrl.u32 %v1390, 16
        %v1716 = vrot.slane %v1714, 4
        %v1717 = vshll.u32 %v1390, 16
        %v1719 = vrot.slane %v1717, 5
        %v1720 = vor.u32 %v1716, %v1719
        %v1721 = vrot.slane %v1720, 4
        %v1723 = vshll.u32 %v1391, 16
        %v1725 = vrot.slane %v1723, 5
        %v1726 = vsel %vm1424, %v1721, %v1725
        %v1727 = vshrl.u32 %v1391, 16
        %v1729 = vrot.slane %v1727, 4
        %v1730 = vor.u32 %v1729, %v1725
        %v1731 = vrot.slane %v1730, 4
        %v1733 = vshll.u32 %v1418, 16
        %v1735 = vrot.slane %v1733, 5
        %v1736 = vsel %vm1424, %v1731, %v1735
        %v1738 = vshrl.u32 %v1392, 16
        %v1740 = vrot.slane %v1738, 4
        %v1741 = vshll.u32 %v1392, 16
        %v1743 = vrot.slane %v1741, 5
        %v1744 = vor.u32 %v1740, %v1743
        %v1745 = vrot.slane %v1744, 4
        %v1747 = vshll.u32 %v1393, 16
        %v1749 = vrot.slane %v1747, 5
        %v1750 = vsel %vm1424, %v1745, %v1749
        %v1751 = vshrl.u32 %v1393, 16
        %v1753 = vrot.slane %v1751, 4
        %v1754 = vor.u32 %v1753, %v1749
        %v1755 = vrot.slane %v1754, 4
        %v1757 = vshll.u32 %v1419, 16
        %v1759 = vrot.slane %v1757, 5
        %v1760 = vsel %vm1424, %v1755, %v1759
        %v1762 = vshrl.u32 %v1394, 16
        %v1764 = vrot.slane %v1762, 4
        %v1765 = vshll.u32 %v1394, 16
        %v1767 = vrot.slane %v1765, 5
        %v1768 = vor.u32 %v1764, %v1767
        %v1769 = vrot.slane %v1768, 4
        %v1771 = vshll.u32 %v1395, 16
        %v1773 = vrot.slane %v1771, 5
        %v1774 = vsel %vm1424, %v1769, %v1773
        %v1775 = vshrl.u32 %v1395, 16
        %v1777 = vrot.slane %v1775, 4
        %v1778 = vor.u32 %v1777, %v1773
        %v1779 = vrot.slane %v1778, 4
        %v1781 = vshll.u32 %v1420, 16
        %v1783 = vrot.slane %v1781, 5
        %v1784 = vsel %vm1424, %v1779, %v1783
        %v1786 = vshrl.u32 %v1396, 16
        %v1788 = vrot.slane %v1786, 4
        %v1789 = vshll.u32 %v1396, 16
        %v1791 = vrot.slane %v1789, 5
        %v1792 = vor.u32 %v1788, %v1791
        %v1793 = vrot.slane %v1792, 4
        %v1795 = vshll.u32 %v1397, 16
        %v1797 = vrot.slane %v1795, 5
        %v1798 = vsel %vm1424, %v1793, %v1797
        %v1799 = vshrl.u32 %v1397, 16
        %v1801 = vrot.slane %v1799, 4
        %v1802 = vor.u32 %v1801, %v1797
        %v1803 = vrot.slane %v1802, 4
        %v1805 = vshll.u32 %v1421, 16
        %v1807 = vrot.slane %v1805, 5
        %v1808 = vsel %vm1424, %v1803, %v1807
        %s1809 = scalar_lea.vmem %s2, 32
        %v1810 = vld [vmem:[%s1809] sm:$0xf]
        %v1811 = vld [vmem:[%s1809 + $0x4] sm:$0xf]
        %v1812 = vld [vmem:[%s1809 + $0x8] sm:$0xf]
        %v1813 = vld [vmem:[%s1809 + $0xc] sm:$0xf]
        %v1814 = vld [vmem:[%s1809 + $0x10] sm:$0xf]
        %v1815 = vld [vmem:[%s1809 + $0x14] sm:$0xf]
        %v1816 = vld [vmem:[%s1809 + $0x18] sm:$0xf]
        %v1817 = vld [vmem:[%s1809 + $0x1c] sm:$0xf]
        %v1818 = vunpack.c.l.b16 %v1438
        %v1819 = vunpack.c.l.b16 %v1448
        %v1820 = vunpack.c.l.b16 %v1462
        %v1821 = vunpack.c.l.b16 %v1472
        %v1822 = vunpack.c.l.b16 %v1486
        %v1823 = vunpack.c.l.b16 %v1496
        %v1824 = vunpack.c.l.b16 %v1510
        %v1825 = vunpack.c.l.b16 %v1520
        %v1826 = vunpack.c.l.b16 %v1534
        %v1827 = vunpack.c.l.b16 %v1544
        %v1828 = vunpack.c.l.b16 %v1558
        %v1829 = vunpack.c.l.b16 %v1568
        %v1830 = vunpack.c.l.b16 %v1582
        %v1831 = vunpack.c.l.b16 %v1592
        %v1832 = vunpack.c.l.b16 %v1606
        %v1833 = vunpack.c.l.b16 %v1616
        %v1834 = vunpack.c.l.b16 %v1630
        %v1835 = vunpack.c.l.b16 %v1640
        %v1836 = vunpack.c.l.b16 %v1654
        %v1837 = vunpack.c.l.b16 %v1664
        %v1838 = vunpack.c.l.b16 %v1678
        %v1839 = vunpack.c.l.b16 %v1688
        %v1840 = vunpack.c.l.b16 %v1702
        %v1841 = vunpack.c.l.b16 %v1712
        %v1842 = vunpack.c.l.b16 %v1726
        %v1843 = vunpack.c.l.b16 %v1736
        %v1844 = vunpack.c.l.b16 %v1750
        %v1845 = vunpack.c.l.b16 %v1760
        %v1846 = vunpack.c.l.b16 %v1774
        %v1847 = vunpack.c.l.b16 %v1784
        %v1848 = vunpack.c.l.b16 %v1798
        %v1849 = vunpack.c.l.b16 %v1808
        %v1850 = vpack.c.b16 %v1819, %v1818
        %v1851 = vpack.c.b16 %v1821, %v1820
        %v1852 = vpack.c.b16 %v1823, %v1822
        %v1853 = vpack.c.b16 %v1825, %v1824
        %v1854 = vpack.c.b16 %v1827, %v1826
        %v1855 = vpack.c.b16 %v1829, %v1828
        %v1856 = vpack.c.b16 %v1831, %v1830
        %v1857 = vpack.c.b16 %v1833, %v1832
        %v1858 = vpack.c.b16 %v1835, %v1834
        %v1859 = vpack.c.b16 %v1837, %v1836
        %v1860 = vpack.c.b16 %v1839, %v1838
        %v1861 = vpack.c.b16 %v1841, %v1840
        %v1862 = vpack.c.b16 %v1843, %v1842
        %v1863 = vpack.c.b16 %v1845, %v1844
        %v1864 = vpack.c.b16 %v1847, %v1846
        %v1865 = vpack.c.b16 %v1849, %v1848
        %v1874 = vunpack.c.l.b16 %v1810
        %v1875 = vunpack.c.l.b16 %v1811
        %v1876 = vunpack.c.l.b16 %v1812
        %v1877 = vunpack.c.l.b16 %v1813
        %v1878 = vunpack.c.l.b16 %v1814
        %v1879 = vunpack.c.l.b16 %v1815
        %v1880 = vunpack.c.l.b16 %v1816
        %v1881 = vunpack.c.l.b16 %v1817
        %v1882 = vpack.c.b16 %v1875, %v1874
        %v1883 = vpack.c.b16 %v1877, %v1876
        %v1884 = vpack.c.b16 %v1879, %v1878
        %v1885 = vpack.c.b16 %v1881, %v1880
        %vm1890 = vcmask 523264
        %v1892 = vsel %vm1890, %v1850, 0
        %v1895 = vsel %vm1890, %v1851, 0
        %v1898 = vsel %vm1890, %v1852, 0
        %v1901 = vsel %vm1890, %v1853, 0
        %v1904 = vsel %vm1890, %v1854, 0
        %v1907 = vsel %vm1890, %v1855, 0
        %v1910 = vsel %vm1890, %v1856, 0
        %v1913 = vsel %vm1890, %v1857, 0
        %v1916 = vsel %vm1890, %v1858, 0
        %v1919 = vsel %vm1890, %v1859, 0
        %v1922 = vsel %vm1890, %v1860, 0
        %v1925 = vsel %vm1890, %v1861, 0
        %v1928 = vsel %vm1890, %v1862, 0
        %v1931 = vsel %vm1890, %v1863, 0
        %v1934 = vsel %vm1890, %v1864, 0
        %v1937 = vsel %vm1890, %v1865, 0
        %1939 = vmatprep.subr.bf16.mxu0 0
        %1940 = vmatpush1.bf16.msra.mxu0 0
        %1941 = vmatprep.subr.bf16.mxu0 0
        %1942 = vmatpush1.bf16.msra.mxu0 0
        %1943 = vmatprep.subr.bf16.mxu0 0
        %1944 = vmatpush1.bf16.msra.mxu0 0
        %1945 = vmatprep.subr.bf16.mxu0 0
        %1946 = vmatpush1.bf16.msra.mxu0 0
        %1947 = vmatprep.subr.bf16.mxu0 0
        %1948 = vmatpush1.bf16.msra.mxu0 %v1885
        %1949 = vmatprep.subr.bf16.mxu0 0
        %1950 = vmatpush1.bf16.msra.mxu0 %v1884
        %1951 = vmatprep.subr.bf16.mxu0 0
        %1952 = vmatpush1.bf16.msra.mxu0 %v1883
        %1953 = vmatprep.subr.bf16.mxu0 0
        %1954 = vmatpush1.bf16.msra.mxu0 %v1882
        %1955 = vmatprep.subr.bf16.mxu0 0
        %1956 = vmatpush2.bf16.msra.mxu0 0
        %1957 = vmatprep.subr.bf16.mxu0 0
        %1958 = vmatpush2.bf16.msra.mxu0 0
        %1959 = vmatprep.subr.bf16.mxu0 0
        %1960 = vmatpush2.bf16.msra.mxu0 0
        %1961 = vmatprep.subr.bf16.mxu0 0
        %1962 = vmatpush2.bf16.msra.mxu0 0
        %1963 = vmatprep.subr.bf16.mxu0 0
        %1964 = vmatpush2.bf16.msra.mxu0 0
        %1965 = vmatprep.subr.bf16.mxu0 0
        %1966 = vmatpush2.bf16.msra.mxu0 0
        %1967 = vmatprep.subr.bf16.mxu0 0
        %1968 = vmatpush2.bf16.msra.mxu0 0
        %1969 = vmatprep.subr.bf16.mxu0 0
        %1970 = vmatpush2.bf16.msra.mxu0 0
        %1971 = vmatprep.mubr.bf16.mxu0 0
        %1972 = vmatmul.mubr.bf16.gmra.mxu0 %v1892
        %v1973 = vpop.f32.mrf.mxu0
        %v1974 = vadd.f32 0.0, %v1973
        %v1975 = vpop.f32.mrf.mxu0
        %v1976 = vpop.f32.mrf.mxu0
        %v1977 = vadd.f32 0.0, %v1976
        %v1978 = vpop.f32.mrf.mxu0
        %1979 = vmatprep.mubr.bf16.mxu0 0
        %1980 = vmatmul.mubr.bf16.gmra.mxu0 %v1895
        %v1981 = vpop.f32.mrf.mxu0
        %v1982 = vadd.f32 0.0, %v1981
        %v1983 = vpop.f32.mrf.mxu0
        %v1984 = vpop.f32.mrf.mxu0
        %v1985 = vadd.f32 0.0, %v1984
        %v1986 = vpop.f32.mrf.mxu0
        %1987 = vmatprep.mubr.bf16.mxu0 0
        %1988 = vmatmul.mubr.bf16.gmra.mxu0 %v1898
        %v1989 = vpop.f32.mrf.mxu0
        %v1990 = vadd.f32 0.0, %v1989
        %v1991 = vpop.f32.mrf.mxu0
        %v1992 = vpop.f32.mrf.mxu0
        %v1993 = vadd.f32 0.0, %v1992
        %v1994 = vpop.f32.mrf.mxu0
        %1995 = vmatprep.mubr.bf16.mxu0 0
        %1996 = vmatmul.mubr.bf16.gmra.mxu0 %v1901
        %v1997 = vpop.f32.mrf.mxu0
        %v1998 = vadd.f32 0.0, %v1997
        %v1999 = vpop.f32.mrf.mxu0
        %v2000 = vpop.f32.mrf.mxu0
        %v2001 = vadd.f32 0.0, %v2000
        %v2002 = vpop.f32.mrf.mxu0
        %2003 = vmatprep.mubr.bf16.mxu0 0
        %2004 = vmatmul.mubr.bf16.gmra.mxu0 %v1904
        %v2005 = vpop.f32.mrf.mxu0
        %v2006 = vadd.f32 0.0, %v2005
        %v2007 = vpop.f32.mrf.mxu0
        %v2008 = vpop.f32.mrf.mxu0
        %v2009 = vadd.f32 0.0, %v2008
        %v2010 = vpop.f32.mrf.mxu0
        %2011 = vmatprep.mubr.bf16.mxu0 0
        %2012 = vmatmul.mubr.bf16.gmra.mxu0 %v1907
        %v2013 = vpop.f32.mrf.mxu0
        %v2014 = vadd.f32 0.0, %v2013
        %v2015 = vpop.f32.mrf.mxu0
        %v2016 = vpop.f32.mrf.mxu0
        %v2017 = vadd.f32 0.0, %v2016
        %v2018 = vpop.f32.mrf.mxu0
        %2019 = vmatprep.mubr.bf16.mxu0 0
        %2020 = vmatmul.mubr.bf16.gmra.mxu0 %v1910
        %v2021 = vpop.f32.mrf.mxu0
        %v2022 = vadd.f32 0.0, %v2021
        %v2023 = vpop.f32.mrf.mxu0
        %v2024 = vpop.f32.mrf.mxu0
        %v2025 = vadd.f32 0.0, %v2024
        %v2026 = vpop.f32.mrf.mxu0
        %2027 = vmatprep.mubr.bf16.mxu0 0
        %2028 = vmatmul.mubr.bf16.gmra.mxu0 %v1913
        %v2029 = vpop.f32.mrf.mxu0
        %v2030 = vadd.f32 0.0, %v2029
        %v2031 = vpop.f32.mrf.mxu0
        %v2032 = vpop.f32.mrf.mxu0
        %v2033 = vadd.f32 0.0, %v2032
        %v2034 = vpop.f32.mrf.mxu0
        %2035 = vmatprep.mubr.bf16.mxu0 0
        %2036 = vmatmul.mubr.bf16.gmra.mxu0 %v1916
        %v2037 = vpop.f32.mrf.mxu0
        %v2038 = vadd.f32 0.0, %v2037
        %v2039 = vpop.f32.mrf.mxu0
        %v2040 = vpop.f32.mrf.mxu0
        %v2041 = vadd.f32 0.0, %v2040
        %v2042 = vpop.f32.mrf.mxu0
        %2043 = vmatprep.mubr.bf16.mxu0 0
        %2044 = vmatmul.mubr.bf16.gmra.mxu0 %v1919
        %v2045 = vpop.f32.mrf.mxu0
        %v2046 = vadd.f32 0.0, %v2045
        %v2047 = vpop.f32.mrf.mxu0
        %v2048 = vpop.f32.mrf.mxu0
        %v2049 = vadd.f32 0.0, %v2048
        %v2050 = vpop.f32.mrf.mxu0
        %2051 = vmatprep.mubr.bf16.mxu0 0
        %2052 = vmatmul.mubr.bf16.gmra.mxu0 %v1922
        %v2053 = vpop.f32.mrf.mxu0
        %v2054 = vadd.f32 0.0, %v2053
        %v2055 = vpop.f32.mrf.mxu0
        %v2056 = vpop.f32.mrf.mxu0
        %v2057 = vadd.f32 0.0, %v2056
        %v2058 = vpop.f32.mrf.mxu0
        %2059 = vmatprep.mubr.bf16.mxu0 0
        %2060 = vmatmul.mubr.bf16.gmra.mxu0 %v1925
        %v2061 = vpop.f32.mrf.mxu0
        %v2062 = vadd.f32 0.0, %v2061
        %v2063 = vpop.f32.mrf.mxu0
        %v2064 = vpop.f32.mrf.mxu0
        %v2065 = vadd.f32 0.0, %v2064
        %v2066 = vpop.f32.mrf.mxu0
        %2067 = vmatprep.mubr.bf16.mxu0 0
        %2068 = vmatmul.mubr.bf16.gmra.mxu0 %v1928
        %v2069 = vpop.f32.mrf.mxu0
        %v2070 = vadd.f32 0.0, %v2069
        %v2071 = vpop.f32.mrf.mxu0
        %v2072 = vpop.f32.mrf.mxu0
        %v2073 = vadd.f32 0.0, %v2072
        %v2074 = vpop.f32.mrf.mxu0
        %2075 = vmatprep.mubr.bf16.mxu0 0
        %2076 = vmatmul.mubr.bf16.gmra.mxu0 %v1931
        %v2077 = vpop.f32.mrf.mxu0
        %v2078 = vadd.f32 0.0, %v2077
        %v2079 = vpop.f32.mrf.mxu0
        %v2080 = vpop.f32.mrf.mxu0
        %v2081 = vadd.f32 0.0, %v2080
        %v2082 = vpop.f32.mrf.mxu0
        %2083 = vmatprep.mubr.bf16.mxu0 0
        %2084 = vmatmul.mubr.bf16.gmra.mxu0 %v1934
        %v2085 = vpop.f32.mrf.mxu0
        %v2086 = vadd.f32 0.0, %v2085
        %v2087 = vpop.f32.mrf.mxu0
        %v2088 = vpop.f32.mrf.mxu0
        %v2089 = vadd.f32 0.0, %v2088
        %v2090 = vpop.f32.mrf.mxu0
        %2091 = vmatprep.mubr.bf16.mxu0 0
        %2092 = vmatmul.mubr.bf16.gmra.mxu0 %v1937
        %v2093 = vpop.f32.mrf.mxu0
        %v2094 = vadd.f32 0.0, %v2093
        %v2095 = vpop.f32.mrf.mxu0
        %v2096 = vpop.f32.mrf.mxu0
        %v2097 = vadd.f32 0.0, %v2096
        %v2098 = vpop.f32.mrf.mxu0
        %2099 = vdwg.mxu0
        %v2132 = vunpack.c.l.b16 %v1366
        %v2133 = vunpack.c.l.b16 %v1367
        %v2134 = vunpack.c.l.b16 %v1368
        %v2135 = vunpack.c.l.b16 %v1369
        %v2136 = vunpack.c.l.b16 %v1370
        %v2137 = vunpack.c.l.b16 %v1371
        %v2138 = vunpack.c.l.b16 %v1372
        %v2139 = vunpack.c.l.b16 %v1373
        %v2140 = vunpack.c.l.b16 %v1374
        %v2141 = vunpack.c.l.b16 %v1375
        %v2142 = vunpack.c.l.b16 %v1376
        %v2143 = vunpack.c.l.b16 %v1377
        %v2144 = vunpack.c.l.b16 %v1378
        %v2145 = vunpack.c.l.b16 %v1379
        %v2146 = vunpack.c.l.b16 %v1380
        %v2147 = vunpack.c.l.b16 %v1381
        %v2148 = vunpack.c.l.b16 %v1382
        %v2149 = vunpack.c.l.b16 %v1383
        %v2150 = vunpack.c.l.b16 %v1384
        %v2151 = vunpack.c.l.b16 %v1385
        %v2152 = vunpack.c.l.b16 %v1386
        %v2153 = vunpack.c.l.b16 %v1387
        %v2154 = vunpack.c.l.b16 %v1388
        %v2155 = vunpack.c.l.b16 %v1389
        %v2156 = vunpack.c.l.b16 %v1390
        %v2157 = vunpack.c.l.b16 %v1391
        %v2158 = vunpack.c.l.b16 %v1392
        %v2159 = vunpack.c.l.b16 %v1393
        %v2160 = vunpack.c.l.b16 %v1394
        %v2161 = vunpack.c.l.b16 %v1395
        %v2162 = vunpack.c.l.b16 %v1396
        %v2163 = vunpack.c.l.b16 %v1397
        %v2164 = vpack.c.b16 %v2133, %v2132
        %v2165 = vpack.c.b16 %v2135, %v2134
        %v2166 = vpack.c.b16 %v2137, %v2136
        %v2167 = vpack.c.b16 %v2139, %v2138
        %v2168 = vpack.c.b16 %v2141, %v2140
        %v2169 = vpack.c.b16 %v2143, %v2142
        %v2170 = vpack.c.b16 %v2145, %v2144
        %v2171 = vpack.c.b16 %v2147, %v2146
        %v2172 = vpack.c.b16 %v2149, %v2148
        %v2173 = vpack.c.b16 %v2151, %v2150
        %v2174 = vpack.c.b16 %v2153, %v2152
        %v2175 = vpack.c.b16 %v2155, %v2154
        %v2176 = vpack.c.b16 %v2157, %v2156
        %v2177 = vpack.c.b16 %v2159, %v2158
        %v2178 = vpack.c.b16 %v2161, %v2160
        %v2179 = vpack.c.b16 %v2163, %v2162
        %v2188 = vunpack.c.l.b16 %v1398
        %v2189 = vunpack.c.l.b16 %v1399
        %v2190 = vunpack.c.l.b16 %v1400
        %v2191 = vunpack.c.l.b16 %v1401
        %v2192 = vunpack.c.l.b16 %v1402
        %v2193 = vunpack.c.l.b16 %v1403
        %v2194 = vunpack.c.l.b16 %v1404
        %v2195 = vunpack.c.l.b16 %v1405
        %v2196 = vpack.c.b16 %v2189, %v2188
        %v2197 = vpack.c.b16 %v2191, %v2190
        %v2198 = vpack.c.b16 %v2193, %v2192
        %v2199 = vpack.c.b16 %v2195, %v2194
        %v2205 = vsel %vm1890, %v2164, 0
        %v2208 = vsel %vm1890, %v2165, 0
        %v2211 = vsel %vm1890, %v2166, 0
        %v2214 = vsel %vm1890, %v2167, 0
        %v2217 = vsel %vm1890, %v2168, 0
        %v2220 = vsel %vm1890, %v2169, 0
        %v2223 = vsel %vm1890, %v2170, 0
        %v2226 = vsel %vm1890, %v2171, 0
        %v2229 = vsel %vm1890, %v2172, 0
        %v2232 = vsel %vm1890, %v2173, 0
        %v2235 = vsel %vm1890, %v2174, 0
        %v2238 = vsel %vm1890, %v2175, 0
        %v2241 = vsel %vm1890, %v2176, 0
        %v2244 = vsel %vm1890, %v2177, 0
        %v2247 = vsel %vm1890, %v2178, 0
        %v2250 = vsel %vm1890, %v2179, 0
        %2252 = vmatprep.subr.bf16.mxu0 0
        %2253 = vmatpush1.bf16.msra.mxu0 0
        %2254 = vmatprep.subr.bf16.mxu0 0
        %2255 = vmatpush1.bf16.msra.mxu0 0
        %2256 = vmatprep.subr.bf16.mxu0 0
        %2257 = vmatpush1.bf16.msra.mxu0 0
        %2258 = vmatprep.subr.bf16.mxu0 0
        %2259 = vmatpush1.bf16.msra.mxu0 0
        %2260 = vmatprep.subr.bf16.mxu0 0
        %2261 = vmatpush1.bf16.msra.mxu0 %v2199
        %2262 = vmatprep.subr.bf16.mxu0 0
        %2263 = vmatpush1.bf16.msra.mxu0 %v2198
        %2264 = vmatprep.subr.bf16.mxu0 0
        %2265 = vmatpush1.bf16.msra.mxu0 %v2197
        %2266 = vmatprep.subr.bf16.mxu0 0
        %2267 = vmatpush1.bf16.msra.mxu0 %v2196
        %2268 = vmatprep.subr.bf16.mxu0 0
        %2269 = vmatpush2.bf16.msra.mxu0 0
        %2270 = vmatprep.subr.bf16.mxu0 0
        %2271 = vmatpush2.bf16.msra.mxu0 0
        %2272 = vmatprep.subr.bf16.mxu0 0
        %2273 = vmatpush2.bf16.msra.mxu0 0
        %2274 = vmatprep.subr.bf16.mxu0 0
        %2275 = vmatpush2.bf16.msra.mxu0 0
        %2276 = vmatprep.subr.bf16.mxu0 0
        %2277 = vmatpush2.bf16.msra.mxu0 0
        %2278 = vmatprep.subr.bf16.mxu0 0
        %2279 = vmatpush2.bf16.msra.mxu0 0
        %2280 = vmatprep.subr.bf16.mxu0 0
        %2281 = vmatpush2.bf16.msra.mxu0 0
        %2282 = vmatprep.subr.bf16.mxu0 0
        %2283 = vmatpush2.bf16.msra.mxu0 0
        %2284 = vmatprep.mubr.bf16.mxu0 0
        %2285 = vmatmul.mubr.bf16.gmra.mxu0 %v2205
        %v2286 = vpop.f32.mrf.mxu0
        %v2287 = vadd.f32 %v1974, %v2286
        %v2288 = vpop.f32.mrf.mxu0
        %v2289 = vpop.f32.mrf.mxu0
        %v2290 = vadd.f32 %v1977, %v2289
        %v2291 = vpop.f32.mrf.mxu0
        %2292 = vmatprep.mubr.bf16.mxu0 0
        %2293 = vmatmul.mubr.bf16.gmra.mxu0 %v2208
        %v2294 = vpop.f32.mrf.mxu0
        %v2295 = vadd.f32 %v1982, %v2294
        %v2296 = vpop.f32.mrf.mxu0
        %v2297 = vpop.f32.mrf.mxu0
        %v2298 = vadd.f32 %v1985, %v2297
        %v2299 = vpop.f32.mrf.mxu0
        %2300 = vmatprep.mubr.bf16.mxu0 0
        %2301 = vmatmul.mubr.bf16.gmra.mxu0 %v2211
        %v2302 = vpop.f32.mrf.mxu0
        %v2303 = vadd.f32 %v1990, %v2302
        %v2304 = vpop.f32.mrf.mxu0
        %v2305 = vpop.f32.mrf.mxu0
        %v2306 = vadd.f32 %v1993, %v2305
        %v2307 = vpop.f32.mrf.mxu0
        %2308 = vmatprep.mubr.bf16.mxu0 0
        %2309 = vmatmul.mubr.bf16.gmra.mxu0 %v2214
        %v2310 = vpop.f32.mrf.mxu0
        %v2311 = vadd.f32 %v1998, %v2310
        %v2312 = vpop.f32.mrf.mxu0
        %v2313 = vpop.f32.mrf.mxu0
        %v2314 = vadd.f32 %v2001, %v2313
        %v2315 = vpop.f32.mrf.mxu0
        %2316 = vmatprep.mubr.bf16.mxu0 0
        %2317 = vmatmul.mubr.bf16.gmra.mxu0 %v2217
        %v2318 = vpop.f32.mrf.mxu0
        %v2319 = vadd.f32 %v2006, %v2318
        %v2320 = vpop.f32.mrf.mxu0
        %v2321 = vpop.f32.mrf.mxu0
        %v2322 = vadd.f32 %v2009, %v2321
        %v2323 = vpop.f32.mrf.mxu0
        %2324 = vmatprep.mubr.bf16.mxu0 0
        %2325 = vmatmul.mubr.bf16.gmra.mxu0 %v2220
        %v2326 = vpop.f32.mrf.mxu0
        %v2327 = vadd.f32 %v2014, %v2326
        %v2328 = vpop.f32.mrf.mxu0
        %v2329 = vpop.f32.mrf.mxu0
        %v2330 = vadd.f32 %v2017, %v2329
        %v2331 = vpop.f32.mrf.mxu0
        %2332 = vmatprep.mubr.bf16.mxu0 0
        %2333 = vmatmul.mubr.bf16.gmra.mxu0 %v2223
        %v2334 = vpop.f32.mrf.mxu0
        %v2335 = vadd.f32 %v2022, %v2334
        %v2336 = vpop.f32.mrf.mxu0
        %v2337 = vpop.f32.mrf.mxu0
        %v2338 = vadd.f32 %v2025, %v2337
        %v2339 = vpop.f32.mrf.mxu0
        %2340 = vmatprep.mubr.bf16.mxu0 0
        %2341 = vmatmul.mubr.bf16.gmra.mxu0 %v2226
        %v2342 = vpop.f32.mrf.mxu0
        %v2343 = vadd.f32 %v2030, %v2342
        %v2344 = vpop.f32.mrf.mxu0
        %v2345 = vpop.f32.mrf.mxu0
        %v2346 = vadd.f32 %v2033, %v2345
        %v2347 = vpop.f32.mrf.mxu0
        %2348 = vmatprep.mubr.bf16.mxu0 0
        %2349 = vmatmul.mubr.bf16.gmra.mxu0 %v2229
        %v2350 = vpop.f32.mrf.mxu0
        %v2351 = vadd.f32 %v2038, %v2350
        %v2352 = vpop.f32.mrf.mxu0
        %v2353 = vpop.f32.mrf.mxu0
        %v2354 = vadd.f32 %v2041, %v2353
        %v2355 = vpop.f32.mrf.mxu0
        %2356 = vmatprep.mubr.bf16.mxu0 0
        %2357 = vmatmul.mubr.bf16.gmra.mxu0 %v2232
        %v2358 = vpop.f32.mrf.mxu0
        %v2359 = vadd.f32 %v2046, %v2358
        %v2360 = vpop.f32.mrf.mxu0
        %v2361 = vpop.f32.mrf.mxu0
        %v2362 = vadd.f32 %v2049, %v2361
        %v2363 = vpop.f32.mrf.mxu0
        %2364 = vmatprep.mubr.bf16.mxu0 0
        %2365 = vmatmul.mubr.bf16.gmra.mxu0 %v2235
        %v2366 = vpop.f32.mrf.mxu0
        %v2367 = vadd.f32 %v2054, %v2366
        %v2368 = vpop.f32.mrf.mxu0
        %v2369 = vpop.f32.mrf.mxu0
        %v2370 = vadd.f32 %v2057, %v2369
        %v2371 = vpop.f32.mrf.mxu0
        %2372 = vmatprep.mubr.bf16.mxu0 0
        %2373 = vmatmul.mubr.bf16.gmra.mxu0 %v2238
        %v2374 = vpop.f32.mrf.mxu0
        %v2375 = vadd.f32 %v2062, %v2374
        %v2376 = vpop.f32.mrf.mxu0
        %v2377 = vpop.f32.mrf.mxu0
        %v2378 = vadd.f32 %v2065, %v2377
        %v2379 = vpop.f32.mrf.mxu0
        %2380 = vmatprep.mubr.bf16.mxu0 0
        %2381 = vmatmul.mubr.bf16.gmra.mxu0 %v2241
        %v2382 = vpop.f32.mrf.mxu0
        %v2383 = vadd.f32 %v2070, %v2382
        %v2384 = vpop.f32.mrf.mxu0
        %v2385 = vpop.f32.mrf.mxu0
        %v2386 = vadd.f32 %v2073, %v2385
        %v2387 = vpop.f32.mrf.mxu0
        %2388 = vmatprep.mubr.bf16.mxu0 0
        %2389 = vmatmul.mubr.bf16.gmra.mxu0 %v2244
        %v2390 = vpop.f32.mrf.mxu0
        %v2391 = vadd.f32 %v2078, %v2390
        %v2392 = vpop.f32.mrf.mxu0
        %v2393 = vpop.f32.mrf.mxu0
        %v2394 = vadd.f32 %v2081, %v2393
        %v2395 = vpop.f32.mrf.mxu0
        %2396 = vmatprep.mubr.bf16.mxu0 0
        %2397 = vmatmul.mubr.bf16.gmra.mxu0 %v2247
        %v2398 = vpop.f32.mrf.mxu0
        %v2399 = vadd.f32 %v2086, %v2398
        %v2400 = vpop.f32.mrf.mxu0
        %v2401 = vpop.f32.mrf.mxu0
        %v2402 = vadd.f32 %v2089, %v2401
        %v2403 = vpop.f32.mrf.mxu0
        %2404 = vmatprep.mubr.bf16.mxu0 0
        %2405 = vmatmul.mubr.bf16.gmra.mxu0 %v2250
        %v2406 = vpop.f32.mrf.mxu0
        %v2407 = vadd.f32 %v2094, %v2406
        %v2408 = vpop.f32.mrf.mxu0
        %v2409 = vpop.f32.mrf.mxu0
        %v2410 = vadd.f32 %v2097, %v2409
        %v2411 = vpop.f32.mrf.mxu0
        %2412 = vdwg.mxu0
        %v2413 = vld [vmem:[#allocation2] sm:$0xe]
        %v2414 = vld [vmem:[#allocation2 + $0xc] sm:$0xe]
        %v2415 = vld [vmem:[#allocation2 + $0x18] sm:$0xe]
        %v2416 = vld [vmem:[#allocation2 + $0x24] sm:$0xe]
        %v2417 = vld [vmem:[#allocation2 + $0x30] sm:$0xe]
        %v2418 = vld [vmem:[#allocation2 + $0x3c] sm:$0xe]
        %v2419 = vld [vmem:[#allocation2 + $0x48] sm:$0xe]
        %v2420 = vld [vmem:[#allocation2 + $0x54] sm:$0xe]
        %v2421 = vld [vmem:[#allocation2 + $0x60] sm:$0xe]
        %v2422 = vld [vmem:[#allocation2 + $0x6c] sm:$0xe]
        %v2423 = vld [vmem:[#allocation2 + $0x78] sm:$0xe]
        %v2424 = vld [vmem:[#allocation2 + $0x84] sm:$0xe]
        %v2425 = vld [vmem:[#allocation2 + $0x90] sm:$0xe]
        %v2426 = vld [vmem:[#allocation2 + $0x9c] sm:$0xe]
        %v2427 = vld [vmem:[#allocation2 + $0xa8] sm:$0xe]
        %v2428 = vld [vmem:[#allocation2 + $0xb4] sm:$0xe]
        %vm2461 = vcmask 1042432
        %vm2462 = vcmask 1046532
        %vm2463 = vmor %vm2461, %vm2462
        %v2464 = vrot.slane %v2413, 5
        %v2465 = vrot.slane %v2464, 4
        %v2466 = vrot.slane %v1367, 5
        %v2467 = vsel %vm2463, %v2465, %v2466
        %v2468 = vrot.slane %v2466, 4
        %v2469 = vrot.slane %v1406, 5
        %v2470 = vsel %vm2463, %v2468, %v2469
        %v2471 = vrot.slane %v2414, 5
        %v2472 = vrot.slane %v2471, 4
        %v2473 = vrot.slane %v1369, 5
        %v2474 = vsel %vm2463, %v2472, %v2473
        %v2475 = vrot.slane %v2473, 4
        %v2476 = vrot.slane %v1407, 5
        %v2477 = vsel %vm2463, %v2475, %v2476
        %v2478 = vrot.slane %v2415, 5
        %v2479 = vrot.slane %v2478, 4
        %v2480 = vrot.slane %v1371, 5
        %v2481 = vsel %vm2463, %v2479, %v2480
        %v2482 = vrot.slane %v2480, 4
        %v2483 = vrot.slane %v1408, 5
        %v2484 = vsel %vm2463, %v2482, %v2483
        %v2485 = vrot.slane %v2416, 5
        %v2486 = vrot.slane %v2485, 4
        %v2487 = vrot.slane %v1373, 5
        %v2488 = vsel %vm2463, %v2486, %v2487
        %v2489 = vrot.slane %v2487, 4
        %v2490 = vrot.slane %v1409, 5
        %v2491 = vsel %vm2463, %v2489, %v2490
        %v2492 = vrot.slane %v2417, 5
        %v2493 = vrot.slane %v2492, 4
        %v2494 = vrot.slane %v1375, 5
        %v2495 = vsel %vm2463, %v2493, %v2494
        %v2496 = vrot.slane %v2494, 4
        %v2497 = vrot.slane %v1410, 5
        %v2498 = vsel %vm2463, %v2496, %v2497
        %v2499 = vrot.slane %v2418, 5
        %v2500 = vrot.slane %v2499, 4
        %v2501 = vrot.slane %v1377, 5
        %v2502 = vsel %vm2463, %v2500, %v2501
        %v2503 = vrot.slane %v2501, 4
        %v2504 = vrot.slane %v1411, 5
        %v2505 = vsel %vm2463, %v2503, %v2504
        %v2506 = vrot.slane %v2419, 5
        %v2507 = vrot.slane %v2506, 4
        %v2508 = vrot.slane %v1379, 5
        %v2509 = vsel %vm2463, %v2507, %v2508
        %v2510 = vrot.slane %v2508, 4
        %v2511 = vrot.slane %v1412, 5
        %v2512 = vsel %vm2463, %v2510, %v2511
        %v2513 = vrot.slane %v2420, 5
        %v2514 = vrot.slane %v2513, 4
        %v2515 = vrot.slane %v1381, 5
        %v2516 = vsel %vm2463, %v2514, %v2515
        %v2517 = vrot.slane %v2515, 4
        %v2518 = vrot.slane %v1413, 5
        %v2519 = vsel %vm2463, %v2517, %v2518
        %v2520 = vrot.slane %v2421, 5
        %v2521 = vrot.slane %v2520, 4
        %v2522 = vrot.slane %v1383, 5
        %v2523 = vsel %vm2463, %v2521, %v2522
        %v2524 = vrot.slane %v2522, 4
        %v2525 = vrot.slane %v1414, 5
        %v2526 = vsel %vm2463, %v2524, %v2525
        %v2527 = vrot.slane %v2422, 5
        %v2528 = vrot.slane %v2527, 4
        %v2529 = vrot.slane %v1385, 5
        %v2530 = vsel %vm2463, %v2528, %v2529
        %v2531 = vrot.slane %v2529, 4
        %v2532 = vrot.slane %v1415, 5
        %v2533 = vsel %vm2463, %v2531, %v2532
        %v2534 = vrot.slane %v2423, 5
        %v2535 = vrot.slane %v2534, 4
        %v2536 = vrot.slane %v1387, 5
        %v2537 = vsel %vm2463, %v2535, %v2536
        %v2538 = vrot.slane %v2536, 4
        %v2539 = vrot.slane %v1416, 5
        %v2540 = vsel %vm2463, %v2538, %v2539
        %v2541 = vrot.slane %v2424, 5
        %v2542 = vrot.slane %v2541, 4
        %v2543 = vrot.slane %v1389, 5
        %v2544 = vsel %vm2463, %v2542, %v2543
        %v2545 = vrot.slane %v2543, 4
        %v2546 = vrot.slane %v1417, 5
        %v2547 = vsel %vm2463, %v2545, %v2546
        %v2548 = vrot.slane %v2425, 5
        %v2549 = vrot.slane %v2548, 4
        %v2550 = vrot.slane %v1391, 5
        %v2551 = vsel %vm2463, %v2549, %v2550
        %v2552 = vrot.slane %v2550, 4
        %v2553 = vrot.slane %v1418, 5
        %v2554 = vsel %vm2463, %v2552, %v2553
        %v2555 = vrot.slane %v2426, 5
        %v2556 = vrot.slane %v2555, 4
        %v2557 = vrot.slane %v1393, 5
        %v2558 = vsel %vm2463, %v2556, %v2557
        %v2559 = vrot.slane %v2557, 4
        %v2560 = vrot.slane %v1419, 5
        %v2561 = vsel %vm2463, %v2559, %v2560
        %v2562 = vrot.slane %v2427, 5
        %v2563 = vrot.slane %v2562, 4
        %v2564 = vrot.slane %v1395, 5
        %v2565 = vsel %vm2463, %v2563, %v2564
        %v2566 = vrot.slane %v2564, 4
        %v2567 = vrot.slane %v1420, 5
        %v2568 = vsel %vm2463, %v2566, %v2567
        %v2569 = vrot.slane %v2428, 5
        %v2570 = vrot.slane %v2569, 4
        %v2571 = vrot.slane %v1397, 5
        %v2572 = vsel %vm2463, %v2570, %v2571
        %v2573 = vrot.slane %v2571, 4
        %v2574 = vrot.slane %v1421, 5
        %v2575 = vsel %vm2463, %v2573, %v2574
        %s2576 = scalar_lea.vmem %s2, 64
        %v2577 = vld [vmem:[%s2576] sm:$0xf]
        %v2578 = vld [vmem:[%s2576 + $0x4] sm:$0xf]
        %v2579 = vld [vmem:[%s2576 + $0x8] sm:$0xf]
        %v2580 = vld [vmem:[%s2576 + $0xc] sm:$0xf]
        %v2581 = vld [vmem:[%s2576 + $0x10] sm:$0xf]
        %v2582 = vld [vmem:[%s2576 + $0x14] sm:$0xf]
        %v2583 = vld [vmem:[%s2576 + $0x18] sm:$0xf]
        %v2584 = vld [vmem:[%s2576 + $0x1c] sm:$0xf]
        %v2585 = vunpack.c.l.b16 %v2467
        %v2586 = vunpack.c.l.b16 %v2470
        %v2587 = vunpack.c.l.b16 %v2474
        %v2588 = vunpack.c.l.b16 %v2477
        %v2589 = vunpack.c.l.b16 %v2481
        %v2590 = vunpack.c.l.b16 %v2484
        %v2591 = vunpack.c.l.b16 %v2488
        %v2592 = vunpack.c.l.b16 %v2491
        %v2593 = vunpack.c.l.b16 %v2495
        %v2594 = vunpack.c.l.b16 %v2498
        %v2595 = vunpack.c.l.b16 %v2502
        %v2596 = vunpack.c.l.b16 %v2505
        %v2597 = vunpack.c.l.b16 %v2509
        %v2598 = vunpack.c.l.b16 %v2512
        %v2599 = vunpack.c.l.b16 %v2516
        %v2600 = vunpack.c.l.b16 %v2519
        %v2601 = vunpack.c.l.b16 %v2523
        %v2602 = vunpack.c.l.b16 %v2526
        %v2603 = vunpack.c.l.b16 %v2530
        %v2604 = vunpack.c.l.b16 %v2533
        %v2605 = vunpack.c.l.b16 %v2537
        %v2606 = vunpack.c.l.b16 %v2540
        %v2607 = vunpack.c.l.b16 %v2544
        %v2608 = vunpack.c.l.b16 %v2547
        %v2609 = vunpack.c.l.b16 %v2551
        %v2610 = vunpack.c.l.b16 %v2554
        %v2611 = vunpack.c.l.b16 %v2558
        %v2612 = vunpack.c.l.b16 %v2561
        %v2613 = vunpack.c.l.b16 %v2565
        %v2614 = vunpack.c.l.b16 %v2568
        %v2615 = vunpack.c.l.b16 %v2572
        %v2616 = vunpack.c.l.b16 %v2575
        %v2617 = vpack.c.b16 %v2586, %v2585
        %v2618 = vpack.c.b16 %v2588, %v2587
        %v2619 = vpack.c.b16 %v2590, %v2589
        %v2620 = vpack.c.b16 %v2592, %v2591
        %v2621 = vpack.c.b16 %v2594, %v2593
        %v2622 = vpack.c.b16 %v2596, %v2595
        %v2623 = vpack.c.b16 %v2598, %v2597
        %v2624 = vpack.c.b16 %v2600, %v2599
        %v2625 = vpack.c.b16 %v2602, %v2601
        %v2626 = vpack.c.b16 %v2604, %v2603
        %v2627 = vpack.c.b16 %v2606, %v2605
        %v2628 = vpack.c.b16 %v2608, %v2607
        %v2629 = vpack.c.b16 %v2610, %v2609
        %v2630 = vpack.c.b16 %v2612, %v2611
        %v2631 = vpack.c.b16 %v2614, %v2613
        %v2632 = vpack.c.b16 %v2616, %v2615
        %v2641 = vunpack.c.l.b16 %v2577
        %v2642 = vunpack.c.l.b16 %v2578
        %v2643 = vunpack.c.l.b16 %v2579
        %v2644 = vunpack.c.l.b16 %v2580
        %v2645 = vunpack.c.l.b16 %v2581
        %v2646 = vunpack.c.l.b16 %v2582
        %v2647 = vunpack.c.l.b16 %v2583
        %v2648 = vunpack.c.l.b16 %v2584
        %v2649 = vpack.c.b16 %v2642, %v2641
        %v2650 = vpack.c.b16 %v2644, %v2643
        %v2651 = vpack.c.b16 %v2646, %v2645
        %v2652 = vpack.c.b16 %v2648, %v2647
        %v2658 = vsel %vm1890, %v2617, 0
        %v2661 = vsel %vm1890, %v2618, 0
        %v2664 = vsel %vm1890, %v2619, 0
        %v2667 = vsel %vm1890, %v2620, 0
        %v2670 = vsel %vm1890, %v2621, 0
        %v2673 = vsel %vm1890, %v2622, 0
        %v2676 = vsel %vm1890, %v2623, 0
        %v2679 = vsel %vm1890, %v2624, 0
        %v2682 = vsel %vm1890, %v2625, 0
        %v2685 = vsel %vm1890, %v2626, 0
        %v2688 = vsel %vm1890, %v2627, 0
        %v2691 = vsel %vm1890, %v2628, 0
        %v2694 = vsel %vm1890, %v2629, 0
        %v2697 = vsel %vm1890, %v2630, 0
        %v2700 = vsel %vm1890, %v2631, 0
        %v2703 = vsel %vm1890, %v2632, 0
        %2705 = vmatprep.subr.bf16.mxu0 0
        %2706 = vmatpush1.bf16.msra.mxu0 0
        %2707 = vmatprep.subr.bf16.mxu0 0
        %2708 = vmatpush1.bf16.msra.mxu0 0
        %2709 = vmatprep.subr.bf16.mxu0 0
        %2710 = vmatpush1.bf16.msra.mxu0 0
        %2711 = vmatprep.subr.bf16.mxu0 0
        %2712 = vmatpush1.bf16.msra.mxu0 0
        %2713 = vmatprep.subr.bf16.mxu0 0
        %2714 = vmatpush1.bf16.msra.mxu0 %v2652
        %2715 = vmatprep.subr.bf16.mxu0 0
        %2716 = vmatpush1.bf16.msra.mxu0 %v2651
        %2717 = vmatprep.subr.bf16.mxu0 0
        %2718 = vmatpush1.bf16.msra.mxu0 %v2650
        %2719 = vmatprep.subr.bf16.mxu0 0
        %2720 = vmatpush1.bf16.msra.mxu0 %v2649
        %2721 = vmatprep.subr.bf16.mxu0 0
        %2722 = vmatpush2.bf16.msra.mxu0 0
        %2723 = vmatprep.subr.bf16.mxu0 0
        %2724 = vmatpush2.bf16.msra.mxu0 0
        %2725 = vmatprep.subr.bf16.mxu0 0
        %2726 = vmatpush2.bf16.msra.mxu0 0
        %2727 = vmatprep.subr.bf16.mxu0 0
        %2728 = vmatpush2.bf16.msra.mxu0 0
        %2729 = vmatprep.subr.bf16.mxu0 0
        %2730 = vmatpush2.bf16.msra.mxu0 0
        %2731 = vmatprep.subr.bf16.mxu0 0
        %2732 = vmatpush2.bf16.msra.mxu0 0
        %2733 = vmatprep.subr.bf16.mxu0 0
        %2734 = vmatpush2.bf16.msra.mxu0 0
        %2735 = vmatprep.subr.bf16.mxu0 0
        %2736 = vmatpush2.bf16.msra.mxu0 0
        %2737 = vmatprep.mubr.bf16.mxu0 0
        %2738 = vmatmul.mubr.bf16.gmra.mxu0 %v2658
        %v2739 = vpop.f32.mrf.mxu0
        %v2740 = vadd.f32 0.0, %v2739
        %v2741 = vpop.f32.mrf.mxu0
        %v2742 = vpop.f32.mrf.mxu0
        %v2743 = vadd.f32 0.0, %v2742
        %v2744 = vpop.f32.mrf.mxu0
        %2745 = vmatprep.mubr.bf16.mxu0 0
        %2746 = vmatmul.mubr.bf16.gmra.mxu0 %v2661
        %v2747 = vpop.f32.mrf.mxu0
        %v2748 = vadd.f32 0.0, %v2747
        %v2749 = vpop.f32.mrf.mxu0
        %v2750 = vpop.f32.mrf.mxu0
        %v2751 = vadd.f32 0.0, %v2750
        %v2752 = vpop.f32.mrf.mxu0
        %2753 = vmatprep.mubr.bf16.mxu0 0
        %2754 = vmatmul.mubr.bf16.gmra.mxu0 %v2664
        %v2755 = vpop.f32.mrf.mxu0
        %v2756 = vadd.f32 0.0, %v2755
        %v2757 = vpop.f32.mrf.mxu0
        %v2758 = vpop.f32.mrf.mxu0
        %v2759 = vadd.f32 0.0, %v2758
        %v2760 = vpop.f32.mrf.mxu0
        %2761 = vmatprep.mubr.bf16.mxu0 0
        %2762 = vmatmul.mubr.bf16.gmra.mxu0 %v2667
        %v2763 = vpop.f32.mrf.mxu0
        %v2764 = vadd.f32 0.0, %v2763
        %v2765 = vpop.f32.mrf.mxu0
        %v2766 = vpop.f32.mrf.mxu0
        %v2767 = vadd.f32 0.0, %v2766
        %v2768 = vpop.f32.mrf.mxu0
        %2769 = vmatprep.mubr.bf16.mxu0 0
        %2770 = vmatmul.mubr.bf16.gmra.mxu0 %v2670
        %v2771 = vpop.f32.mrf.mxu0
        %v2772 = vadd.f32 0.0, %v2771
        %v2773 = vpop.f32.mrf.mxu0
        %v2774 = vpop.f32.mrf.mxu0
        %v2775 = vadd.f32 0.0, %v2774
        %v2776 = vpop.f32.mrf.mxu0
        %2777 = vmatprep.mubr.bf16.mxu0 0
        %2778 = vmatmul.mubr.bf16.gmra.mxu0 %v2673
        %v2779 = vpop.f32.mrf.mxu0
        %v2780 = vadd.f32 0.0, %v2779
        %v2781 = vpop.f32.mrf.mxu0
        %v2782 = vpop.f32.mrf.mxu0
        %v2783 = vadd.f32 0.0, %v2782
        %v2784 = vpop.f32.mrf.mxu0
        %2785 = vmatprep.mubr.bf16.mxu0 0
        %2786 = vmatmul.mubr.bf16.gmra.mxu0 %v2676
        %v2787 = vpop.f32.mrf.mxu0
        %v2788 = vadd.f32 0.0, %v2787
        %v2789 = vpop.f32.mrf.mxu0
        %v2790 = vpop.f32.mrf.mxu0
        %v2791 = vadd.f32 0.0, %v2790
        %v2792 = vpop.f32.mrf.mxu0
        %2793 = vmatprep.mubr.bf16.mxu0 0
        %2794 = vmatmul.mubr.bf16.gmra.mxu0 %v2679
        %v2795 = vpop.f32.mrf.mxu0
        %v2796 = vadd.f32 0.0, %v2795
        %v2797 = vpop.f32.mrf.mxu0
        %v2798 = vpop.f32.mrf.mxu0
        %v2799 = vadd.f32 0.0, %v2798
        %v2800 = vpop.f32.mrf.mxu0
        %2801 = vmatprep.mubr.bf16.mxu0 0
        %2802 = vmatmul.mubr.bf16.gmra.mxu0 %v2682
        %v2803 = vpop.f32.mrf.mxu0
        %v2804 = vadd.f32 0.0, %v2803
        %v2805 = vpop.f32.mrf.mxu0
        %v2806 = vpop.f32.mrf.mxu0
        %v2807 = vadd.f32 0.0, %v2806
        %v2808 = vpop.f32.mrf.mxu0
        %2809 = vmatprep.mubr.bf16.mxu0 0
        %2810 = vmatmul.mubr.bf16.gmra.mxu0 %v2685
        %v2811 = vpop.f32.mrf.mxu0
        %v2812 = vadd.f32 0.0, %v2811
        %v2813 = vpop.f32.mrf.mxu0
        %v2814 = vpop.f32.mrf.mxu0
        %v2815 = vadd.f32 0.0, %v2814
        %v2816 = vpop.f32.mrf.mxu0
        %2817 = vmatprep.mubr.bf16.mxu0 0
        %2818 = vmatmul.mubr.bf16.gmra.mxu0 %v2688
        %v2819 = vpop.f32.mrf.mxu0
        %v2820 = vadd.f32 0.0, %v2819
        %v2821 = vpop.f32.mrf.mxu0
        %v2822 = vpop.f32.mrf.mxu0
        %v2823 = vadd.f32 0.0, %v2822
        %v2824 = vpop.f32.mrf.mxu0
        %2825 = vmatprep.mubr.bf16.mxu0 0
        %2826 = vmatmul.mubr.bf16.gmra.mxu0 %v2691
        %v2827 = vpop.f32.mrf.mxu0
        %v2828 = vadd.f32 0.0, %v2827
        %v2829 = vpop.f32.mrf.mxu0
        %v2830 = vpop.f32.mrf.mxu0
        %v2831 = vadd.f32 0.0, %v2830
        %v2832 = vpop.f32.mrf.mxu0
        %2833 = vmatprep.mubr.bf16.mxu0 0
        %2834 = vmatmul.mubr.bf16.gmra.mxu0 %v2694
        %v2835 = vpop.f32.mrf.mxu0
        %v2836 = vadd.f32 0.0, %v2835
        %v2837 = vpop.f32.mrf.mxu0
        %v2838 = vpop.f32.mrf.mxu0
        %v2839 = vadd.f32 0.0, %v2838
        %v2840 = vpop.f32.mrf.mxu0
        %2841 = vmatprep.mubr.bf16.mxu0 0
        %2842 = vmatmul.mubr.bf16.gmra.mxu0 %v2697
        %v2843 = vpop.f32.mrf.mxu0
        %v2844 = vadd.f32 0.0, %v2843
        %v2845 = vpop.f32.mrf.mxu0
        %v2846 = vpop.f32.mrf.mxu0
        %v2847 = vadd.f32 0.0, %v2846
        %v2848 = vpop.f32.mrf.mxu0
        %2849 = vmatprep.mubr.bf16.mxu0 0
        %2850 = vmatmul.mubr.bf16.gmra.mxu0 %v2700
        %v2851 = vpop.f32.mrf.mxu0
        %v2852 = vadd.f32 0.0, %v2851
        %v2853 = vpop.f32.mrf.mxu0
        %v2854 = vpop.f32.mrf.mxu0
        %v2855 = vadd.f32 0.0, %v2854
        %v2856 = vpop.f32.mrf.mxu0
        %2857 = vmatprep.mubr.bf16.mxu0 0
        %2858 = vmatmul.mubr.bf16.gmra.mxu0 %v2703
        %v2859 = vpop.f32.mrf.mxu0
        %v2860 = vadd.f32 0.0, %v2859
        %v2861 = vpop.f32.mrf.mxu0
        %v2862 = vpop.f32.mrf.mxu0
        %v2863 = vadd.f32 0.0, %v2862
        %v2864 = vpop.f32.mrf.mxu0
        %2865 = vdwg.mxu0
        %v2866 = vadd.f32 %v2287, %v2740
        %v2867 = vadd.f32 %v2290, %v2743
        %v2868 = vadd.f32 %v2295, %v2748
        %v2869 = vadd.f32 %v2298, %v2751
        %v2870 = vadd.f32 %v2303, %v2756
        %v2871 = vadd.f32 %v2306, %v2759
        %v2872 = vadd.f32 %v2311, %v2764
        %v2873 = vadd.f32 %v2314, %v2767
        %v2874 = vadd.f32 %v2319, %v2772
        %v2875 = vadd.f32 %v2322, %v2775
        %v2876 = vadd.f32 %v2327, %v2780
        %v2877 = vadd.f32 %v2330, %v2783
        %v2878 = vadd.f32 %v2335, %v2788
        %v2879 = vadd.f32 %v2338, %v2791
        %v2880 = vadd.f32 %v2343, %v2796
        %v2881 = vadd.f32 %v2346, %v2799
        %v2882 = vadd.f32 %v2351, %v2804
        %v2883 = vadd.f32 %v2354, %v2807
        %v2884 = vadd.f32 %v2359, %v2812
        %v2885 = vadd.f32 %v2362, %v2815
        %v2886 = vadd.f32 %v2367, %v2820
        %v2887 = vadd.f32 %v2370, %v2823
        %v2888 = vadd.f32 %v2375, %v2828
        %v2889 = vadd.f32 %v2378, %v2831
        %v2890 = vadd.f32 %v2383, %v2836
        %v2891 = vadd.f32 %v2386, %v2839
        %v2892 = vadd.f32 %v2391, %v2844
        %v2893 = vadd.f32 %v2394, %v2847
        %v2894 = vadd.f32 %v2399, %v2852
        %v2895 = vadd.f32 %v2402, %v2855
        %v2896 = vadd.f32 %v2407, %v2860
        %v2897 = vadd.f32 %v2410, %v2863
        %v2898 = vld [vmem:[%s682] sm:$0xf]
        %v2899 = vld [vmem:[%s682 + $0x4] sm:$0xf]
        %v2900 = vld [vmem:[%s682 + $0xc] sm:$0xf]
        %v2901 = vld [vmem:[%s682 + $0x10] sm:$0xf]
        %v2902 = vld [vmem:[%s682 + $0x18] sm:$0xf]
        %v2903 = vld [vmem:[%s682 + $0x1c] sm:$0xf]
        %v2904 = vld [vmem:[%s682 + $0x24] sm:$0xf]
        %v2905 = vld [vmem:[%s682 + $0x28] sm:$0xf]
        %v2906 = vld [vmem:[%s682 + $0x30] sm:$0xf]
        %v2907 = vld [vmem:[%s682 + $0x34] sm:$0xf]
        %v2908 = vld [vmem:[%s682 + $0x3c] sm:$0xf]
        %v2909 = vld [vmem:[%s682 + $0x40] sm:$0xf]
        %v2910 = vld [vmem:[%s682 + $0x48] sm:$0xf]
        %v2911 = vld [vmem:[%s682 + $0x4c] sm:$0xf]
        %v2912 = vld [vmem:[%s682 + $0x54] sm:$0xf]
        %v2913 = vld [vmem:[%s682 + $0x58] sm:$0xf]
        %v2914 = vld [vmem:[%s682 + $0x60] sm:$0xf]
        %v2915 = vld [vmem:[%s682 + $0x64] sm:$0xf]
        %v2916 = vld [vmem:[%s682 + $0x6c] sm:$0xf]
        %v2917 = vld [vmem:[%s682 + $0x70] sm:$0xf]
        %v2918 = vld [vmem:[%s682 + $0x78] sm:$0xf]
        %v2919 = vld [vmem:[%s682 + $0x7c] sm:$0xf]
        %v2920 = vld [vmem:[%s682 + $0x84] sm:$0xf]
        %v2921 = vld [vmem:[%s682 + $0x88] sm:$0xf]
        %v2922 = vld [vmem:[%s682 + $0x90] sm:$0xf]
        %v2923 = vld [vmem:[%s682 + $0x94] sm:$0xf]
        %v2924 = vld [vmem:[%s682 + $0x9c] sm:$0xf]
        %v2925 = vld [vmem:[%s682 + $0xa0] sm:$0xf]
        %v2926 = vld [vmem:[%s682 + $0xa8] sm:$0xf]
        %v2927 = vld [vmem:[%s682 + $0xac] sm:$0xf]
        %v2928 = vld [vmem:[%s682 + $0xb4] sm:$0xf]
        %v2929 = vld [vmem:[%s682 + $0xb8] sm:$0xf]
        %s2930 = scalar_lea.vmem %s2, 96
        %v2931 = vld [vmem:[%s2930] sm:$0xf]
        %v2932 = vld [vmem:[%s2930 + $0x4] sm:$0xf]
        %v2933 = vld [vmem:[%s2930 + $0x8] sm:$0xf]
        %v2934 = vld [vmem:[%s2930 + $0xc] sm:$0xf]
        %v2935 = vld [vmem:[%s2930 + $0x10] sm:$0xf]
        %v2936 = vld [vmem:[%s2930 + $0x14] sm:$0xf]
        %v2937 = vld [vmem:[%s2930 + $0x18] sm:$0xf]
        %v2938 = vld [vmem:[%s2930 + $0x1c] sm:$0xf]
        %v2971 = vunpack.c.l.b16 %v2898
        %v2972 = vunpack.c.l.b16 %v2899
        %v2973 = vunpack.c.l.b16 %v2900
        %v2974 = vunpack.c.l.b16 %v2901
        %v2975 = vunpack.c.l.b16 %v2902
        %v2976 = vunpack.c.l.b16 %v2903
        %v2977 = vunpack.c.l.b16 %v2904
        %v2978 = vunpack.c.l.b16 %v2905
        %v2979 = vunpack.c.l.b16 %v2906
        %v2980 = vunpack.c.l.b16 %v2907
        %v2981 = vunpack.c.l.b16 %v2908
        %v2982 = vunpack.c.l.b16 %v2909
        %v2983 = vunpack.c.l.b16 %v2910
        %v2984 = vunpack.c.l.b16 %v2911
        %v2985 = vunpack.c.l.b16 %v2912
        %v2986 = vunpack.c.l.b16 %v2913
        %v2987 = vunpack.c.l.b16 %v2914
        %v2988 = vunpack.c.l.b16 %v2915
        %v2989 = vunpack.c.l.b16 %v2916
        %v2990 = vunpack.c.l.b16 %v2917
        %v2991 = vunpack.c.l.b16 %v2918
        %v2992 = vunpack.c.l.b16 %v2919
        %v2993 = vunpack.c.l.b16 %v2920
        %v2994 = vunpack.c.l.b16 %v2921
        %v2995 = vunpack.c.l.b16 %v2922
        %v2996 = vunpack.c.l.b16 %v2923
        %v2997 = vunpack.c.l.b16 %v2924
        %v2998 = vunpack.c.l.b16 %v2925
        %v2999 = vunpack.c.l.b16 %v2926
        %v3000 = vunpack.c.l.b16 %v2927
        %v3001 = vunpack.c.l.b16 %v2928
        %v3002 = vunpack.c.l.b16 %v2929
        %v3003 = vpack.c.b16 %v2972, %v2971
        %v3004 = vpack.c.b16 %v2974, %v2973
        %v3005 = vpack.c.b16 %v2976, %v2975
        %v3006 = vpack.c.b16 %v2978, %v2977
        %v3007 = vpack.c.b16 %v2980, %v2979
        %v3008 = vpack.c.b16 %v2982, %v2981
        %v3009 = vpack.c.b16 %v2984, %v2983
        %v3010 = vpack.c.b16 %v2986, %v2985
        %v3011 = vpack.c.b16 %v2988, %v2987
        %v3012 = vpack.c.b16 %v2990, %v2989
        %v3013 = vpack.c.b16 %v2992, %v2991
        %v3014 = vpack.c.b16 %v2994, %v2993
        %v3015 = vpack.c.b16 %v2996, %v2995
        %v3016 = vpack.c.b16 %v2998, %v2997
        %v3017 = vpack.c.b16 %v3000, %v2999
        %v3018 = vpack.c.b16 %v3002, %v3001
        %v3027 = vunpack.c.l.b16 %v2931
        %v3028 = vunpack.c.l.b16 %v2932
        %v3029 = vunpack.c.l.b16 %v2933
        %v3030 = vunpack.c.l.b16 %v2934
        %v3031 = vunpack.c.l.b16 %v2935
        %v3032 = vunpack.c.l.b16 %v2936
        %v3033 = vunpack.c.l.b16 %v2937
        %v3034 = vunpack.c.l.b16 %v2938
        %v3035 = vpack.c.b16 %v3028, %v3027
        %v3036 = vpack.c.b16 %v3030, %v3029
        %v3037 = vpack.c.b16 %v3032, %v3031
        %v3038 = vpack.c.b16 %v3034, %v3033
        %v3044 = vsel %vm1890, %v3003, 0
        %v3047 = vsel %vm1890, %v3004, 0
        %v3050 = vsel %vm1890, %v3005, 0
        %v3053 = vsel %vm1890, %v3006, 0
        %v3056 = vsel %vm1890, %v3007, 0
        %v3059 = vsel %vm1890, %v3008, 0
        %v3062 = vsel %vm1890, %v3009, 0
        %v3065 = vsel %vm1890, %v3010, 0
        %v3068 = vsel %vm1890, %v3011, 0
        %v3071 = vsel %vm1890, %v3012, 0
        %v3074 = vsel %vm1890, %v3013, 0
        %v3077 = vsel %vm1890, %v3014, 0
        %v3080 = vsel %vm1890, %v3015, 0
        %v3083 = vsel %vm1890, %v3016, 0
        %v3086 = vsel %vm1890, %v3017, 0
        %v3089 = vsel %vm1890, %v3018, 0
        %3091 = vmatprep.subr.bf16.mxu0 0
        %3092 = vmatpush1.bf16.msra.mxu0 0
        %3093 = vmatprep.subr.bf16.mxu0 0
        %3094 = vmatpush1.bf16.msra.mxu0 0
        %3095 = vmatprep.subr.bf16.mxu0 0
        %3096 = vmatpush1.bf16.msra.mxu0 0
        %3097 = vmatprep.subr.bf16.mxu0 0
        %3098 = vmatpush1.bf16.msra.mxu0 0
        %3099 = vmatprep.subr.bf16.mxu0 0
        %3100 = vmatpush1.bf16.msra.mxu0 %v3038
        %3101 = vmatprep.subr.bf16.mxu0 0
        %3102 = vmatpush1.bf16.msra.mxu0 %v3037
        %3103 = vmatprep.subr.bf16.mxu0 0
        %3104 = vmatpush1.bf16.msra.mxu0 %v3036
        %3105 = vmatprep.subr.bf16.mxu0 0
        %3106 = vmatpush1.bf16.msra.mxu0 %v3035
        %3107 = vmatprep.subr.bf16.mxu0 0
        %3108 = vmatpush2.bf16.msra.mxu0 0
        %3109 = vmatprep.subr.bf16.mxu0 0
        %3110 = vmatpush2.bf16.msra.mxu0 0
        %3111 = vmatprep.subr.bf16.mxu0 0
        %3112 = vmatpush2.bf16.msra.mxu0 0
        %3113 = vmatprep.subr.bf16.mxu0 0
        %3114 = vmatpush2.bf16.msra.mxu0 0
        %3115 = vmatprep.subr.bf16.mxu0 0
        %3116 = vmatpush2.bf16.msra.mxu0 0
        %3117 = vmatprep.subr.bf16.mxu0 0
        %3118 = vmatpush2.bf16.msra.mxu0 0
        %3119 = vmatprep.subr.bf16.mxu0 0
        %3120 = vmatpush2.bf16.msra.mxu0 0
        %3121 = vmatprep.subr.bf16.mxu0 0
        %3122 = vmatpush2.bf16.msra.mxu0 0
        %3123 = vmatprep.mubr.bf16.mxu0 0
        %3124 = vmatmul.mubr.bf16.gmra.mxu0 %v3044
        %v3125 = vpop.f32.mrf.mxu0
        %v3126 = vadd.f32 0.0, %v3125
        %v3127 = vpop.f32.mrf.mxu0
        %v3128 = vpop.f32.mrf.mxu0
        %v3129 = vadd.f32 0.0, %v3128
        %v3130 = vpop.f32.mrf.mxu0
        %3131 = vmatprep.mubr.bf16.mxu0 0
        %3132 = vmatmul.mubr.bf16.gmra.mxu0 %v3047
        %v3133 = vpop.f32.mrf.mxu0
        %v3134 = vadd.f32 0.0, %v3133
        %v3135 = vpop.f32.mrf.mxu0
        %v3136 = vpop.f32.mrf.mxu0
        %v3137 = vadd.f32 0.0, %v3136
        %v3138 = vpop.f32.mrf.mxu0
        %3139 = vmatprep.mubr.bf16.mxu0 0
        %3140 = vmatmul.mubr.bf16.gmra.mxu0 %v3050
        %v3141 = vpop.f32.mrf.mxu0
        %v3142 = vadd.f32 0.0, %v3141
        %v3143 = vpop.f32.mrf.mxu0
        %v3144 = vpop.f32.mrf.mxu0
        %v3145 = vadd.f32 0.0, %v3144
        %v3146 = vpop.f32.mrf.mxu0
        %3147 = vmatprep.mubr.bf16.mxu0 0
        %3148 = vmatmul.mubr.bf16.gmra.mxu0 %v3053
        %v3149 = vpop.f32.mrf.mxu0
        %v3150 = vadd.f32 0.0, %v3149
        %v3151 = vpop.f32.mrf.mxu0
        %v3152 = vpop.f32.mrf.mxu0
        %v3153 = vadd.f32 0.0, %v3152
        %v3154 = vpop.f32.mrf.mxu0
        %3155 = vmatprep.mubr.bf16.mxu0 0
        %3156 = vmatmul.mubr.bf16.gmra.mxu0 %v3056
        %v3157 = vpop.f32.mrf.mxu0
        %v3158 = vadd.f32 0.0, %v3157
        %v3159 = vpop.f32.mrf.mxu0
        %v3160 = vpop.f32.mrf.mxu0
        %v3161 = vadd.f32 0.0, %v3160
        %v3162 = vpop.f32.mrf.mxu0
        %3163 = vmatprep.mubr.bf16.mxu0 0
        %3164 = vmatmul.mubr.bf16.gmra.mxu0 %v3059
        %v3165 = vpop.f32.mrf.mxu0
        %v3166 = vadd.f32 0.0, %v3165
        %v3167 = vpop.f32.mrf.mxu0
        %v3168 = vpop.f32.mrf.mxu0
        %v3169 = vadd.f32 0.0, %v3168
        %v3170 = vpop.f32.mrf.mxu0
        %3171 = vmatprep.mubr.bf16.mxu0 0
        %3172 = vmatmul.mubr.bf16.gmra.mxu0 %v3062
        %v3173 = vpop.f32.mrf.mxu0
        %v3174 = vadd.f32 0.0, %v3173
        %v3175 = vpop.f32.mrf.mxu0
        %v3176 = vpop.f32.mrf.mxu0
        %v3177 = vadd.f32 0.0, %v3176
        %v3178 = vpop.f32.mrf.mxu0
        %3179 = vmatprep.mubr.bf16.mxu0 0
        %3180 = vmatmul.mubr.bf16.gmra.mxu0 %v3065
        %v3181 = vpop.f32.mrf.mxu0
        %v3182 = vadd.f32 0.0, %v3181
        %v3183 = vpop.f32.mrf.mxu0
        %v3184 = vpop.f32.mrf.mxu0
        %v3185 = vadd.f32 0.0, %v3184
        %v3186 = vpop.f32.mrf.mxu0
        %3187 = vmatprep.mubr.bf16.mxu0 0
        %3188 = vmatmul.mubr.bf16.gmra.mxu0 %v3068
        %v3189 = vpop.f32.mrf.mxu0
        %v3190 = vadd.f32 0.0, %v3189
        %v3191 = vpop.f32.mrf.mxu0
        %v3192 = vpop.f32.mrf.mxu0
        %v3193 = vadd.f32 0.0, %v3192
        %v3194 = vpop.f32.mrf.mxu0
        %3195 = vmatprep.mubr.bf16.mxu0 0
        %3196 = vmatmul.mubr.bf16.gmra.mxu0 %v3071
        %v3197 = vpop.f32.mrf.mxu0
        %v3198 = vadd.f32 0.0, %v3197
        %v3199 = vpop.f32.mrf.mxu0
        %v3200 = vpop.f32.mrf.mxu0
        %v3201 = vadd.f32 0.0, %v3200
        %v3202 = vpop.f32.mrf.mxu0
        %3203 = vmatprep.mubr.bf16.mxu0 0
        %3204 = vmatmul.mubr.bf16.gmra.mxu0 %v3074
        %v3205 = vpop.f32.mrf.mxu0
        %v3206 = vadd.f32 0.0, %v3205
        %v3207 = vpop.f32.mrf.mxu0
        %v3208 = vpop.f32.mrf.mxu0
        %v3209 = vadd.f32 0.0, %v3208
        %v3210 = vpop.f32.mrf.mxu0
        %3211 = vmatprep.mubr.bf16.mxu0 0
        %3212 = vmatmul.mubr.bf16.gmra.mxu0 %v3077
        %v3213 = vpop.f32.mrf.mxu0
        %v3214 = vadd.f32 0.0, %v3213
        %v3215 = vpop.f32.mrf.mxu0
        %v3216 = vpop.f32.mrf.mxu0
        %v3217 = vadd.f32 0.0, %v3216
        %v3218 = vpop.f32.mrf.mxu0
        %3219 = vmatprep.mubr.bf16.mxu0 0
        %3220 = vmatmul.mubr.bf16.gmra.mxu0 %v3080
        %v3221 = vpop.f32.mrf.mxu0
        %v3222 = vadd.f32 0.0, %v3221
        %v3223 = vpop.f32.mrf.mxu0
        %v3224 = vpop.f32.mrf.mxu0
        %v3225 = vadd.f32 0.0, %v3224
        %v3226 = vpop.f32.mrf.mxu0
        %3227 = vmatprep.mubr.bf16.mxu0 0
        %3228 = vmatmul.mubr.bf16.gmra.mxu0 %v3083
        %v3229 = vpop.f32.mrf.mxu0
        %v3230 = vadd.f32 0.0, %v3229
        %v3231 = vpop.f32.mrf.mxu0
        %v3232 = vpop.f32.mrf.mxu0
        %v3233 = vadd.f32 0.0, %v3232
        %v3234 = vpop.f32.mrf.mxu0
        %3235 = vmatprep.mubr.bf16.mxu0 0
        %3236 = vmatmul.mubr.bf16.gmra.mxu0 %v3086
        %v3237 = vpop.f32.mrf.mxu0
        %v3238 = vadd.f32 0.0, %v3237
        %v3239 = vpop.f32.mrf.mxu0
        %v3240 = vpop.f32.mrf.mxu0
        %v3241 = vadd.f32 0.0, %v3240
        %v3242 = vpop.f32.mrf.mxu0
        %3243 = vmatprep.mubr.bf16.mxu0 0
        %3244 = vmatmul.mubr.bf16.gmra.mxu0 %v3089
        %v3245 = vpop.f32.mrf.mxu0
        %v3246 = vadd.f32 0.0, %v3245
        %v3247 = vpop.f32.mrf.mxu0
        %v3248 = vpop.f32.mrf.mxu0
        %v3249 = vadd.f32 0.0, %v3248
        %v3250 = vpop.f32.mrf.mxu0
        %3251 = vdwg.mxu0
        %v3252 = vadd.f32 %v2866, %v3126
        %v3253 = vadd.f32 %v2867, %v3129
        %v3254 = vadd.f32 %v2868, %v3134
        %v3255 = vadd.f32 %v2869, %v3137
        %v3256 = vadd.f32 %v2870, %v3142
        %v3257 = vadd.f32 %v2871, %v3145
        %v3258 = vadd.f32 %v2872, %v3150
        %v3259 = vadd.f32 %v2873, %v3153
        %v3260 = vadd.f32 %v2874, %v3158
        %v3261 = vadd.f32 %v2875, %v3161
        %v3262 = vadd.f32 %v2876, %v3166
        %v3263 = vadd.f32 %v2877, %v3169
        %v3264 = vadd.f32 %v2878, %v3174
        %v3265 = vadd.f32 %v2879, %v3177
        %v3266 = vadd.f32 %v2880, %v3182
        %v3267 = vadd.f32 %v2881, %v3185
        %v3268 = vadd.f32 %v2882, %v3190
        %v3269 = vadd.f32 %v2883, %v3193
        %v3270 = vadd.f32 %v2884, %v3198
        %v3271 = vadd.f32 %v2885, %v3201
        %v3272 = vadd.f32 %v2886, %v3206
        %v3273 = vadd.f32 %v2887, %v3209
        %v3274 = vadd.f32 %v2888, %v3214
        %v3275 = vadd.f32 %v2889, %v3217
        %v3276 = vadd.f32 %v2890, %v3222
        %v3277 = vadd.f32 %v2891, %v3225
        %v3278 = vadd.f32 %v2892, %v3230
        %v3279 = vadd.f32 %v2893, %v3233
        %v3280 = vadd.f32 %v2894, %v3238
        %v3281 = vadd.f32 %v2895, %v3241
        %v3282 = vadd.f32 %v2896, %v3246
        %v3283 = vadd.f32 %v2897, %v3249
        %v3284 = vld [vmem:[%s682] sm:$0xf]
        %v3285 = vld [vmem:[%s682 + $0x4] sm:$0xf]
        %v3286 = vld [vmem:[%s682 + $0x8] sm:$0x1]
        %v3287 = vld [vmem:[%s682 + $0xc] sm:$0xf]
        %v3288 = vld [vmem:[%s682 + $0x10] sm:$0xf]
        %v3289 = vld [vmem:[%s682 + $0x14] sm:$0x1]
        %v3290 = vld [vmem:[%s682 + $0x18] sm:$0xf]
        %v3291 = vld [vmem:[%s682 + $0x1c] sm:$0xf]
        %v3292 = vld [vmem:[%s682 + $0x20] sm:$0x1]
        %v3293 = vld [vmem:[%s682 + $0x24] sm:$0xf]
        %v3294 = vld [vmem:[%s682 + $0x28] sm:$0xf]
        %v3295 = vld [vmem:[%s682 + $0x2c] sm:$0x1]
        %v3296 = vld [vmem:[%s682 + $0x30] sm:$0xf]
        %v3297 = vld [vmem:[%s682 + $0x34] sm:$0xf]
        %v3298 = vld [vmem:[%s682 + $0x38] sm:$0x1]
        %v3299 = vld [vmem:[%s682 + $0x3c] sm:$0xf]
        %v3300 = vld [vmem:[%s682 + $0x40] sm:$0xf]
        %v3301 = vld [vmem:[%s682 + $0x44] sm:$0x1]
        %v3302 = vld [vmem:[%s682 + $0x48] sm:$0xf]
        %v3303 = vld [vmem:[%s682 + $0x4c] sm:$0xf]
        %v3304 = vld [vmem:[%s682 + $0x50] sm:$0x1]
        %v3305 = vld [vmem:[%s682 + $0x54] sm:$0xf]
        %v3306 = vld [vmem:[%s682 + $0x58] sm:$0xf]
        %v3307 = vld [vmem:[%s682 + $0x5c] sm:$0x1]
        %v3308 = vld [vmem:[%s682 + $0x60] sm:$0xf]
        %v3309 = vld [vmem:[%s682 + $0x64] sm:$0xf]
        %v3310 = vld [vmem:[%s682 + $0x68] sm:$0x1]
        %v3311 = vld [vmem:[%s682 + $0x6c] sm:$0xf]
        %v3312 = vld [vmem:[%s682 + $0x70] sm:$0xf]
        %v3313 = vld [vmem:[%s682 + $0x74] sm:$0x1]
        %v3314 = vld [vmem:[%s682 + $0x78] sm:$0xf]
        %v3315 = vld [vmem:[%s682 + $0x7c] sm:$0xf]
        %v3316 = vld [vmem:[%s682 + $0x80] sm:$0x1]
        %v3317 = vld [vmem:[%s682 + $0x84] sm:$0xf]
        %v3318 = vld [vmem:[%s682 + $0x88] sm:$0xf]
        %v3319 = vld [vmem:[%s682 + $0x8c] sm:$0x1]
        %v3320 = vld [vmem:[%s682 + $0x90] sm:$0xf]
        %v3321 = vld [vmem:[%s682 + $0x94] sm:$0xf]
        %v3322 = vld [vmem:[%s682 + $0x98] sm:$0x1]
        %v3323 = vld [vmem:[%s682 + $0x9c] sm:$0xf]
        %v3324 = vld [vmem:[%s682 + $0xa0] sm:$0xf]
        %v3325 = vld [vmem:[%s682 + $0xa4] sm:$0x1]
        %v3326 = vld [vmem:[%s682 + $0xa8] sm:$0xf]
        %v3327 = vld [vmem:[%s682 + $0xac] sm:$0xf]
        %v3328 = vld [vmem:[%s682 + $0xb0] sm:$0x1]
        %v3329 = vld [vmem:[%s682 + $0xb4] sm:$0xf]
        %v3330 = vld [vmem:[%s682 + $0xb8] sm:$0xf]
        %v3331 = vld [vmem:[%s682 + $0xbc] sm:$0x1]
        %v3333 = vshrl.u32 %v3284, 16
        %v3335 = vrot.slane %v3333, 4
        %v3336 = vshll.u32 %v3284, 16
        %v3338 = vrot.slane %v3336, 5
        %v3339 = vor.u32 %v3335, %v3338
        %v3340 = vrot.slane %v3339, 4
        %v3342 = vshll.u32 %v3285, 16
        %v3344 = vrot.slane %v3342, 5
        %v3345 = vsel %vm1424, %v3340, %v3344
        %v3346 = vshrl.u32 %v3285, 16
        %v3348 = vrot.slane %v3346, 4
        %v3349 = vor.u32 %v3348, %v3344
        %v3350 = vrot.slane %v3349, 4
        %v3352 = vshll.u32 %v3286, 16
        %v3354 = vrot.slane %v3352, 5
        %v3355 = vsel %vm1424, %v3350, %v3354
        %v3357 = vshrl.u32 %v3287, 16
        %v3359 = vrot.slane %v3357, 4
        %v3360 = vshll.u32 %v3287, 16
        %v3362 = vrot.slane %v3360, 5
        %v3363 = vor.u32 %v3359, %v3362
        %v3364 = vrot.slane %v3363, 4
        %v3366 = vshll.u32 %v3288, 16
        %v3368 = vrot.slane %v3366, 5
        %v3369 = vsel %vm1424, %v3364, %v3368
        %v3370 = vshrl.u32 %v3288, 16
        %v3372 = vrot.slane %v3370, 4
        %v3373 = vor.u32 %v3372, %v3368
        %v3374 = vrot.slane %v3373, 4
        %v3376 = vshll.u32 %v3289, 16
        %v3378 = vrot.slane %v3376, 5
        %v3379 = vsel %vm1424, %v3374, %v3378
        %v3381 = vshrl.u32 %v3290, 16
        %v3383 = vrot.slane %v3381, 4
        %v3384 = vshll.u32 %v3290, 16
        %v3386 = vrot.slane %v3384, 5
        %v3387 = vor.u32 %v3383, %v3386
        %v3388 = vrot.slane %v3387, 4
        %v3390 = vshll.u32 %v3291, 16
        %v3392 = vrot.slane %v3390, 5
        %v3393 = vsel %vm1424, %v3388, %v3392
        %v3394 = vshrl.u32 %v3291, 16
        %v3396 = vrot.slane %v3394, 4
        %v3397 = vor.u32 %v3396, %v3392
        %v3398 = vrot.slane %v3397, 4
        %v3400 = vshll.u32 %v3292, 16
        %v3402 = vrot.slane %v3400, 5
        %v3403 = vsel %vm1424, %v3398, %v3402
        %v3405 = vshrl.u32 %v3293, 16
        %v3407 = vrot.slane %v3405, 4
        %v3408 = vshll.u32 %v3293, 16
        %v3410 = vrot.slane %v3408, 5
        %v3411 = vor.u32 %v3407, %v3410
        %v3412 = vrot.slane %v3411, 4
        %v3414 = vshll.u32 %v3294, 16
        %v3416 = vrot.slane %v3414, 5
        %v3417 = vsel %vm1424, %v3412, %v3416
        %v3418 = vshrl.u32 %v3294, 16
        %v3420 = vrot.slane %v3418, 4
        %v3421 = vor.u32 %v3420, %v3416
        %v3422 = vrot.slane %v3421, 4
        %v3424 = vshll.u32 %v3295, 16
        %v3426 = vrot.slane %v3424, 5
        %v3427 = vsel %vm1424, %v3422, %v3426
        %v3429 = vshrl.u32 %v3296, 16
        %v3431 = vrot.slane %v3429, 4
        %v3432 = vshll.u32 %v3296, 16
        %v3434 = vrot.slane %v3432, 5
        %v3435 = vor.u32 %v3431, %v3434
        %v3436 = vrot.slane %v3435, 4
        %v3438 = vshll.u32 %v3297, 16
        %v3440 = vrot.slane %v3438, 5
        %v3441 = vsel %vm1424, %v3436, %v3440
        %v3442 = vshrl.u32 %v3297, 16
        %v3444 = vrot.slane %v3442, 4
        %v3445 = vor.u32 %v3444, %v3440
        %v3446 = vrot.slane %v3445, 4
        %v3448 = vshll.u32 %v3298, 16
        %v3450 = vrot.slane %v3448, 5
        %v3451 = vsel %vm1424, %v3446, %v3450
        %v3453 = vshrl.u32 %v3299, 16
        %v3455 = vrot.slane %v3453, 4
        %v3456 = vshll.u32 %v3299, 16
        %v3458 = vrot.slane %v3456, 5
        %v3459 = vor.u32 %v3455, %v3458
        %v3460 = vrot.slane %v3459, 4
        %v3462 = vshll.u32 %v3300, 16
        %v3464 = vrot.slane %v3462, 5
        %v3465 = vsel %vm1424, %v3460, %v3464
        %v3466 = vshrl.u32 %v3300, 16
        %v3468 = vrot.slane %v3466, 4
        %v3469 = vor.u32 %v3468, %v3464
        %v3470 = vrot.slane %v3469, 4
        %v3472 = vshll.u32 %v3301, 16
        %v3474 = vrot.slane %v3472, 5
        %v3475 = vsel %vm1424, %v3470, %v3474
        %v3477 = vshrl.u32 %v3302, 16
        %v3479 = vrot.slane %v3477, 4
        %v3480 = vshll.u32 %v3302, 16
        %v3482 = vrot.slane %v3480, 5
        %v3483 = vor.u32 %v3479, %v3482
        %v3484 = vrot.slane %v3483, 4
        %v3486 = vshll.u32 %v3303, 16
        %v3488 = vrot.slane %v3486, 5
        %v3489 = vsel %vm1424, %v3484, %v3488
        %v3490 = vshrl.u32 %v3303, 16
        %v3492 = vrot.slane %v3490, 4
        %v3493 = vor.u32 %v3492, %v3488
        %v3494 = vrot.slane %v3493, 4
        %v3496 = vshll.u32 %v3304, 16
        %v3498 = vrot.slane %v3496, 5
        %v3499 = vsel %vm1424, %v3494, %v3498
        %v3501 = vshrl.u32 %v3305, 16
        %v3503 = vrot.slane %v3501, 4
        %v3504 = vshll.u32 %v3305, 16
        %v3506 = vrot.slane %v3504, 5
        %v3507 = vor.u32 %v3503, %v3506
        %v3508 = vrot.slane %v3507, 4
        %v3510 = vshll.u32 %v3306, 16
        %v3512 = vrot.slane %v3510, 5
        %v3513 = vsel %vm1424, %v3508, %v3512
        %v3514 = vshrl.u32 %v3306, 16
        %v3516 = vrot.slane %v3514, 4
        %v3517 = vor.u32 %v3516, %v3512
        %v3518 = vrot.slane %v3517, 4
        %v3520 = vshll.u32 %v3307, 16
        %v3522 = vrot.slane %v3520, 5
        %v3523 = vsel %vm1424, %v3518, %v3522
        %v3525 = vshrl.u32 %v3308, 16
        %v3527 = vrot.slane %v3525, 4
        %v3528 = vshll.u32 %v3308, 16
        %v3530 = vrot.slane %v3528, 5
        %v3531 = vor.u32 %v3527, %v3530
        %v3532 = vrot.slane %v3531, 4
        %v3534 = vshll.u32 %v3309, 16
        %v3536 = vrot.slane %v3534, 5
        %v3537 = vsel %vm1424, %v3532, %v3536
        %v3538 = vshrl.u32 %v3309, 16
        %v3540 = vrot.slane %v3538, 4
        %v3541 = vor.u32 %v3540, %v3536
        %v3542 = vrot.slane %v3541, 4
        %v3544 = vshll.u32 %v3310, 16
        %v3546 = vrot.slane %v3544, 5
        %v3547 = vsel %vm1424, %v3542, %v3546
        %v3549 = vshrl.u32 %v3311, 16
        %v3551 = vrot.slane %v3549, 4
        %v3552 = vshll.u32 %v3311, 16
        %v3554 = vrot.slane %v3552, 5
        %v3555 = vor.u32 %v3551, %v3554
        %v3556 = vrot.slane %v3555, 4
        %v3558 = vshll.u32 %v3312, 16
        %v3560 = vrot.slane %v3558, 5
        %v3561 = vsel %vm1424, %v3556, %v3560
        %v3562 = vshrl.u32 %v3312, 16
        %v3564 = vrot.slane %v3562, 4
        %v3565 = vor.u32 %v3564, %v3560
        %v3566 = vrot.slane %v3565, 4
        %v3568 = vshll.u32 %v3313, 16
        %v3570 = vrot.slane %v3568, 5
        %v3571 = vsel %vm1424, %v3566, %v3570
        %v3573 = vshrl.u32 %v3314, 16
        %v3575 = vrot.slane %v3573, 4
        %v3576 = vshll.u32 %v3314, 16
        %v3578 = vrot.slane %v3576, 5
        %v3579 = vor.u32 %v3575, %v3578
        %v3580 = vrot.slane %v3579, 4
        %v3582 = vshll.u32 %v3315, 16
        %v3584 = vrot.slane %v3582, 5
        %v3585 = vsel %vm1424, %v3580, %v3584
        %v3586 = vshrl.u32 %v3315, 16
        %v3588 = vrot.slane %v3586, 4
        %v3589 = vor.u32 %v3588, %v3584
        %v3590 = vrot.slane %v3589, 4
        %v3592 = vshll.u32 %v3316, 16
        %v3594 = vrot.slane %v3592, 5
        %v3595 = vsel %vm1424, %v3590, %v3594
        %v3597 = vshrl.u32 %v3317, 16
        %v3599 = vrot.slane %v3597, 4
        %v3600 = vshll.u32 %v3317, 16
        %v3602 = vrot.slane %v3600, 5
        %v3603 = vor.u32 %v3599, %v3602
        %v3604 = vrot.slane %v3603, 4
        %v3606 = vshll.u32 %v3318, 16
        %v3608 = vrot.slane %v3606, 5
        %v3609 = vsel %vm1424, %v3604, %v3608
        %v3610 = vshrl.u32 %v3318, 16
        %v3612 = vrot.slane %v3610, 4
        %v3613 = vor.u32 %v3612, %v3608
        %v3614 = vrot.slane %v3613, 4
        %v3616 = vshll.u32 %v3319, 16
        %v3618 = vrot.slane %v3616, 5
        %v3619 = vsel %vm1424, %v3614, %v3618
        %v3621 = vshrl.u32 %v3320, 16
        %v3623 = vrot.slane %v3621, 4
        %v3624 = vshll.u32 %v3320, 16
        %v3626 = vrot.slane %v3624, 5
        %v3627 = vor.u32 %v3623, %v3626
        %v3628 = vrot.slane %v3627, 4
        %v3630 = vshll.u32 %v3321, 16
        %v3632 = vrot.slane %v3630, 5
        %v3633 = vsel %vm1424, %v3628, %v3632
        %v3634 = vshrl.u32 %v3321, 16
        %v3636 = vrot.slane %v3634, 4
        %v3637 = vor.u32 %v3636, %v3632
        %v3638 = vrot.slane %v3637, 4
        %v3640 = vshll.u32 %v3322, 16
        %v3642 = vrot.slane %v3640, 5
        %v3643 = vsel %vm1424, %v3638, %v3642
        %v3645 = vshrl.u32 %v3323, 16
        %v3647 = vrot.slane %v3645, 4
        %v3648 = vshll.u32 %v3323, 16
        %v3650 = vrot.slane %v3648, 5
        %v3651 = vor.u32 %v3647, %v3650
        %v3652 = vrot.slane %v3651, 4
        %v3654 = vshll.u32 %v3324, 16
        %v3656 = vrot.slane %v3654, 5
        %v3657 = vsel %vm1424, %v3652, %v3656
        %v3658 = vshrl.u32 %v3324, 16
        %v3660 = vrot.slane %v3658, 4
        %v3661 = vor.u32 %v3660, %v3656
        %v3662 = vrot.slane %v3661, 4
        %v3664 = vshll.u32 %v3325, 16
        %v3666 = vrot.slane %v3664, 5
        %v3667 = vsel %vm1424, %v3662, %v3666
        %v3669 = vshrl.u32 %v3326, 16
        %v3671 = vrot.slane %v3669, 4
        %v3672 = vshll.u32 %v3326, 16
        %v3674 = vrot.slane %v3672, 5
        %v3675 = vor.u32 %v3671, %v3674
        %v3676 = vrot.slane %v3675, 4
        %v3678 = vshll.u32 %v3327, 16
        %v3680 = vrot.slane %v3678, 5
        %v3681 = vsel %vm1424, %v3676, %v3680
        %v3682 = vshrl.u32 %v3327, 16
        %v3684 = vrot.slane %v3682, 4
        %v3685 = vor.u32 %v3684, %v3680
        %v3686 = vrot.slane %v3685, 4
        %v3688 = vshll.u32 %v3328, 16
        %v3690 = vrot.slane %v3688, 5
        %v3691 = vsel %vm1424, %v3686, %v3690
        %v3693 = vshrl.u32 %v3329, 16
        %v3695 = vrot.slane %v3693, 4
        %v3696 = vshll.u32 %v3329, 16
        %v3698 = vrot.slane %v3696, 5
        %v3699 = vor.u32 %v3695, %v3698
        %v3700 = vrot.slane %v3699, 4
        %v3702 = vshll.u32 %v3330, 16
        %v3704 = vrot.slane %v3702, 5
        %v3705 = vsel %vm1424, %v3700, %v3704
        %v3706 = vshrl.u32 %v3330, 16
        %v3708 = vrot.slane %v3706, 4
        %v3709 = vor.u32 %v3708, %v3704
        %v3710 = vrot.slane %v3709, 4
        %v3712 = vshll.u32 %v3331, 16
        %v3714 = vrot.slane %v3712, 5
        %v3715 = vsel %vm1424, %v3710, %v3714
        %s3716 = scalar_lea.vmem %s2, 128
        %v3717 = vld [vmem:[%s3716] sm:$0xf]
        %v3718 = vld [vmem:[%s3716 + $0x4] sm:$0xf]
        %v3719 = vld [vmem:[%s3716 + $0x8] sm:$0xf]
        %v3720 = vld [vmem:[%s3716 + $0xc] sm:$0xf]
        %v3721 = vld [vmem:[%s3716 + $0x10] sm:$0xf]
        %v3722 = vld [vmem:[%s3716 + $0x14] sm:$0xf]
        %v3723 = vld [vmem:[%s3716 + $0x18] sm:$0xf]
        %v3724 = vld [vmem:[%s3716 + $0x1c] sm:$0xf]
        %v3725 = vunpack.c.l.b16 %v3345
        %v3726 = vunpack.c.l.b16 %v3355
        %v3727 = vunpack.c.l.b16 %v3369
        %v3728 = vunpack.c.l.b16 %v3379
        %v3729 = vunpack.c.l.b16 %v3393
        %v3730 = vunpack.c.l.b16 %v3403
        %v3731 = vunpack.c.l.b16 %v3417
        %v3732 = vunpack.c.l.b16 %v3427
        %v3733 = vunpack.c.l.b16 %v3441
        %v3734 = vunpack.c.l.b16 %v3451
        %v3735 = vunpack.c.l.b16 %v3465
        %v3736 = vunpack.c.l.b16 %v3475
        %v3737 = vunpack.c.l.b16 %v3489
        %v3738 = vunpack.c.l.b16 %v3499
        %v3739 = vunpack.c.l.b16 %v3513
        %v3740 = vunpack.c.l.b16 %v3523
        %v3741 = vunpack.c.l.b16 %v3537
        %v3742 = vunpack.c.l.b16 %v3547
        %v3743 = vunpack.c.l.b16 %v3561
        %v3744 = vunpack.c.l.b16 %v3571
        %v3745 = vunpack.c.l.b16 %v3585
        %v3746 = vunpack.c.l.b16 %v3595
        %v3747 = vunpack.c.l.b16 %v3609
        %v3748 = vunpack.c.l.b16 %v3619
        %v3749 = vunpack.c.l.b16 %v3633
        %v3750 = vunpack.c.l.b16 %v3643
        %v3751 = vunpack.c.l.b16 %v3657
        %v3752 = vunpack.c.l.b16 %v3667
        %v3753 = vunpack.c.l.b16 %v3681
        %v3754 = vunpack.c.l.b16 %v3691
        %v3755 = vunpack.c.l.b16 %v3705
        %v3756 = vunpack.c.l.b16 %v3715
        %v3757 = vpack.c.b16 %v3726, %v3725
        %v3758 = vpack.c.b16 %v3728, %v3727
        %v3759 = vpack.c.b16 %v3730, %v3729
        %v3760 = vpack.c.b16 %v3732, %v3731
        %v3761 = vpack.c.b16 %v3734, %v3733
        %v3762 = vpack.c.b16 %v3736, %v3735
        %v3763 = vpack.c.b16 %v3738, %v3737
        %v3764 = vpack.c.b16 %v3740, %v3739
        %v3765 = vpack.c.b16 %v3742, %v3741
        %v3766 = vpack.c.b16 %v3744, %v3743
        %v3767 = vpack.c.b16 %v3746, %v3745
        %v3768 = vpack.c.b16 %v3748, %v3747
        %v3769 = vpack.c.b16 %v3750, %v3749
        %v3770 = vpack.c.b16 %v3752, %v3751
        %v3771 = vpack.c.b16 %v3754, %v3753
        %v3772 = vpack.c.b16 %v3756, %v3755
        %v3781 = vunpack.c.l.b16 %v3717
        %v3782 = vunpack.c.l.b16 %v3718
        %v3783 = vunpack.c.l.b16 %v3719
        %v3784 = vunpack.c.l.b16 %v3720
        %v3785 = vunpack.c.l.b16 %v3721
        %v3786 = vunpack.c.l.b16 %v3722
        %v3787 = vunpack.c.l.b16 %v3723
        %v3788 = vunpack.c.l.b16 %v3724
        %v3789 = vpack.c.b16 %v3782, %v3781
        %v3790 = vpack.c.b16 %v3784, %v3783
        %v3791 = vpack.c.b16 %v3786, %v3785
        %v3792 = vpack.c.b16 %v3788, %v3787
        %v3798 = vsel %vm1890, %v3757, 0
        %v3801 = vsel %vm1890, %v3758, 0
        %v3804 = vsel %vm1890, %v3759, 0
        %v3807 = vsel %vm1890, %v3760, 0
        %v3810 = vsel %vm1890, %v3761, 0
        %v3813 = vsel %vm1890, %v3762, 0
        %v3816 = vsel %vm1890, %v3763, 0
        %v3819 = vsel %vm1890, %v3764, 0
        %v3822 = vsel %vm1890, %v3765, 0
        %v3825 = vsel %vm1890, %v3766, 0
        %v3828 = vsel %vm1890, %v3767, 0
        %v3831 = vsel %vm1890, %v3768, 0
        %v3834 = vsel %vm1890, %v3769, 0
        %v3837 = vsel %vm1890, %v3770, 0
        %v3840 = vsel %vm1890, %v3771, 0
        %v3843 = vsel %vm1890, %v3772, 0
        %3845 = vmatprep.subr.bf16.mxu0 0
        %3846 = vmatpush1.bf16.msra.mxu0 0
        %3847 = vmatprep.subr.bf16.mxu0 0
        %3848 = vmatpush1.bf16.msra.mxu0 0
        %3849 = vmatprep.subr.bf16.mxu0 0
        %3850 = vmatpush1.bf16.msra.mxu0 0
        %3851 = vmatprep.subr.bf16.mxu0 0
        %3852 = vmatpush1.bf16.msra.mxu0 0
        %3853 = vmatprep.subr.bf16.mxu0 0
        %3854 = vmatpush1.bf16.msra.mxu0 %v3792
        %3855 = vmatprep.subr.bf16.mxu0 0
        %3856 = vmatpush1.bf16.msra.mxu0 %v3791
        %3857 = vmatprep.subr.bf16.mxu0 0
        %3858 = vmatpush1.bf16.msra.mxu0 %v3790
        %3859 = vmatprep.subr.bf16.mxu0 0
        %3860 = vmatpush1.bf16.msra.mxu0 %v3789
        %3861 = vmatprep.subr.bf16.mxu0 0
        %3862 = vmatpush2.bf16.msra.mxu0 0
        %3863 = vmatprep.subr.bf16.mxu0 0
        %3864 = vmatpush2.bf16.msra.mxu0 0
        %3865 = vmatprep.subr.bf16.mxu0 0
        %3866 = vmatpush2.bf16.msra.mxu0 0
        %3867 = vmatprep.subr.bf16.mxu0 0
        %3868 = vmatpush2.bf16.msra.mxu0 0
        %3869 = vmatprep.subr.bf16.mxu0 0
        %3870 = vmatpush2.bf16.msra.mxu0 0
        %3871 = vmatprep.subr.bf16.mxu0 0
        %3872 = vmatpush2.bf16.msra.mxu0 0
        %3873 = vmatprep.subr.bf16.mxu0 0
        %3874 = vmatpush2.bf16.msra.mxu0 0
        %3875 = vmatprep.subr.bf16.mxu0 0
        %3876 = vmatpush2.bf16.msra.mxu0 0
        %3877 = vmatprep.mubr.bf16.mxu0 0
        %3878 = vmatmul.mubr.bf16.gmra.mxu0 %v3798
        %v3879 = vpop.f32.mrf.mxu0
        %v3880 = vadd.f32 0.0, %v3879
        %v3881 = vpop.f32.mrf.mxu0
        %v3882 = vpop.f32.mrf.mxu0
        %v3883 = vadd.f32 0.0, %v3882
        %v3884 = vpop.f32.mrf.mxu0
        %3885 = vmatprep.mubr.bf16.mxu0 0
        %3886 = vmatmul.mubr.bf16.gmra.mxu0 %v3801
        %v3887 = vpop.f32.mrf.mxu0
        %v3888 = vadd.f32 0.0, %v3887
        %v3889 = vpop.f32.mrf.mxu0
        %v3890 = vpop.f32.mrf.mxu0
        %v3891 = vadd.f32 0.0, %v3890
        %v3892 = vpop.f32.mrf.mxu0
        %3893 = vmatprep.mubr.bf16.mxu0 0
        %3894 = vmatmul.mubr.bf16.gmra.mxu0 %v3804
        %v3895 = vpop.f32.mrf.mxu0
        %v3896 = vadd.f32 0.0, %v3895
        %v3897 = vpop.f32.mrf.mxu0
        %v3898 = vpop.f32.mrf.mxu0
        %v3899 = vadd.f32 0.0, %v3898
        %v3900 = vpop.f32.mrf.mxu0
        %3901 = vmatprep.mubr.bf16.mxu0 0
        %3902 = vmatmul.mubr.bf16.gmra.mxu0 %v3807
        %v3903 = vpop.f32.mrf.mxu0
        %v3904 = vadd.f32 0.0, %v3903
        %v3905 = vpop.f32.mrf.mxu0
        %v3906 = vpop.f32.mrf.mxu0
        %v3907 = vadd.f32 0.0, %v3906
        %v3908 = vpop.f32.mrf.mxu0
        %3909 = vmatprep.mubr.bf16.mxu0 0
        %3910 = vmatmul.mubr.bf16.gmra.mxu0 %v3810
        %v3911 = vpop.f32.mrf.mxu0
        %v3912 = vadd.f32 0.0, %v3911
        %v3913 = vpop.f32.mrf.mxu0
        %v3914 = vpop.f32.mrf.mxu0
        %v3915 = vadd.f32 0.0, %v3914
        %v3916 = vpop.f32.mrf.mxu0
        %3917 = vmatprep.mubr.bf16.mxu0 0
        %3918 = vmatmul.mubr.bf16.gmra.mxu0 %v3813
        %v3919 = vpop.f32.mrf.mxu0
        %v3920 = vadd.f32 0.0, %v3919
        %v3921 = vpop.f32.mrf.mxu0
        %v3922 = vpop.f32.mrf.mxu0
        %v3923 = vadd.f32 0.0, %v3922
        %v3924 = vpop.f32.mrf.mxu0
        %3925 = vmatprep.mubr.bf16.mxu0 0
        %3926 = vmatmul.mubr.bf16.gmra.mxu0 %v3816
        %v3927 = vpop.f32.mrf.mxu0
        %v3928 = vadd.f32 0.0, %v3927
        %v3929 = vpop.f32.mrf.mxu0
        %v3930 = vpop.f32.mrf.mxu0
        %v3931 = vadd.f32 0.0, %v3930
        %v3932 = vpop.f32.mrf.mxu0
        %3933 = vmatprep.mubr.bf16.mxu0 0
        %3934 = vmatmul.mubr.bf16.gmra.mxu0 %v3819
        %v3935 = vpop.f32.mrf.mxu0
        %v3936 = vadd.f32 0.0, %v3935
        %v3937 = vpop.f32.mrf.mxu0
        %v3938 = vpop.f32.mrf.mxu0
        %v3939 = vadd.f32 0.0, %v3938
        %v3940 = vpop.f32.mrf.mxu0
        %3941 = vmatprep.mubr.bf16.mxu0 0
        %3942 = vmatmul.mubr.bf16.gmra.mxu0 %v3822
        %v3943 = vpop.f32.mrf.mxu0
        %v3944 = vadd.f32 0.0, %v3943
        %v3945 = vpop.f32.mrf.mxu0
        %v3946 = vpop.f32.mrf.mxu0
        %v3947 = vadd.f32 0.0, %v3946
        %v3948 = vpop.f32.mrf.mxu0
        %3949 = vmatprep.mubr.bf16.mxu0 0
        %3950 = vmatmul.mubr.bf16.gmra.mxu0 %v3825
        %v3951 = vpop.f32.mrf.mxu0
        %v3952 = vadd.f32 0.0, %v3951
        %v3953 = vpop.f32.mrf.mxu0
        %v3954 = vpop.f32.mrf.mxu0
        %v3955 = vadd.f32 0.0, %v3954
        %v3956 = vpop.f32.mrf.mxu0
        %3957 = vmatprep.mubr.bf16.mxu0 0
        %3958 = vmatmul.mubr.bf16.gmra.mxu0 %v3828
        %v3959 = vpop.f32.mrf.mxu0
        %v3960 = vadd.f32 0.0, %v3959
        %v3961 = vpop.f32.mrf.mxu0
        %v3962 = vpop.f32.mrf.mxu0
        %v3963 = vadd.f32 0.0, %v3962
        %v3964 = vpop.f32.mrf.mxu0
        %3965 = vmatprep.mubr.bf16.mxu0 0
        %3966 = vmatmul.mubr.bf16.gmra.mxu0 %v3831
        %v3967 = vpop.f32.mrf.mxu0
        %v3968 = vadd.f32 0.0, %v3967
        %v3969 = vpop.f32.mrf.mxu0
        %v3970 = vpop.f32.mrf.mxu0
        %v3971 = vadd.f32 0.0, %v3970
        %v3972 = vpop.f32.mrf.mxu0
        %3973 = vmatprep.mubr.bf16.mxu0 0
        %3974 = vmatmul.mubr.bf16.gmra.mxu0 %v3834
        %v3975 = vpop.f32.mrf.mxu0
        %v3976 = vadd.f32 0.0, %v3975
        %v3977 = vpop.f32.mrf.mxu0
        %v3978 = vpop.f32.mrf.mxu0
        %v3979 = vadd.f32 0.0, %v3978
        %v3980 = vpop.f32.mrf.mxu0
        %3981 = vmatprep.mubr.bf16.mxu0 0
        %3982 = vmatmul.mubr.bf16.gmra.mxu0 %v3837
        %v3983 = vpop.f32.mrf.mxu0
        %v3984 = vadd.f32 0.0, %v3983
        %v3985 = vpop.f32.mrf.mxu0
        %v3986 = vpop.f32.mrf.mxu0
        %v3987 = vadd.f32 0.0, %v3986
        %v3988 = vpop.f32.mrf.mxu0
        %3989 = vmatprep.mubr.bf16.mxu0 0
        %3990 = vmatmul.mubr.bf16.gmra.mxu0 %v3840
        %v3991 = vpop.f32.mrf.mxu0
        %v3992 = vadd.f32 0.0, %v3991
        %v3993 = vpop.f32.mrf.mxu0
        %v3994 = vpop.f32.mrf.mxu0
        %v3995 = vadd.f32 0.0, %v3994
        %v3996 = vpop.f32.mrf.mxu0
        %3997 = vmatprep.mubr.bf16.mxu0 0
        %3998 = vmatmul.mubr.bf16.gmra.mxu0 %v3843
        %v3999 = vpop.f32.mrf.mxu0
        %v4000 = vadd.f32 0.0, %v3999
        %v4001 = vpop.f32.mrf.mxu0
        %v4002 = vpop.f32.mrf.mxu0
        %v4003 = vadd.f32 0.0, %v4002
        %v4004 = vpop.f32.mrf.mxu0
        %4005 = vdwg.mxu0
        %v4006 = vadd.f32 %v3252, %v3880
        %v4007 = vadd.f32 %v3253, %v3883
        %v4008 = vadd.f32 %v3254, %v3888
        %v4009 = vadd.f32 %v3255, %v3891
        %v4010 = vadd.f32 %v3256, %v3896
        %v4011 = vadd.f32 %v3257, %v3899
        %v4012 = vadd.f32 %v3258, %v3904
        %v4013 = vadd.f32 %v3259, %v3907
        %v4014 = vadd.f32 %v3260, %v3912
        %v4015 = vadd.f32 %v3261, %v3915
        %v4016 = vadd.f32 %v3262, %v3920
        %v4017 = vadd.f32 %v3263, %v3923
        %v4018 = vadd.f32 %v3264, %v3928
        %v4019 = vadd.f32 %v3265, %v3931
        %v4020 = vadd.f32 %v3266, %v3936
        %v4021 = vadd.f32 %v3267, %v3939
        %v4022 = vadd.f32 %v3268, %v3944
        %v4023 = vadd.f32 %v3269, %v3947
        %v4024 = vadd.f32 %v3270, %v3952
        %v4025 = vadd.f32 %v3271, %v3955
        %v4026 = vadd.f32 %v3272, %v3960
        %v4027 = vadd.f32 %v3273, %v3963
        %v4028 = vadd.f32 %v3274, %v3968
        %v4029 = vadd.f32 %v3275, %v3971
        %v4030 = vadd.f32 %v3276, %v3976
        %v4031 = vadd.f32 %v3277, %v3979
        %v4032 = vadd.f32 %v3278, %v3984
        %v4033 = vadd.f32 %v3279, %v3987
        %v4034 = vadd.f32 %v3280, %v3992
        %v4035 = vadd.f32 %v3281, %v3995
        %v4036 = vadd.f32 %v3282, %v4000
        %v4037 = vadd.f32 %v3283, %v4003
        %v4038 = vld [vmem:[%s682] sm:$0xe]
        %v4039 = vld [vmem:[%s682 + $0xc] sm:$0xe]
        %v4040 = vld [vmem:[%s682 + $0x18] sm:$0xe]
        %v4041 = vld [vmem:[%s682 + $0x24] sm:$0xe]
        %v4042 = vld [vmem:[%s682 + $0x30] sm:$0xe]
        %v4043 = vld [vmem:[%s682 + $0x3c] sm:$0xe]
        %v4044 = vld [vmem:[%s682 + $0x48] sm:$0xe]
        %v4045 = vld [vmem:[%s682 + $0x54] sm:$0xe]
        %v4046 = vld [vmem:[%s682 + $0x60] sm:$0xe]
        %v4047 = vld [vmem:[%s682 + $0x6c] sm:$0xe]
        %v4048 = vld [vmem:[%s682 + $0x78] sm:$0xe]
        %v4049 = vld [vmem:[%s682 + $0x84] sm:$0xe]
        %v4050 = vld [vmem:[%s682 + $0x90] sm:$0xe]
        %v4051 = vld [vmem:[%s682 + $0x9c] sm:$0xe]
        %v4052 = vld [vmem:[%s682 + $0xa8] sm:$0xe]
        %v4053 = vld [vmem:[%s682 + $0xb4] sm:$0xe]
        %v4102 = vrot.slane %v4038, 5
        %v4103 = vrot.slane %v4102, 4
        %v4104 = vrot.slane %v3285, 5
        %v4105 = vsel %vm2463, %v4103, %v4104
        %v4106 = vrot.slane %v4104, 4
        %v4107 = vrot.slane %v3286, 5
        %v4108 = vsel %vm2463, %v4106, %v4107
        %v4109 = vrot.slane %v4039, 5
        %v4110 = vrot.slane %v4109, 4
        %v4111 = vrot.slane %v3288, 5
        %v4112 = vsel %vm2463, %v4110, %v4111
        %v4113 = vrot.slane %v4111, 4
        %v4114 = vrot.slane %v3289, 5
        %v4115 = vsel %vm2463, %v4113, %v4114
        %v4116 = vrot.slane %v4040, 5
        %v4117 = vrot.slane %v4116, 4
        %v4118 = vrot.slane %v3291, 5
        %v4119 = vsel %vm2463, %v4117, %v4118
        %v4120 = vrot.slane %v4118, 4
        %v4121 = vrot.slane %v3292, 5
        %v4122 = vsel %vm2463, %v4120, %v4121
        %v4123 = vrot.slane %v4041, 5
        %v4124 = vrot.slane %v4123, 4
        %v4125 = vrot.slane %v3294, 5
        %v4126 = vsel %vm2463, %v4124, %v4125
        %v4127 = vrot.slane %v4125, 4
        %v4128 = vrot.slane %v3295, 5
        %v4129 = vsel %vm2463, %v4127, %v4128
        %v4130 = vrot.slane %v4042, 5
        %v4131 = vrot.slane %v4130, 4
        %v4132 = vrot.slane %v3297, 5
        %v4133 = vsel %vm2463, %v4131, %v4132
        %v4134 = vrot.slane %v4132, 4
        %v4135 = vrot.slane %v3298, 5
        %v4136 = vsel %vm2463, %v4134, %v4135
        %v4137 = vrot.slane %v4043, 5
        %v4138 = vrot.slane %v4137, 4
        %v4139 = vrot.slane %v3300, 5
        %v4140 = vsel %vm2463, %v4138, %v4139
        %v4141 = vrot.slane %v4139, 4
        %v4142 = vrot.slane %v3301, 5
        %v4143 = vsel %vm2463, %v4141, %v4142
        %v4144 = vrot.slane %v4044, 5
        %v4145 = vrot.slane %v4144, 4
        %v4146 = vrot.slane %v3303, 5
        %v4147 = vsel %vm2463, %v4145, %v4146
        %v4148 = vrot.slane %v4146, 4
        %v4149 = vrot.slane %v3304, 5
        %v4150 = vsel %vm2463, %v4148, %v4149
        %v4151 = vrot.slane %v4045, 5
        %v4152 = vrot.slane %v4151, 4
        %v4153 = vrot.slane %v3306, 5
        %v4154 = vsel %vm2463, %v4152, %v4153
        %v4155 = vrot.slane %v4153, 4
        %v4156 = vrot.slane %v3307, 5
        %v4157 = vsel %vm2463, %v4155, %v4156
        %v4158 = vrot.slane %v4046, 5
        %v4159 = vrot.slane %v4158, 4
        %v4160 = vrot.slane %v3309, 5
        %v4161 = vsel %vm2463, %v4159, %v4160
        %v4162 = vrot.slane %v4160, 4
        %v4163 = vrot.slane %v3310, 5
        %v4164 = vsel %vm2463, %v4162, %v4163
        %v4165 = vrot.slane %v4047, 5
        %v4166 = vrot.slane %v4165, 4
        %v4167 = vrot.slane %v3312, 5
        %v4168 = vsel %vm2463, %v4166, %v4167
        %v4169 = vrot.slane %v4167, 4
        %v4170 = vrot.slane %v3313, 5
        %v4171 = vsel %vm2463, %v4169, %v4170
        %v4172 = vrot.slane %v4048, 5
        %v4173 = vrot.slane %v4172, 4
        %v4174 = vrot.slane %v3315, 5
        %v4175 = vsel %vm2463, %v4173, %v4174
        %v4176 = vrot.slane %v4174, 4
        %v4177 = vrot.slane %v3316, 5
        %v4178 = vsel %vm2463, %v4176, %v4177
        %v4179 = vrot.slane %v4049, 5
        %v4180 = vrot.slane %v4179, 4
        %v4181 = vrot.slane %v3318, 5
        %v4182 = vsel %vm2463, %v4180, %v4181
        %v4183 = vrot.slane %v4181, 4
        %v4184 = vrot.slane %v3319, 5
        %v4185 = vsel %vm2463, %v4183, %v4184
        %v4186 = vrot.slane %v4050, 5
        %v4187 = vrot.slane %v4186, 4
        %v4188 = vrot.slane %v3321, 5
        %v4189 = vsel %vm2463, %v4187, %v4188
        %v4190 = vrot.slane %v4188, 4
        %v4191 = vrot.slane %v3322, 5
        %v4192 = vsel %vm2463, %v4190, %v4191
        %v4193 = vrot.slane %v4051, 5
        %v4194 = vrot.slane %v4193, 4
        %v4195 = vrot.slane %v3324, 5
        %v4196 = vsel %vm2463, %v4194, %v4195
        %v4197 = vrot.slane %v4195, 4
        %v4198 = vrot.slane %v3325, 5
        %v4199 = vsel %vm2463, %v4197, %v4198
        %v4200 = vrot.slane %v4052, 5
        %v4201 = vrot.slane %v4200, 4
        %v4202 = vrot.slane %v3327, 5
        %v4203 = vsel %vm2463, %v4201, %v4202
        %v4204 = vrot.slane %v4202, 4
        %v4205 = vrot.slane %v3328, 5
        %v4206 = vsel %vm2463, %v4204, %v4205
        %v4207 = vrot.slane %v4053, 5
        %v4208 = vrot.slane %v4207, 4
        %v4209 = vrot.slane %v3330, 5
        %v4210 = vsel %vm2463, %v4208, %v4209
        %v4211 = vrot.slane %v4209, 4
        %v4212 = vrot.slane %v3331, 5
        %v4213 = vsel %vm2463, %v4211, %v4212
        %s4214 = scalar_lea.vmem %s2, 160
        %v4215 = vld [vmem:[%s4214] sm:$0xf]
        %v4216 = vld [vmem:[%s4214 + $0x4] sm:$0xf]
        %v4217 = vld [vmem:[%s4214 + $0x8] sm:$0xf]
        %v4218 = vld [vmem:[%s4214 + $0xc] sm:$0xf]
        %v4219 = vld [vmem:[%s4214 + $0x10] sm:$0xf]
        %v4220 = vld [vmem:[%s4214 + $0x14] sm:$0xf]
        %v4221 = vld [vmem:[%s4214 + $0x18] sm:$0xf]
        %v4222 = vld [vmem:[%s4214 + $0x1c] sm:$0xf]
        %v4223 = vunpack.c.l.b16 %v4105
        %v4224 = vunpack.c.l.b16 %v4108
        %v4225 = vunpack.c.l.b16 %v4112
        %v4226 = vunpack.c.l.b16 %v4115
        %v4227 = vunpack.c.l.b16 %v4119
        %v4228 = vunpack.c.l.b16 %v4122
        %v4229 = vunpack.c.l.b16 %v4126
        %v4230 = vunpack.c.l.b16 %v4129
        %v4231 = vunpack.c.l.b16 %v4133
        %v4232 = vunpack.c.l.b16 %v4136
        %v4233 = vunpack.c.l.b16 %v4140
        %v4234 = vunpack.c.l.b16 %v4143
        %v4235 = vunpack.c.l.b16 %v4147
        %v4236 = vunpack.c.l.b16 %v4150
        %v4237 = vunpack.c.l.b16 %v4154
        %v4238 = vunpack.c.l.b16 %v4157
        %v4239 = vunpack.c.l.b16 %v4161
        %v4240 = vunpack.c.l.b16 %v4164
        %v4241 = vunpack.c.l.b16 %v4168
        %v4242 = vunpack.c.l.b16 %v4171
        %v4243 = vunpack.c.l.b16 %v4175
        %v4244 = vunpack.c.l.b16 %v4178
        %v4245 = vunpack.c.l.b16 %v4182
        %v4246 = vunpack.c.l.b16 %v4185
        %v4247 = vunpack.c.l.b16 %v4189
        %v4248 = vunpack.c.l.b16 %v4192
        %v4249 = vunpack.c.l.b16 %v4196
        %v4250 = vunpack.c.l.b16 %v4199
        %v4251 = vunpack.c.l.b16 %v4203
        %v4252 = vunpack.c.l.b16 %v4206
        %v4253 = vunpack.c.l.b16 %v4210
        %v4254 = vunpack.c.l.b16 %v4213
        %v4255 = vpack.c.b16 %v4224, %v4223
        %v4256 = vpack.c.b16 %v4226, %v4225
        %v4257 = vpack.c.b16 %v4228, %v4227
        %v4258 = vpack.c.b16 %v4230, %v4229
        %v4259 = vpack.c.b16 %v4232, %v4231
        %v4260 = vpack.c.b16 %v4234, %v4233
        %v4261 = vpack.c.b16 %v4236, %v4235
        %v4262 = vpack.c.b16 %v4238, %v4237
        %v4263 = vpack.c.b16 %v4240, %v4239
        %v4264 = vpack.c.b16 %v4242, %v4241
        %v4265 = vpack.c.b16 %v4244, %v4243
        %v4266 = vpack.c.b16 %v4246, %v4245
        %v4267 = vpack.c.b16 %v4248, %v4247
        %v4268 = vpack.c.b16 %v4250, %v4249
        %v4269 = vpack.c.b16 %v4252, %v4251
        %v4270 = vpack.c.b16 %v4254, %v4253
        %v4279 = vunpack.c.l.b16 %v4215
        %v4280 = vunpack.c.l.b16 %v4216
        %v4281 = vunpack.c.l.b16 %v4217
        %v4282 = vunpack.c.l.b16 %v4218
        %v4283 = vunpack.c.l.b16 %v4219
        %v4284 = vunpack.c.l.b16 %v4220
        %v4285 = vunpack.c.l.b16 %v4221
        %v4286 = vunpack.c.l.b16 %v4222
        %v4287 = vpack.c.b16 %v4280, %v4279
        %v4288 = vpack.c.b16 %v4282, %v4281
        %v4289 = vpack.c.b16 %v4284, %v4283
        %v4290 = vpack.c.b16 %v4286, %v4285
        %v4296 = vsel %vm1890, %v4255, 0
        %v4299 = vsel %vm1890, %v4256, 0
        %v4302 = vsel %vm1890, %v4257, 0
        %v4305 = vsel %vm1890, %v4258, 0
        %v4308 = vsel %vm1890, %v4259, 0
        %v4311 = vsel %vm1890, %v4260, 0
        %v4314 = vsel %vm1890, %v4261, 0
        %v4317 = vsel %vm1890, %v4262, 0
        %v4320 = vsel %vm1890, %v4263, 0
        %v4323 = vsel %vm1890, %v4264, 0
        %v4326 = vsel %vm1890, %v4265, 0
        %v4329 = vsel %vm1890, %v4266, 0
        %v4332 = vsel %vm1890, %v4267, 0
        %v4335 = vsel %vm1890, %v4268, 0
        %v4338 = vsel %vm1890, %v4269, 0
        %v4341 = vsel %vm1890, %v4270, 0
        %4343 = vmatprep.subr.bf16.mxu0 0
        %4344 = vmatpush1.bf16.msra.mxu0 0
        %4345 = vmatprep.subr.bf16.mxu0 0
        %4346 = vmatpush1.bf16.msra.mxu0 0
        %4347 = vmatprep.subr.bf16.mxu0 0
        %4348 = vmatpush1.bf16.msra.mxu0 0
        %4349 = vmatprep.subr.bf16.mxu0 0
        %4350 = vmatpush1.bf16.msra.mxu0 0
        %4351 = vmatprep.subr.bf16.mxu0 0
        %4352 = vmatpush1.bf16.msra.mxu0 %v4290
        %4353 = vmatprep.subr.bf16.mxu0 0
        %4354 = vmatpush1.bf16.msra.mxu0 %v4289
        %4355 = vmatprep.subr.bf16.mxu0 0
        %4356 = vmatpush1.bf16.msra.mxu0 %v4288
        %4357 = vmatprep.subr.bf16.mxu0 0
        %4358 = vmatpush1.bf16.msra.mxu0 %v4287
        %4359 = vmatprep.subr.bf16.mxu0 0
        %4360 = vmatpush2.bf16.msra.mxu0 0
        %4361 = vmatprep.subr.bf16.mxu0 0
        %4362 = vmatpush2.bf16.msra.mxu0 0
        %4363 = vmatprep.subr.bf16.mxu0 0
        %4364 = vmatpush2.bf16.msra.mxu0 0
        %4365 = vmatprep.subr.bf16.mxu0 0
        %4366 = vmatpush2.bf16.msra.mxu0 0
        %4367 = vmatprep.subr.bf16.mxu0 0
        %4368 = vmatpush2.bf16.msra.mxu0 0
        %4369 = vmatprep.subr.bf16.mxu0 0
        %4370 = vmatpush2.bf16.msra.mxu0 0
        %4371 = vmatprep.subr.bf16.mxu0 0
        %4372 = vmatpush2.bf16.msra.mxu0 0
        %4373 = vmatprep.subr.bf16.mxu0 0
        %4374 = vmatpush2.bf16.msra.mxu0 0
        %4375 = vmatprep.mubr.bf16.mxu0 0
        %4376 = vmatmul.mubr.bf16.gmra.mxu0 %v4296
        %v4377 = vpop.f32.mrf.mxu0
        %v4378 = vadd.f32 0.0, %v4377
        %v4379 = vpop.f32.mrf.mxu0
        %v4380 = vpop.f32.mrf.mxu0
        %v4381 = vadd.f32 0.0, %v4380
        %v4382 = vpop.f32.mrf.mxu0
        %4383 = vmatprep.mubr.bf16.mxu0 0
        %4384 = vmatmul.mubr.bf16.gmra.mxu0 %v4299
        %v4385 = vpop.f32.mrf.mxu0
        %v4386 = vadd.f32 0.0, %v4385
        %v4387 = vpop.f32.mrf.mxu0
        %v4388 = vpop.f32.mrf.mxu0
        %v4389 = vadd.f32 0.0, %v4388
        %v4390 = vpop.f32.mrf.mxu0
        %4391 = vmatprep.mubr.bf16.mxu0 0
        %4392 = vmatmul.mubr.bf16.gmra.mxu0 %v4302
        %v4393 = vpop.f32.mrf.mxu0
        %v4394 = vadd.f32 0.0, %v4393
        %v4395 = vpop.f32.mrf.mxu0
        %v4396 = vpop.f32.mrf.mxu0
        %v4397 = vadd.f32 0.0, %v4396
        %v4398 = vpop.f32.mrf.mxu0
        %4399 = vmatprep.mubr.bf16.mxu0 0
        %4400 = vmatmul.mubr.bf16.gmra.mxu0 %v4305
        %v4401 = vpop.f32.mrf.mxu0
        %v4402 = vadd.f32 0.0, %v4401
        %v4403 = vpop.f32.mrf.mxu0
        %v4404 = vpop.f32.mrf.mxu0
        %v4405 = vadd.f32 0.0, %v4404
        %v4406 = vpop.f32.mrf.mxu0
        %4407 = vmatprep.mubr.bf16.mxu0 0
        %4408 = vmatmul.mubr.bf16.gmra.mxu0 %v4308
        %v4409 = vpop.f32.mrf.mxu0
        %v4410 = vadd.f32 0.0, %v4409
        %v4411 = vpop.f32.mrf.mxu0
        %v4412 = vpop.f32.mrf.mxu0
        %v4413 = vadd.f32 0.0, %v4412
        %v4414 = vpop.f32.mrf.mxu0
        %4415 = vmatprep.mubr.bf16.mxu0 0
        %4416 = vmatmul.mubr.bf16.gmra.mxu0 %v4311
        %v4417 = vpop.f32.mrf.mxu0
        %v4418 = vadd.f32 0.0, %v4417
        %v4419 = vpop.f32.mrf.mxu0
        %v4420 = vpop.f32.mrf.mxu0
        %v4421 = vadd.f32 0.0, %v4420
        %v4422 = vpop.f32.mrf.mxu0
        %4423 = vmatprep.mubr.bf16.mxu0 0
        %4424 = vmatmul.mubr.bf16.gmra.mxu0 %v4314
        %v4425 = vpop.f32.mrf.mxu0
        %v4426 = vadd.f32 0.0, %v4425
        %v4427 = vpop.f32.mrf.mxu0
        %v4428 = vpop.f32.mrf.mxu0
        %v4429 = vadd.f32 0.0, %v4428
        %v4430 = vpop.f32.mrf.mxu0
        %4431 = vmatprep.mubr.bf16.mxu0 0
        %4432 = vmatmul.mubr.bf16.gmra.mxu0 %v4317
        %v4433 = vpop.f32.mrf.mxu0
        %v4434 = vadd.f32 0.0, %v4433
        %v4435 = vpop.f32.mrf.mxu0
        %v4436 = vpop.f32.mrf.mxu0
        %v4437 = vadd.f32 0.0, %v4436
        %v4438 = vpop.f32.mrf.mxu0
        %4439 = vmatprep.mubr.bf16.mxu0 0
        %4440 = vmatmul.mubr.bf16.gmra.mxu0 %v4320
        %v4441 = vpop.f32.mrf.mxu0
        %v4442 = vadd.f32 0.0, %v4441
        %v4443 = vpop.f32.mrf.mxu0
        %v4444 = vpop.f32.mrf.mxu0
        %v4445 = vadd.f32 0.0, %v4444
        %v4446 = vpop.f32.mrf.mxu0
        %4447 = vmatprep.mubr.bf16.mxu0 0
        %4448 = vmatmul.mubr.bf16.gmra.mxu0 %v4323
        %v4449 = vpop.f32.mrf.mxu0
        %v4450 = vadd.f32 0.0, %v4449
        %v4451 = vpop.f32.mrf.mxu0
        %v4452 = vpop.f32.mrf.mxu0
        %v4453 = vadd.f32 0.0, %v4452
        %v4454 = vpop.f32.mrf.mxu0
        %4455 = vmatprep.mubr.bf16.mxu0 0
        %4456 = vmatmul.mubr.bf16.gmra.mxu0 %v4326
        %v4457 = vpop.f32.mrf.mxu0
        %v4458 = vadd.f32 0.0, %v4457
        %v4459 = vpop.f32.mrf.mxu0
        %v4460 = vpop.f32.mrf.mxu0
        %v4461 = vadd.f32 0.0, %v4460
        %v4462 = vpop.f32.mrf.mxu0
        %4463 = vmatprep.mubr.bf16.mxu0 0
        %4464 = vmatmul.mubr.bf16.gmra.mxu0 %v4329
        %v4465 = vpop.f32.mrf.mxu0
        %v4466 = vadd.f32 0.0, %v4465
        %v4467 = vpop.f32.mrf.mxu0
        %v4468 = vpop.f32.mrf.mxu0
        %v4469 = vadd.f32 0.0, %v4468
        %v4470 = vpop.f32.mrf.mxu0
        %4471 = vmatprep.mubr.bf16.mxu0 0
        %4472 = vmatmul.mubr.bf16.gmra.mxu0 %v4332
        %v4473 = vpop.f32.mrf.mxu0
        %v4474 = vadd.f32 0.0, %v4473
        %v4475 = vpop.f32.mrf.mxu0
        %v4476 = vpop.f32.mrf.mxu0
        %v4477 = vadd.f32 0.0, %v4476
        %v4478 = vpop.f32.mrf.mxu0
        %4479 = vmatprep.mubr.bf16.mxu0 0
        %4480 = vmatmul.mubr.bf16.gmra.mxu0 %v4335
        %v4481 = vpop.f32.mrf.mxu0
        %v4482 = vadd.f32 0.0, %v4481
        %v4483 = vpop.f32.mrf.mxu0
        %v4484 = vpop.f32.mrf.mxu0
        %v4485 = vadd.f32 0.0, %v4484
        %v4486 = vpop.f32.mrf.mxu0
        %4487 = vmatprep.mubr.bf16.mxu0 0
        %4488 = vmatmul.mubr.bf16.gmra.mxu0 %v4338
        %v4489 = vpop.f32.mrf.mxu0
        %v4490 = vadd.f32 0.0, %v4489
        %v4491 = vpop.f32.mrf.mxu0
        %v4492 = vpop.f32.mrf.mxu0
        %v4493 = vadd.f32 0.0, %v4492
        %v4494 = vpop.f32.mrf.mxu0
        %4495 = vmatprep.mubr.bf16.mxu0 0
        %4496 = vmatmul.mubr.bf16.gmra.mxu0 %v4341
        %v4497 = vpop.f32.mrf.mxu0
        %v4498 = vadd.f32 0.0, %v4497
        %v4499 = vpop.f32.mrf.mxu0
        %v4500 = vpop.f32.mrf.mxu0
        %v4501 = vadd.f32 0.0, %v4500
        %v4502 = vpop.f32.mrf.mxu0
        %4503 = vdwg.mxu0
        %v4504 = vadd.f32 %v4006, %v4378
        %v4505 = vadd.f32 %v4007, %v4381
        %v4506 = vadd.f32 %v4008, %v4386
        %v4507 = vadd.f32 %v4009, %v4389
        %v4508 = vadd.f32 %v4010, %v4394
        %v4509 = vadd.f32 %v4011, %v4397
        %v4510 = vadd.f32 %v4012, %v4402
        %v4511 = vadd.f32 %v4013, %v4405
        %v4512 = vadd.f32 %v4014, %v4410
        %v4513 = vadd.f32 %v4015, %v4413
        %v4514 = vadd.f32 %v4016, %v4418
        %v4515 = vadd.f32 %v4017, %v4421
        %v4516 = vadd.f32 %v4018, %v4426
        %v4517 = vadd.f32 %v4019, %v4429
        %v4518 = vadd.f32 %v4020, %v4434
        %v4519 = vadd.f32 %v4021, %v4437
        %v4520 = vadd.f32 %v4022, %v4442
        %v4521 = vadd.f32 %v4023, %v4445
        %v4522 = vadd.f32 %v4024, %v4450
        %v4523 = vadd.f32 %v4025, %v4453
        %v4524 = vadd.f32 %v4026, %v4458
        %v4525 = vadd.f32 %v4027, %v4461
        %v4526 = vadd.f32 %v4028, %v4466
        %v4527 = vadd.f32 %v4029, %v4469
        %v4528 = vadd.f32 %v4030, %v4474
        %v4529 = vadd.f32 %v4031, %v4477
        %v4530 = vadd.f32 %v4032, %v4482
        %v4531 = vadd.f32 %v4033, %v4485
        %v4532 = vadd.f32 %v4034, %v4490
        %v4533 = vadd.f32 %v4035, %v4493
        %v4534 = vadd.f32 %v4036, %v4498
        %v4535 = vadd.f32 %v4037, %v4501
        %s4536 = scalar_lea.vmem [#allocation2], 24
        %v4537 = vld [vmem:[%s4536] sm:$0xf]
        %v4538 = vld [vmem:[%s4536 + $0x4] sm:$0xf]
        %v4539 = vld [vmem:[%s4536 + $0xc] sm:$0xf]
        %v4540 = vld [vmem:[%s4536 + $0x10] sm:$0xf]
        %v4541 = vld [vmem:[%s4536 + $0x18] sm:$0xf]
        %v4542 = vld [vmem:[%s4536 + $0x1c] sm:$0xf]
        %v4543 = vld [vmem:[%s4536 + $0x24] sm:$0xf]
        %v4544 = vld [vmem:[%s4536 + $0x28] sm:$0xf]
        %v4545 = vld [vmem:[%s4536 + $0x30] sm:$0xf]
        %v4546 = vld [vmem:[%s4536 + $0x34] sm:$0xf]
        %v4547 = vld [vmem:[%s4536 + $0x3c] sm:$0xf]
        %v4548 = vld [vmem:[%s4536 + $0x40] sm:$0xf]
        %v4549 = vld [vmem:[%s4536 + $0x48] sm:$0xf]
        %v4550 = vld [vmem:[%s4536 + $0x4c] sm:$0xf]
        %v4551 = vld [vmem:[%s4536 + $0x54] sm:$0xf]
        %v4552 = vld [vmem:[%s4536 + $0x58] sm:$0xf]
        %v4553 = vld [vmem:[%s4536 + $0x60] sm:$0xf]
        %v4554 = vld [vmem:[%s4536 + $0x64] sm:$0xf]
        %v4555 = vld [vmem:[%s4536 + $0x6c] sm:$0xf]
        %v4556 = vld [vmem:[%s4536 + $0x70] sm:$0xf]
        %v4557 = vld [vmem:[%s4536 + $0x78] sm:$0xf]
        %v4558 = vld [vmem:[%s4536 + $0x7c] sm:$0xf]
        %v4559 = vld [vmem:[%s4536 + $0x84] sm:$0xf]
        %v4560 = vld [vmem:[%s4536 + $0x88] sm:$0xf]
        %v4561 = vld [vmem:[%s4536 + $0x90] sm:$0xf]
        %v4562 = vld [vmem:[%s4536 + $0x94] sm:$0xf]
        %v4563 = vld [vmem:[%s4536 + $0x9c] sm:$0xf]
        %v4564 = vld [vmem:[%s4536 + $0xa0] sm:$0xf]
        %v4565 = vld [vmem:[%s4536 + $0xa8] sm:$0xf]
        %v4566 = vld [vmem:[%s4536 + $0xac] sm:$0xf]
        %v4567 = vld [vmem:[%s4536 + $0xb4] sm:$0xf]
        %v4568 = vld [vmem:[%s4536 + $0xb8] sm:$0xf]
        %s4569 = scalar_lea.vmem %s2, 192
        %v4570 = vld [vmem:[%s4569] sm:$0xf]
        %v4571 = vld [vmem:[%s4569 + $0x4] sm:$0xf]
        %v4572 = vld [vmem:[%s4569 + $0x8] sm:$0xf]
        %v4573 = vld [vmem:[%s4569 + $0xc] sm:$0xf]
        %v4574 = vld [vmem:[%s4569 + $0x10] sm:$0xf]
        %v4575 = vld [vmem:[%s4569 + $0x14] sm:$0xf]
        %v4576 = vld [vmem:[%s4569 + $0x18] sm:$0xf]
        %v4577 = vld [vmem:[%s4569 + $0x1c] sm:$0xf]
        %v4610 = vunpack.c.l.b16 %v4537
        %v4611 = vunpack.c.l.b16 %v4538
        %v4612 = vunpack.c.l.b16 %v4539
        %v4613 = vunpack.c.l.b16 %v4540
        %v4614 = vunpack.c.l.b16 %v4541
        %v4615 = vunpack.c.l.b16 %v4542
        %v4616 = vunpack.c.l.b16 %v4543
        %v4617 = vunpack.c.l.b16 %v4544
        %v4618 = vunpack.c.l.b16 %v4545
        %v4619 = vunpack.c.l.b16 %v4546
        %v4620 = vunpack.c.l.b16 %v4547
        %v4621 = vunpack.c.l.b16 %v4548
        %v4622 = vunpack.c.l.b16 %v4549
        %v4623 = vunpack.c.l.b16 %v4550
        %v4624 = vunpack.c.l.b16 %v4551
        %v4625 = vunpack.c.l.b16 %v4552
        %v4626 = vunpack.c.l.b16 %v4553
        %v4627 = vunpack.c.l.b16 %v4554
        %v4628 = vunpack.c.l.b16 %v4555
        %v4629 = vunpack.c.l.b16 %v4556
        %v4630 = vunpack.c.l.b16 %v4557
        %v4631 = vunpack.c.l.b16 %v4558
        %v4632 = vunpack.c.l.b16 %v4559
        %v4633 = vunpack.c.l.b16 %v4560
        %v4634 = vunpack.c.l.b16 %v4561
        %v4635 = vunpack.c.l.b16 %v4562
        %v4636 = vunpack.c.l.b16 %v4563
        %v4637 = vunpack.c.l.b16 %v4564
        %v4638 = vunpack.c.l.b16 %v4565
        %v4639 = vunpack.c.l.b16 %v4566
        %v4640 = vunpack.c.l.b16 %v4567
        %v4641 = vunpack.c.l.b16 %v4568
        %v4642 = vpack.c.b16 %v4611, %v4610
        %v4643 = vpack.c.b16 %v4613, %v4612
        %v4644 = vpack.c.b16 %v4615, %v4614
        %v4645 = vpack.c.b16 %v4617, %v4616
        %v4646 = vpack.c.b16 %v4619, %v4618
        %v4647 = vpack.c.b16 %v4621, %v4620
        %v4648 = vpack.c.b16 %v4623, %v4622
        %v4649 = vpack.c.b16 %v4625, %v4624
        %v4650 = vpack.c.b16 %v4627, %v4626
        %v4651 = vpack.c.b16 %v4629, %v4628
        %v4652 = vpack.c.b16 %v4631, %v4630
        %v4653 = vpack.c.b16 %v4633, %v4632
        %v4654 = vpack.c.b16 %v4635, %v4634
        %v4655 = vpack.c.b16 %v4637, %v4636
        %v4656 = vpack.c.b16 %v4639, %v4638
        %v4657 = vpack.c.b16 %v4641, %v4640
        %v4666 = vunpack.c.l.b16 %v4570
        %v4667 = vunpack.c.l.b16 %v4571
        %v4668 = vunpack.c.l.b16 %v4572
        %v4669 = vunpack.c.l.b16 %v4573
        %v4670 = vunpack.c.l.b16 %v4574
        %v4671 = vunpack.c.l.b16 %v4575
        %v4672 = vunpack.c.l.b16 %v4576
        %v4673 = vunpack.c.l.b16 %v4577
        %v4674 = vpack.c.b16 %v4667, %v4666
        %v4675 = vpack.c.b16 %v4669, %v4668
        %v4676 = vpack.c.b16 %v4671, %v4670
        %v4677 = vpack.c.b16 %v4673, %v4672
        %v4683 = vsel %vm1890, %v4642, 0
        %v4686 = vsel %vm1890, %v4643, 0
        %v4689 = vsel %vm1890, %v4644, 0
        %v4692 = vsel %vm1890, %v4645, 0
        %v4695 = vsel %vm1890, %v4646, 0
        %v4698 = vsel %vm1890, %v4647, 0
        %v4701 = vsel %vm1890, %v4648, 0
        %v4704 = vsel %vm1890, %v4649, 0
        %v4707 = vsel %vm1890, %v4650, 0
        %v4710 = vsel %vm1890, %v4651, 0
        %v4713 = vsel %vm1890, %v4652, 0
        %v4716 = vsel %vm1890, %v4653, 0
        %v4719 = vsel %vm1890, %v4654, 0
        %v4722 = vsel %vm1890, %v4655, 0
        %v4725 = vsel %vm1890, %v4656, 0
        %v4728 = vsel %vm1890, %v4657, 0
        %4730 = vmatprep.subr.bf16.mxu0 0
        %4731 = vmatpush1.bf16.msra.mxu0 0
        %4732 = vmatprep.subr.bf16.mxu0 0
        %4733 = vmatpush1.bf16.msra.mxu0 0
        %4734 = vmatprep.subr.bf16.mxu0 0
        %4735 = vmatpush1.bf16.msra.mxu0 0
        %4736 = vmatprep.subr.bf16.mxu0 0
        %4737 = vmatpush1.bf16.msra.mxu0 0
        %4738 = vmatprep.subr.bf16.mxu0 0
        %4739 = vmatpush1.bf16.msra.mxu0 %v4677
        %4740 = vmatprep.subr.bf16.mxu0 0
        %4741 = vmatpush1.bf16.msra.mxu0 %v4676
        %4742 = vmatprep.subr.bf16.mxu0 0
        %4743 = vmatpush1.bf16.msra.mxu0 %v4675
        %4744 = vmatprep.subr.bf16.mxu0 0
        %4745 = vmatpush1.bf16.msra.mxu0 %v4674
        %4746 = vmatprep.subr.bf16.mxu0 0
        %4747 = vmatpush2.bf16.msra.mxu0 0
        %4748 = vmatprep.subr.bf16.mxu0 0
        %4749 = vmatpush2.bf16.msra.mxu0 0
        %4750 = vmatprep.subr.bf16.mxu0 0
        %4751 = vmatpush2.bf16.msra.mxu0 0
        %4752 = vmatprep.subr.bf16.mxu0 0
        %4753 = vmatpush2.bf16.msra.mxu0 0
        %4754 = vmatprep.subr.bf16.mxu0 0
        %4755 = vmatpush2.bf16.msra.mxu0 0
        %4756 = vmatprep.subr.bf16.mxu0 0
        %4757 = vmatpush2.bf16.msra.mxu0 0
        %4758 = vmatprep.subr.bf16.mxu0 0
        %4759 = vmatpush2.bf16.msra.mxu0 0
        %4760 = vmatprep.subr.bf16.mxu0 0
        %4761 = vmatpush2.bf16.msra.mxu0 0
        %4762 = vmatprep.mubr.bf16.mxu0 0
        %4763 = vmatmul.mubr.bf16.gmra.mxu0 %v4683
        %v4764 = vpop.f32.mrf.mxu0
        %v4765 = vadd.f32 0.0, %v4764
        %v4766 = vpop.f32.mrf.mxu0
        %v4767 = vpop.f32.mrf.mxu0
        %v4768 = vadd.f32 0.0, %v4767
        %v4769 = vpop.f32.mrf.mxu0
        %4770 = vmatprep.mubr.bf16.mxu0 0
        %4771 = vmatmul.mubr.bf16.gmra.mxu0 %v4686
        %v4772 = vpop.f32.mrf.mxu0
        %v4773 = vadd.f32 0.0, %v4772
        %v4774 = vpop.f32.mrf.mxu0
        %v4775 = vpop.f32.mrf.mxu0
        %v4776 = vadd.f32 0.0, %v4775
        %v4777 = vpop.f32.mrf.mxu0
        %4778 = vmatprep.mubr.bf16.mxu0 0
        %4779 = vmatmul.mubr.bf16.gmra.mxu0 %v4689
        %v4780 = vpop.f32.mrf.mxu0
        %v4781 = vadd.f32 0.0, %v4780
        %v4782 = vpop.f32.mrf.mxu0
        %v4783 = vpop.f32.mrf.mxu0
        %v4784 = vadd.f32 0.0, %v4783
        %v4785 = vpop.f32.mrf.mxu0
        %4786 = vmatprep.mubr.bf16.mxu0 0
        %4787 = vmatmul.mubr.bf16.gmra.mxu0 %v4692
        %v4788 = vpop.f32.mrf.mxu0
        %v4789 = vadd.f32 0.0, %v4788
        %v4790 = vpop.f32.mrf.mxu0
        %v4791 = vpop.f32.mrf.mxu0
        %v4792 = vadd.f32 0.0, %v4791
        %v4793 = vpop.f32.mrf.mxu0
        %4794 = vmatprep.mubr.bf16.mxu0 0
        %4795 = vmatmul.mubr.bf16.gmra.mxu0 %v4695
        %v4796 = vpop.f32.mrf.mxu0
        %v4797 = vadd.f32 0.0, %v4796
        %v4798 = vpop.f32.mrf.mxu0
        %v4799 = vpop.f32.mrf.mxu0
        %v4800 = vadd.f32 0.0, %v4799
        %v4801 = vpop.f32.mrf.mxu0
        %4802 = vmatprep.mubr.bf16.mxu0 0
        %4803 = vmatmul.mubr.bf16.gmra.mxu0 %v4698
        %v4804 = vpop.f32.mrf.mxu0
        %v4805 = vadd.f32 0.0, %v4804
        %v4806 = vpop.f32.mrf.mxu0
        %v4807 = vpop.f32.mrf.mxu0
        %v4808 = vadd.f32 0.0, %v4807
        %v4809 = vpop.f32.mrf.mxu0
        %4810 = vmatprep.mubr.bf16.mxu0 0
        %4811 = vmatmul.mubr.bf16.gmra.mxu0 %v4701
        %v4812 = vpop.f32.mrf.mxu0
        %v4813 = vadd.f32 0.0, %v4812
        %v4814 = vpop.f32.mrf.mxu0
        %v4815 = vpop.f32.mrf.mxu0
        %v4816 = vadd.f32 0.0, %v4815
        %v4817 = vpop.f32.mrf.mxu0
        %4818 = vmatprep.mubr.bf16.mxu0 0
        %4819 = vmatmul.mubr.bf16.gmra.mxu0 %v4704
        %v4820 = vpop.f32.mrf.mxu0
        %v4821 = vadd.f32 0.0, %v4820
        %v4822 = vpop.f32.mrf.mxu0
        %v4823 = vpop.f32.mrf.mxu0
        %v4824 = vadd.f32 0.0, %v4823
        %v4825 = vpop.f32.mrf.mxu0
        %4826 = vmatprep.mubr.bf16.mxu0 0
        %4827 = vmatmul.mubr.bf16.gmra.mxu0 %v4707
        %v4828 = vpop.f32.mrf.mxu0
        %v4829 = vadd.f32 0.0, %v4828
        %v4830 = vpop.f32.mrf.mxu0
        %v4831 = vpop.f32.mrf.mxu0
        %v4832 = vadd.f32 0.0, %v4831
        %v4833 = vpop.f32.mrf.mxu0
        %4834 = vmatprep.mubr.bf16.mxu0 0
        %4835 = vmatmul.mubr.bf16.gmra.mxu0 %v4710
        %v4836 = vpop.f32.mrf.mxu0
        %v4837 = vadd.f32 0.0, %v4836
        %v4838 = vpop.f32.mrf.mxu0
        %v4839 = vpop.f32.mrf.mxu0
        %v4840 = vadd.f32 0.0, %v4839
        %v4841 = vpop.f32.mrf.mxu0
        %4842 = vmatprep.mubr.bf16.mxu0 0
        %4843 = vmatmul.mubr.bf16.gmra.mxu0 %v4713
        %v4844 = vpop.f32.mrf.mxu0
        %v4845 = vadd.f32 0.0, %v4844
        %v4846 = vpop.f32.mrf.mxu0
        %v4847 = vpop.f32.mrf.mxu0
        %v4848 = vadd.f32 0.0, %v4847
        %v4849 = vpop.f32.mrf.mxu0
        %4850 = vmatprep.mubr.bf16.mxu0 0
        %4851 = vmatmul.mubr.bf16.gmra.mxu0 %v4716
        %v4852 = vpop.f32.mrf.mxu0
        %v4853 = vadd.f32 0.0, %v4852
        %v4854 = vpop.f32.mrf.mxu0
        %v4855 = vpop.f32.mrf.mxu0
        %v4856 = vadd.f32 0.0, %v4855
        %v4857 = vpop.f32.mrf.mxu0
        %4858 = vmatprep.mubr.bf16.mxu0 0
        %4859 = vmatmul.mubr.bf16.gmra.mxu0 %v4719
        %v4860 = vpop.f32.mrf.mxu0
        %v4861 = vadd.f32 0.0, %v4860
        %v4862 = vpop.f32.mrf.mxu0
        %v4863 = vpop.f32.mrf.mxu0
        %v4864 = vadd.f32 0.0, %v4863
        %v4865 = vpop.f32.mrf.mxu0
        %4866 = vmatprep.mubr.bf16.mxu0 0
        %4867 = vmatmul.mubr.bf16.gmra.mxu0 %v4722
        %v4868 = vpop.f32.mrf.mxu0
        %v4869 = vadd.f32 0.0, %v4868
        %v4870 = vpop.f32.mrf.mxu0
        %v4871 = vpop.f32.mrf.mxu0
        %v4872 = vadd.f32 0.0, %v4871
        %v4873 = vpop.f32.mrf.mxu0
        %4874 = vmatprep.mubr.bf16.mxu0 0
        %4875 = vmatmul.mubr.bf16.gmra.mxu0 %v4725
        %v4876 = vpop.f32.mrf.mxu0
        %v4877 = vadd.f32 0.0, %v4876
        %v4878 = vpop.f32.mrf.mxu0
        %v4879 = vpop.f32.mrf.mxu0
        %v4880 = vadd.f32 0.0, %v4879
        %v4881 = vpop.f32.mrf.mxu0
        %4882 = vmatprep.mubr.bf16.mxu0 0
        %4883 = vmatmul.mubr.bf16.gmra.mxu0 %v4728
        %v4884 = vpop.f32.mrf.mxu0
        %v4885 = vadd.f32 0.0, %v4884
        %v4886 = vpop.f32.mrf.mxu0
        %v4887 = vpop.f32.mrf.mxu0
        %v4888 = vadd.f32 0.0, %v4887
        %v4889 = vpop.f32.mrf.mxu0
        %4890 = vdwg.mxu0
        %v4891 = vadd.f32 %v4504, %v4765
        %v4892 = vadd.f32 %v4505, %v4768
        %v4893 = vadd.f32 %v4506, %v4773
        %v4894 = vadd.f32 %v4507, %v4776
        %v4895 = vadd.f32 %v4508, %v4781
        %v4896 = vadd.f32 %v4509, %v4784
        %v4897 = vadd.f32 %v4510, %v4789
        %v4898 = vadd.f32 %v4511, %v4792
        %v4899 = vadd.f32 %v4512, %v4797
        %v4900 = vadd.f32 %v4513, %v4800
        %v4901 = vadd.f32 %v4514, %v4805
        %v4902 = vadd.f32 %v4515, %v4808
        %v4903 = vadd.f32 %v4516, %v4813
        %v4904 = vadd.f32 %v4517, %v4816
        %v4905 = vadd.f32 %v4518, %v4821
        %v4906 = vadd.f32 %v4519, %v4824
        %v4907 = vadd.f32 %v4520, %v4829
        %v4908 = vadd.f32 %v4521, %v4832
        %v4909 = vadd.f32 %v4522, %v4837
        %v4910 = vadd.f32 %v4523, %v4840
        %v4911 = vadd.f32 %v4524, %v4845
        %v4912 = vadd.f32 %v4525, %v4848
        %v4913 = vadd.f32 %v4526, %v4853
        %v4914 = vadd.f32 %v4527, %v4856
        %v4915 = vadd.f32 %v4528, %v4861
        %v4916 = vadd.f32 %v4529, %v4864
        %v4917 = vadd.f32 %v4530, %v4869
        %v4918 = vadd.f32 %v4531, %v4872
        %v4919 = vadd.f32 %v4532, %v4877
        %v4920 = vadd.f32 %v4533, %v4880
        %v4921 = vadd.f32 %v4534, %v4885
        %v4922 = vadd.f32 %v4535, %v4888
        %v4923 = vld [vmem:[%s4536] sm:$0xf]
        %v4924 = vld [vmem:[%s4536 + $0x4] sm:$0xf]
        %v4925 = vld [vmem:[%s4536 + $0x8] sm:$0x1]
        %v4926 = vld [vmem:[%s4536 + $0xc] sm:$0xf]
        %v4927 = vld [vmem:[%s4536 + $0x10] sm:$0xf]
        %v4928 = vld [vmem:[%s4536 + $0x14] sm:$0x1]
        %v4929 = vld [vmem:[%s4536 + $0x18] sm:$0xf]
        %v4930 = vld [vmem:[%s4536 + $0x1c] sm:$0xf]
        %v4931 = vld [vmem:[%s4536 + $0x20] sm:$0x1]
        %v4932 = vld [vmem:[%s4536 + $0x24] sm:$0xf]
        %v4933 = vld [vmem:[%s4536 + $0x28] sm:$0xf]
        %v4934 = vld [vmem:[%s4536 + $0x2c] sm:$0x1]
        %v4935 = vld [vmem:[%s4536 + $0x30] sm:$0xf]
        %v4936 = vld [vmem:[%s4536 + $0x34] sm:$0xf]
        %v4937 = vld [vmem:[%s4536 + $0x38] sm:$0x1]
        %v4938 = vld [vmem:[%s4536 + $0x3c] sm:$0xf]
        %v4939 = vld [vmem:[%s4536 + $0x40] sm:$0xf]
        %v4940 = vld [vmem:[%s4536 + $0x44] sm:$0x1]
        %v4941 = vld [vmem:[%s4536 + $0x48] sm:$0xf]
        %v4942 = vld [vmem:[%s4536 + $0x4c] sm:$0xf]
        %v4943 = vld [vmem:[%s4536 + $0x50] sm:$0x1]
        %v4944 = vld [vmem:[%s4536 + $0x54] sm:$0xf]
        %v4945 = vld [vmem:[%s4536 + $0x58] sm:$0xf]
        %v4946 = vld [vmem:[%s4536 + $0x5c] sm:$0x1]
        %v4947 = vld [vmem:[%s4536 + $0x60] sm:$0xf]
        %v4948 = vld [vmem:[%s4536 + $0x64] sm:$0xf]
        %v4949 = vld [vmem:[%s4536 + $0x68] sm:$0x1]
        %v4950 = vld [vmem:[%s4536 + $0x6c] sm:$0xf]
        %v4951 = vld [vmem:[%s4536 + $0x70] sm:$0xf]
        %v4952 = vld [vmem:[%s4536 + $0x74] sm:$0x1]
        %v4953 = vld [vmem:[%s4536 + $0x78] sm:$0xf]
        %v4954 = vld [vmem:[%s4536 + $0x7c] sm:$0xf]
        %v4955 = vld [vmem:[%s4536 + $0x80] sm:$0x1]
        %v4956 = vld [vmem:[%s4536 + $0x84] sm:$0xf]
        %v4957 = vld [vmem:[%s4536 + $0x88] sm:$0xf]
        %v4958 = vld [vmem:[%s4536 + $0x8c] sm:$0x1]
        %v4959 = vld [vmem:[%s4536 + $0x90] sm:$0xf]
        %v4960 = vld [vmem:[%s4536 + $0x94] sm:$0xf]
        %v4961 = vld [vmem:[%s4536 + $0x98] sm:$0x1]
        %v4962 = vld [vmem:[%s4536 + $0x9c] sm:$0xf]
        %v4963 = vld [vmem:[%s4536 + $0xa0] sm:$0xf]
        %v4964 = vld [vmem:[%s4536 + $0xa4] sm:$0x1]
        %v4965 = vld [vmem:[%s4536 + $0xa8] sm:$0xf]
        %v4966 = vld [vmem:[%s4536 + $0xac] sm:$0xf]
        %v4967 = vld [vmem:[%s4536 + $0xb0] sm:$0x1]
        %v4968 = vld [vmem:[%s4536 + $0xb4] sm:$0xf]
        %v4969 = vld [vmem:[%s4536 + $0xb8] sm:$0xf]
        %v4970 = vld [vmem:[%s4536 + $0xbc] sm:$0x1]
        %v4972 = vshrl.u32 %v4923, 16
        %v4974 = vrot.slane %v4972, 4
        %v4975 = vshll.u32 %v4923, 16
        %v4977 = vrot.slane %v4975, 5
        %v4978 = vor.u32 %v4974, %v4977
        %v4979 = vrot.slane %v4978, 4
        %v4981 = vshll.u32 %v4924, 16
        %v4983 = vrot.slane %v4981, 5
        %v4984 = vsel %vm1424, %v4979, %v4983
        %v4985 = vshrl.u32 %v4924, 16
        %v4987 = vrot.slane %v4985, 4
        %v4988 = vor.u32 %v4987, %v4983
        %v4989 = vrot.slane %v4988, 4
        %v4991 = vshll.u32 %v4925, 16
        %v4993 = vrot.slane %v4991, 5
        %v4994 = vsel %vm1424, %v4989, %v4993
        %v4996 = vshrl.u32 %v4926, 16
        %v4998 = vrot.slane %v4996, 4
        %v4999 = vshll.u32 %v4926, 16
        %v5001 = vrot.slane %v4999, 5
        %v5002 = vor.u32 %v4998, %v5001
        %v5003 = vrot.slane %v5002, 4
        %v5005 = vshll.u32 %v4927, 16
        %v5007 = vrot.slane %v5005, 5
        %v5008 = vsel %vm1424, %v5003, %v5007
        %v5009 = vshrl.u32 %v4927, 16
        %v5011 = vrot.slane %v5009, 4
        %v5012 = vor.u32 %v5011, %v5007
        %v5013 = vrot.slane %v5012, 4
        %v5015 = vshll.u32 %v4928, 16
        %v5017 = vrot.slane %v5015, 5
        %v5018 = vsel %vm1424, %v5013, %v5017
        %v5020 = vshrl.u32 %v4929, 16
        %v5022 = vrot.slane %v5020, 4
        %v5023 = vshll.u32 %v4929, 16
        %v5025 = vrot.slane %v5023, 5
        %v5026 = vor.u32 %v5022, %v5025
        %v5027 = vrot.slane %v5026, 4
        %v5029 = vshll.u32 %v4930, 16
        %v5031 = vrot.slane %v5029, 5
        %v5032 = vsel %vm1424, %v5027, %v5031
        %v5033 = vshrl.u32 %v4930, 16
        %v5035 = vrot.slane %v5033, 4
        %v5036 = vor.u32 %v5035, %v5031
        %v5037 = vrot.slane %v5036, 4
        %v5039 = vshll.u32 %v4931, 16
        %v5041 = vrot.slane %v5039, 5
        %v5042 = vsel %vm1424, %v5037, %v5041
        %v5044 = vshrl.u32 %v4932, 16
        %v5046 = vrot.slane %v5044, 4
        %v5047 = vshll.u32 %v4932, 16
        %v5049 = vrot.slane %v5047, 5
        %v5050 = vor.u32 %v5046, %v5049
        %v5051 = vrot.slane %v5050, 4
        %v5053 = vshll.u32 %v4933, 16
        %v5055 = vrot.slane %v5053, 5
        %v5056 = vsel %vm1424, %v5051, %v5055
        %v5057 = vshrl.u32 %v4933, 16
        %v5059 = vrot.slane %v5057, 4
        %v5060 = vor.u32 %v5059, %v5055
        %v5061 = vrot.slane %v5060, 4
        %v5063 = vshll.u32 %v4934, 16
        %v5065 = vrot.slane %v5063, 5
        %v5066 = vsel %vm1424, %v5061, %v5065
        %v5068 = vshrl.u32 %v4935, 16
        %v5070 = vrot.slane %v5068, 4
        %v5071 = vshll.u32 %v4935, 16
        %v5073 = vrot.slane %v5071, 5
        %v5074 = vor.u32 %v5070, %v5073
        %v5075 = vrot.slane %v5074, 4
        %v5077 = vshll.u32 %v4936, 16
        %v5079 = vrot.slane %v5077, 5
        %v5080 = vsel %vm1424, %v5075, %v5079
        %v5081 = vshrl.u32 %v4936, 16
        %v5083 = vrot.slane %v5081, 4
        %v5084 = vor.u32 %v5083, %v5079
        %v5085 = vrot.slane %v5084, 4
        %v5087 = vshll.u32 %v4937, 16
        %v5089 = vrot.slane %v5087, 5
        %v5090 = vsel %vm1424, %v5085, %v5089
        %v5092 = vshrl.u32 %v4938, 16
        %v5094 = vrot.slane %v5092, 4
        %v5095 = vshll.u32 %v4938, 16
        %v5097 = vrot.slane %v5095, 5
        %v5098 = vor.u32 %v5094, %v5097
        %v5099 = vrot.slane %v5098, 4
        %v5101 = vshll.u32 %v4939, 16
        %v5103 = vrot.slane %v5101, 5
        %v5104 = vsel %vm1424, %v5099, %v5103
        %v5105 = vshrl.u32 %v4939, 16
        %v5107 = vrot.slane %v5105, 4
        %v5108 = vor.u32 %v5107, %v5103
        %v5109 = vrot.slane %v5108, 4
        %v5111 = vshll.u32 %v4940, 16
        %v5113 = vrot.slane %v5111, 5
        %v5114 = vsel %vm1424, %v5109, %v5113
        %v5116 = vshrl.u32 %v4941, 16
        %v5118 = vrot.slane %v5116, 4
        %v5119 = vshll.u32 %v4941, 16
        %v5121 = vrot.slane %v5119, 5
        %v5122 = vor.u32 %v5118, %v5121
        %v5123 = vrot.slane %v5122, 4
        %v5125 = vshll.u32 %v4942, 16
        %v5127 = vrot.slane %v5125, 5
        %v5128 = vsel %vm1424, %v5123, %v5127
        %v5129 = vshrl.u32 %v4942, 16
        %v5131 = vrot.slane %v5129, 4
        %v5132 = vor.u32 %v5131, %v5127
        %v5133 = vrot.slane %v5132, 4
        %v5135 = vshll.u32 %v4943, 16
        %v5137 = vrot.slane %v5135, 5
        %v5138 = vsel %vm1424, %v5133, %v5137
        %v5140 = vshrl.u32 %v4944, 16
        %v5142 = vrot.slane %v5140, 4
        %v5143 = vshll.u32 %v4944, 16
        %v5145 = vrot.slane %v5143, 5
        %v5146 = vor.u32 %v5142, %v5145
        %v5147 = vrot.slane %v5146, 4
        %v5149 = vshll.u32 %v4945, 16
        %v5151 = vrot.slane %v5149, 5
        %v5152 = vsel %vm1424, %v5147, %v5151
        %v5153 = vshrl.u32 %v4945, 16
        %v5155 = vrot.slane %v5153, 4
        %v5156 = vor.u32 %v5155, %v5151
        %v5157 = vrot.slane %v5156, 4
        %v5159 = vshll.u32 %v4946, 16
        %v5161 = vrot.slane %v5159, 5
        %v5162 = vsel %vm1424, %v5157, %v5161
        %v5164 = vshrl.u32 %v4947, 16
        %v5166 = vrot.slane %v5164, 4
        %v5167 = vshll.u32 %v4947, 16
        %v5169 = vrot.slane %v5167, 5
        %v5170 = vor.u32 %v5166, %v5169
        %v5171 = vrot.slane %v5170, 4
        %v5173 = vshll.u32 %v4948, 16
        %v5175 = vrot.slane %v5173, 5
        %v5176 = vsel %vm1424, %v5171, %v5175
        %v5177 = vshrl.u32 %v4948, 16
        %v5179 = vrot.slane %v5177, 4
        %v5180 = vor.u32 %v5179, %v5175
        %v5181 = vrot.slane %v5180, 4
        %v5183 = vshll.u32 %v4949, 16
        %v5185 = vrot.slane %v5183, 5
        %v5186 = vsel %vm1424, %v5181, %v5185
        %v5188 = vshrl.u32 %v4950, 16
        %v5190 = vrot.slane %v5188, 4
        %v5191 = vshll.u32 %v4950, 16
        %v5193 = vrot.slane %v5191, 5
        %v5194 = vor.u32 %v5190, %v5193
        %v5195 = vrot.slane %v5194, 4
        %v5197 = vshll.u32 %v4951, 16
        %v5199 = vrot.slane %v5197, 5
        %v5200 = vsel %vm1424, %v5195, %v5199
        %v5201 = vshrl.u32 %v4951, 16
        %v5203 = vrot.slane %v5201, 4
        %v5204 = vor.u32 %v5203, %v5199
        %v5205 = vrot.slane %v5204, 4
        %v5207 = vshll.u32 %v4952, 16
        %v5209 = vrot.slane %v5207, 5
        %v5210 = vsel %vm1424, %v5205, %v5209
        %v5212 = vshrl.u32 %v4953, 16
        %v5214 = vrot.slane %v5212, 4
        %v5215 = vshll.u32 %v4953, 16
        %v5217 = vrot.slane %v5215, 5
        %v5218 = vor.u32 %v5214, %v5217
        %v5219 = vrot.slane %v5218, 4
        %v5221 = vshll.u32 %v4954, 16
        %v5223 = vrot.slane %v5221, 5
        %v5224 = vsel %vm1424, %v5219, %v5223
        %v5225 = vshrl.u32 %v4954, 16
        %v5227 = vrot.slane %v5225, 4
        %v5228 = vor.u32 %v5227, %v5223
        %v5229 = vrot.slane %v5228, 4
        %v5231 = vshll.u32 %v4955, 16
        %v5233 = vrot.slane %v5231, 5
        %v5234 = vsel %vm1424, %v5229, %v5233
        %v5236 = vshrl.u32 %v4956, 16
        %v5238 = vrot.slane %v5236, 4
        %v5239 = vshll.u32 %v4956, 16
        %v5241 = vrot.slane %v5239, 5
        %v5242 = vor.u32 %v5238, %v5241
        %v5243 = vrot.slane %v5242, 4
        %v5245 = vshll.u32 %v4957, 16
        %v5247 = vrot.slane %v5245, 5
        %v5248 = vsel %vm1424, %v5243, %v5247
        %v5249 = vshrl.u32 %v4957, 16
        %v5251 = vrot.slane %v5249, 4
        %v5252 = vor.u32 %v5251, %v5247
        %v5253 = vrot.slane %v5252, 4
        %v5255 = vshll.u32 %v4958, 16
        %v5257 = vrot.slane %v5255, 5
        %v5258 = vsel %vm1424, %v5253, %v5257
        %v5260 = vshrl.u32 %v4959, 16
        %v5262 = vrot.slane %v5260, 4
        %v5263 = vshll.u32 %v4959, 16
        %v5265 = vrot.slane %v5263, 5
        %v5266 = vor.u32 %v5262, %v5265
        %v5267 = vrot.slane %v5266, 4
        %v5269 = vshll.u32 %v4960, 16
        %v5271 = vrot.slane %v5269, 5
        %v5272 = vsel %vm1424, %v5267, %v5271
        %v5273 = vshrl.u32 %v4960, 16
        %v5275 = vrot.slane %v5273, 4
        %v5276 = vor.u32 %v5275, %v5271
        %v5277 = vrot.slane %v5276, 4
        %v5279 = vshll.u32 %v4961, 16
        %v5281 = vrot.slane %v5279, 5
        %v5282 = vsel %vm1424, %v5277, %v5281
        %v5284 = vshrl.u32 %v4962, 16
        %v5286 = vrot.slane %v5284, 4
        %v5287 = vshll.u32 %v4962, 16
        %v5289 = vrot.slane %v5287, 5
        %v5290 = vor.u32 %v5286, %v5289
        %v5291 = vrot.slane %v5290, 4
        %v5293 = vshll.u32 %v4963, 16
        %v5295 = vrot.slane %v5293, 5
        %v5296 = vsel %vm1424, %v5291, %v5295
        %v5297 = vshrl.u32 %v4963, 16
        %v5299 = vrot.slane %v5297, 4
        %v5300 = vor.u32 %v5299, %v5295
        %v5301 = vrot.slane %v5300, 4
        %v5303 = vshll.u32 %v4964, 16
        %v5305 = vrot.slane %v5303, 5
        %v5306 = vsel %vm1424, %v5301, %v5305
        %v5308 = vshrl.u32 %v4965, 16
        %v5310 = vrot.slane %v5308, 4
        %v5311 = vshll.u32 %v4965, 16
        %v5313 = vrot.slane %v5311, 5
        %v5314 = vor.u32 %v5310, %v5313
        %v5315 = vrot.slane %v5314, 4
        %v5317 = vshll.u32 %v4966, 16
        %v5319 = vrot.slane %v5317, 5
        %v5320 = vsel %vm1424, %v5315, %v5319
        %v5321 = vshrl.u32 %v4966, 16
        %v5323 = vrot.slane %v5321, 4
        %v5324 = vor.u32 %v5323, %v5319
        %v5325 = vrot.slane %v5324, 4
        %v5327 = vshll.u32 %v4967, 16
        %v5329 = vrot.slane %v5327, 5
        %v5330 = vsel %vm1424, %v5325, %v5329
        %v5332 = vshrl.u32 %v4968, 16
        %v5334 = vrot.slane %v5332, 4
        %v5335 = vshll.u32 %v4968, 16
        %v5337 = vrot.slane %v5335, 5
        %v5338 = vor.u32 %v5334, %v5337
        %v5339 = vrot.slane %v5338, 4
        %v5341 = vshll.u32 %v4969, 16
        %v5343 = vrot.slane %v5341, 5
        %v5344 = vsel %vm1424, %v5339, %v5343
        %v5345 = vshrl.u32 %v4969, 16
        %v5347 = vrot.slane %v5345, 4
        %v5348 = vor.u32 %v5347, %v5343
        %v5349 = vrot.slane %v5348, 4
        %v5351 = vshll.u32 %v4970, 16
        %v5353 = vrot.slane %v5351, 5
        %v5354 = vsel %vm1424, %v5349, %v5353
        %s5355 = scalar_lea.vmem %s2, 224
        %v5356 = vld [vmem:[%s5355] sm:$0xf]
        %v5357 = vld [vmem:[%s5355 + $0x4] sm:$0xf]
        %v5358 = vld [vmem:[%s5355 + $0x8] sm:$0xf]
        %v5359 = vld [vmem:[%s5355 + $0xc] sm:$0xf]
        %v5360 = vld [vmem:[%s5355 + $0x10] sm:$0xf]
        %v5361 = vld [vmem:[%s5355 + $0x14] sm:$0xf]
        %v5362 = vld [vmem:[%s5355 + $0x18] sm:$0xf]
        %v5363 = vld [vmem:[%s5355 + $0x1c] sm:$0xf]
        %v5364 = vunpack.c.l.b16 %v4984
        %v5365 = vunpack.c.l.b16 %v4994
        %v5366 = vunpack.c.l.b16 %v5008
        %v5367 = vunpack.c.l.b16 %v5018
        %v5368 = vunpack.c.l.b16 %v5032
        %v5369 = vunpack.c.l.b16 %v5042
        %v5370 = vunpack.c.l.b16 %v5056
        %v5371 = vunpack.c.l.b16 %v5066
        %v5372 = vunpack.c.l.b16 %v5080
        %v5373 = vunpack.c.l.b16 %v5090
        %v5374 = vunpack.c.l.b16 %v5104
        %v5375 = vunpack.c.l.b16 %v5114
        %v5376 = vunpack.c.l.b16 %v5128
        %v5377 = vunpack.c.l.b16 %v5138
        %v5378 = vunpack.c.l.b16 %v5152
        %v5379 = vunpack.c.l.b16 %v5162
        %v5380 = vunpack.c.l.b16 %v5176
        %v5381 = vunpack.c.l.b16 %v5186
        %v5382 = vunpack.c.l.b16 %v5200
        %v5383 = vunpack.c.l.b16 %v5210
        %v5384 = vunpack.c.l.b16 %v5224
        %v5385 = vunpack.c.l.b16 %v5234
        %v5386 = vunpack.c.l.b16 %v5248
        %v5387 = vunpack.c.l.b16 %v5258
        %v5388 = vunpack.c.l.b16 %v5272
        %v5389 = vunpack.c.l.b16 %v5282
        %v5390 = vunpack.c.l.b16 %v5296
        %v5391 = vunpack.c.l.b16 %v5306
        %v5392 = vunpack.c.l.b16 %v5320
        %v5393 = vunpack.c.l.b16 %v5330
        %v5394 = vunpack.c.l.b16 %v5344
        %v5395 = vunpack.c.l.b16 %v5354
        %v5396 = vpack.c.b16 %v5365, %v5364
        %v5397 = vpack.c.b16 %v5367, %v5366
        %v5398 = vpack.c.b16 %v5369, %v5368
        %v5399 = vpack.c.b16 %v5371, %v5370
        %v5400 = vpack.c.b16 %v5373, %v5372
        %v5401 = vpack.c.b16 %v5375, %v5374
        %v5402 = vpack.c.b16 %v5377, %v5376
        %v5403 = vpack.c.b16 %v5379, %v5378
        %v5404 = vpack.c.b16 %v5381, %v5380
        %v5405 = vpack.c.b16 %v5383, %v5382
        %v5406 = vpack.c.b16 %v5385, %v5384
        %v5407 = vpack.c.b16 %v5387, %v5386
        %v5408 = vpack.c.b16 %v5389, %v5388
        %v5409 = vpack.c.b16 %v5391, %v5390
        %v5410 = vpack.c.b16 %v5393, %v5392
        %v5411 = vpack.c.b16 %v5395, %v5394
        %v5420 = vunpack.c.l.b16 %v5356
        %v5421 = vunpack.c.l.b16 %v5357
        %v5422 = vunpack.c.l.b16 %v5358
        %v5423 = vunpack.c.l.b16 %v5359
        %v5424 = vunpack.c.l.b16 %v5360
        %v5425 = vunpack.c.l.b16 %v5361
        %v5426 = vunpack.c.l.b16 %v5362
        %v5427 = vunpack.c.l.b16 %v5363
        %v5428 = vpack.c.b16 %v5421, %v5420
        %v5429 = vpack.c.b16 %v5423, %v5422
        %v5430 = vpack.c.b16 %v5425, %v5424
        %v5431 = vpack.c.b16 %v5427, %v5426
        %v5437 = vsel %vm1890, %v5396, 0
        %v5440 = vsel %vm1890, %v5397, 0
        %v5443 = vsel %vm1890, %v5398, 0
        %v5446 = vsel %vm1890, %v5399, 0
        %v5449 = vsel %vm1890, %v5400, 0
        %v5452 = vsel %vm1890, %v5401, 0
        %v5455 = vsel %vm1890, %v5402, 0
        %v5458 = vsel %vm1890, %v5403, 0
        %v5461 = vsel %vm1890, %v5404, 0
        %v5464 = vsel %vm1890, %v5405, 0
        %v5467 = vsel %vm1890, %v5406, 0
        %v5470 = vsel %vm1890, %v5407, 0
        %v5473 = vsel %vm1890, %v5408, 0
        %v5476 = vsel %vm1890, %v5409, 0
        %v5479 = vsel %vm1890, %v5410, 0
        %v5482 = vsel %vm1890, %v5411, 0
        %5484 = vmatprep.subr.bf16.mxu0 0
        %5485 = vmatpush1.bf16.msra.mxu0 0
        %5486 = vmatprep.subr.bf16.mxu0 0
        %5487 = vmatpush1.bf16.msra.mxu0 0
        %5488 = vmatprep.subr.bf16.mxu0 0
        %5489 = vmatpush1.bf16.msra.mxu0 0
        %5490 = vmatprep.subr.bf16.mxu0 0
        %5491 = vmatpush1.bf16.msra.mxu0 0
        %5492 = vmatprep.subr.bf16.mxu0 0
        %5493 = vmatpush1.bf16.msra.mxu0 %v5431
        %5494 = vmatprep.subr.bf16.mxu0 0
        %5495 = vmatpush1.bf16.msra.mxu0 %v5430
        %5496 = vmatprep.subr.bf16.mxu0 0
        %5497 = vmatpush1.bf16.msra.mxu0 %v5429
        %5498 = vmatprep.subr.bf16.mxu0 0
        %5499 = vmatpush1.bf16.msra.mxu0 %v5428
        %5500 = vmatprep.subr.bf16.mxu0 0
        %5501 = vmatpush2.bf16.msra.mxu0 0
        %5502 = vmatprep.subr.bf16.mxu0 0
        %5503 = vmatpush2.bf16.msra.mxu0 0
        %5504 = vmatprep.subr.bf16.mxu0 0
        %5505 = vmatpush2.bf16.msra.mxu0 0
        %5506 = vmatprep.subr.bf16.mxu0 0
        %5507 = vmatpush2.bf16.msra.mxu0 0
        %5508 = vmatprep.subr.bf16.mxu0 0
        %5509 = vmatpush2.bf16.msra.mxu0 0
        %5510 = vmatprep.subr.bf16.mxu0 0
        %5511 = vmatpush2.bf16.msra.mxu0 0
        %5512 = vmatprep.subr.bf16.mxu0 0
        %5513 = vmatpush2.bf16.msra.mxu0 0
        %5514 = vmatprep.subr.bf16.mxu0 0
        %5515 = vmatpush2.bf16.msra.mxu0 0
        %5516 = vmatprep.mubr.bf16.mxu0 0
        %5517 = vmatmul.mubr.bf16.gmra.mxu0 %v5437
        %v5518 = vpop.f32.mrf.mxu0
        %v5519 = vadd.f32 0.0, %v5518
        %v5520 = vpop.f32.mrf.mxu0
        %v5521 = vpop.f32.mrf.mxu0
        %v5522 = vadd.f32 0.0, %v5521
        %v5523 = vpop.f32.mrf.mxu0
        %5524 = vmatprep.mubr.bf16.mxu0 0
        %5525 = vmatmul.mubr.bf16.gmra.mxu0 %v5440
        %v5526 = vpop.f32.mrf.mxu0
        %v5527 = vadd.f32 0.0, %v5526
        %v5528 = vpop.f32.mrf.mxu0
        %v5529 = vpop.f32.mrf.mxu0
        %v5530 = vadd.f32 0.0, %v5529
        %v5531 = vpop.f32.mrf.mxu0
        %5532 = vmatprep.mubr.bf16.mxu0 0
        %5533 = vmatmul.mubr.bf16.gmra.mxu0 %v5443
        %v5534 = vpop.f32.mrf.mxu0
        %v5535 = vadd.f32 0.0, %v5534
        %v5536 = vpop.f32.mrf.mxu0
        %v5537 = vpop.f32.mrf.mxu0
        %v5538 = vadd.f32 0.0, %v5537
        %v5539 = vpop.f32.mrf.mxu0
        %5540 = vmatprep.mubr.bf16.mxu0 0
        %5541 = vmatmul.mubr.bf16.gmra.mxu0 %v5446
        %v5542 = vpop.f32.mrf.mxu0
        %v5543 = vadd.f32 0.0, %v5542
        %v5544 = vpop.f32.mrf.mxu0
        %v5545 = vpop.f32.mrf.mxu0
        %v5546 = vadd.f32 0.0, %v5545
        %v5547 = vpop.f32.mrf.mxu0
        %5548 = vmatprep.mubr.bf16.mxu0 0
        %5549 = vmatmul.mubr.bf16.gmra.mxu0 %v5449
        %v5550 = vpop.f32.mrf.mxu0
        %v5551 = vadd.f32 0.0, %v5550
        %v5552 = vpop.f32.mrf.mxu0
        %v5553 = vpop.f32.mrf.mxu0
        %v5554 = vadd.f32 0.0, %v5553
        %v5555 = vpop.f32.mrf.mxu0
        %5556 = vmatprep.mubr.bf16.mxu0 0
        %5557 = vmatmul.mubr.bf16.gmra.mxu0 %v5452
        %v5558 = vpop.f32.mrf.mxu0
        %v5559 = vadd.f32 0.0, %v5558
        %v5560 = vpop.f32.mrf.mxu0
        %v5561 = vpop.f32.mrf.mxu0
        %v5562 = vadd.f32 0.0, %v5561
        %v5563 = vpop.f32.mrf.mxu0
        %5564 = vmatprep.mubr.bf16.mxu0 0
        %5565 = vmatmul.mubr.bf16.gmra.mxu0 %v5455
        %v5566 = vpop.f32.mrf.mxu0
        %v5567 = vadd.f32 0.0, %v5566
        %v5568 = vpop.f32.mrf.mxu0
        %v5569 = vpop.f32.mrf.mxu0
        %v5570 = vadd.f32 0.0, %v5569
        %v5571 = vpop.f32.mrf.mxu0
        %5572 = vmatprep.mubr.bf16.mxu0 0
        %5573 = vmatmul.mubr.bf16.gmra.mxu0 %v5458
        %v5574 = vpop.f32.mrf.mxu0
        %v5575 = vadd.f32 0.0, %v5574
        %v5576 = vpop.f32.mrf.mxu0
        %v5577 = vpop.f32.mrf.mxu0
        %v5578 = vadd.f32 0.0, %v5577
        %v5579 = vpop.f32.mrf.mxu0
        %5580 = vmatprep.mubr.bf16.mxu0 0
        %5581 = vmatmul.mubr.bf16.gmra.mxu0 %v5461
        %v5582 = vpop.f32.mrf.mxu0
        %v5583 = vadd.f32 0.0, %v5582
        %v5584 = vpop.f32.mrf.mxu0
        %v5585 = vpop.f32.mrf.mxu0
        %v5586 = vadd.f32 0.0, %v5585
        %v5587 = vpop.f32.mrf.mxu0
        %5588 = vmatprep.mubr.bf16.mxu0 0
        %5589 = vmatmul.mubr.bf16.gmra.mxu0 %v5464
        %v5590 = vpop.f32.mrf.mxu0
        %v5591 = vadd.f32 0.0, %v5590
        %v5592 = vpop.f32.mrf.mxu0
        %v5593 = vpop.f32.mrf.mxu0
        %v5594 = vadd.f32 0.0, %v5593
        %v5595 = vpop.f32.mrf.mxu0
        %5596 = vmatprep.mubr.bf16.mxu0 0
        %5597 = vmatmul.mubr.bf16.gmra.mxu0 %v5467
        %v5598 = vpop.f32.mrf.mxu0
        %v5599 = vadd.f32 0.0, %v5598
        %v5600 = vpop.f32.mrf.mxu0
        %v5601 = vpop.f32.mrf.mxu0
        %v5602 = vadd.f32 0.0, %v5601
        %v5603 = vpop.f32.mrf.mxu0
        %5604 = vmatprep.mubr.bf16.mxu0 0
        %5605 = vmatmul.mubr.bf16.gmra.mxu0 %v5470
        %v5606 = vpop.f32.mrf.mxu0
        %v5607 = vadd.f32 0.0, %v5606
        %v5608 = vpop.f32.mrf.mxu0
        %v5609 = vpop.f32.mrf.mxu0
        %v5610 = vadd.f32 0.0, %v5609
        %v5611 = vpop.f32.mrf.mxu0
        %5612 = vmatprep.mubr.bf16.mxu0 0
        %5613 = vmatmul.mubr.bf16.gmra.mxu0 %v5473
        %v5614 = vpop.f32.mrf.mxu0
        %v5615 = vadd.f32 0.0, %v5614
        %v5616 = vpop.f32.mrf.mxu0
        %v5617 = vpop.f32.mrf.mxu0
        %v5618 = vadd.f32 0.0, %v5617
        %v5619 = vpop.f32.mrf.mxu0
        %5620 = vmatprep.mubr.bf16.mxu0 0
        %5621 = vmatmul.mubr.bf16.gmra.mxu0 %v5476
        %v5622 = vpop.f32.mrf.mxu0
        %v5623 = vadd.f32 0.0, %v5622
        %v5624 = vpop.f32.mrf.mxu0
        %v5625 = vpop.f32.mrf.mxu0
        %v5626 = vadd.f32 0.0, %v5625
        %v5627 = vpop.f32.mrf.mxu0
        %5628 = vmatprep.mubr.bf16.mxu0 0
        %5629 = vmatmul.mubr.bf16.gmra.mxu0 %v5479
        %v5630 = vpop.f32.mrf.mxu0
        %v5631 = vadd.f32 0.0, %v5630
        %v5632 = vpop.f32.mrf.mxu0
        %v5633 = vpop.f32.mrf.mxu0
        %v5634 = vadd.f32 0.0, %v5633
        %v5635 = vpop.f32.mrf.mxu0
        %5636 = vmatprep.mubr.bf16.mxu0 0
        %5637 = vmatmul.mubr.bf16.gmra.mxu0 %v5482
        %v5638 = vpop.f32.mrf.mxu0
        %v5639 = vadd.f32 0.0, %v5638
        %v5640 = vpop.f32.mrf.mxu0
        %v5641 = vpop.f32.mrf.mxu0
        %v5642 = vadd.f32 0.0, %v5641
        %v5643 = vpop.f32.mrf.mxu0
        %5644 = vdwg.mxu0
        %v5645 = vadd.f32 %v4891, %v5519
        %v5646 = vadd.f32 %v4892, %v5522
        %v5647 = vadd.f32 %v4893, %v5527
        %v5648 = vadd.f32 %v4894, %v5530
        %v5649 = vadd.f32 %v4895, %v5535
        %v5650 = vadd.f32 %v4896, %v5538
        %v5651 = vadd.f32 %v4897, %v5543
        %v5652 = vadd.f32 %v4898, %v5546
        %v5653 = vadd.f32 %v4899, %v5551
        %v5654 = vadd.f32 %v4900, %v5554
        %v5655 = vadd.f32 %v4901, %v5559
        %v5656 = vadd.f32 %v4902, %v5562
        %v5657 = vadd.f32 %v4903, %v5567
        %v5658 = vadd.f32 %v4904, %v5570
        %v5659 = vadd.f32 %v4905, %v5575
        %v5660 = vadd.f32 %v4906, %v5578
        %v5661 = vadd.f32 %v4907, %v5583
        %v5662 = vadd.f32 %v4908, %v5586
        %v5663 = vadd.f32 %v4909, %v5591
        %v5664 = vadd.f32 %v4910, %v5594
        %v5665 = vadd.f32 %v4911, %v5599
        %v5666 = vadd.f32 %v4912, %v5602
        %v5667 = vadd.f32 %v4913, %v5607
        %v5668 = vadd.f32 %v4914, %v5610
        %v5669 = vadd.f32 %v4915, %v5615
        %v5670 = vadd.f32 %v4916, %v5618
        %v5671 = vadd.f32 %v4917, %v5623
        %v5672 = vadd.f32 %v4918, %v5626
        %v5673 = vadd.f32 %v4919, %v5631
        %v5674 = vadd.f32 %v4920, %v5634
        %v5675 = vadd.f32 %v4921, %v5639
        %v5676 = vadd.f32 %v4922, %v5642
        %v5677 = vld [vmem:[%s4536] sm:$0xe]
        %v5678 = vld [vmem:[%s4536 + $0xc] sm:$0xe]
        %v5679 = vld [vmem:[%s4536 + $0x18] sm:$0xe]
        %v5680 = vld [vmem:[%s4536 + $0x24] sm:$0xe]
        %v5681 = vld [vmem:[%s4536 + $0x30] sm:$0xe]
        %v5682 = vld [vmem:[%s4536 + $0x3c] sm:$0xe]
        %v5683 = vld [vmem:[%s4536 + $0x48] sm:$0xe]
        %v5684 = vld [vmem:[%s4536 + $0x54] sm:$0xe]
        %v5685 = vld [vmem:[%s4536 + $0x60] sm:$0xe]
        %v5686 = vld [vmem:[%s4536 + $0x6c] sm:$0xe]
        %v5687 = vld [vmem:[%s4536 + $0x78] sm:$0xe]
        %v5688 = vld [vmem:[%s4536 + $0x84] sm:$0xe]
        %v5689 = vld [vmem:[%s4536 + $0x90] sm:$0xe]
        %v5690 = vld [vmem:[%s4536 + $0x9c] sm:$0xe]
        %v5691 = vld [vmem:[%s4536 + $0xa8] sm:$0xe]
        %v5692 = vld [vmem:[%s4536 + $0xb4] sm:$0xe]
        %v5741 = vrot.slane %v5677, 5
        %v5742 = vrot.slane %v5741, 4
        %v5743 = vrot.slane %v4924, 5
        %v5744 = vsel %vm2463, %v5742, %v5743
        %v5745 = vrot.slane %v5743, 4
        %v5746 = vrot.slane %v4925, 5
        %v5747 = vsel %vm2463, %v5745, %v5746
        %v5748 = vrot.slane %v5678, 5
        %v5749 = vrot.slane %v5748, 4
        %v5750 = vrot.slane %v4927, 5
        %v5751 = vsel %vm2463, %v5749, %v5750
        %v5752 = vrot.slane %v5750, 4
        %v5753 = vrot.slane %v4928, 5
        %v5754 = vsel %vm2463, %v5752, %v5753
        %v5755 = vrot.slane %v5679, 5
        %v5756 = vrot.slane %v5755, 4
        %v5757 = vrot.slane %v4930, 5
        %v5758 = vsel %vm2463, %v5756, %v5757
        %v5759 = vrot.slane %v5757, 4
        %v5760 = vrot.slane %v4931, 5
        %v5761 = vsel %vm2463, %v5759, %v5760
        %v5762 = vrot.slane %v5680, 5
        %v5763 = vrot.slane %v5762, 4
        %v5764 = vrot.slane %v4933, 5
        %v5765 = vsel %vm2463, %v5763, %v5764
        %v5766 = vrot.slane %v5764, 4
        %v5767 = vrot.slane %v4934, 5
        %v5768 = vsel %vm2463, %v5766, %v5767
        %v5769 = vrot.slane %v5681, 5
        %v5770 = vrot.slane %v5769, 4
        %v5771 = vrot.slane %v4936, 5
        %v5772 = vsel %vm2463, %v5770, %v5771
        %v5773 = vrot.slane %v5771, 4
        %v5774 = vrot.slane %v4937, 5
        %v5775 = vsel %vm2463, %v5773, %v5774
        %v5776 = vrot.slane %v5682, 5
        %v5777 = vrot.slane %v5776, 4
        %v5778 = vrot.slane %v4939, 5
        %v5779 = vsel %vm2463, %v5777, %v5778
        %v5780 = vrot.slane %v5778, 4
        %v5781 = vrot.slane %v4940, 5
        %v5782 = vsel %vm2463, %v5780, %v5781
        %v5783 = vrot.slane %v5683, 5
        %v5784 = vrot.slane %v5783, 4
        %v5785 = vrot.slane %v4942, 5
        %v5786 = vsel %vm2463, %v5784, %v5785
        %v5787 = vrot.slane %v5785, 4
        %v5788 = vrot.slane %v4943, 5
        %v5789 = vsel %vm2463, %v5787, %v5788
        %v5790 = vrot.slane %v5684, 5
        %v5791 = vrot.slane %v5790, 4
        %v5792 = vrot.slane %v4945, 5
        %v5793 = vsel %vm2463, %v5791, %v5792
        %v5794 = vrot.slane %v5792, 4
        %v5795 = vrot.slane %v4946, 5
        %v5796 = vsel %vm2463, %v5794, %v5795
        %v5797 = vrot.slane %v5685, 5
        %v5798 = vrot.slane %v5797, 4
        %v5799 = vrot.slane %v4948, 5
        %v5800 = vsel %vm2463, %v5798, %v5799
        %v5801 = vrot.slane %v5799, 4
        %v5802 = vrot.slane %v4949, 5
        %v5803 = vsel %vm2463, %v5801, %v5802
        %v5804 = vrot.slane %v5686, 5
        %v5805 = vrot.slane %v5804, 4
        %v5806 = vrot.slane %v4951, 5
        %v5807 = vsel %vm2463, %v5805, %v5806
        %v5808 = vrot.slane %v5806, 4
        %v5809 = vrot.slane %v4952, 5
        %v5810 = vsel %vm2463, %v5808, %v5809
        %v5811 = vrot.slane %v5687, 5
        %v5812 = vrot.slane %v5811, 4
        %v5813 = vrot.slane %v4954, 5
        %v5814 = vsel %vm2463, %v5812, %v5813
        %v5815 = vrot.slane %v5813, 4
        %v5816 = vrot.slane %v4955, 5
        %v5817 = vsel %vm2463, %v5815, %v5816
        %v5818 = vrot.slane %v5688, 5
        %v5819 = vrot.slane %v5818, 4
        %v5820 = vrot.slane %v4957, 5
        %v5821 = vsel %vm2463, %v5819, %v5820
        %v5822 = vrot.slane %v5820, 4
        %v5823 = vrot.slane %v4958, 5
        %v5824 = vsel %vm2463, %v5822, %v5823
        %v5825 = vrot.slane %v5689, 5
        %v5826 = vrot.slane %v5825, 4
        %v5827 = vrot.slane %v4960, 5
        %v5828 = vsel %vm2463, %v5826, %v5827
        %v5829 = vrot.slane %v5827, 4
        %v5830 = vrot.slane %v4961, 5
        %v5831 = vsel %vm2463, %v5829, %v5830
        %v5832 = vrot.slane %v5690, 5
        %v5833 = vrot.slane %v5832, 4
        %v5834 = vrot.slane %v4963, 5
        %v5835 = vsel %vm2463, %v5833, %v5834
        %v5836 = vrot.slane %v5834, 4
        %v5837 = vrot.slane %v4964, 5
        %v5838 = vsel %vm2463, %v5836, %v5837
        %v5839 = vrot.slane %v5691, 5
        %v5840 = vrot.slane %v5839, 4
        %v5841 = vrot.slane %v4966, 5
        %v5842 = vsel %vm2463, %v5840, %v5841
        %v5843 = vrot.slane %v5841, 4
        %v5844 = vrot.slane %v4967, 5
        %v5845 = vsel %vm2463, %v5843, %v5844
        %v5846 = vrot.slane %v5692, 5
        %v5847 = vrot.slane %v5846, 4
        %v5848 = vrot.slane %v4969, 5
        %v5849 = vsel %vm2463, %v5847, %v5848
        %v5850 = vrot.slane %v5848, 4
        %v5851 = vrot.slane %v4970, 5
        %v5852 = vsel %vm2463, %v5850, %v5851
        %s5853 = scalar_lea.vmem %s2, 256
        %v5854 = vld [vmem:[%s5853] sm:$0xf]
        %v5855 = vld [vmem:[%s5853 + $0x4] sm:$0xf]
        %v5856 = vld [vmem:[%s5853 + $0x8] sm:$0xf]
        %v5857 = vld [vmem:[%s5853 + $0xc] sm:$0xf]
        %v5858 = vld [vmem:[%s5853 + $0x10] sm:$0xf]
        %v5859 = vld [vmem:[%s5853 + $0x14] sm:$0xf]
        %v5860 = vld [vmem:[%s5853 + $0x18] sm:$0xf]
        %v5861 = vld [vmem:[%s5853 + $0x1c] sm:$0xf]
        %v5862 = vunpack.c.l.b16 %v5744
        %v5863 = vunpack.c.l.b16 %v5747
        %v5864 = vunpack.c.l.b16 %v5751
        %v5865 = vunpack.c.l.b16 %v5754
        %v5866 = vunpack.c.l.b16 %v5758
        %v5867 = vunpack.c.l.b16 %v5761
        %v5868 = vunpack.c.l.b16 %v5765
        %v5869 = vunpack.c.l.b16 %v5768
        %v5870 = vunpack.c.l.b16 %v5772
        %v5871 = vunpack.c.l.b16 %v5775
        %v5872 = vunpack.c.l.b16 %v5779
        %v5873 = vunpack.c.l.b16 %v5782
        %v5874 = vunpack.c.l.b16 %v5786
        %v5875 = vunpack.c.l.b16 %v5789
        %v5876 = vunpack.c.l.b16 %v5793
        %v5877 = vunpack.c.l.b16 %v5796
        %v5878 = vunpack.c.l.b16 %v5800
        %v5879 = vunpack.c.l.b16 %v5803
        %v5880 = vunpack.c.l.b16 %v5807
        %v5881 = vunpack.c.l.b16 %v5810
        %v5882 = vunpack.c.l.b16 %v5814
        %v5883 = vunpack.c.l.b16 %v5817
        %v5884 = vunpack.c.l.b16 %v5821
        %v5885 = vunpack.c.l.b16 %v5824
        %v5886 = vunpack.c.l.b16 %v5828
        %v5887 = vunpack.c.l.b16 %v5831
        %v5888 = vunpack.c.l.b16 %v5835
        %v5889 = vunpack.c.l.b16 %v5838
        %v5890 = vunpack.c.l.b16 %v5842
        %v5891 = vunpack.c.l.b16 %v5845
        %v5892 = vunpack.c.l.b16 %v5849
        %v5893 = vunpack.c.l.b16 %v5852
        %v5894 = vpack.c.b16 %v5863, %v5862
        %v5895 = vpack.c.b16 %v5865, %v5864
        %v5896 = vpack.c.b16 %v5867, %v5866
        %v5897 = vpack.c.b16 %v5869, %v5868
        %v5898 = vpack.c.b16 %v5871, %v5870
        %v5899 = vpack.c.b16 %v5873, %v5872
        %v5900 = vpack.c.b16 %v5875, %v5874
        %v5901 = vpack.c.b16 %v5877, %v5876
        %v5902 = vpack.c.b16 %v5879, %v5878
        %v5903 = vpack.c.b16 %v5881, %v5880
        %v5904 = vpack.c.b16 %v5883, %v5882
        %v5905 = vpack.c.b16 %v5885, %v5884
        %v5906 = vpack.c.b16 %v5887, %v5886
        %v5907 = vpack.c.b16 %v5889, %v5888
        %v5908 = vpack.c.b16 %v5891, %v5890
        %v5909 = vpack.c.b16 %v5893, %v5892
        %v5918 = vunpack.c.l.b16 %v5854
        %v5919 = vunpack.c.l.b16 %v5855
        %v5920 = vunpack.c.l.b16 %v5856
        %v5921 = vunpack.c.l.b16 %v5857
        %v5922 = vunpack.c.l.b16 %v5858
        %v5923 = vunpack.c.l.b16 %v5859
        %v5924 = vunpack.c.l.b16 %v5860
        %v5925 = vunpack.c.l.b16 %v5861
        %v5926 = vpack.c.b16 %v5919, %v5918
        %v5927 = vpack.c.b16 %v5921, %v5920
        %v5928 = vpack.c.b16 %v5923, %v5922
        %v5929 = vpack.c.b16 %v5925, %v5924
        %v5935 = vsel %vm1890, %v5894, 0
        %v5938 = vsel %vm1890, %v5895, 0
        %v5941 = vsel %vm1890, %v5896, 0
        %v5944 = vsel %vm1890, %v5897, 0
        %v5947 = vsel %vm1890, %v5898, 0
        %v5950 = vsel %vm1890, %v5899, 0
        %v5953 = vsel %vm1890, %v5900, 0
        %v5956 = vsel %vm1890, %v5901, 0
        %v5959 = vsel %vm1890, %v5902, 0
        %v5962 = vsel %vm1890, %v5903, 0
        %v5965 = vsel %vm1890, %v5904, 0
        %v5968 = vsel %vm1890, %v5905, 0
        %v5971 = vsel %vm1890, %v5906, 0
        %v5974 = vsel %vm1890, %v5907, 0
        %v5977 = vsel %vm1890, %v5908, 0
        %v5980 = vsel %vm1890, %v5909, 0
        %5982 = vmatprep.subr.bf16.mxu0 0
        %5983 = vmatpush1.bf16.msra.mxu0 0
        %5984 = vmatprep.subr.bf16.mxu0 0
        %5985 = vmatpush1.bf16.msra.mxu0 0
        %5986 = vmatprep.subr.bf16.mxu0 0
        %5987 = vmatpush1.bf16.msra.mxu0 0
        %5988 = vmatprep.subr.bf16.mxu0 0
        %5989 = vmatpush1.bf16.msra.mxu0 0
        %5990 = vmatprep.subr.bf16.mxu0 0
        %5991 = vmatpush1.bf16.msra.mxu0 %v5929
        %5992 = vmatprep.subr.bf16.mxu0 0
        %5993 = vmatpush1.bf16.msra.mxu0 %v5928
        %5994 = vmatprep.subr.bf16.mxu0 0
        %5995 = vmatpush1.bf16.msra.mxu0 %v5927
        %5996 = vmatprep.subr.bf16.mxu0 0
        %5997 = vmatpush1.bf16.msra.mxu0 %v5926
        %5998 = vmatprep.subr.bf16.mxu0 0
        %5999 = vmatpush2.bf16.msra.mxu0 0
        %6000 = vmatprep.subr.bf16.mxu0 0
        %6001 = vmatpush2.bf16.msra.mxu0 0
        %6002 = vmatprep.subr.bf16.mxu0 0
        %6003 = vmatpush2.bf16.msra.mxu0 0
        %6004 = vmatprep.subr.bf16.mxu0 0
        %6005 = vmatpush2.bf16.msra.mxu0 0
        %6006 = vmatprep.subr.bf16.mxu0 0
        %6007 = vmatpush2.bf16.msra.mxu0 0
        %6008 = vmatprep.subr.bf16.mxu0 0
        %6009 = vmatpush2.bf16.msra.mxu0 0
        %6010 = vmatprep.subr.bf16.mxu0 0
        %6011 = vmatpush2.bf16.msra.mxu0 0
        %6012 = vmatprep.subr.bf16.mxu0 0
        %6013 = vmatpush2.bf16.msra.mxu0 0
        %6014 = vmatprep.mubr.bf16.mxu0 0
        %6015 = vmatmul.mubr.bf16.gmra.mxu0 %v5935
        %v6016 = vpop.f32.mrf.mxu0
        %v6017 = vadd.f32 0.0, %v6016
        %v6018 = vpop.f32.mrf.mxu0
        %v6019 = vpop.f32.mrf.mxu0
        %v6020 = vadd.f32 0.0, %v6019
        %v6021 = vpop.f32.mrf.mxu0
        %6022 = vmatprep.mubr.bf16.mxu0 0
        %6023 = vmatmul.mubr.bf16.gmra.mxu0 %v5938
        %v6024 = vpop.f32.mrf.mxu0
        %v6025 = vadd.f32 0.0, %v6024
        %v6026 = vpop.f32.mrf.mxu0
        %v6027 = vpop.f32.mrf.mxu0
        %v6028 = vadd.f32 0.0, %v6027
        %v6029 = vpop.f32.mrf.mxu0
        %6030 = vmatprep.mubr.bf16.mxu0 0
        %6031 = vmatmul.mubr.bf16.gmra.mxu0 %v5941
        %v6032 = vpop.f32.mrf.mxu0
        %v6033 = vadd.f32 0.0, %v6032
        %v6034 = vpop.f32.mrf.mxu0
        %v6035 = vpop.f32.mrf.mxu0
        %v6036 = vadd.f32 0.0, %v6035
        %v6037 = vpop.f32.mrf.mxu0
        %6038 = vmatprep.mubr.bf16.mxu0 0
        %6039 = vmatmul.mubr.bf16.gmra.mxu0 %v5944
        %v6040 = vpop.f32.mrf.mxu0
        %v6041 = vadd.f32 0.0, %v6040
        %v6042 = vpop.f32.mrf.mxu0
        %v6043 = vpop.f32.mrf.mxu0
        %v6044 = vadd.f32 0.0, %v6043
        %v6045 = vpop.f32.mrf.mxu0
        %6046 = vmatprep.mubr.bf16.mxu0 0
        %6047 = vmatmul.mubr.bf16.gmra.mxu0 %v5947
        %v6048 = vpop.f32.mrf.mxu0
        %v6049 = vadd.f32 0.0, %v6048
        %v6050 = vpop.f32.mrf.mxu0
        %v6051 = vpop.f32.mrf.mxu0
        %v6052 = vadd.f32 0.0, %v6051
        %v6053 = vpop.f32.mrf.mxu0
        %6054 = vmatprep.mubr.bf16.mxu0 0
        %6055 = vmatmul.mubr.bf16.gmra.mxu0 %v5950
        %v6056 = vpop.f32.mrf.mxu0
        %v6057 = vadd.f32 0.0, %v6056
        %v6058 = vpop.f32.mrf.mxu0
        %v6059 = vpop.f32.mrf.mxu0
        %v6060 = vadd.f32 0.0, %v6059
        %v6061 = vpop.f32.mrf.mxu0
        %6062 = vmatprep.mubr.bf16.mxu0 0
        %6063 = vmatmul.mubr.bf16.gmra.mxu0 %v5953
        %v6064 = vpop.f32.mrf.mxu0
        %v6065 = vadd.f32 0.0, %v6064
        %v6066 = vpop.f32.mrf.mxu0
        %v6067 = vpop.f32.mrf.mxu0
        %v6068 = vadd.f32 0.0, %v6067
        %v6069 = vpop.f32.mrf.mxu0
        %6070 = vmatprep.mubr.bf16.mxu0 0
        %6071 = vmatmul.mubr.bf16.gmra.mxu0 %v5956
        %v6072 = vpop.f32.mrf.mxu0
        %v6073 = vadd.f32 0.0, %v6072
        %v6074 = vpop.f32.mrf.mxu0
        %v6075 = vpop.f32.mrf.mxu0
        %v6076 = vadd.f32 0.0, %v6075
        %v6077 = vpop.f32.mrf.mxu0
        %6078 = vmatprep.mubr.bf16.mxu0 0
        %6079 = vmatmul.mubr.bf16.gmra.mxu0 %v5959
        %v6080 = vpop.f32.mrf.mxu0
        %v6081 = vadd.f32 0.0, %v6080
        %v6082 = vpop.f32.mrf.mxu0
        %v6083 = vpop.f32.mrf.mxu0
        %v6084 = vadd.f32 0.0, %v6083
        %v6085 = vpop.f32.mrf.mxu0
        %6086 = vmatprep.mubr.bf16.mxu0 0
        %6087 = vmatmul.mubr.bf16.gmra.mxu0 %v5962
        %v6088 = vpop.f32.mrf.mxu0
        %v6089 = vadd.f32 0.0, %v6088
        %v6090 = vpop.f32.mrf.mxu0
        %v6091 = vpop.f32.mrf.mxu0
        %v6092 = vadd.f32 0.0, %v6091
        %v6093 = vpop.f32.mrf.mxu0
        %6094 = vmatprep.mubr.bf16.mxu0 0
        %6095 = vmatmul.mubr.bf16.gmra.mxu0 %v5965
        %v6096 = vpop.f32.mrf.mxu0
        %v6097 = vadd.f32 0.0, %v6096
        %v6098 = vpop.f32.mrf.mxu0
        %v6099 = vpop.f32.mrf.mxu0
        %v6100 = vadd.f32 0.0, %v6099
        %v6101 = vpop.f32.mrf.mxu0
        %6102 = vmatprep.mubr.bf16.mxu0 0
        %6103 = vmatmul.mubr.bf16.gmra.mxu0 %v5968
        %v6104 = vpop.f32.mrf.mxu0
        %v6105 = vadd.f32 0.0, %v6104
        %v6106 = vpop.f32.mrf.mxu0
        %v6107 = vpop.f32.mrf.mxu0
        %v6108 = vadd.f32 0.0, %v6107
        %v6109 = vpop.f32.mrf.mxu0
        %6110 = vmatprep.mubr.bf16.mxu0 0
        %6111 = vmatmul.mubr.bf16.gmra.mxu0 %v5971
        %v6112 = vpop.f32.mrf.mxu0
        %v6113 = vadd.f32 0.0, %v6112
        %v6114 = vpop.f32.mrf.mxu0
        %v6115 = vpop.f32.mrf.mxu0
        %v6116 = vadd.f32 0.0, %v6115
        %v6117 = vpop.f32.mrf.mxu0
        %6118 = vmatprep.mubr.bf16.mxu0 0
        %6119 = vmatmul.mubr.bf16.gmra.mxu0 %v5974
        %v6120 = vpop.f32.mrf.mxu0
        %v6121 = vadd.f32 0.0, %v6120
        %v6122 = vpop.f32.mrf.mxu0
        %v6123 = vpop.f32.mrf.mxu0
        %v6124 = vadd.f32 0.0, %v6123
        %v6125 = vpop.f32.mrf.mxu0
        %6126 = vmatprep.mubr.bf16.mxu0 0
        %6127 = vmatmul.mubr.bf16.gmra.mxu0 %v5977
        %v6128 = vpop.f32.mrf.mxu0
        %v6129 = vadd.f32 0.0, %v6128
        %v6130 = vpop.f32.mrf.mxu0
        %v6131 = vpop.f32.mrf.mxu0
        %v6132 = vadd.f32 0.0, %v6131
        %v6133 = vpop.f32.mrf.mxu0
        %6134 = vmatprep.mubr.bf16.mxu0 0
        %6135 = vmatmul.mubr.bf16.gmra.mxu0 %v5980
        %v6136 = vpop.f32.mrf.mxu0
        %v6137 = vadd.f32 0.0, %v6136
        %v6138 = vpop.f32.mrf.mxu0
        %v6139 = vpop.f32.mrf.mxu0
        %v6140 = vadd.f32 0.0, %v6139
        %v6141 = vpop.f32.mrf.mxu0
        %6142 = vdwg.mxu0
        %v6143 = vadd.f32 %v5645, %v6017
        %v6144 = vadd.f32 %v5646, %v6020
        %v6145 = vadd.f32 %v5647, %v6025
        %v6146 = vadd.f32 %v5648, %v6028
        %v6147 = vadd.f32 %v5649, %v6033
        %v6148 = vadd.f32 %v5650, %v6036
        %v6149 = vadd.f32 %v5651, %v6041
        %v6150 = vadd.f32 %v5652, %v6044
        %v6151 = vadd.f32 %v5653, %v6049
        %v6152 = vadd.f32 %v5654, %v6052
        %v6153 = vadd.f32 %v5655, %v6057
        %v6154 = vadd.f32 %v5656, %v6060
        %v6155 = vadd.f32 %v5657, %v6065
        %v6156 = vadd.f32 %v5658, %v6068
        %v6157 = vadd.f32 %v5659, %v6073
        %v6158 = vadd.f32 %v5660, %v6076
        %v6159 = vadd.f32 %v5661, %v6081
        %v6160 = vadd.f32 %v5662, %v6084
        %v6161 = vadd.f32 %v5663, %v6089
        %v6162 = vadd.f32 %v5664, %v6092
        %v6163 = vadd.f32 %v5665, %v6097
        %v6164 = vadd.f32 %v5666, %v6100
        %v6165 = vadd.f32 %v5667, %v6105
        %v6166 = vadd.f32 %v5668, %v6108
        %v6167 = vadd.f32 %v5669, %v6113
        %v6168 = vadd.f32 %v5670, %v6116
        %v6169 = vadd.f32 %v5671, %v6121
        %v6170 = vadd.f32 %v5672, %v6124
        %v6171 = vadd.f32 %v5673, %v6129
        %v6172 = vadd.f32 %v5674, %v6132
        %v6173 = vadd.f32 %v5675, %v6137
        %v6174 = vadd.f32 %v5676, %v6140
        %v6175 = vld [vmem:[%s3] sm:$0x1]
        %v6177 = vlaneseq
        %v6178 = vshrl.u32 %v6177, 7
        %v6179 = vsub.s32 0, %v6178
        %v6180 = vrot.slane %v6175, %v6179
        %v6182 = vadd.f32 %v6143, %v6180
        %v6183 = vadd.f32 %v6144, %v6180
        %v6184 = vadd.f32 %v6145, %v6180
        %v6185 = vadd.f32 %v6146, %v6180
        %v6186 = vadd.f32 %v6147, %v6180
        %v6187 = vadd.f32 %v6148, %v6180
        %v6188 = vadd.f32 %v6149, %v6180
        %v6189 = vadd.f32 %v6150, %v6180
        %v6190 = vadd.f32 %v6151, %v6180
        %v6191 = vadd.f32 %v6152, %v6180
        %v6192 = vadd.f32 %v6153, %v6180
        %v6193 = vadd.f32 %v6154, %v6180
        %v6194 = vadd.f32 %v6155, %v6180
        %v6195 = vadd.f32 %v6156, %v6180
        %v6196 = vadd.f32 %v6157, %v6180
        %v6197 = vadd.f32 %v6158, %v6180
        %v6198 = vadd.f32 %v6159, %v6180
        %v6199 = vadd.f32 %v6160, %v6180
        %v6200 = vadd.f32 %v6161, %v6180
        %v6201 = vadd.f32 %v6162, %v6180
        %v6202 = vadd.f32 %v6163, %v6180
        %v6203 = vadd.f32 %v6164, %v6180
        %v6204 = vadd.f32 %v6165, %v6180
        %v6205 = vadd.f32 %v6166, %v6180
        %v6206 = vadd.f32 %v6167, %v6180
        %v6207 = vadd.f32 %v6168, %v6180
        %v6208 = vadd.f32 %v6169, %v6180
        %v6209 = vadd.f32 %v6170, %v6180
        %v6210 = vadd.f32 %v6171, %v6180
        %v6211 = vadd.f32 %v6172, %v6180
        %v6212 = vadd.f32 %v6173, %v6180
        %v6213 = vadd.f32 %v6174, %v6180
        %v6214 = vmax.f32 %v6182, 0.0
        %v6215 = vmax.f32 %v6183, 0.0
        %v6216 = vmax.f32 %v6184, 0.0
        %v6217 = vmax.f32 %v6185, 0.0
        %v6218 = vmax.f32 %v6186, 0.0
        %v6219 = vmax.f32 %v6187, 0.0
        %v6220 = vmax.f32 %v6188, 0.0
        %v6221 = vmax.f32 %v6189, 0.0
        %v6222 = vmax.f32 %v6190, 0.0
        %v6223 = vmax.f32 %v6191, 0.0
        %v6224 = vmax.f32 %v6192, 0.0
        %v6225 = vmax.f32 %v6193, 0.0
        %v6226 = vmax.f32 %v6194, 0.0
        %v6227 = vmax.f32 %v6195, 0.0
        %v6228 = vmax.f32 %v6196, 0.0
        %v6229 = vmax.f32 %v6197, 0.0
        %v6230 = vmax.f32 %v6198, 0.0
        %v6231 = vmax.f32 %v6199, 0.0
        %v6232 = vmax.f32 %v6200, 0.0
        %v6233 = vmax.f32 %v6201, 0.0
        %v6234 = vmax.f32 %v6202, 0.0
        %v6235 = vmax.f32 %v6203, 0.0
        %v6236 = vmax.f32 %v6204, 0.0
        %v6237 = vmax.f32 %v6205, 0.0
        %v6238 = vmax.f32 %v6206, 0.0
        %v6239 = vmax.f32 %v6207, 0.0
        %v6240 = vmax.f32 %v6208, 0.0
        %v6241 = vmax.f32 %v6209, 0.0
        %v6242 = vmax.f32 %v6210, 0.0
        %v6243 = vmax.f32 %v6211, 0.0
        %v6244 = vmax.f32 %v6212, 0.0
        %v6245 = vmax.f32 %v6213, 0.0
        %6246 = vst.msk [vmem:[#allocation3] sm:$0xf] %vm689, 0
        %6247 = vst.msk [vmem:[#allocation3 + $0x4] sm:$0xf] %vm689, 0
        %vm6248 = vcmask 253952
        %6249 = vst.msk [vmem:[#allocation3 + $0x8] sm:$0x1] %vm6248, 0
        %6250 = vst.msk [vmem:[#allocation3 + $0xc] sm:$0xf] %vm689, 0
        %6251 = vst.msk [vmem:[#allocation3 + $0x10] sm:$0xf] %vm689, 0
        %6252 = vst.msk [vmem:[#allocation3 + $0x14] sm:$0x1] %vm6248, 0
        %6253 = vst.msk [vmem:[#allocation3 + $0x18] sm:$0xf] %vm689, 0
        %6254 = vst.msk [vmem:[#allocation3 + $0x1c] sm:$0xf] %vm689, 0
        %6255 = vst.msk [vmem:[#allocation3 + $0x20] sm:$0x1] %vm6248, 0
        %6256 = vst.msk [vmem:[#allocation3 + $0x24] sm:$0xf] %vm689, 0
        %6257 = vst.msk [vmem:[#allocation3 + $0x28] sm:$0xf] %vm689, 0
        %6258 = vst.msk [vmem:[#allocation3 + $0x2c] sm:$0x1] %vm6248, 0
        %6259 = vst.msk [vmem:[#allocation3 + $0x30] sm:$0xf] %vm689, 0
        %6260 = vst.msk [vmem:[#allocation3 + $0x34] sm:$0xf] %vm689, 0
        %6261 = vst.msk [vmem:[#allocation3 + $0x38] sm:$0x1] %vm6248, 0
        %6262 = vst.msk [vmem:[#allocation3 + $0x3c] sm:$0xf] %vm689, 0
        %6263 = vst.msk [vmem:[#allocation3 + $0x40] sm:$0xf] %vm689, 0
        %6264 = vst.msk [vmem:[#allocation3 + $0x44] sm:$0x1] %vm6248, 0
        %6265 = vst.msk [vmem:[#allocation3 + $0x48] sm:$0xf] %vm689, 0
        %6266 = vst.msk [vmem:[#allocation3 + $0x4c] sm:$0xf] %vm689, 0
        %6267 = vst.msk [vmem:[#allocation3 + $0x50] sm:$0x1] %vm6248, 0
        %6268 = vst.msk [vmem:[#allocation3 + $0x54] sm:$0xf] %vm689, 0
        %6269 = vst.msk [vmem:[#allocation3 + $0x58] sm:$0xf] %vm689, 0
        %6270 = vst.msk [vmem:[#allocation3 + $0x5c] sm:$0x1] %vm6248, 0
        %6271 = vst.msk [vmem:[#allocation3 + $0x60] sm:$0xf] %vm689, 0
        %6272 = vst.msk [vmem:[#allocation3 + $0x64] sm:$0xf] %vm689, 0
        %6273 = vst.msk [vmem:[#allocation3 + $0x68] sm:$0x1] %vm6248, 0
        %6274 = vst.msk [vmem:[#allocation3 + $0x6c] sm:$0xf] %vm689, 0
        %6275 = vst.msk [vmem:[#allocation3 + $0x70] sm:$0xf] %vm689, 0
        %6276 = vst.msk [vmem:[#allocation3 + $0x74] sm:$0x1] %vm6248, 0
        %6277 = vst.msk [vmem:[#allocation3 + $0x78] sm:$0xf] %vm689, 0
        %6278 = vst.msk [vmem:[#allocation3 + $0x7c] sm:$0xf] %vm689, 0
        %6279 = vst.msk [vmem:[#allocation3 + $0x80] sm:$0x1] %vm6248, 0
        %6280 = vst.msk [vmem:[#allocation3 + $0x84] sm:$0xf] %vm689, 0
        %6281 = vst.msk [vmem:[#allocation3 + $0x88] sm:$0xf] %vm689, 0
        %6282 = vst.msk [vmem:[#allocation3 + $0x8c] sm:$0x1] %vm6248, 0
        %6283 = vst.msk [vmem:[#allocation3 + $0x90] sm:$0xf] %vm689, 0
        %6284 = vst.msk [vmem:[#allocation3 + $0x94] sm:$0xf] %vm689, 0
        %6285 = vst.msk [vmem:[#allocation3 + $0x98] sm:$0x1] %vm6248, 0
        %6286 = vst.msk [vmem:[#allocation3 + $0x9c] sm:$0xf] %vm689, 0
        %6287 = vst.msk [vmem:[#allocation3 + $0xa0] sm:$0xf] %vm689, 0
        %6288 = vst.msk [vmem:[#allocation3 + $0xa4] sm:$0x1] %vm6248, 0
        %6289 = vst.msk [vmem:[#allocation3 + $0xa8] sm:$0xf] %vm689, 0
        %6290 = vst.msk [vmem:[#allocation3 + $0xac] sm:$0xf] %vm689, 0
        %6291 = vst.msk [vmem:[#allocation3 + $0xb0] sm:$0x1] %vm6248, 0
        %6292 = vst.msk [vmem:[#allocation3 + $0xb4] sm:$0xf] %vm689, 0
        %6293 = vst.msk [vmem:[#allocation3 + $0xb8] sm:$0xf] %vm689, 0
        %6294 = vst.msk [vmem:[#allocation3 + $0xbc] sm:$0x1] %vm6248, 0
        %6295 = vst.msk [vmem:[#allocation3 + $0xc0] sm:$0xf] %vm689, 0
        %6296 = vst.msk [vmem:[#allocation3 + $0xc4] sm:$0xf] %vm689, 0
        %6297 = vst.msk [vmem:[#allocation3 + $0xc8] sm:$0x1] %vm6248, 0
        %6298 = vst.msk [vmem:[#allocation3 + $0xcc] sm:$0xf] %vm689, 0
        %6299 = vst.msk [vmem:[#allocation3 + $0xd0] sm:$0xf] %vm689, 0
        %6300 = vst.msk [vmem:[#allocation3 + $0xd4] sm:$0x1] %vm6248, 0
        %v6301 = vpack.c.bf16 %v6215, %v6214
        %v6302 = vpack.c.bf16 %v6217, %v6216
        %v6303 = vpack.c.bf16 %v6219, %v6218
        %v6304 = vpack.c.bf16 %v6221, %v6220
        %v6305 = vpack.c.bf16 %v6223, %v6222
        %v6306 = vpack.c.bf16 %v6225, %v6224
        %v6307 = vpack.c.bf16 %v6227, %v6226
        %v6308 = vpack.c.bf16 %v6229, %v6228
        %v6309 = vpack.c.bf16 %v6231, %v6230
        %v6310 = vpack.c.bf16 %v6233, %v6232
        %v6311 = vpack.c.bf16 %v6235, %v6234
        %v6312 = vpack.c.bf16 %v6237, %v6236
        %v6313 = vpack.c.bf16 %v6239, %v6238
        %v6314 = vpack.c.bf16 %v6241, %v6240
        %v6315 = vpack.c.bf16 %v6243, %v6242
        %v6316 = vpack.c.bf16 %v6245, %v6244
        %v6333 = vunpack.c.l.b16 %v6301
        %v6334 = vunpack.c.h.b16 %v6301
        %v6335 = vunpack.c.l.b16 %v6302
        %v6336 = vunpack.c.h.b16 %v6302
        %v6337 = vunpack.c.l.b16 %v6303
        %v6338 = vunpack.c.h.b16 %v6303
        %v6339 = vunpack.c.l.b16 %v6304
        %v6340 = vunpack.c.h.b16 %v6304
        %v6341 = vunpack.c.l.b16 %v6305
        %v6342 = vunpack.c.h.b16 %v6305
        %v6343 = vunpack.c.l.b16 %v6306
        %v6344 = vunpack.c.h.b16 %v6306
        %v6345 = vunpack.c.l.b16 %v6307
        %v6346 = vunpack.c.h.b16 %v6307
        %v6347 = vunpack.c.l.b16 %v6308
        %v6348 = vunpack.c.h.b16 %v6308
        %v6349 = vunpack.c.l.b16 %v6309
        %v6350 = vunpack.c.h.b16 %v6309
        %v6351 = vunpack.c.l.b16 %v6310
        %v6352 = vunpack.c.h.b16 %v6310
        %v6353 = vunpack.c.l.b16 %v6311
        %v6354 = vunpack.c.h.b16 %v6311
        %v6355 = vunpack.c.l.b16 %v6312
        %v6356 = vunpack.c.h.b16 %v6312
        %v6357 = vunpack.c.l.b16 %v6313
        %v6358 = vunpack.c.h.b16 %v6313
        %v6359 = vunpack.c.l.b16 %v6314
        %v6360 = vunpack.c.h.b16 %v6314
        %v6361 = vunpack.c.l.b16 %v6315
        %v6362 = vunpack.c.h.b16 %v6315
        %v6363 = vunpack.c.l.b16 %v6316
        %v6364 = vunpack.c.h.b16 %v6316
        %v6365 = vpack.c.b16 %v6333, %v6333
        %v6366 = vpack.c.b16 %v6334, %v6334
        %v6367 = vpack.c.b16 %v6335, %v6335
        %v6368 = vpack.c.b16 %v6336, %v6336
        %v6369 = vpack.c.b16 %v6337, %v6337
        %v6370 = vpack.c.b16 %v6338, %v6338
        %v6371 = vpack.c.b16 %v6339, %v6339
        %v6372 = vpack.c.b16 %v6340, %v6340
        %v6373 = vpack.c.b16 %v6341, %v6341
        %v6374 = vpack.c.b16 %v6342, %v6342
        %v6375 = vpack.c.b16 %v6343, %v6343
        %v6376 = vpack.c.b16 %v6344, %v6344
        %v6377 = vpack.c.b16 %v6345, %v6345
        %v6378 = vpack.c.b16 %v6346, %v6346
        %v6379 = vpack.c.b16 %v6347, %v6347
        %v6380 = vpack.c.b16 %v6348, %v6348
        %v6381 = vpack.c.b16 %v6349, %v6349
        %v6382 = vpack.c.b16 %v6350, %v6350
        %v6383 = vpack.c.b16 %v6351, %v6351
        %v6384 = vpack.c.b16 %v6352, %v6352
        %v6385 = vpack.c.b16 %v6353, %v6353
        %v6386 = vpack.c.b16 %v6354, %v6354
        %v6387 = vpack.c.b16 %v6355, %v6355
        %v6388 = vpack.c.b16 %v6356, %v6356
        %v6389 = vpack.c.b16 %v6357, %v6357
        %v6390 = vpack.c.b16 %v6358, %v6358
        %v6391 = vpack.c.b16 %v6359, %v6359
        %v6392 = vpack.c.b16 %v6360, %v6360
        %v6393 = vpack.c.b16 %v6361, %v6361
        %v6394 = vpack.c.b16 %v6362, %v6362
        %v6395 = vpack.c.b16 %v6363, %v6363
        %v6396 = vpack.c.b16 %v6364, %v6364
        %v6398 = vshrl.u32 %v6365, 16
        %v6400 = vrot.slane %v6398, 7
        %v6401 = vshll.u32 %v6365, 16
        %v6403 = vor.u32 %v6400, %v6401
        %v6404 = vrot.slane %v6400, 4
        %v6406 = vshrl.u32 %v6366, 16
        %v6408 = vrot.slane %v6406, 7
        %v6409 = vshll.u32 %v6366, 16
        %v6411 = vor.u32 %v6408, %v6409
        %v6412 = vsel %vm361, %v6404, %v6411
        %v6413 = vrot.slane %v6408, 4
        %v6415 = vshrl.u32 %v6367, 16
        %v6417 = vrot.slane %v6415, 7
        %v6418 = vshll.u32 %v6367, 16
        %v6420 = vor.u32 %v6417, %v6418
        %v6421 = vrot.slane %v6417, 4
        %v6423 = vshrl.u32 %v6368, 16
        %v6425 = vrot.slane %v6423, 7
        %v6426 = vshll.u32 %v6368, 16
        %v6428 = vor.u32 %v6425, %v6426
        %v6429 = vsel %vm361, %v6421, %v6428
        %v6430 = vrot.slane %v6425, 4
        %v6432 = vshrl.u32 %v6369, 16
        %v6434 = vrot.slane %v6432, 7
        %v6435 = vshll.u32 %v6369, 16
        %v6437 = vor.u32 %v6434, %v6435
        %v6438 = vrot.slane %v6434, 4
        %v6440 = vshrl.u32 %v6370, 16
        %v6442 = vrot.slane %v6440, 7
        %v6443 = vshll.u32 %v6370, 16
        %v6445 = vor.u32 %v6442, %v6443
        %v6446 = vsel %vm361, %v6438, %v6445
        %v6447 = vrot.slane %v6442, 4
        %v6449 = vshrl.u32 %v6371, 16
        %v6451 = vrot.slane %v6449, 7
        %v6452 = vshll.u32 %v6371, 16
        %v6454 = vor.u32 %v6451, %v6452
        %v6455 = vrot.slane %v6451, 4
        %v6457 = vshrl.u32 %v6372, 16
        %v6459 = vrot.slane %v6457, 7
        %v6460 = vshll.u32 %v6372, 16
        %v6462 = vor.u32 %v6459, %v6460
        %v6463 = vsel %vm361, %v6455, %v6462
        %v6464 = vrot.slane %v6459, 4
        %v6466 = vshrl.u32 %v6373, 16
        %v6468 = vrot.slane %v6466, 7
        %v6469 = vshll.u32 %v6373, 16
        %v6471 = vor.u32 %v6468, %v6469
        %v6472 = vrot.slane %v6468, 4
        %v6474 = vshrl.u32 %v6374, 16
        %v6476 = vrot.slane %v6474, 7
        %v6477 = vshll.u32 %v6374, 16
        %v6479 = vor.u32 %v6476, %v6477
        %v6480 = vsel %vm361, %v6472, %v6479
        %v6481 = vrot.slane %v6476, 4
        %v6483 = vshrl.u32 %v6375, 16
        %v6485 = vrot.slane %v6483, 7
        %v6486 = vshll.u32 %v6375, 16
        %v6488 = vor.u32 %v6485, %v6486
        %v6489 = vrot.slane %v6485, 4
        %v6491 = vshrl.u32 %v6376, 16
        %v6493 = vrot.slane %v6491, 7
        %v6494 = vshll.u32 %v6376, 16
        %v6496 = vor.u32 %v6493, %v6494
        %v6497 = vsel %vm361, %v6489, %v6496
        %v6498 = vrot.slane %v6493, 4
        %v6500 = vshrl.u32 %v6377, 16
        %v6502 = vrot.slane %v6500, 7
        %v6503 = vshll.u32 %v6377, 16
        %v6505 = vor.u32 %v6502, %v6503
        %v6506 = vrot.slane %v6502, 4
        %v6508 = vshrl.u32 %v6378, 16
        %v6510 = vrot.slane %v6508, 7
        %v6511 = vshll.u32 %v6378, 16
        %v6513 = vor.u32 %v6510, %v6511
        %v6514 = vsel %vm361, %v6506, %v6513
        %v6515 = vrot.slane %v6510, 4
        %v6517 = vshrl.u32 %v6379, 16
        %v6519 = vrot.slane %v6517, 7
        %v6520 = vshll.u32 %v6379, 16
        %v6522 = vor.u32 %v6519, %v6520
        %v6523 = vrot.slane %v6519, 4
        %v6525 = vshrl.u32 %v6380, 16
        %v6527 = vrot.slane %v6525, 7
        %v6528 = vshll.u32 %v6380, 16
        %v6530 = vor.u32 %v6527, %v6528
        %v6531 = vsel %vm361, %v6523, %v6530
        %v6532 = vrot.slane %v6527, 4
        %v6534 = vshrl.u32 %v6381, 16
        %v6536 = vrot.slane %v6534, 7
        %v6537 = vshll.u32 %v6381, 16
        %v6539 = vor.u32 %v6536, %v6537
        %v6540 = vrot.slane %v6536, 4
        %v6542 = vshrl.u32 %v6382, 16
        %v6544 = vrot.slane %v6542, 7
        %v6545 = vshll.u32 %v6382, 16
        %v6547 = vor.u32 %v6544, %v6545
        %v6548 = vsel %vm361, %v6540, %v6547
        %v6549 = vrot.slane %v6544, 4
        %v6551 = vshrl.u32 %v6383, 16
        %v6553 = vrot.slane %v6551, 7
        %v6554 = vshll.u32 %v6383, 16
        %v6556 = vor.u32 %v6553, %v6554
        %v6557 = vrot.slane %v6553, 4
        %v6559 = vshrl.u32 %v6384, 16
        %v6561 = vrot.slane %v6559, 7
        %v6562 = vshll.u32 %v6384, 16
        %v6564 = vor.u32 %v6561, %v6562
        %v6565 = vsel %vm361, %v6557, %v6564
        %v6566 = vrot.slane %v6561, 4
        %v6568 = vshrl.u32 %v6385, 16
        %v6570 = vrot.slane %v6568, 7
        %v6571 = vshll.u32 %v6385, 16
        %v6573 = vor.u32 %v6570, %v6571
        %v6574 = vrot.slane %v6570, 4
        %v6576 = vshrl.u32 %v6386, 16
        %v6578 = vrot.slane %v6576, 7
        %v6579 = vshll.u32 %v6386, 16
        %v6581 = vor.u32 %v6578, %v6579
        %v6582 = vsel %vm361, %v6574, %v6581
        %v6583 = vrot.slane %v6578, 4
        %v6585 = vshrl.u32 %v6387, 16
        %v6587 = vrot.slane %v6585, 7
        %v6588 = vshll.u32 %v6387, 16
        %v6590 = vor.u32 %v6587, %v6588
        %v6591 = vrot.slane %v6587, 4
        %v6593 = vshrl.u32 %v6388, 16
        %v6595 = vrot.slane %v6593, 7
        %v6596 = vshll.u32 %v6388, 16
        %v6598 = vor.u32 %v6595, %v6596
        %v6599 = vsel %vm361, %v6591, %v6598
        %v6600 = vrot.slane %v6595, 4
        %v6602 = vshrl.u32 %v6389, 16
        %v6604 = vrot.slane %v6602, 7
        %v6605 = vshll.u32 %v6389, 16
        %v6607 = vor.u32 %v6604, %v6605
        %v6608 = vrot.slane %v6604, 4
        %v6610 = vshrl.u32 %v6390, 16
        %v6612 = vrot.slane %v6610, 7
        %v6613 = vshll.u32 %v6390, 16
        %v6615 = vor.u32 %v6612, %v6613
        %v6616 = vsel %vm361, %v6608, %v6615
        %v6617 = vrot.slane %v6612, 4
        %v6619 = vshrl.u32 %v6391, 16
        %v6621 = vrot.slane %v6619, 7
        %v6622 = vshll.u32 %v6391, 16
        %v6624 = vor.u32 %v6621, %v6622
        %v6625 = vrot.slane %v6621, 4
        %v6627 = vshrl.u32 %v6392, 16
        %v6629 = vrot.slane %v6627, 7
        %v6630 = vshll.u32 %v6392, 16
        %v6632 = vor.u32 %v6629, %v6630
        %v6633 = vsel %vm361, %v6625, %v6632
        %v6634 = vrot.slane %v6629, 4
        %v6636 = vshrl.u32 %v6393, 16
        %v6638 = vrot.slane %v6636, 7
        %v6639 = vshll.u32 %v6393, 16
        %v6641 = vor.u32 %v6638, %v6639
        %v6642 = vrot.slane %v6638, 4
        %v6644 = vshrl.u32 %v6394, 16
        %v6646 = vrot.slane %v6644, 7
        %v6647 = vshll.u32 %v6394, 16
        %v6649 = vor.u32 %v6646, %v6647
        %v6650 = vsel %vm361, %v6642, %v6649
        %v6651 = vrot.slane %v6646, 4
        %v6653 = vshrl.u32 %v6395, 16
        %v6655 = vrot.slane %v6653, 7
        %v6656 = vshll.u32 %v6395, 16
        %v6658 = vor.u32 %v6655, %v6656
        %v6659 = vrot.slane %v6655, 4
        %v6661 = vshrl.u32 %v6396, 16
        %v6663 = vrot.slane %v6661, 7
        %v6664 = vshll.u32 %v6396, 16
        %v6666 = vor.u32 %v6663, %v6664
        %v6667 = vsel %vm361, %v6659, %v6666
        %v6668 = vrot.slane %v6663, 4
        %s6717 = scalar_lea.vmem [#allocation3], 12
        %v6718 = vld [vmem:[%s6717] sm:$0xf]
        %v6719 = vsel %vm685, %v6403, %v6718
        %6720 = vst [vmem:[%s6717] sm:$0xf] %v6719
        %6721 = vst.msk [vmem:[%s6717 + $0x4] sm:$0xf] %vm689, %v6412
        %v6722 = vld [vmem:[%s6717 + $0x8] sm:$0x1]
        %v6723 = vsel %vm692, %v6413, %v6722
        %6724 = vst [vmem:[%s6717 + $0x8] sm:$0x1] %v6723
        %v6725 = vld [vmem:[%s6717 + $0xc] sm:$0xf]
        %v6726 = vsel %vm685, %v6420, %v6725
        %6727 = vst [vmem:[%s6717 + $0xc] sm:$0xf] %v6726
        %6728 = vst.msk [vmem:[%s6717 + $0x10] sm:$0xf] %vm689, %v6429
        %v6729 = vld [vmem:[%s6717 + $0x14] sm:$0x1]
        %v6730 = vsel %vm692, %v6430, %v6729
        %6731 = vst [vmem:[%s6717 + $0x14] sm:$0x1] %v6730
        %v6732 = vld [vmem:[%s6717 + $0x18] sm:$0xf]
        %v6733 = vsel %vm685, %v6437, %v6732
        %6734 = vst [vmem:[%s6717 + $0x18] sm:$0xf] %v6733
        %6735 = vst.msk [vmem:[%s6717 + $0x1c] sm:$0xf] %vm689, %v6446
        %v6736 = vld [vmem:[%s6717 + $0x20] sm:$0x1]
        %v6737 = vsel %vm692, %v6447, %v6736
        %6738 = vst [vmem:[%s6717 + $0x20] sm:$0x1] %v6737
        %v6739 = vld [vmem:[%s6717 + $0x24] sm:$0xf]
        %v6740 = vsel %vm685, %v6454, %v6739
        %6741 = vst [vmem:[%s6717 + $0x24] sm:$0xf] %v6740
        %6742 = vst.msk [vmem:[%s6717 + $0x28] sm:$0xf] %vm689, %v6463
        %v6743 = vld [vmem:[%s6717 + $0x2c] sm:$0x1]
        %v6744 = vsel %vm692, %v6464, %v6743
        %6745 = vst [vmem:[%s6717 + $0x2c] sm:$0x1] %v6744
        %v6746 = vld [vmem:[%s6717 + $0x30] sm:$0xf]
        %v6747 = vsel %vm685, %v6471, %v6746
        %6748 = vst [vmem:[%s6717 + $0x30] sm:$0xf] %v6747
        %6749 = vst.msk [vmem:[%s6717 + $0x34] sm:$0xf] %vm689, %v6480
        %v6750 = vld [vmem:[%s6717 + $0x38] sm:$0x1]
        %v6751 = vsel %vm692, %v6481, %v6750
        %6752 = vst [vmem:[%s6717 + $0x38] sm:$0x1] %v6751
        %v6753 = vld [vmem:[%s6717 + $0x3c] sm:$0xf]
        %v6754 = vsel %vm685, %v6488, %v6753
        %6755 = vst [vmem:[%s6717 + $0x3c] sm:$0xf] %v6754
        %6756 = vst.msk [vmem:[%s6717 + $0x40] sm:$0xf] %vm689, %v6497
        %v6757 = vld [vmem:[%s6717 + $0x44] sm:$0x1]
        %v6758 = vsel %vm692, %v6498, %v6757
        %6759 = vst [vmem:[%s6717 + $0x44] sm:$0x1] %v6758
        %v6760 = vld [vmem:[%s6717 + $0x48] sm:$0xf]
        %v6761 = vsel %vm685, %v6505, %v6760
        %6762 = vst [vmem:[%s6717 + $0x48] sm:$0xf] %v6761
        %6763 = vst.msk [vmem:[%s6717 + $0x4c] sm:$0xf] %vm689, %v6514
        %v6764 = vld [vmem:[%s6717 + $0x50] sm:$0x1]
        %v6765 = vsel %vm692, %v6515, %v6764
        %6766 = vst [vmem:[%s6717 + $0x50] sm:$0x1] %v6765
        %v6767 = vld [vmem:[%s6717 + $0x54] sm:$0xf]
        %v6768 = vsel %vm685, %v6522, %v6767
        %6769 = vst [vmem:[%s6717 + $0x54] sm:$0xf] %v6768
        %6770 = vst.msk [vmem:[%s6717 + $0x58] sm:$0xf] %vm689, %v6531
        %v6771 = vld [vmem:[%s6717 + $0x5c] sm:$0x1]
        %v6772 = vsel %vm692, %v6532, %v6771
        %6773 = vst [vmem:[%s6717 + $0x5c] sm:$0x1] %v6772
        %v6774 = vld [vmem:[%s6717 + $0x60] sm:$0xf]
        %v6775 = vsel %vm685, %v6539, %v6774
        %6776 = vst [vmem:[%s6717 + $0x60] sm:$0xf] %v6775
        %6777 = vst.msk [vmem:[%s6717 + $0x64] sm:$0xf] %vm689, %v6548
        %v6778 = vld [vmem:[%s6717 + $0x68] sm:$0x1]
        %v6779 = vsel %vm692, %v6549, %v6778
        %6780 = vst [vmem:[%s6717 + $0x68] sm:$0x1] %v6779
        %v6781 = vld [vmem:[%s6717 + $0x6c] sm:$0xf]
        %v6782 = vsel %vm685, %v6556, %v6781
        %6783 = vst [vmem:[%s6717 + $0x6c] sm:$0xf] %v6782
        %6784 = vst.msk [vmem:[%s6717 + $0x70] sm:$0xf] %vm689, %v6565
        %v6785 = vld [vmem:[%s6717 + $0x74] sm:$0x1]
        %v6786 = vsel %vm692, %v6566, %v6785
        %6787 = vst [vmem:[%s6717 + $0x74] sm:$0x1] %v6786
        %v6788 = vld [vmem:[%s6717 + $0x78] sm:$0xf]
        %v6789 = vsel %vm685, %v6573, %v6788
        %6790 = vst [vmem:[%s6717 + $0x78] sm:$0xf] %v6789
        %6791 = vst.msk [vmem:[%s6717 + $0x7c] sm:$0xf] %vm689, %v6582
        %v6792 = vld [vmem:[%s6717 + $0x80] sm:$0x1]
        %v6793 = vsel %vm692, %v6583, %v6792
        %6794 = vst [vmem:[%s6717 + $0x80] sm:$0x1] %v6793
        %v6795 = vld [vmem:[%s6717 + $0x84] sm:$0xf]
        %v6796 = vsel %vm685, %v6590, %v6795
        %6797 = vst [vmem:[%s6717 + $0x84] sm:$0xf] %v6796
        %6798 = vst.msk [vmem:[%s6717 + $0x88] sm:$0xf] %vm689, %v6599
        %v6799 = vld [vmem:[%s6717 + $0x8c] sm:$0x1]
        %v6800 = vsel %vm692, %v6600, %v6799
        %6801 = vst [vmem:[%s6717 + $0x8c] sm:$0x1] %v6800
        %v6802 = vld [vmem:[%s6717 + $0x90] sm:$0xf]
        %v6803 = vsel %vm685, %v6607, %v6802
        %6804 = vst [vmem:[%s6717 + $0x90] sm:$0xf] %v6803
        %6805 = vst.msk [vmem:[%s6717 + $0x94] sm:$0xf] %vm689, %v6616
        %v6806 = vld [vmem:[%s6717 + $0x98] sm:$0x1]
        %v6807 = vsel %vm692, %v6617, %v6806
        %6808 = vst [vmem:[%s6717 + $0x98] sm:$0x1] %v6807
        %v6809 = vld [vmem:[%s6717 + $0x9c] sm:$0xf]
        %v6810 = vsel %vm685, %v6624, %v6809
        %6811 = vst [vmem:[%s6717 + $0x9c] sm:$0xf] %v6810
        %6812 = vst.msk [vmem:[%s6717 + $0xa0] sm:$0xf] %vm689, %v6633
        %v6813 = vld [vmem:[%s6717 + $0xa4] sm:$0x1]
        %v6814 = vsel %vm692, %v6634, %v6813
        %6815 = vst [vmem:[%s6717 + $0xa4] sm:$0x1] %v6814
        %v6816 = vld [vmem:[%s6717 + $0xa8] sm:$0xf]
        %v6817 = vsel %vm685, %v6641, %v6816
        %6818 = vst [vmem:[%s6717 + $0xa8] sm:$0xf] %v6817
        %6819 = vst.msk [vmem:[%s6717 + $0xac] sm:$0xf] %vm689, %v6650
        %v6820 = vld [vmem:[%s6717 + $0xb0] sm:$0x1]
        %v6821 = vsel %vm692, %v6651, %v6820
        %6822 = vst [vmem:[%s6717 + $0xb0] sm:$0x1] %v6821
        %v6823 = vld [vmem:[%s6717 + $0xb4] sm:$0xf]
        %v6824 = vsel %vm685, %v6658, %v6823
        %6825 = vst [vmem:[%s6717 + $0xb4] sm:$0xf] %v6824
        %6826 = vst.msk [vmem:[%s6717 + $0xb8] sm:$0xf] %vm689, %v6667
        %v6827 = vld [vmem:[%s6717 + $0xbc] sm:$0x1]
        %v6828 = vsel %vm692, %v6668, %v6827
        %6829 = vst [vmem:[%s6717 + $0xbc] sm:$0x1] %v6828
        %v6830 = vld [vmem:[#allocation3] sm:$0xf]
        %v6831 = vld [vmem:[#allocation3 + $0x4] sm:$0xf]
        %v6832 = vld [vmem:[#allocation3 + $0xc] sm:$0xf]
        %v6833 = vld [vmem:[#allocation3 + $0x10] sm:$0xf]
        %v6834 = vld [vmem:[#allocation3 + $0x18] sm:$0xf]
        %v6835 = vld [vmem:[#allocation3 + $0x1c] sm:$0xf]
        %v6836 = vld [vmem:[#allocation3 + $0x24] sm:$0xf]
        %v6837 = vld [vmem:[#allocation3 + $0x28] sm:$0xf]
        %v6838 = vld [vmem:[#allocation3 + $0x30] sm:$0xf]
        %v6839 = vld [vmem:[#allocation3 + $0x34] sm:$0xf]
        %v6840 = vld [vmem:[#allocation3 + $0x3c] sm:$0xf]
        %v6841 = vld [vmem:[#allocation3 + $0x40] sm:$0xf]
        %v6842 = vld [vmem:[#allocation3 + $0x48] sm:$0xf]
        %v6843 = vld [vmem:[#allocation3 + $0x4c] sm:$0xf]
        %v6844 = vld [vmem:[#allocation3 + $0x54] sm:$0xf]
        %v6845 = vld [vmem:[#allocation3 + $0x58] sm:$0xf]
        %v6846 = vld [vmem:[#allocation3 + $0x60] sm:$0xf]
        %v6847 = vld [vmem:[#allocation3 + $0x64] sm:$0xf]
        %v6848 = vld [vmem:[#allocation3 + $0x6c] sm:$0xf]
        %v6849 = vld [vmem:[#allocation3 + $0x70] sm:$0xf]
        %v6850 = vld [vmem:[#allocation3 + $0x78] sm:$0xf]
        %v6851 = vld [vmem:[#allocation3 + $0x7c] sm:$0xf]
        %v6852 = vld [vmem:[#allocation3 + $0x84] sm:$0xf]
        %v6853 = vld [vmem:[#allocation3 + $0x88] sm:$0xf]
        %v6854 = vld [vmem:[#allocation3 + $0x90] sm:$0xf]
        %v6855 = vld [vmem:[#allocation3 + $0x94] sm:$0xf]
        %v6856 = vld [vmem:[#allocation3 + $0x9c] sm:$0xf]
        %v6857 = vld [vmem:[#allocation3 + $0xa0] sm:$0xf]
        %v6858 = vld [vmem:[#allocation3 + $0xa8] sm:$0xf]
        %v6859 = vld [vmem:[#allocation3 + $0xac] sm:$0xf]
        %v6860 = vld [vmem:[#allocation3 + $0xb4] sm:$0xf]
        %v6861 = vld [vmem:[#allocation3 + $0xb8] sm:$0xf]
        %v6862 = vld [vmem:[%s4] sm:$0xf]
        %v6863 = vld [vmem:[%s4 + $0x4] sm:$0xf]
        %v6864 = vld [vmem:[%s4 + $0x8] sm:$0xf]
        %v6865 = vld [vmem:[%s4 + $0xc] sm:$0xf]
        %v6866 = vld [vmem:[#allocation3 + $0x8] sm:$0x1]
        %v6867 = vld [vmem:[#allocation3 + $0x14] sm:$0x1]
        %v6868 = vld [vmem:[#allocation3 + $0x20] sm:$0x1]
        %v6869 = vld [vmem:[#allocation3 + $0x2c] sm:$0x1]
        %v6870 = vld [vmem:[#allocation3 + $0x38] sm:$0x1]
        %v6871 = vld [vmem:[#allocation3 + $0x44] sm:$0x1]
        %v6872 = vld [vmem:[#allocation3 + $0x50] sm:$0x1]
        %v6873 = vld [vmem:[#allocation3 + $0x5c] sm:$0x1]
        %v6874 = vld [vmem:[#allocation3 + $0x68] sm:$0x1]
        %v6875 = vld [vmem:[#allocation3 + $0x74] sm:$0x1]
        %v6876 = vld [vmem:[#allocation3 + $0x80] sm:$0x1]
        %v6877 = vld [vmem:[#allocation3 + $0x8c] sm:$0x1]
        %v6878 = vld [vmem:[#allocation3 + $0x98] sm:$0x1]
        %v6879 = vld [vmem:[#allocation3 + $0xa4] sm:$0x1]
        %v6880 = vld [vmem:[#allocation3 + $0xb0] sm:$0x1]
        %v6881 = vld [vmem:[#allocation3 + $0xbc] sm:$0x1]
        %v6883 = vshrl.u32 %v6830, 16
        %v6885 = vrot.slane %v6883, 4
        %v6886 = vshll.u32 %v6830, 16
        %v6888 = vrot.slane %v6886, 5
        %v6889 = vor.u32 %v6885, %v6888
        %v6890 = vrot.slane %v6889, 4
        %v6892 = vshll.u32 %v6831, 16
        %v6894 = vrot.slane %v6892, 5
        %v6895 = vsel %vm1424, %v6890, %v6894
        %v6896 = vshrl.u32 %v6831, 16
        %v6898 = vrot.slane %v6896, 4
        %v6899 = vor.u32 %v6898, %v6894
        %v6900 = vrot.slane %v6899, 4
        %v6902 = vshll.u32 %v6866, 16
        %v6904 = vrot.slane %v6902, 5
        %v6905 = vsel %vm1424, %v6900, %v6904
        %v6907 = vshrl.u32 %v6832, 16
        %v6909 = vrot.slane %v6907, 4
        %v6910 = vshll.u32 %v6832, 16
        %v6912 = vrot.slane %v6910, 5
        %v6913 = vor.u32 %v6909, %v6912
        %v6914 = vrot.slane %v6913, 4
        %v6916 = vshll.u32 %v6833, 16
        %v6918 = vrot.slane %v6916, 5
        %v6919 = vsel %vm1424, %v6914, %v6918
        %v6920 = vshrl.u32 %v6833, 16
        %v6922 = vrot.slane %v6920, 4
        %v6923 = vor.u32 %v6922, %v6918
        %v6924 = vrot.slane %v6923, 4
        %v6926 = vshll.u32 %v6867, 16
        %v6928 = vrot.slane %v6926, 5
        %v6929 = vsel %vm1424, %v6924, %v6928
        %v6931 = vshrl.u32 %v6834, 16
        %v6933 = vrot.slane %v6931, 4
        %v6934 = vshll.u32 %v6834, 16
        %v6936 = vrot.slane %v6934, 5
        %v6937 = vor.u32 %v6933, %v6936
        %v6938 = vrot.slane %v6937, 4
        %v6940 = vshll.u32 %v6835, 16
        %v6942 = vrot.slane %v6940, 5
        %v6943 = vsel %vm1424, %v6938, %v6942
        %v6944 = vshrl.u32 %v6835, 16
        %v6946 = vrot.slane %v6944, 4
        %v6947 = vor.u32 %v6946, %v6942
        %v6948 = vrot.slane %v6947, 4
        %v6950 = vshll.u32 %v6868, 16
        %v6952 = vrot.slane %v6950, 5
        %v6953 = vsel %vm1424, %v6948, %v6952
        %v6955 = vshrl.u32 %v6836, 16
        %v6957 = vrot.slane %v6955, 4
        %v6958 = vshll.u32 %v6836, 16
        %v6960 = vrot.slane %v6958, 5
        %v6961 = vor.u32 %v6957, %v6960
        %v6962 = vrot.slane %v6961, 4
        %v6964 = vshll.u32 %v6837, 16
        %v6966 = vrot.slane %v6964, 5
        %v6967 = vsel %vm1424, %v6962, %v6966
        %v6968 = vshrl.u32 %v6837, 16
        %v6970 = vrot.slane %v6968, 4
        %v6971 = vor.u32 %v6970, %v6966
        %v6972 = vrot.slane %v6971, 4
        %v6974 = vshll.u32 %v6869, 16
        %v6976 = vrot.slane %v6974, 5
        %v6977 = vsel %vm1424, %v6972, %v6976
        %v6979 = vshrl.u32 %v6838, 16
        %v6981 = vrot.slane %v6979, 4
        %v6982 = vshll.u32 %v6838, 16
        %v6984 = vrot.slane %v6982, 5
        %v6985 = vor.u32 %v6981, %v6984
        %v6986 = vrot.slane %v6985, 4
        %v6988 = vshll.u32 %v6839, 16
        %v6990 = vrot.slane %v6988, 5
        %v6991 = vsel %vm1424, %v6986, %v6990
        %v6992 = vshrl.u32 %v6839, 16
        %v6994 = vrot.slane %v6992, 4
        %v6995 = vor.u32 %v6994, %v6990
        %v6996 = vrot.slane %v6995, 4
        %v6998 = vshll.u32 %v6870, 16
        %v7000 = vrot.slane %v6998, 5
        %v7001 = vsel %vm1424, %v6996, %v7000
        %v7003 = vshrl.u32 %v6840, 16
        %v7005 = vrot.slane %v7003, 4
        %v7006 = vshll.u32 %v6840, 16
        %v7008 = vrot.slane %v7006, 5
        %v7009 = vor.u32 %v7005, %v7008
        %v7010 = vrot.slane %v7009, 4
        %v7012 = vshll.u32 %v6841, 16
        %v7014 = vrot.slane %v7012, 5
        %v7015 = vsel %vm1424, %v7010, %v7014
        %v7016 = vshrl.u32 %v6841, 16
        %v7018 = vrot.slane %v7016, 4
        %v7019 = vor.u32 %v7018, %v7014
        %v7020 = vrot.slane %v7019, 4
        %v7022 = vshll.u32 %v6871, 16
        %v7024 = vrot.slane %v7022, 5
        %v7025 = vsel %vm1424, %v7020, %v7024
        %v7027 = vshrl.u32 %v6842, 16
        %v7029 = vrot.slane %v7027, 4
        %v7030 = vshll.u32 %v6842, 16
        %v7032 = vrot.slane %v7030, 5
        %v7033 = vor.u32 %v7029, %v7032
        %v7034 = vrot.slane %v7033, 4
        %v7036 = vshll.u32 %v6843, 16
        %v7038 = vrot.slane %v7036, 5
        %v7039 = vsel %vm1424, %v7034, %v7038
        %v7040 = vshrl.u32 %v6843, 16
        %v7042 = vrot.slane %v7040, 4
        %v7043 = vor.u32 %v7042, %v7038
        %v7044 = vrot.slane %v7043, 4
        %v7046 = vshll.u32 %v6872, 16
        %v7048 = vrot.slane %v7046, 5
        %v7049 = vsel %vm1424, %v7044, %v7048
        %v7051 = vshrl.u32 %v6844, 16
        %v7053 = vrot.slane %v7051, 4
        %v7054 = vshll.u32 %v6844, 16
        %v7056 = vrot.slane %v7054, 5
        %v7057 = vor.u32 %v7053, %v7056
        %v7058 = vrot.slane %v7057, 4
        %v7060 = vshll.u32 %v6845, 16
        %v7062 = vrot.slane %v7060, 5
        %v7063 = vsel %vm1424, %v7058, %v7062
        %v7064 = vshrl.u32 %v6845, 16
        %v7066 = vrot.slane %v7064, 4
        %v7067 = vor.u32 %v7066, %v7062
        %v7068 = vrot.slane %v7067, 4
        %v7070 = vshll.u32 %v6873, 16
        %v7072 = vrot.slane %v7070, 5
        %v7073 = vsel %vm1424, %v7068, %v7072
        %v7075 = vshrl.u32 %v6846, 16
        %v7077 = vrot.slane %v7075, 4
        %v7078 = vshll.u32 %v6846, 16
        %v7080 = vrot.slane %v7078, 5
        %v7081 = vor.u32 %v7077, %v7080
        %v7082 = vrot.slane %v7081, 4
        %v7084 = vshll.u32 %v6847, 16
        %v7086 = vrot.slane %v7084, 5
        %v7087 = vsel %vm1424, %v7082, %v7086
        %v7088 = vshrl.u32 %v6847, 16
        %v7090 = vrot.slane %v7088, 4
        %v7091 = vor.u32 %v7090, %v7086
        %v7092 = vrot.slane %v7091, 4
        %v7094 = vshll.u32 %v6874, 16
        %v7096 = vrot.slane %v7094, 5
        %v7097 = vsel %vm1424, %v7092, %v7096
        %v7099 = vshrl.u32 %v6848, 16
        %v7101 = vrot.slane %v7099, 4
        %v7102 = vshll.u32 %v6848, 16
        %v7104 = vrot.slane %v7102, 5
        %v7105 = vor.u32 %v7101, %v7104
        %v7106 = vrot.slane %v7105, 4
        %v7108 = vshll.u32 %v6849, 16
        %v7110 = vrot.slane %v7108, 5
        %v7111 = vsel %vm1424, %v7106, %v7110
        %v7112 = vshrl.u32 %v6849, 16
        %v7114 = vrot.slane %v7112, 4
        %v7115 = vor.u32 %v7114, %v7110
        %v7116 = vrot.slane %v7115, 4
        %v7118 = vshll.u32 %v6875, 16
        %v7120 = vrot.slane %v7118, 5
        %v7121 = vsel %vm1424, %v7116, %v7120
        %v7123 = vshrl.u32 %v6850, 16
        %v7125 = vrot.slane %v7123, 4
        %v7126 = vshll.u32 %v6850, 16
        %v7128 = vrot.slane %v7126, 5
        %v7129 = vor.u32 %v7125, %v7128
        %v7130 = vrot.slane %v7129, 4
        %v7132 = vshll.u32 %v6851, 16
        %v7134 = vrot.slane %v7132, 5
        %v7135 = vsel %vm1424, %v7130, %v7134
        %v7136 = vshrl.u32 %v6851, 16
        %v7138 = vrot.slane %v7136, 4
        %v7139 = vor.u32 %v7138, %v7134
        %v7140 = vrot.slane %v7139, 4
        %v7142 = vshll.u32 %v6876, 16
        %v7144 = vrot.slane %v7142, 5
        %v7145 = vsel %vm1424, %v7140, %v7144
        %v7147 = vshrl.u32 %v6852, 16
        %v7149 = vrot.slane %v7147, 4
        %v7150 = vshll.u32 %v6852, 16
        %v7152 = vrot.slane %v7150, 5
        %v7153 = vor.u32 %v7149, %v7152
        %v7154 = vrot.slane %v7153, 4
        %v7156 = vshll.u32 %v6853, 16
        %v7158 = vrot.slane %v7156, 5
        %v7159 = vsel %vm1424, %v7154, %v7158
        %v7160 = vshrl.u32 %v6853, 16
        %v7162 = vrot.slane %v7160, 4
        %v7163 = vor.u32 %v7162, %v7158
        %v7164 = vrot.slane %v7163, 4
        %v7166 = vshll.u32 %v6877, 16
        %v7168 = vrot.slane %v7166, 5
        %v7169 = vsel %vm1424, %v7164, %v7168
        %v7171 = vshrl.u32 %v6854, 16
        %v7173 = vrot.slane %v7171, 4
        %v7174 = vshll.u32 %v6854, 16
        %v7176 = vrot.slane %v7174, 5
        %v7177 = vor.u32 %v7173, %v7176
        %v7178 = vrot.slane %v7177, 4
        %v7180 = vshll.u32 %v6855, 16
        %v7182 = vrot.slane %v7180, 5
        %v7183 = vsel %vm1424, %v7178, %v7182
        %v7184 = vshrl.u32 %v6855, 16
        %v7186 = vrot.slane %v7184, 4
        %v7187 = vor.u32 %v7186, %v7182
        %v7188 = vrot.slane %v7187, 4
        %v7190 = vshll.u32 %v6878, 16
        %v7192 = vrot.slane %v7190, 5
        %v7193 = vsel %vm1424, %v7188, %v7192
        %v7195 = vshrl.u32 %v6856, 16
        %v7197 = vrot.slane %v7195, 4
        %v7198 = vshll.u32 %v6856, 16
        %v7200 = vrot.slane %v7198, 5
        %v7201 = vor.u32 %v7197, %v7200
        %v7202 = vrot.slane %v7201, 4
        %v7204 = vshll.u32 %v6857, 16
        %v7206 = vrot.slane %v7204, 5
        %v7207 = vsel %vm1424, %v7202, %v7206
        %v7208 = vshrl.u32 %v6857, 16
        %v7210 = vrot.slane %v7208, 4
        %v7211 = vor.u32 %v7210, %v7206
        %v7212 = vrot.slane %v7211, 4
        %v7214 = vshll.u32 %v6879, 16
        %v7216 = vrot.slane %v7214, 5
        %v7217 = vsel %vm1424, %v7212, %v7216
        %v7219 = vshrl.u32 %v6858, 16
        %v7221 = vrot.slane %v7219, 4
        %v7222 = vshll.u32 %v6858, 16
        %v7224 = vrot.slane %v7222, 5
        %v7225 = vor.u32 %v7221, %v7224
        %v7226 = vrot.slane %v7225, 4
        %v7228 = vshll.u32 %v6859, 16
        %v7230 = vrot.slane %v7228, 5
        %v7231 = vsel %vm1424, %v7226, %v7230
        %v7232 = vshrl.u32 %v6859, 16
        %v7234 = vrot.slane %v7232, 4
        %v7235 = vor.u32 %v7234, %v7230
        %v7236 = vrot.slane %v7235, 4
        %v7238 = vshll.u32 %v6880, 16
        %v7240 = vrot.slane %v7238, 5
        %v7241 = vsel %vm1424, %v7236, %v7240
        %v7243 = vshrl.u32 %v6860, 16
        %v7245 = vrot.slane %v7243, 4
        %v7246 = vshll.u32 %v6860, 16
        %v7248 = vrot.slane %v7246, 5
        %v7249 = vor.u32 %v7245, %v7248
        %v7250 = vrot.slane %v7249, 4
        %v7252 = vshll.u32 %v6861, 16
        %v7254 = vrot.slane %v7252, 5
        %v7255 = vsel %vm1424, %v7250, %v7254
        %v7256 = vshrl.u32 %v6861, 16
        %v7258 = vrot.slane %v7256, 4
        %v7259 = vor.u32 %v7258, %v7254
        %v7260 = vrot.slane %v7259, 4
        %v7262 = vshll.u32 %v6881, 16
        %v7264 = vrot.slane %v7262, 5
        %v7265 = vsel %vm1424, %v7260, %v7264
        %s7266 = scalar_lea.vmem %s4, 16
        %v7267 = vld [vmem:[%s7266] sm:$0xf]
        %v7268 = vld [vmem:[%s7266 + $0x4] sm:$0xf]
        %v7269 = vld [vmem:[%s7266 + $0x8] sm:$0xf]
        %v7270 = vld [vmem:[%s7266 + $0xc] sm:$0xf]
        %v7271 = vunpack.c.l.b16 %v6895
        %v7272 = vunpack.c.l.b16 %v6905
        %v7273 = vunpack.c.l.b16 %v6919
        %v7274 = vunpack.c.l.b16 %v6929
        %v7275 = vunpack.c.l.b16 %v6943
        %v7276 = vunpack.c.l.b16 %v6953
        %v7277 = vunpack.c.l.b16 %v6967
        %v7278 = vunpack.c.l.b16 %v6977
        %v7279 = vunpack.c.l.b16 %v6991
        %v7280 = vunpack.c.l.b16 %v7001
        %v7281 = vunpack.c.l.b16 %v7015
        %v7282 = vunpack.c.l.b16 %v7025
        %v7283 = vunpack.c.l.b16 %v7039
        %v7284 = vunpack.c.l.b16 %v7049
        %v7285 = vunpack.c.l.b16 %v7063
        %v7286 = vunpack.c.l.b16 %v7073
        %v7287 = vunpack.c.l.b16 %v7087
        %v7288 = vunpack.c.l.b16 %v7097
        %v7289 = vunpack.c.l.b16 %v7111
        %v7290 = vunpack.c.l.b16 %v7121
        %v7291 = vunpack.c.l.b16 %v7135
        %v7292 = vunpack.c.l.b16 %v7145
        %v7293 = vunpack.c.l.b16 %v7159
        %v7294 = vunpack.c.l.b16 %v7169
        %v7295 = vunpack.c.l.b16 %v7183
        %v7296 = vunpack.c.l.b16 %v7193
        %v7297 = vunpack.c.l.b16 %v7207
        %v7298 = vunpack.c.l.b16 %v7217
        %v7299 = vunpack.c.l.b16 %v7231
        %v7300 = vunpack.c.l.b16 %v7241
        %v7301 = vunpack.c.l.b16 %v7255
        %v7302 = vunpack.c.l.b16 %v7265
        %v7303 = vpack.c.b16 %v7272, %v7271
        %v7304 = vpack.c.b16 %v7274, %v7273
        %v7305 = vpack.c.b16 %v7276, %v7275
        %v7306 = vpack.c.b16 %v7278, %v7277
        %v7307 = vpack.c.b16 %v7280, %v7279
        %v7308 = vpack.c.b16 %v7282, %v7281
        %v7309 = vpack.c.b16 %v7284, %v7283
        %v7310 = vpack.c.b16 %v7286, %v7285
        %v7311 = vpack.c.b16 %v7288, %v7287
        %v7312 = vpack.c.b16 %v7290, %v7289
        %v7313 = vpack.c.b16 %v7292, %v7291
        %v7314 = vpack.c.b16 %v7294, %v7293
        %v7315 = vpack.c.b16 %v7296, %v7295
        %v7316 = vpack.c.b16 %v7298, %v7297
        %v7317 = vpack.c.b16 %v7300, %v7299
        %v7318 = vpack.c.b16 %v7302, %v7301
        %v7323 = vunpack.c.l.b16 %v7267
        %v7324 = vunpack.c.l.b16 %v7268
        %v7325 = vunpack.c.l.b16 %v7269
        %v7326 = vunpack.c.l.b16 %v7270
        %v7327 = vpack.c.b16 %v7324, %v7323
        %v7328 = vpack.c.b16 %v7326, %v7325
        %vm7331 = vcmask 261120
        %v7333 = vsel %vm7331, %v7303, 0
        %v7336 = vsel %vm7331, %v7304, 0
        %v7339 = vsel %vm7331, %v7305, 0
        %v7342 = vsel %vm7331, %v7306, 0
        %v7345 = vsel %vm7331, %v7307, 0
        %v7348 = vsel %vm7331, %v7308, 0
        %v7351 = vsel %vm7331, %v7309, 0
        %v7354 = vsel %vm7331, %v7310, 0
        %v7357 = vsel %vm7331, %v7311, 0
        %v7360 = vsel %vm7331, %v7312, 0
        %v7363 = vsel %vm7331, %v7313, 0
        %v7366 = vsel %vm7331, %v7314, 0
        %v7369 = vsel %vm7331, %v7315, 0
        %v7372 = vsel %vm7331, %v7316, 0
        %v7375 = vsel %vm7331, %v7317, 0
        %v7378 = vsel %vm7331, %v7318, 0
        %7380 = vmatprep.subr.bf16.mxu0 0
        %7381 = vmatpush1.bf16.msra.mxu0 0
        %7382 = vmatprep.subr.bf16.mxu0 0
        %7383 = vmatpush1.bf16.msra.mxu0 0
        %7384 = vmatprep.subr.bf16.mxu0 0
        %7385 = vmatpush1.bf16.msra.mxu0 0
        %7386 = vmatprep.subr.bf16.mxu0 0
        %7387 = vmatpush1.bf16.msra.mxu0 0
        %7388 = vmatprep.subr.bf16.mxu0 0
        %7389 = vmatpush1.bf16.msra.mxu0 0
        %7390 = vmatprep.subr.bf16.mxu0 0
        %7391 = vmatpush1.bf16.msra.mxu0 0
        %7392 = vmatprep.subr.bf16.mxu0 0
        %7393 = vmatpush1.bf16.msra.mxu0 %v7328
        %7394 = vmatprep.subr.bf16.mxu0 0
        %7395 = vmatpush1.bf16.msra.mxu0 %v7327
        %7396 = vmatprep.subr.bf16.mxu0 0
        %7397 = vmatpush2.bf16.msra.mxu0 0
        %7398 = vmatprep.subr.bf16.mxu0 0
        %7399 = vmatpush2.bf16.msra.mxu0 0
        %7400 = vmatprep.subr.bf16.mxu0 0
        %7401 = vmatpush2.bf16.msra.mxu0 0
        %7402 = vmatprep.subr.bf16.mxu0 0
        %7403 = vmatpush2.bf16.msra.mxu0 0
        %7404 = vmatprep.subr.bf16.mxu0 0
        %7405 = vmatpush2.bf16.msra.mxu0 0
        %7406 = vmatprep.subr.bf16.mxu0 0
        %7407 = vmatpush2.bf16.msra.mxu0 0
        %7408 = vmatprep.subr.bf16.mxu0 0
        %7409 = vmatpush2.bf16.msra.mxu0 0
        %7410 = vmatprep.subr.bf16.mxu0 0
        %7411 = vmatpush2.bf16.msra.mxu0 0
        %7412 = vmatprep.mubr.bf16.mxu0 0
        %7413 = vmatmul.mubr.bf16.gmra.mxu0 %v7333
        %v7414 = vpop.f32.mrf.mxu0
        %v7415 = vadd.f32 0.0, %v7414
        %v7416 = vpop.f32.mrf.mxu0
        %v7417 = vpop.f32.mrf.mxu0
        %v7418 = vadd.f32 0.0, %v7417
        %v7419 = vpop.f32.mrf.mxu0
        %7420 = vmatprep.mubr.bf16.mxu0 0
        %7421 = vmatmul.mubr.bf16.gmra.mxu0 %v7336
        %v7422 = vpop.f32.mrf.mxu0
        %v7423 = vadd.f32 0.0, %v7422
        %v7424 = vpop.f32.mrf.mxu0
        %v7425 = vpop.f32.mrf.mxu0
        %v7426 = vadd.f32 0.0, %v7425
        %v7427 = vpop.f32.mrf.mxu0
        %7428 = vmatprep.mubr.bf16.mxu0 0
        %7429 = vmatmul.mubr.bf16.gmra.mxu0 %v7339
        %v7430 = vpop.f32.mrf.mxu0
        %v7431 = vadd.f32 0.0, %v7430
        %v7432 = vpop.f32.mrf.mxu0
        %v7433 = vpop.f32.mrf.mxu0
        %v7434 = vadd.f32 0.0, %v7433
        %v7435 = vpop.f32.mrf.mxu0
        %7436 = vmatprep.mubr.bf16.mxu0 0
        %7437 = vmatmul.mubr.bf16.gmra.mxu0 %v7342
        %v7438 = vpop.f32.mrf.mxu0
        %v7439 = vadd.f32 0.0, %v7438
        %v7440 = vpop.f32.mrf.mxu0
        %v7441 = vpop.f32.mrf.mxu0
        %v7442 = vadd.f32 0.0, %v7441
        %v7443 = vpop.f32.mrf.mxu0
        %7444 = vmatprep.mubr.bf16.mxu0 0
        %7445 = vmatmul.mubr.bf16.gmra.mxu0 %v7345
        %v7446 = vpop.f32.mrf.mxu0
        %v7447 = vadd.f32 0.0, %v7446
        %v7448 = vpop.f32.mrf.mxu0
        %v7449 = vpop.f32.mrf.mxu0
        %v7450 = vadd.f32 0.0, %v7449
        %v7451 = vpop.f32.mrf.mxu0
        %7452 = vmatprep.mubr.bf16.mxu0 0
        %7453 = vmatmul.mubr.bf16.gmra.mxu0 %v7348
        %v7454 = vpop.f32.mrf.mxu0
        %v7455 = vadd.f32 0.0, %v7454
        %v7456 = vpop.f32.mrf.mxu0
        %v7457 = vpop.f32.mrf.mxu0
        %v7458 = vadd.f32 0.0, %v7457
        %v7459 = vpop.f32.mrf.mxu0
        %7460 = vmatprep.mubr.bf16.mxu0 0
        %7461 = vmatmul.mubr.bf16.gmra.mxu0 %v7351
        %v7462 = vpop.f32.mrf.mxu0
        %v7463 = vadd.f32 0.0, %v7462
        %v7464 = vpop.f32.mrf.mxu0
        %v7465 = vpop.f32.mrf.mxu0
        %v7466 = vadd.f32 0.0, %v7465
        %v7467 = vpop.f32.mrf.mxu0
        %7468 = vmatprep.mubr.bf16.mxu0 0
        %7469 = vmatmul.mubr.bf16.gmra.mxu0 %v7354
        %v7470 = vpop.f32.mrf.mxu0
        %v7471 = vadd.f32 0.0, %v7470
        %v7472 = vpop.f32.mrf.mxu0
        %v7473 = vpop.f32.mrf.mxu0
        %v7474 = vadd.f32 0.0, %v7473
        %v7475 = vpop.f32.mrf.mxu0
        %7476 = vmatprep.mubr.bf16.mxu0 0
        %7477 = vmatmul.mubr.bf16.gmra.mxu0 %v7357
        %v7478 = vpop.f32.mrf.mxu0
        %v7479 = vadd.f32 0.0, %v7478
        %v7480 = vpop.f32.mrf.mxu0
        %v7481 = vpop.f32.mrf.mxu0
        %v7482 = vadd.f32 0.0, %v7481
        %v7483 = vpop.f32.mrf.mxu0
        %7484 = vmatprep.mubr.bf16.mxu0 0
        %7485 = vmatmul.mubr.bf16.gmra.mxu0 %v7360
        %v7486 = vpop.f32.mrf.mxu0
        %v7487 = vadd.f32 0.0, %v7486
        %v7488 = vpop.f32.mrf.mxu0
        %v7489 = vpop.f32.mrf.mxu0
        %v7490 = vadd.f32 0.0, %v7489
        %v7491 = vpop.f32.mrf.mxu0
        %7492 = vmatprep.mubr.bf16.mxu0 0
        %7493 = vmatmul.mubr.bf16.gmra.mxu0 %v7363
        %v7494 = vpop.f32.mrf.mxu0
        %v7495 = vadd.f32 0.0, %v7494
        %v7496 = vpop.f32.mrf.mxu0
        %v7497 = vpop.f32.mrf.mxu0
        %v7498 = vadd.f32 0.0, %v7497
        %v7499 = vpop.f32.mrf.mxu0
        %7500 = vmatprep.mubr.bf16.mxu0 0
        %7501 = vmatmul.mubr.bf16.gmra.mxu0 %v7366
        %v7502 = vpop.f32.mrf.mxu0
        %v7503 = vadd.f32 0.0, %v7502
        %v7504 = vpop.f32.mrf.mxu0
        %v7505 = vpop.f32.mrf.mxu0
        %v7506 = vadd.f32 0.0, %v7505
        %v7507 = vpop.f32.mrf.mxu0
        %7508 = vmatprep.mubr.bf16.mxu0 0
        %7509 = vmatmul.mubr.bf16.gmra.mxu0 %v7369
        %v7510 = vpop.f32.mrf.mxu0
        %v7511 = vadd.f32 0.0, %v7510
        %v7512 = vpop.f32.mrf.mxu0
        %v7513 = vpop.f32.mrf.mxu0
        %v7514 = vadd.f32 0.0, %v7513
        %v7515 = vpop.f32.mrf.mxu0
        %7516 = vmatprep.mubr.bf16.mxu0 0
        %7517 = vmatmul.mubr.bf16.gmra.mxu0 %v7372
        %v7518 = vpop.f32.mrf.mxu0
        %v7519 = vadd.f32 0.0, %v7518
        %v7520 = vpop.f32.mrf.mxu0
        %v7521 = vpop.f32.mrf.mxu0
        %v7522 = vadd.f32 0.0, %v7521
        %v7523 = vpop.f32.mrf.mxu0
        %7524 = vmatprep.mubr.bf16.mxu0 0
        %7525 = vmatmul.mubr.bf16.gmra.mxu0 %v7375
        %v7526 = vpop.f32.mrf.mxu0
        %v7527 = vadd.f32 0.0, %v7526
        %v7528 = vpop.f32.mrf.mxu0
        %v7529 = vpop.f32.mrf.mxu0
        %v7530 = vadd.f32 0.0, %v7529
        %v7531 = vpop.f32.mrf.mxu0
        %7532 = vmatprep.mubr.bf16.mxu0 0
        %7533 = vmatmul.mubr.bf16.gmra.mxu0 %v7378
        %v7534 = vpop.f32.mrf.mxu0
        %v7535 = vadd.f32 0.0, %v7534
        %v7536 = vpop.f32.mrf.mxu0
        %v7537 = vpop.f32.mrf.mxu0
        %v7538 = vadd.f32 0.0, %v7537
        %v7539 = vpop.f32.mrf.mxu0
        %7540 = vdwg.mxu0
        %v7573 = vunpack.c.l.b16 %v6830
        %v7574 = vunpack.c.l.b16 %v6831
        %v7575 = vunpack.c.l.b16 %v6832
        %v7576 = vunpack.c.l.b16 %v6833
        %v7577 = vunpack.c.l.b16 %v6834
        %v7578 = vunpack.c.l.b16 %v6835
        %v7579 = vunpack.c.l.b16 %v6836
        %v7580 = vunpack.c.l.b16 %v6837
        %v7581 = vunpack.c.l.b16 %v6838
        %v7582 = vunpack.c.l.b16 %v6839
        %v7583 = vunpack.c.l.b16 %v6840
        %v7584 = vunpack.c.l.b16 %v6841
        %v7585 = vunpack.c.l.b16 %v6842
        %v7586 = vunpack.c.l.b16 %v6843
        %v7587 = vunpack.c.l.b16 %v6844
        %v7588 = vunpack.c.l.b16 %v6845
        %v7589 = vunpack.c.l.b16 %v6846
        %v7590 = vunpack.c.l.b16 %v6847
        %v7591 = vunpack.c.l.b16 %v6848
        %v7592 = vunpack.c.l.b16 %v6849
        %v7593 = vunpack.c.l.b16 %v6850
        %v7594 = vunpack.c.l.b16 %v6851
        %v7595 = vunpack.c.l.b16 %v6852
        %v7596 = vunpack.c.l.b16 %v6853
        %v7597 = vunpack.c.l.b16 %v6854
        %v7598 = vunpack.c.l.b16 %v6855
        %v7599 = vunpack.c.l.b16 %v6856
        %v7600 = vunpack.c.l.b16 %v6857
        %v7601 = vunpack.c.l.b16 %v6858
        %v7602 = vunpack.c.l.b16 %v6859
        %v7603 = vunpack.c.l.b16 %v6860
        %v7604 = vunpack.c.l.b16 %v6861
        %v7605 = vpack.c.b16 %v7574, %v7573
        %v7606 = vpack.c.b16 %v7576, %v7575
        %v7607 = vpack.c.b16 %v7578, %v7577
        %v7608 = vpack.c.b16 %v7580, %v7579
        %v7609 = vpack.c.b16 %v7582, %v7581
        %v7610 = vpack.c.b16 %v7584, %v7583
        %v7611 = vpack.c.b16 %v7586, %v7585
        %v7612 = vpack.c.b16 %v7588, %v7587
        %v7613 = vpack.c.b16 %v7590, %v7589
        %v7614 = vpack.c.b16 %v7592, %v7591
        %v7615 = vpack.c.b16 %v7594, %v7593
        %v7616 = vpack.c.b16 %v7596, %v7595
        %v7617 = vpack.c.b16 %v7598, %v7597
        %v7618 = vpack.c.b16 %v7600, %v7599
        %v7619 = vpack.c.b16 %v7602, %v7601
        %v7620 = vpack.c.b16 %v7604, %v7603
        %v7625 = vunpack.c.l.b16 %v6862
        %v7626 = vunpack.c.l.b16 %v6863
        %v7627 = vunpack.c.l.b16 %v6864
        %v7628 = vunpack.c.l.b16 %v6865
        %v7629 = vpack.c.b16 %v7626, %v7625
        %v7630 = vpack.c.b16 %v7628, %v7627
        %v7634 = vsel %vm7331, %v7605, 0
        %v7637 = vsel %vm7331, %v7606, 0
        %v7640 = vsel %vm7331, %v7607, 0
        %v7643 = vsel %vm7331, %v7608, 0
        %v7646 = vsel %vm7331, %v7609, 0
        %v7649 = vsel %vm7331, %v7610, 0
        %v7652 = vsel %vm7331, %v7611, 0
        %v7655 = vsel %vm7331, %v7612, 0
        %v7658 = vsel %vm7331, %v7613, 0
        %v7661 = vsel %vm7331, %v7614, 0
        %v7664 = vsel %vm7331, %v7615, 0
        %v7667 = vsel %vm7331, %v7616, 0
        %v7670 = vsel %vm7331, %v7617, 0
        %v7673 = vsel %vm7331, %v7618, 0
        %v7676 = vsel %vm7331, %v7619, 0
        %v7679 = vsel %vm7331, %v7620, 0
        %7681 = vmatprep.subr.bf16.mxu0 0
        %7682 = vmatpush1.bf16.msra.mxu0 0
        %7683 = vmatprep.subr.bf16.mxu0 0
        %7684 = vmatpush1.bf16.msra.mxu0 0
        %7685 = vmatprep.subr.bf16.mxu0 0
        %7686 = vmatpush1.bf16.msra.mxu0 0
        %7687 = vmatprep.subr.bf16.mxu0 0
        %7688 = vmatpush1.bf16.msra.mxu0 0
        %7689 = vmatprep.subr.bf16.mxu0 0
        %7690 = vmatpush1.bf16.msra.mxu0 0
        %7691 = vmatprep.subr.bf16.mxu0 0
        %7692 = vmatpush1.bf16.msra.mxu0 0
        %7693 = vmatprep.subr.bf16.mxu0 0
        %7694 = vmatpush1.bf16.msra.mxu0 %v7630
        %7695 = vmatprep.subr.bf16.mxu0 0
        %7696 = vmatpush1.bf16.msra.mxu0 %v7629
        %7697 = vmatprep.subr.bf16.mxu0 0
        %7698 = vmatpush2.bf16.msra.mxu0 0
        %7699 = vmatprep.subr.bf16.mxu0 0
        %7700 = vmatpush2.bf16.msra.mxu0 0
        %7701 = vmatprep.subr.bf16.mxu0 0
        %7702 = vmatpush2.bf16.msra.mxu0 0
        %7703 = vmatprep.subr.bf16.mxu0 0
        %7704 = vmatpush2.bf16.msra.mxu0 0
        %7705 = vmatprep.subr.bf16.mxu0 0
        %7706 = vmatpush2.bf16.msra.mxu0 0
        %7707 = vmatprep.subr.bf16.mxu0 0
        %7708 = vmatpush2.bf16.msra.mxu0 0
        %7709 = vmatprep.subr.bf16.mxu0 0
        %7710 = vmatpush2.bf16.msra.mxu0 0
        %7711 = vmatprep.subr.bf16.mxu0 0
        %7712 = vmatpush2.bf16.msra.mxu0 0
        %7713 = vmatprep.mubr.bf16.mxu0 0
        %7714 = vmatmul.mubr.bf16.gmra.mxu0 %v7634
        %v7715 = vpop.f32.mrf.mxu0
        %v7716 = vadd.f32 %v7415, %v7715
        %v7717 = vpop.f32.mrf.mxu0
        %v7718 = vpop.f32.mrf.mxu0
        %v7719 = vadd.f32 %v7418, %v7718
        %v7720 = vpop.f32.mrf.mxu0
        %7721 = vmatprep.mubr.bf16.mxu0 0
        %7722 = vmatmul.mubr.bf16.gmra.mxu0 %v7637
        %v7723 = vpop.f32.mrf.mxu0
        %v7724 = vadd.f32 %v7423, %v7723
        %v7725 = vpop.f32.mrf.mxu0
        %v7726 = vpop.f32.mrf.mxu0
        %v7727 = vadd.f32 %v7426, %v7726
        %v7728 = vpop.f32.mrf.mxu0
        %7729 = vmatprep.mubr.bf16.mxu0 0
        %7730 = vmatmul.mubr.bf16.gmra.mxu0 %v7640
        %v7731 = vpop.f32.mrf.mxu0
        %v7732 = vadd.f32 %v7431, %v7731
        %v7733 = vpop.f32.mrf.mxu0
        %v7734 = vpop.f32.mrf.mxu0
        %v7735 = vadd.f32 %v7434, %v7734
        %v7736 = vpop.f32.mrf.mxu0
        %7737 = vmatprep.mubr.bf16.mxu0 0
        %7738 = vmatmul.mubr.bf16.gmra.mxu0 %v7643
        %v7739 = vpop.f32.mrf.mxu0
        %v7740 = vadd.f32 %v7439, %v7739
        %v7741 = vpop.f32.mrf.mxu0
        %v7742 = vpop.f32.mrf.mxu0
        %v7743 = vadd.f32 %v7442, %v7742
        %v7744 = vpop.f32.mrf.mxu0
        %7745 = vmatprep.mubr.bf16.mxu0 0
        %7746 = vmatmul.mubr.bf16.gmra.mxu0 %v7646
        %v7747 = vpop.f32.mrf.mxu0
        %v7748 = vadd.f32 %v7447, %v7747
        %v7749 = vpop.f32.mrf.mxu0
        %v7750 = vpop.f32.mrf.mxu0
        %v7751 = vadd.f32 %v7450, %v7750
        %v7752 = vpop.f32.mrf.mxu0
        %7753 = vmatprep.mubr.bf16.mxu0 0
        %7754 = vmatmul.mubr.bf16.gmra.mxu0 %v7649
        %v7755 = vpop.f32.mrf.mxu0
        %v7756 = vadd.f32 %v7455, %v7755
        %v7757 = vpop.f32.mrf.mxu0
        %v7758 = vpop.f32.mrf.mxu0
        %v7759 = vadd.f32 %v7458, %v7758
        %v7760 = vpop.f32.mrf.mxu0
        %7761 = vmatprep.mubr.bf16.mxu0 0
        %7762 = vmatmul.mubr.bf16.gmra.mxu0 %v7652
        %v7763 = vpop.f32.mrf.mxu0
        %v7764 = vadd.f32 %v7463, %v7763
        %v7765 = vpop.f32.mrf.mxu0
        %v7766 = vpop.f32.mrf.mxu0
        %v7767 = vadd.f32 %v7466, %v7766
        %v7768 = vpop.f32.mrf.mxu0
        %7769 = vmatprep.mubr.bf16.mxu0 0
        %7770 = vmatmul.mubr.bf16.gmra.mxu0 %v7655
        %v7771 = vpop.f32.mrf.mxu0
        %v7772 = vadd.f32 %v7471, %v7771
        %v7773 = vpop.f32.mrf.mxu0
        %v7774 = vpop.f32.mrf.mxu0
        %v7775 = vadd.f32 %v7474, %v7774
        %v7776 = vpop.f32.mrf.mxu0
        %7777 = vmatprep.mubr.bf16.mxu0 0
        %7778 = vmatmul.mubr.bf16.gmra.mxu0 %v7658
        %v7779 = vpop.f32.mrf.mxu0
        %v7780 = vadd.f32 %v7479, %v7779
        %v7781 = vpop.f32.mrf.mxu0
        %v7782 = vpop.f32.mrf.mxu0
        %v7783 = vadd.f32 %v7482, %v7782
        %v7784 = vpop.f32.mrf.mxu0
        %7785 = vmatprep.mubr.bf16.mxu0 0
        %7786 = vmatmul.mubr.bf16.gmra.mxu0 %v7661
        %v7787 = vpop.f32.mrf.mxu0
        %v7788 = vadd.f32 %v7487, %v7787
        %v7789 = vpop.f32.mrf.mxu0
        %v7790 = vpop.f32.mrf.mxu0
        %v7791 = vadd.f32 %v7490, %v7790
        %v7792 = vpop.f32.mrf.mxu0
        %7793 = vmatprep.mubr.bf16.mxu0 0
        %7794 = vmatmul.mubr.bf16.gmra.mxu0 %v7664
        %v7795 = vpop.f32.mrf.mxu0
        %v7796 = vadd.f32 %v7495, %v7795
        %v7797 = vpop.f32.mrf.mxu0
        %v7798 = vpop.f32.mrf.mxu0
        %v7799 = vadd.f32 %v7498, %v7798
        %v7800 = vpop.f32.mrf.mxu0
        %7801 = vmatprep.mubr.bf16.mxu0 0
        %7802 = vmatmul.mubr.bf16.gmra.mxu0 %v7667
        %v7803 = vpop.f32.mrf.mxu0
        %v7804 = vadd.f32 %v7503, %v7803
        %v7805 = vpop.f32.mrf.mxu0
        %v7806 = vpop.f32.mrf.mxu0
        %v7807 = vadd.f32 %v7506, %v7806
        %v7808 = vpop.f32.mrf.mxu0
        %7809 = vmatprep.mubr.bf16.mxu0 0
        %7810 = vmatmul.mubr.bf16.gmra.mxu0 %v7670
        %v7811 = vpop.f32.mrf.mxu0
        %v7812 = vadd.f32 %v7511, %v7811
        %v7813 = vpop.f32.mrf.mxu0
        %v7814 = vpop.f32.mrf.mxu0
        %v7815 = vadd.f32 %v7514, %v7814
        %v7816 = vpop.f32.mrf.mxu0
        %7817 = vmatprep.mubr.bf16.mxu0 0
        %7818 = vmatmul.mubr.bf16.gmra.mxu0 %v7673
        %v7819 = vpop.f32.mrf.mxu0
        %v7820 = vadd.f32 %v7519, %v7819
        %v7821 = vpop.f32.mrf.mxu0
        %v7822 = vpop.f32.mrf.mxu0
        %v7823 = vadd.f32 %v7522, %v7822
        %v7824 = vpop.f32.mrf.mxu0
        %7825 = vmatprep.mubr.bf16.mxu0 0
        %7826 = vmatmul.mubr.bf16.gmra.mxu0 %v7676
        %v7827 = vpop.f32.mrf.mxu0
        %v7828 = vadd.f32 %v7527, %v7827
        %v7829 = vpop.f32.mrf.mxu0
        %v7830 = vpop.f32.mrf.mxu0
        %v7831 = vadd.f32 %v7530, %v7830
        %v7832 = vpop.f32.mrf.mxu0
        %7833 = vmatprep.mubr.bf16.mxu0 0
        %7834 = vmatmul.mubr.bf16.gmra.mxu0 %v7679
        %v7835 = vpop.f32.mrf.mxu0
        %v7836 = vadd.f32 %v7535, %v7835
        %v7837 = vpop.f32.mrf.mxu0
        %v7838 = vpop.f32.mrf.mxu0
        %v7839 = vadd.f32 %v7538, %v7838
        %v7840 = vpop.f32.mrf.mxu0
        %7841 = vdwg.mxu0
        %v7842 = vld [vmem:[#allocation3] sm:$0xe]
        %v7843 = vld [vmem:[#allocation3 + $0xc] sm:$0xe]
        %v7844 = vld [vmem:[#allocation3 + $0x18] sm:$0xe]
        %v7845 = vld [vmem:[#allocation3 + $0x24] sm:$0xe]
        %v7846 = vld [vmem:[#allocation3 + $0x30] sm:$0xe]
        %v7847 = vld [vmem:[#allocation3 + $0x3c] sm:$0xe]
        %v7848 = vld [vmem:[#allocation3 + $0x48] sm:$0xe]
        %v7849 = vld [vmem:[#allocation3 + $0x54] sm:$0xe]
        %v7850 = vld [vmem:[#allocation3 + $0x60] sm:$0xe]
        %v7851 = vld [vmem:[#allocation3 + $0x6c] sm:$0xe]
        %v7852 = vld [vmem:[#allocation3 + $0x78] sm:$0xe]
        %v7853 = vld [vmem:[#allocation3 + $0x84] sm:$0xe]
        %v7854 = vld [vmem:[#allocation3 + $0x90] sm:$0xe]
        %v7855 = vld [vmem:[#allocation3 + $0x9c] sm:$0xe]
        %v7856 = vld [vmem:[#allocation3 + $0xa8] sm:$0xe]
        %v7857 = vld [vmem:[#allocation3 + $0xb4] sm:$0xe]
        %v7890 = vrot.slane %v7842, 5
        %v7891 = vrot.slane %v7890, 4
        %v7892 = vrot.slane %v6831, 5
        %v7893 = vsel %vm2463, %v7891, %v7892
        %v7894 = vrot.slane %v7892, 4
        %v7895 = vrot.slane %v6866, 5
        %v7896 = vsel %vm2463, %v7894, %v7895
        %v7897 = vrot.slane %v7843, 5
        %v7898 = vrot.slane %v7897, 4
        %v7899 = vrot.slane %v6833, 5
        %v7900 = vsel %vm2463, %v7898, %v7899
        %v7901 = vrot.slane %v7899, 4
        %v7902 = vrot.slane %v6867, 5
        %v7903 = vsel %vm2463, %v7901, %v7902
        %v7904 = vrot.slane %v7844, 5
        %v7905 = vrot.slane %v7904, 4
        %v7906 = vrot.slane %v6835, 5
        %v7907 = vsel %vm2463, %v7905, %v7906
        %v7908 = vrot.slane %v7906, 4
        %v7909 = vrot.slane %v6868, 5
        %v7910 = vsel %vm2463, %v7908, %v7909
        %v7911 = vrot.slane %v7845, 5
        %v7912 = vrot.slane %v7911, 4
        %v7913 = vrot.slane %v6837, 5
        %v7914 = vsel %vm2463, %v7912, %v7913
        %v7915 = vrot.slane %v7913, 4
        %v7916 = vrot.slane %v6869, 5
        %v7917 = vsel %vm2463, %v7915, %v7916
        %v7918 = vrot.slane %v7846, 5
        %v7919 = vrot.slane %v7918, 4
        %v7920 = vrot.slane %v6839, 5
        %v7921 = vsel %vm2463, %v7919, %v7920
        %v7922 = vrot.slane %v7920, 4
        %v7923 = vrot.slane %v6870, 5
        %v7924 = vsel %vm2463, %v7922, %v7923
        %v7925 = vrot.slane %v7847, 5
        %v7926 = vrot.slane %v7925, 4
        %v7927 = vrot.slane %v6841, 5
        %v7928 = vsel %vm2463, %v7926, %v7927
        %v7929 = vrot.slane %v7927, 4
        %v7930 = vrot.slane %v6871, 5
        %v7931 = vsel %vm2463, %v7929, %v7930
        %v7932 = vrot.slane %v7848, 5
        %v7933 = vrot.slane %v7932, 4
        %v7934 = vrot.slane %v6843, 5
        %v7935 = vsel %vm2463, %v7933, %v7934
        %v7936 = vrot.slane %v7934, 4
        %v7937 = vrot.slane %v6872, 5
        %v7938 = vsel %vm2463, %v7936, %v7937
        %v7939 = vrot.slane %v7849, 5
        %v7940 = vrot.slane %v7939, 4
        %v7941 = vrot.slane %v6845, 5
        %v7942 = vsel %vm2463, %v7940, %v7941
        %v7943 = vrot.slane %v7941, 4
        %v7944 = vrot.slane %v6873, 5
        %v7945 = vsel %vm2463, %v7943, %v7944
        %v7946 = vrot.slane %v7850, 5
        %v7947 = vrot.slane %v7946, 4
        %v7948 = vrot.slane %v6847, 5
        %v7949 = vsel %vm2463, %v7947, %v7948
        %v7950 = vrot.slane %v7948, 4
        %v7951 = vrot.slane %v6874, 5
        %v7952 = vsel %vm2463, %v7950, %v7951
        %v7953 = vrot.slane %v7851, 5
        %v7954 = vrot.slane %v7953, 4
        %v7955 = vrot.slane %v6849, 5
        %v7956 = vsel %vm2463, %v7954, %v7955
        %v7957 = vrot.slane %v7955, 4
        %v7958 = vrot.slane %v6875, 5
        %v7959 = vsel %vm2463, %v7957, %v7958
        %v7960 = vrot.slane %v7852, 5
        %v7961 = vrot.slane %v7960, 4
        %v7962 = vrot.slane %v6851, 5
        %v7963 = vsel %vm2463, %v7961, %v7962
        %v7964 = vrot.slane %v7962, 4
        %v7965 = vrot.slane %v6876, 5
        %v7966 = vsel %vm2463, %v7964, %v7965
        %v7967 = vrot.slane %v7853, 5
        %v7968 = vrot.slane %v7967, 4
        %v7969 = vrot.slane %v6853, 5
        %v7970 = vsel %vm2463, %v7968, %v7969
        %v7971 = vrot.slane %v7969, 4
        %v7972 = vrot.slane %v6877, 5
        %v7973 = vsel %vm2463, %v7971, %v7972
        %v7974 = vrot.slane %v7854, 5
        %v7975 = vrot.slane %v7974, 4
        %v7976 = vrot.slane %v6855, 5
        %v7977 = vsel %vm2463, %v7975, %v7976
        %v7978 = vrot.slane %v7976, 4
        %v7979 = vrot.slane %v6878, 5
        %v7980 = vsel %vm2463, %v7978, %v7979
        %v7981 = vrot.slane %v7855, 5
        %v7982 = vrot.slane %v7981, 4
        %v7983 = vrot.slane %v6857, 5
        %v7984 = vsel %vm2463, %v7982, %v7983
        %v7985 = vrot.slane %v7983, 4
        %v7986 = vrot.slane %v6879, 5
        %v7987 = vsel %vm2463, %v7985, %v7986
        %v7988 = vrot.slane %v7856, 5
        %v7989 = vrot.slane %v7988, 4
        %v7990 = vrot.slane %v6859, 5
        %v7991 = vsel %vm2463, %v7989, %v7990
        %v7992 = vrot.slane %v7990, 4
        %v7993 = vrot.slane %v6880, 5
        %v7994 = vsel %vm2463, %v7992, %v7993
        %v7995 = vrot.slane %v7857, 5
        %v7996 = vrot.slane %v7995, 4
        %v7997 = vrot.slane %v6861, 5
        %v7998 = vsel %vm2463, %v7996, %v7997
        %v7999 = vrot.slane %v7997, 4
        %v8000 = vrot.slane %v6881, 5
        %v8001 = vsel %vm2463, %v7999, %v8000
        %s8002 = scalar_lea.vmem %s4, 32
        %v8003 = vld [vmem:[%s8002] sm:$0xf]
        %v8004 = vld [vmem:[%s8002 + $0x4] sm:$0xf]
        %v8005 = vld [vmem:[%s8002 + $0x8] sm:$0xf]
        %v8006 = vld [vmem:[%s8002 + $0xc] sm:$0xf]
        %v8007 = vunpack.c.l.b16 %v7893
        %v8008 = vunpack.c.l.b16 %v7896
        %v8009 = vunpack.c.l.b16 %v7900
        %v8010 = vunpack.c.l.b16 %v7903
        %v8011 = vunpack.c.l.b16 %v7907
        %v8012 = vunpack.c.l.b16 %v7910
        %v8013 = vunpack.c.l.b16 %v7914
        %v8014 = vunpack.c.l.b16 %v7917
        %v8015 = vunpack.c.l.b16 %v7921
        %v8016 = vunpack.c.l.b16 %v7924
        %v8017 = vunpack.c.l.b16 %v7928
        %v8018 = vunpack.c.l.b16 %v7931
        %v8019 = vunpack.c.l.b16 %v7935
        %v8020 = vunpack.c.l.b16 %v7938
        %v8021 = vunpack.c.l.b16 %v7942
        %v8022 = vunpack.c.l.b16 %v7945
        %v8023 = vunpack.c.l.b16 %v7949
        %v8024 = vunpack.c.l.b16 %v7952
        %v8025 = vunpack.c.l.b16 %v7956
        %v8026 = vunpack.c.l.b16 %v7959
        %v8027 = vunpack.c.l.b16 %v7963
        %v8028 = vunpack.c.l.b16 %v7966
        %v8029 = vunpack.c.l.b16 %v7970
        %v8030 = vunpack.c.l.b16 %v7973
        %v8031 = vunpack.c.l.b16 %v7977
        %v8032 = vunpack.c.l.b16 %v7980
        %v8033 = vunpack.c.l.b16 %v7984
        %v8034 = vunpack.c.l.b16 %v7987
        %v8035 = vunpack.c.l.b16 %v7991
        %v8036 = vunpack.c.l.b16 %v7994
        %v8037 = vunpack.c.l.b16 %v7998
        %v8038 = vunpack.c.l.b16 %v8001
        %v8039 = vpack.c.b16 %v8008, %v8007
        %v8040 = vpack.c.b16 %v8010, %v8009
        %v8041 = vpack.c.b16 %v8012, %v8011
        %v8042 = vpack.c.b16 %v8014, %v8013
        %v8043 = vpack.c.b16 %v8016, %v8015
        %v8044 = vpack.c.b16 %v8018, %v8017
        %v8045 = vpack.c.b16 %v8020, %v8019
        %v8046 = vpack.c.b16 %v8022, %v8021
        %v8047 = vpack.c.b16 %v8024, %v8023
        %v8048 = vpack.c.b16 %v8026, %v8025
        %v8049 = vpack.c.b16 %v8028, %v8027
        %v8050 = vpack.c.b16 %v8030, %v8029
        %v8051 = vpack.c.b16 %v8032, %v8031
        %v8052 = vpack.c.b16 %v8034, %v8033
        %v8053 = vpack.c.b16 %v8036, %v8035
        %v8054 = vpack.c.b16 %v8038, %v8037
        %v8059 = vunpack.c.l.b16 %v8003
        %v8060 = vunpack.c.l.b16 %v8004
        %v8061 = vunpack.c.l.b16 %v8005
        %v8062 = vunpack.c.l.b16 %v8006
        %v8063 = vpack.c.b16 %v8060, %v8059
        %v8064 = vpack.c.b16 %v8062, %v8061
        %v8068 = vsel %vm7331, %v8039, 0
        %v8071 = vsel %vm7331, %v8040, 0
        %v8074 = vsel %vm7331, %v8041, 0
        %v8077 = vsel %vm7331, %v8042, 0
        %v8080 = vsel %vm7331, %v8043, 0
        %v8083 = vsel %vm7331, %v8044, 0
        %v8086 = vsel %vm7331, %v8045, 0
        %v8089 = vsel %vm7331, %v8046, 0
        %v8092 = vsel %vm7331, %v8047, 0
        %v8095 = vsel %vm7331, %v8048, 0
        %v8098 = vsel %vm7331, %v8049, 0
        %v8101 = vsel %vm7331, %v8050, 0
        %v8104 = vsel %vm7331, %v8051, 0
        %v8107 = vsel %vm7331, %v8052, 0
        %v8110 = vsel %vm7331, %v8053, 0
        %v8113 = vsel %vm7331, %v8054, 0
        %8115 = vmatprep.subr.bf16.mxu0 0
        %8116 = vmatpush1.bf16.msra.mxu0 0
        %8117 = vmatprep.subr.bf16.mxu0 0
        %8118 = vmatpush1.bf16.msra.mxu0 0
        %8119 = vmatprep.subr.bf16.mxu0 0
        %8120 = vmatpush1.bf16.msra.mxu0 0
        %8121 = vmatprep.subr.bf16.mxu0 0
        %8122 = vmatpush1.bf16.msra.mxu0 0
        %8123 = vmatprep.subr.bf16.mxu0 0
        %8124 = vmatpush1.bf16.msra.mxu0 0
        %8125 = vmatprep.subr.bf16.mxu0 0
        %8126 = vmatpush1.bf16.msra.mxu0 0
        %8127 = vmatprep.subr.bf16.mxu0 0
        %8128 = vmatpush1.bf16.msra.mxu0 %v8064
        %8129 = vmatprep.subr.bf16.mxu0 0
        %8130 = vmatpush1.bf16.msra.mxu0 %v8063
        %8131 = vmatprep.subr.bf16.mxu0 0
        %8132 = vmatpush2.bf16.msra.mxu0 0
        %8133 = vmatprep.subr.bf16.mxu0 0
        %8134 = vmatpush2.bf16.msra.mxu0 0
        %8135 = vmatprep.subr.bf16.mxu0 0
        %8136 = vmatpush2.bf16.msra.mxu0 0
        %8137 = vmatprep.subr.bf16.mxu0 0
        %8138 = vmatpush2.bf16.msra.mxu0 0
        %8139 = vmatprep.subr.bf16.mxu0 0
        %8140 = vmatpush2.bf16.msra.mxu0 0
        %8141 = vmatprep.subr.bf16.mxu0 0
        %8142 = vmatpush2.bf16.msra.mxu0 0
        %8143 = vmatprep.subr.bf16.mxu0 0
        %8144 = vmatpush2.bf16.msra.mxu0 0
        %8145 = vmatprep.subr.bf16.mxu0 0
        %8146 = vmatpush2.bf16.msra.mxu0 0
        %8147 = vmatprep.mubr.bf16.mxu0 0
        %8148 = vmatmul.mubr.bf16.gmra.mxu0 %v8068
        %v8149 = vpop.f32.mrf.mxu0
        %v8150 = vadd.f32 0.0, %v8149
        %v8151 = vpop.f32.mrf.mxu0
        %v8152 = vpop.f32.mrf.mxu0
        %v8153 = vadd.f32 0.0, %v8152
        %v8154 = vpop.f32.mrf.mxu0
        %8155 = vmatprep.mubr.bf16.mxu0 0
        %8156 = vmatmul.mubr.bf16.gmra.mxu0 %v8071
        %v8157 = vpop.f32.mrf.mxu0
        %v8158 = vadd.f32 0.0, %v8157
        %v8159 = vpop.f32.mrf.mxu0
        %v8160 = vpop.f32.mrf.mxu0
        %v8161 = vadd.f32 0.0, %v8160
        %v8162 = vpop.f32.mrf.mxu0
        %8163 = vmatprep.mubr.bf16.mxu0 0
        %8164 = vmatmul.mubr.bf16.gmra.mxu0 %v8074
        %v8165 = vpop.f32.mrf.mxu0
        %v8166 = vadd.f32 0.0, %v8165
        %v8167 = vpop.f32.mrf.mxu0
        %v8168 = vpop.f32.mrf.mxu0
        %v8169 = vadd.f32 0.0, %v8168
        %v8170 = vpop.f32.mrf.mxu0
        %8171 = vmatprep.mubr.bf16.mxu0 0
        %8172 = vmatmul.mubr.bf16.gmra.mxu0 %v8077
        %v8173 = vpop.f32.mrf.mxu0
        %v8174 = vadd.f32 0.0, %v8173
        %v8175 = vpop.f32.mrf.mxu0
        %v8176 = vpop.f32.mrf.mxu0
        %v8177 = vadd.f32 0.0, %v8176
        %v8178 = vpop.f32.mrf.mxu0
        %8179 = vmatprep.mubr.bf16.mxu0 0
        %8180 = vmatmul.mubr.bf16.gmra.mxu0 %v8080
        %v8181 = vpop.f32.mrf.mxu0
        %v8182 = vadd.f32 0.0, %v8181
        %v8183 = vpop.f32.mrf.mxu0
        %v8184 = vpop.f32.mrf.mxu0
        %v8185 = vadd.f32 0.0, %v8184
        %v8186 = vpop.f32.mrf.mxu0
        %8187 = vmatprep.mubr.bf16.mxu0 0
        %8188 = vmatmul.mubr.bf16.gmra.mxu0 %v8083
        %v8189 = vpop.f32.mrf.mxu0
        %v8190 = vadd.f32 0.0, %v8189
        %v8191 = vpop.f32.mrf.mxu0
        %v8192 = vpop.f32.mrf.mxu0
        %v8193 = vadd.f32 0.0, %v8192
        %v8194 = vpop.f32.mrf.mxu0
        %8195 = vmatprep.mubr.bf16.mxu0 0
        %8196 = vmatmul.mubr.bf16.gmra.mxu0 %v8086
        %v8197 = vpop.f32.mrf.mxu0
        %v8198 = vadd.f32 0.0, %v8197
        %v8199 = vpop.f32.mrf.mxu0
        %v8200 = vpop.f32.mrf.mxu0
        %v8201 = vadd.f32 0.0, %v8200
        %v8202 = vpop.f32.mrf.mxu0
        %8203 = vmatprep.mubr.bf16.mxu0 0
        %8204 = vmatmul.mubr.bf16.gmra.mxu0 %v8089
        %v8205 = vpop.f32.mrf.mxu0
        %v8206 = vadd.f32 0.0, %v8205
        %v8207 = vpop.f32.mrf.mxu0
        %v8208 = vpop.f32.mrf.mxu0
        %v8209 = vadd.f32 0.0, %v8208
        %v8210 = vpop.f32.mrf.mxu0
        %8211 = vmatprep.mubr.bf16.mxu0 0
        %8212 = vmatmul.mubr.bf16.gmra.mxu0 %v8092
        %v8213 = vpop.f32.mrf.mxu0
        %v8214 = vadd.f32 0.0, %v8213
        %v8215 = vpop.f32.mrf.mxu0
        %v8216 = vpop.f32.mrf.mxu0
        %v8217 = vadd.f32 0.0, %v8216
        %v8218 = vpop.f32.mrf.mxu0
        %8219 = vmatprep.mubr.bf16.mxu0 0
        %8220 = vmatmul.mubr.bf16.gmra.mxu0 %v8095
        %v8221 = vpop.f32.mrf.mxu0
        %v8222 = vadd.f32 0.0, %v8221
        %v8223 = vpop.f32.mrf.mxu0
        %v8224 = vpop.f32.mrf.mxu0
        %v8225 = vadd.f32 0.0, %v8224
        %v8226 = vpop.f32.mrf.mxu0
        %8227 = vmatprep.mubr.bf16.mxu0 0
        %8228 = vmatmul.mubr.bf16.gmra.mxu0 %v8098
        %v8229 = vpop.f32.mrf.mxu0
        %v8230 = vadd.f32 0.0, %v8229
        %v8231 = vpop.f32.mrf.mxu0
        %v8232 = vpop.f32.mrf.mxu0
        %v8233 = vadd.f32 0.0, %v8232
        %v8234 = vpop.f32.mrf.mxu0
        %8235 = vmatprep.mubr.bf16.mxu0 0
        %8236 = vmatmul.mubr.bf16.gmra.mxu0 %v8101
        %v8237 = vpop.f32.mrf.mxu0
        %v8238 = vadd.f32 0.0, %v8237
        %v8239 = vpop.f32.mrf.mxu0
        %v8240 = vpop.f32.mrf.mxu0
        %v8241 = vadd.f32 0.0, %v8240
        %v8242 = vpop.f32.mrf.mxu0
        %8243 = vmatprep.mubr.bf16.mxu0 0
        %8244 = vmatmul.mubr.bf16.gmra.mxu0 %v8104
        %v8245 = vpop.f32.mrf.mxu0
        %v8246 = vadd.f32 0.0, %v8245
        %v8247 = vpop.f32.mrf.mxu0
        %v8248 = vpop.f32.mrf.mxu0
        %v8249 = vadd.f32 0.0, %v8248
        %v8250 = vpop.f32.mrf.mxu0
        %8251 = vmatprep.mubr.bf16.mxu0 0
        %8252 = vmatmul.mubr.bf16.gmra.mxu0 %v8107
        %v8253 = vpop.f32.mrf.mxu0
        %v8254 = vadd.f32 0.0, %v8253
        %v8255 = vpop.f32.mrf.mxu0
        %v8256 = vpop.f32.mrf.mxu0
        %v8257 = vadd.f32 0.0, %v8256
        %v8258 = vpop.f32.mrf.mxu0
        %8259 = vmatprep.mubr.bf16.mxu0 0
        %8260 = vmatmul.mubr.bf16.gmra.mxu0 %v8110
        %v8261 = vpop.f32.mrf.mxu0
        %v8262 = vadd.f32 0.0, %v8261
        %v8263 = vpop.f32.mrf.mxu0
        %v8264 = vpop.f32.mrf.mxu0
        %v8265 = vadd.f32 0.0, %v8264
        %v8266 = vpop.f32.mrf.mxu0
        %8267 = vmatprep.mubr.bf16.mxu0 0
        %8268 = vmatmul.mubr.bf16.gmra.mxu0 %v8113
        %v8269 = vpop.f32.mrf.mxu0
        %v8270 = vadd.f32 0.0, %v8269
        %v8271 = vpop.f32.mrf.mxu0
        %v8272 = vpop.f32.mrf.mxu0
        %v8273 = vadd.f32 0.0, %v8272
        %v8274 = vpop.f32.mrf.mxu0
        %8275 = vdwg.mxu0
        %v8276 = vadd.f32 %v7716, %v8150
        %v8277 = vadd.f32 %v7719, %v8153
        %v8278 = vadd.f32 %v7724, %v8158
        %v8279 = vadd.f32 %v7727, %v8161
        %v8280 = vadd.f32 %v7732, %v8166
        %v8281 = vadd.f32 %v7735, %v8169
        %v8282 = vadd.f32 %v7740, %v8174
        %v8283 = vadd.f32 %v7743, %v8177
        %v8284 = vadd.f32 %v7748, %v8182
        %v8285 = vadd.f32 %v7751, %v8185
        %v8286 = vadd.f32 %v7756, %v8190
        %v8287 = vadd.f32 %v7759, %v8193
        %v8288 = vadd.f32 %v7764, %v8198
        %v8289 = vadd.f32 %v7767, %v8201
        %v8290 = vadd.f32 %v7772, %v8206
        %v8291 = vadd.f32 %v7775, %v8209
        %v8292 = vadd.f32 %v7780, %v8214
        %v8293 = vadd.f32 %v7783, %v8217
        %v8294 = vadd.f32 %v7788, %v8222
        %v8295 = vadd.f32 %v7791, %v8225
        %v8296 = vadd.f32 %v7796, %v8230
        %v8297 = vadd.f32 %v7799, %v8233
        %v8298 = vadd.f32 %v7804, %v8238
        %v8299 = vadd.f32 %v7807, %v8241
        %v8300 = vadd.f32 %v7812, %v8246
        %v8301 = vadd.f32 %v7815, %v8249
        %v8302 = vadd.f32 %v7820, %v8254
        %v8303 = vadd.f32 %v7823, %v8257
        %v8304 = vadd.f32 %v7828, %v8262
        %v8305 = vadd.f32 %v7831, %v8265
        %v8306 = vadd.f32 %v7836, %v8270
        %v8307 = vadd.f32 %v7839, %v8273
        %v8308 = vld [vmem:[%s6717] sm:$0xf]
        %v8309 = vld [vmem:[%s6717 + $0x4] sm:$0xf]
        %v8310 = vld [vmem:[%s6717 + $0xc] sm:$0xf]
        %v8311 = vld [vmem:[%s6717 + $0x10] sm:$0xf]
        %v8312 = vld [vmem:[%s6717 + $0x18] sm:$0xf]
        %v8313 = vld [vmem:[%s6717 + $0x1c] sm:$0xf]
        %v8314 = vld [vmem:[%s6717 + $0x24] sm:$0xf]
        %v8315 = vld [vmem:[%s6717 + $0x28] sm:$0xf]
        %v8316 = vld [vmem:[%s6717 + $0x30] sm:$0xf]
        %v8317 = vld [vmem:[%s6717 + $0x34] sm:$0xf]
        %v8318 = vld [vmem:[%s6717 + $0x3c] sm:$0xf]
        %v8319 = vld [vmem:[%s6717 + $0x40] sm:$0xf]
        %v8320 = vld [vmem:[%s6717 + $0x48] sm:$0xf]
        %v8321 = vld [vmem:[%s6717 + $0x4c] sm:$0xf]
        %v8322 = vld [vmem:[%s6717 + $0x54] sm:$0xf]
        %v8323 = vld [vmem:[%s6717 + $0x58] sm:$0xf]
        %v8324 = vld [vmem:[%s6717 + $0x60] sm:$0xf]
        %v8325 = vld [vmem:[%s6717 + $0x64] sm:$0xf]
        %v8326 = vld [vmem:[%s6717 + $0x6c] sm:$0xf]
        %v8327 = vld [vmem:[%s6717 + $0x70] sm:$0xf]
        %v8328 = vld [vmem:[%s6717 + $0x78] sm:$0xf]
        %v8329 = vld [vmem:[%s6717 + $0x7c] sm:$0xf]
        %v8330 = vld [vmem:[%s6717 + $0x84] sm:$0xf]
        %v8331 = vld [vmem:[%s6717 + $0x88] sm:$0xf]
        %v8332 = vld [vmem:[%s6717 + $0x90] sm:$0xf]
        %v8333 = vld [vmem:[%s6717 + $0x94] sm:$0xf]
        %v8334 = vld [vmem:[%s6717 + $0x9c] sm:$0xf]
        %v8335 = vld [vmem:[%s6717 + $0xa0] sm:$0xf]
        %v8336 = vld [vmem:[%s6717 + $0xa8] sm:$0xf]
        %v8337 = vld [vmem:[%s6717 + $0xac] sm:$0xf]
        %v8338 = vld [vmem:[%s6717 + $0xb4] sm:$0xf]
        %v8339 = vld [vmem:[%s6717 + $0xb8] sm:$0xf]
        %s8340 = scalar_lea.vmem %s4, 48
        %v8341 = vld [vmem:[%s8340] sm:$0xf]
        %v8342 = vld [vmem:[%s8340 + $0x4] sm:$0xf]
        %v8343 = vld [vmem:[%s8340 + $0x8] sm:$0xf]
        %v8344 = vld [vmem:[%s8340 + $0xc] sm:$0xf]
        %v8377 = vunpack.c.l.b16 %v8308
        %v8378 = vunpack.c.l.b16 %v8309
        %v8379 = vunpack.c.l.b16 %v8310
        %v8380 = vunpack.c.l.b16 %v8311
        %v8381 = vunpack.c.l.b16 %v8312
        %v8382 = vunpack.c.l.b16 %v8313
        %v8383 = vunpack.c.l.b16 %v8314
        %v8384 = vunpack.c.l.b16 %v8315
        %v8385 = vunpack.c.l.b16 %v8316
        %v8386 = vunpack.c.l.b16 %v8317
        %v8387 = vunpack.c.l.b16 %v8318
        %v8388 = vunpack.c.l.b16 %v8319
        %v8389 = vunpack.c.l.b16 %v8320
        %v8390 = vunpack.c.l.b16 %v8321
        %v8391 = vunpack.c.l.b16 %v8322
        %v8392 = vunpack.c.l.b16 %v8323
        %v8393 = vunpack.c.l.b16 %v8324
        %v8394 = vunpack.c.l.b16 %v8325
        %v8395 = vunpack.c.l.b16 %v8326
        %v8396 = vunpack.c.l.b16 %v8327
        %v8397 = vunpack.c.l.b16 %v8328
        %v8398 = vunpack.c.l.b16 %v8329
        %v8399 = vunpack.c.l.b16 %v8330
        %v8400 = vunpack.c.l.b16 %v8331
        %v8401 = vunpack.c.l.b16 %v8332
        %v8402 = vunpack.c.l.b16 %v8333
        %v8403 = vunpack.c.l.b16 %v8334
        %v8404 = vunpack.c.l.b16 %v8335
        %v8405 = vunpack.c.l.b16 %v8336
        %v8406 = vunpack.c.l.b16 %v8337
        %v8407 = vunpack.c.l.b16 %v8338
        %v8408 = vunpack.c.l.b16 %v8339
        %v8409 = vpack.c.b16 %v8378, %v8377
        %v8410 = vpack.c.b16 %v8380, %v8379
        %v8411 = vpack.c.b16 %v8382, %v8381
        %v8412 = vpack.c.b16 %v8384, %v8383
        %v8413 = vpack.c.b16 %v8386, %v8385
        %v8414 = vpack.c.b16 %v8388, %v8387
        %v8415 = vpack.c.b16 %v8390, %v8389
        %v8416 = vpack.c.b16 %v8392, %v8391
        %v8417 = vpack.c.b16 %v8394, %v8393
        %v8418 = vpack.c.b16 %v8396, %v8395
        %v8419 = vpack.c.b16 %v8398, %v8397
        %v8420 = vpack.c.b16 %v8400, %v8399
        %v8421 = vpack.c.b16 %v8402, %v8401
        %v8422 = vpack.c.b16 %v8404, %v8403
        %v8423 = vpack.c.b16 %v8406, %v8405
        %v8424 = vpack.c.b16 %v8408, %v8407
        %v8429 = vunpack.c.l.b16 %v8341
        %v8430 = vunpack.c.l.b16 %v8342
        %v8431 = vunpack.c.l.b16 %v8343
        %v8432 = vunpack.c.l.b16 %v8344
        %v8433 = vpack.c.b16 %v8430, %v8429
        %v8434 = vpack.c.b16 %v8432, %v8431
        %v8438 = vsel %vm7331, %v8409, 0
        %v8441 = vsel %vm7331, %v8410, 0
        %v8444 = vsel %vm7331, %v8411, 0
        %v8447 = vsel %vm7331, %v8412, 0
        %v8450 = vsel %vm7331, %v8413, 0
        %v8453 = vsel %vm7331, %v8414, 0
        %v8456 = vsel %vm7331, %v8415, 0
        %v8459 = vsel %vm7331, %v8416, 0
        %v8462 = vsel %vm7331, %v8417, 0
        %v8465 = vsel %vm7331, %v8418, 0
        %v8468 = vsel %vm7331, %v8419, 0
        %v8471 = vsel %vm7331, %v8420, 0
        %v8474 = vsel %vm7331, %v8421, 0
        %v8477 = vsel %vm7331, %v8422, 0
        %v8480 = vsel %vm7331, %v8423, 0
        %v8483 = vsel %vm7331, %v8424, 0
        %8485 = vmatprep.subr.bf16.mxu0 0
        %8486 = vmatpush1.bf16.msra.mxu0 0
        %8487 = vmatprep.subr.bf16.mxu0 0
        %8488 = vmatpush1.bf16.msra.mxu0 0
        %8489 = vmatprep.subr.bf16.mxu0 0
        %8490 = vmatpush1.bf16.msra.mxu0 0
        %8491 = vmatprep.subr.bf16.mxu0 0
        %8492 = vmatpush1.bf16.msra.mxu0 0
        %8493 = vmatprep.subr.bf16.mxu0 0
        %8494 = vmatpush1.bf16.msra.mxu0 0
        %8495 = vmatprep.subr.bf16.mxu0 0
        %8496 = vmatpush1.bf16.msra.mxu0 0
        %8497 = vmatprep.subr.bf16.mxu0 0
        %8498 = vmatpush1.bf16.msra.mxu0 %v8434
        %8499 = vmatprep.subr.bf16.mxu0 0
        %8500 = vmatpush1.bf16.msra.mxu0 %v8433
        %8501 = vmatprep.subr.bf16.mxu0 0
        %8502 = vmatpush2.bf16.msra.mxu0 0
        %8503 = vmatprep.subr.bf16.mxu0 0
        %8504 = vmatpush2.bf16.msra.mxu0 0
        %8505 = vmatprep.subr.bf16.mxu0 0
        %8506 = vmatpush2.bf16.msra.mxu0 0
        %8507 = vmatprep.subr.bf16.mxu0 0
        %8508 = vmatpush2.bf16.msra.mxu0 0
        %8509 = vmatprep.subr.bf16.mxu0 0
        %8510 = vmatpush2.bf16.msra.mxu0 0
        %8511 = vmatprep.subr.bf16.mxu0 0
        %8512 = vmatpush2.bf16.msra.mxu0 0
        %8513 = vmatprep.subr.bf16.mxu0 0
        %8514 = vmatpush2.bf16.msra.mxu0 0
        %8515 = vmatprep.subr.bf16.mxu0 0
        %8516 = vmatpush2.bf16.msra.mxu0 0
        %8517 = vmatprep.mubr.bf16.mxu0 0
        %8518 = vmatmul.mubr.bf16.gmra.mxu0 %v8438
        %v8519 = vpop.f32.mrf.mxu0
        %v8520 = vadd.f32 0.0, %v8519
        %v8521 = vpop.f32.mrf.mxu0
        %v8522 = vpop.f32.mrf.mxu0
        %v8523 = vadd.f32 0.0, %v8522
        %v8524 = vpop.f32.mrf.mxu0
        %8525 = vmatprep.mubr.bf16.mxu0 0
        %8526 = vmatmul.mubr.bf16.gmra.mxu0 %v8441
        %v8527 = vpop.f32.mrf.mxu0
        %v8528 = vadd.f32 0.0, %v8527
        %v8529 = vpop.f32.mrf.mxu0
        %v8530 = vpop.f32.mrf.mxu0
        %v8531 = vadd.f32 0.0, %v8530
        %v8532 = vpop.f32.mrf.mxu0
        %8533 = vmatprep.mubr.bf16.mxu0 0
        %8534 = vmatmul.mubr.bf16.gmra.mxu0 %v8444
        %v8535 = vpop.f32.mrf.mxu0
        %v8536 = vadd.f32 0.0, %v8535
        %v8537 = vpop.f32.mrf.mxu0
        %v8538 = vpop.f32.mrf.mxu0
        %v8539 = vadd.f32 0.0, %v8538
        %v8540 = vpop.f32.mrf.mxu0
        %8541 = vmatprep.mubr.bf16.mxu0 0
        %8542 = vmatmul.mubr.bf16.gmra.mxu0 %v8447
        %v8543 = vpop.f32.mrf.mxu0
        %v8544 = vadd.f32 0.0, %v8543
        %v8545 = vpop.f32.mrf.mxu0
        %v8546 = vpop.f32.mrf.mxu0
        %v8547 = vadd.f32 0.0, %v8546
        %v8548 = vpop.f32.mrf.mxu0
        %8549 = vmatprep.mubr.bf16.mxu0 0
        %8550 = vmatmul.mubr.bf16.gmra.mxu0 %v8450
        %v8551 = vpop.f32.mrf.mxu0
        %v8552 = vadd.f32 0.0, %v8551
        %v8553 = vpop.f32.mrf.mxu0
        %v8554 = vpop.f32.mrf.mxu0
        %v8555 = vadd.f32 0.0, %v8554
        %v8556 = vpop.f32.mrf.mxu0
        %8557 = vmatprep.mubr.bf16.mxu0 0
        %8558 = vmatmul.mubr.bf16.gmra.mxu0 %v8453
        %v8559 = vpop.f32.mrf.mxu0
        %v8560 = vadd.f32 0.0, %v8559
        %v8561 = vpop.f32.mrf.mxu0
        %v8562 = vpop.f32.mrf.mxu0
        %v8563 = vadd.f32 0.0, %v8562
        %v8564 = vpop.f32.mrf.mxu0
        %8565 = vmatprep.mubr.bf16.mxu0 0
        %8566 = vmatmul.mubr.bf16.gmra.mxu0 %v8456
        %v8567 = vpop.f32.mrf.mxu0
        %v8568 = vadd.f32 0.0, %v8567
        %v8569 = vpop.f32.mrf.mxu0
        %v8570 = vpop.f32.mrf.mxu0
        %v8571 = vadd.f32 0.0, %v8570
        %v8572 = vpop.f32.mrf.mxu0
        %8573 = vmatprep.mubr.bf16.mxu0 0
        %8574 = vmatmul.mubr.bf16.gmra.mxu0 %v8459
        %v8575 = vpop.f32.mrf.mxu0
        %v8576 = vadd.f32 0.0, %v8575
        %v8577 = vpop.f32.mrf.mxu0
        %v8578 = vpop.f32.mrf.mxu0
        %v8579 = vadd.f32 0.0, %v8578
        %v8580 = vpop.f32.mrf.mxu0
        %8581 = vmatprep.mubr.bf16.mxu0 0
        %8582 = vmatmul.mubr.bf16.gmra.mxu0 %v8462
        %v8583 = vpop.f32.mrf.mxu0
        %v8584 = vadd.f32 0.0, %v8583
        %v8585 = vpop.f32.mrf.mxu0
        %v8586 = vpop.f32.mrf.mxu0
        %v8587 = vadd.f32 0.0, %v8586
        %v8588 = vpop.f32.mrf.mxu0
        %8589 = vmatprep.mubr.bf16.mxu0 0
        %8590 = vmatmul.mubr.bf16.gmra.mxu0 %v8465
        %v8591 = vpop.f32.mrf.mxu0
        %v8592 = vadd.f32 0.0, %v8591
        %v8593 = vpop.f32.mrf.mxu0
        %v8594 = vpop.f32.mrf.mxu0
        %v8595 = vadd.f32 0.0, %v8594
        %v8596 = vpop.f32.mrf.mxu0
        %8597 = vmatprep.mubr.bf16.mxu0 0
        %8598 = vmatmul.mubr.bf16.gmra.mxu0 %v8468
        %v8599 = vpop.f32.mrf.mxu0
        %v8600 = vadd.f32 0.0, %v8599
        %v8601 = vpop.f32.mrf.mxu0
        %v8602 = vpop.f32.mrf.mxu0
        %v8603 = vadd.f32 0.0, %v8602
        %v8604 = vpop.f32.mrf.mxu0
        %8605 = vmatprep.mubr.bf16.mxu0 0
        %8606 = vmatmul.mubr.bf16.gmra.mxu0 %v8471
        %v8607 = vpop.f32.mrf.mxu0
        %v8608 = vadd.f32 0.0, %v8607
        %v8609 = vpop.f32.mrf.mxu0
        %v8610 = vpop.f32.mrf.mxu0
        %v8611 = vadd.f32 0.0, %v8610
        %v8612 = vpop.f32.mrf.mxu0
        %8613 = vmatprep.mubr.bf16.mxu0 0
        %8614 = vmatmul.mubr.bf16.gmra.mxu0 %v8474
        %v8615 = vpop.f32.mrf.mxu0
        %v8616 = vadd.f32 0.0, %v8615
        %v8617 = vpop.f32.mrf.mxu0
        %v8618 = vpop.f32.mrf.mxu0
        %v8619 = vadd.f32 0.0, %v8618
        %v8620 = vpop.f32.mrf.mxu0
        %8621 = vmatprep.mubr.bf16.mxu0 0
        %8622 = vmatmul.mubr.bf16.gmra.mxu0 %v8477
        %v8623 = vpop.f32.mrf.mxu0
        %v8624 = vadd.f32 0.0, %v8623
        %v8625 = vpop.f32.mrf.mxu0
        %v8626 = vpop.f32.mrf.mxu0
        %v8627 = vadd.f32 0.0, %v8626
        %v8628 = vpop.f32.mrf.mxu0
        %8629 = vmatprep.mubr.bf16.mxu0 0
        %8630 = vmatmul.mubr.bf16.gmra.mxu0 %v8480
        %v8631 = vpop.f32.mrf.mxu0
        %v8632 = vadd.f32 0.0, %v8631
        %v8633 = vpop.f32.mrf.mxu0
        %v8634 = vpop.f32.mrf.mxu0
        %v8635 = vadd.f32 0.0, %v8634
        %v8636 = vpop.f32.mrf.mxu0
        %8637 = vmatprep.mubr.bf16.mxu0 0
        %8638 = vmatmul.mubr.bf16.gmra.mxu0 %v8483
        %v8639 = vpop.f32.mrf.mxu0
        %v8640 = vadd.f32 0.0, %v8639
        %v8641 = vpop.f32.mrf.mxu0
        %v8642 = vpop.f32.mrf.mxu0
        %v8643 = vadd.f32 0.0, %v8642
        %v8644 = vpop.f32.mrf.mxu0
        %8645 = vdwg.mxu0
        %v8646 = vadd.f32 %v8276, %v8520
        %v8647 = vadd.f32 %v8277, %v8523
        %v8648 = vadd.f32 %v8278, %v8528
        %v8649 = vadd.f32 %v8279, %v8531
        %v8650 = vadd.f32 %v8280, %v8536
        %v8651 = vadd.f32 %v8281, %v8539
        %v8652 = vadd.f32 %v8282, %v8544
        %v8653 = vadd.f32 %v8283, %v8547
        %v8654 = vadd.f32 %v8284, %v8552
        %v8655 = vadd.f32 %v8285, %v8555
        %v8656 = vadd.f32 %v8286, %v8560
        %v8657 = vadd.f32 %v8287, %v8563
        %v8658 = vadd.f32 %v8288, %v8568
        %v8659 = vadd.f32 %v8289, %v8571
        %v8660 = vadd.f32 %v8290, %v8576
        %v8661 = vadd.f32 %v8291, %v8579
        %v8662 = vadd.f32 %v8292, %v8584
        %v8663 = vadd.f32 %v8293, %v8587
        %v8664 = vadd.f32 %v8294, %v8592
        %v8665 = vadd.f32 %v8295, %v8595
        %v8666 = vadd.f32 %v8296, %v8600
        %v8667 = vadd.f32 %v8297, %v8603
        %v8668 = vadd.f32 %v8298, %v8608
        %v8669 = vadd.f32 %v8299, %v8611
        %v8670 = vadd.f32 %v8300, %v8616
        %v8671 = vadd.f32 %v8301, %v8619
        %v8672 = vadd.f32 %v8302, %v8624
        %v8673 = vadd.f32 %v8303, %v8627
        %v8674 = vadd.f32 %v8304, %v8632
        %v8675 = vadd.f32 %v8305, %v8635
        %v8676 = vadd.f32 %v8306, %v8640
        %v8677 = vadd.f32 %v8307, %v8643
        %v8678 = vld [vmem:[%s6717] sm:$0xf]
        %v8679 = vld [vmem:[%s6717 + $0x4] sm:$0xf]
        %v8680 = vld [vmem:[%s6717 + $0x8] sm:$0x1]
        %v8681 = vld [vmem:[%s6717 + $0xc] sm:$0xf]
        %v8682 = vld [vmem:[%s6717 + $0x10] sm:$0xf]
        %v8683 = vld [vmem:[%s6717 + $0x14] sm:$0x1]
        %v8684 = vld [vmem:[%s6717 + $0x18] sm:$0xf]
        %v8685 = vld [vmem:[%s6717 + $0x1c] sm:$0xf]
        %v8686 = vld [vmem:[%s6717 + $0x20] sm:$0x1]
        %v8687 = vld [vmem:[%s6717 + $0x24] sm:$0xf]
        %v8688 = vld [vmem:[%s6717 + $0x28] sm:$0xf]
        %v8689 = vld [vmem:[%s6717 + $0x2c] sm:$0x1]
        %v8690 = vld [vmem:[%s6717 + $0x30] sm:$0xf]
        %v8691 = vld [vmem:[%s6717 + $0x34] sm:$0xf]
        %v8692 = vld [vmem:[%s6717 + $0x38] sm:$0x1]
        %v8693 = vld [vmem:[%s6717 + $0x3c] sm:$0xf]
        %v8694 = vld [vmem:[%s6717 + $0x40] sm:$0xf]
        %v8695 = vld [vmem:[%s6717 + $0x44] sm:$0x1]
        %v8696 = vld [vmem:[%s6717 + $0x48] sm:$0xf]
        %v8697 = vld [vmem:[%s6717 + $0x4c] sm:$0xf]
        %v8698 = vld [vmem:[%s6717 + $0x50] sm:$0x1]
        %v8699 = vld [vmem:[%s6717 + $0x54] sm:$0xf]
        %v8700 = vld [vmem:[%s6717 + $0x58] sm:$0xf]
        %v8701 = vld [vmem:[%s6717 + $0x5c] sm:$0x1]
        %v8702 = vld [vmem:[%s6717 + $0x60] sm:$0xf]
        %v8703 = vld [vmem:[%s6717 + $0x64] sm:$0xf]
        %v8704 = vld [vmem:[%s6717 + $0x68] sm:$0x1]
        %v8705 = vld [vmem:[%s6717 + $0x6c] sm:$0xf]
        %v8706 = vld [vmem:[%s6717 + $0x70] sm:$0xf]
        %v8707 = vld [vmem:[%s6717 + $0x74] sm:$0x1]
        %v8708 = vld [vmem:[%s6717 + $0x78] sm:$0xf]
        %v8709 = vld [vmem:[%s6717 + $0x7c] sm:$0xf]
        %v8710 = vld [vmem:[%s6717 + $0x80] sm:$0x1]
        %v8711 = vld [vmem:[%s6717 + $0x84] sm:$0xf]
        %v8712 = vld [vmem:[%s6717 + $0x88] sm:$0xf]
        %v8713 = vld [vmem:[%s6717 + $0x8c] sm:$0x1]
        %v8714 = vld [vmem:[%s6717 + $0x90] sm:$0xf]
        %v8715 = vld [vmem:[%s6717 + $0x94] sm:$0xf]
        %v8716 = vld [vmem:[%s6717 + $0x98] sm:$0x1]
        %v8717 = vld [vmem:[%s6717 + $0x9c] sm:$0xf]
        %v8718 = vld [vmem:[%s6717 + $0xa0] sm:$0xf]
        %v8719 = vld [vmem:[%s6717 + $0xa4] sm:$0x1]
        %v8720 = vld [vmem:[%s6717 + $0xa8] sm:$0xf]
        %v8721 = vld [vmem:[%s6717 + $0xac] sm:$0xf]
        %v8722 = vld [vmem:[%s6717 + $0xb0] sm:$0x1]
        %v8723 = vld [vmem:[%s6717 + $0xb4] sm:$0xf]
        %v8724 = vld [vmem:[%s6717 + $0xb8] sm:$0xf]
        %v8725 = vld [vmem:[%s6717 + $0xbc] sm:$0x1]
        %v8727 = vshrl.u32 %v8678, 16
        %v8729 = vrot.slane %v8727, 4
        %v8730 = vshll.u32 %v8678, 16
        %v8732 = vrot.slane %v8730, 5
        %v8733 = vor.u32 %v8729, %v8732
        %v8734 = vrot.slane %v8733, 4
        %v8736 = vshll.u32 %v8679, 16
        %v8738 = vrot.slane %v8736, 5
        %v8739 = vsel %vm1424, %v8734, %v8738
        %v8740 = vshrl.u32 %v8679, 16
        %v8742 = vrot.slane %v8740, 4
        %v8743 = vor.u32 %v8742, %v8738
        %v8744 = vrot.slane %v8743, 4
        %v8746 = vshll.u32 %v8680, 16
        %v8748 = vrot.slane %v8746, 5
        %v8749 = vsel %vm1424, %v8744, %v8748
        %v8751 = vshrl.u32 %v8681, 16
        %v8753 = vrot.slane %v8751, 4
        %v8754 = vshll.u32 %v8681, 16
        %v8756 = vrot.slane %v8754, 5
        %v8757 = vor.u32 %v8753, %v8756
        %v8758 = vrot.slane %v8757, 4
        %v8760 = vshll.u32 %v8682, 16
        %v8762 = vrot.slane %v8760, 5
        %v8763 = vsel %vm1424, %v8758, %v8762
        %v8764 = vshrl.u32 %v8682, 16
        %v8766 = vrot.slane %v8764, 4
        %v8767 = vor.u32 %v8766, %v8762
        %v8768 = vrot.slane %v8767, 4
        %v8770 = vshll.u32 %v8683, 16
        %v8772 = vrot.slane %v8770, 5
        %v8773 = vsel %vm1424, %v8768, %v8772
        %v8775 = vshrl.u32 %v8684, 16
        %v8777 = vrot.slane %v8775, 4
        %v8778 = vshll.u32 %v8684, 16
        %v8780 = vrot.slane %v8778, 5
        %v8781 = vor.u32 %v8777, %v8780
        %v8782 = vrot.slane %v8781, 4
        %v8784 = vshll.u32 %v8685, 16
        %v8786 = vrot.slane %v8784, 5
        %v8787 = vsel %vm1424, %v8782, %v8786
        %v8788 = vshrl.u32 %v8685, 16
        %v8790 = vrot.slane %v8788, 4
        %v8791 = vor.u32 %v8790, %v8786
        %v8792 = vrot.slane %v8791, 4
        %v8794 = vshll.u32 %v8686, 16
        %v8796 = vrot.slane %v8794, 5
        %v8797 = vsel %vm1424, %v8792, %v8796
        %v8799 = vshrl.u32 %v8687, 16
        %v8801 = vrot.slane %v8799, 4
        %v8802 = vshll.u32 %v8687, 16
        %v8804 = vrot.slane %v8802, 5
        %v8805 = vor.u32 %v8801, %v8804
        %v8806 = vrot.slane %v8805, 4
        %v8808 = vshll.u32 %v8688, 16
        %v8810 = vrot.slane %v8808, 5
        %v8811 = vsel %vm1424, %v8806, %v8810
        %v8812 = vshrl.u32 %v8688, 16
        %v8814 = vrot.slane %v8812, 4
        %v8815 = vor.u32 %v8814, %v8810
        %v8816 = vrot.slane %v8815, 4
        %v8818 = vshll.u32 %v8689, 16
        %v8820 = vrot.slane %v8818, 5
        %v8821 = vsel %vm1424, %v8816, %v8820
        %v8823 = vshrl.u32 %v8690, 16
        %v8825 = vrot.slane %v8823, 4
        %v8826 = vshll.u32 %v8690, 16
        %v8828 = vrot.slane %v8826, 5
        %v8829 = vor.u32 %v8825, %v8828
        %v8830 = vrot.slane %v8829, 4
        %v8832 = vshll.u32 %v8691, 16
        %v8834 = vrot.slane %v8832, 5
        %v8835 = vsel %vm1424, %v8830, %v8834
        %v8836 = vshrl.u32 %v8691, 16
        %v8838 = vrot.slane %v8836, 4
        %v8839 = vor.u32 %v8838, %v8834
        %v8840 = vrot.slane %v8839, 4
        %v8842 = vshll.u32 %v8692, 16
        %v8844 = vrot.slane %v8842, 5
        %v8845 = vsel %vm1424, %v8840, %v8844
        %v8847 = vshrl.u32 %v8693, 16
        %v8849 = vrot.slane %v8847, 4
        %v8850 = vshll.u32 %v8693, 16
        %v8852 = vrot.slane %v8850, 5
        %v8853 = vor.u32 %v8849, %v8852
        %v8854 = vrot.slane %v8853, 4
        %v8856 = vshll.u32 %v8694, 16
        %v8858 = vrot.slane %v8856, 5
        %v8859 = vsel %vm1424, %v8854, %v8858
        %v8860 = vshrl.u32 %v8694, 16
        %v8862 = vrot.slane %v8860, 4
        %v8863 = vor.u32 %v8862, %v8858
        %v8864 = vrot.slane %v8863, 4
        %v8866 = vshll.u32 %v8695, 16
        %v8868 = vrot.slane %v8866, 5
        %v8869 = vsel %vm1424, %v8864, %v8868
        %v8871 = vshrl.u32 %v8696, 16
        %v8873 = vrot.slane %v8871, 4
        %v8874 = vshll.u32 %v8696, 16
        %v8876 = vrot.slane %v8874, 5
        %v8877 = vor.u32 %v8873, %v8876
        %v8878 = vrot.slane %v8877, 4
        %v8880 = vshll.u32 %v8697, 16
        %v8882 = vrot.slane %v8880, 5
        %v8883 = vsel %vm1424, %v8878, %v8882
        %v8884 = vshrl.u32 %v8697, 16
        %v8886 = vrot.slane %v8884, 4
        %v8887 = vor.u32 %v8886, %v8882
        %v8888 = vrot.slane %v8887, 4
        %v8890 = vshll.u32 %v8698, 16
        %v8892 = vrot.slane %v8890, 5
        %v8893 = vsel %vm1424, %v8888, %v8892
        %v8895 = vshrl.u32 %v8699, 16
        %v8897 = vrot.slane %v8895, 4
        %v8898 = vshll.u32 %v8699, 16
        %v8900 = vrot.slane %v8898, 5
        %v8901 = vor.u32 %v8897, %v8900
        %v8902 = vrot.slane %v8901, 4
        %v8904 = vshll.u32 %v8700, 16
        %v8906 = vrot.slane %v8904, 5
        %v8907 = vsel %vm1424, %v8902, %v8906
        %v8908 = vshrl.u32 %v8700, 16
        %v8910 = vrot.slane %v8908, 4
        %v8911 = vor.u32 %v8910, %v8906
        %v8912 = vrot.slane %v8911, 4
        %v8914 = vshll.u32 %v8701, 16
        %v8916 = vrot.slane %v8914, 5
        %v8917 = vsel %vm1424, %v8912, %v8916
        %v8919 = vshrl.u32 %v8702, 16
        %v8921 = vrot.slane %v8919, 4
        %v8922 = vshll.u32 %v8702, 16
        %v8924 = vrot.slane %v8922, 5
        %v8925 = vor.u32 %v8921, %v8924
        %v8926 = vrot.slane %v8925, 4
        %v8928 = vshll.u32 %v8703, 16
        %v8930 = vrot.slane %v8928, 5
        %v8931 = vsel %vm1424, %v8926, %v8930
        %v8932 = vshrl.u32 %v8703, 16
        %v8934 = vrot.slane %v8932, 4
        %v8935 = vor.u32 %v8934, %v8930
        %v8936 = vrot.slane %v8935, 4
        %v8938 = vshll.u32 %v8704, 16
        %v8940 = vrot.slane %v8938, 5
        %v8941 = vsel %vm1424, %v8936, %v8940
        %v8943 = vshrl.u32 %v8705, 16
        %v8945 = vrot.slane %v8943, 4
        %v8946 = vshll.u32 %v8705, 16
        %v8948 = vrot.slane %v8946, 5
        %v8949 = vor.u32 %v8945, %v8948
        %v8950 = vrot.slane %v8949, 4
        %v8952 = vshll.u32 %v8706, 16
        %v8954 = vrot.slane %v8952, 5
        %v8955 = vsel %vm1424, %v8950, %v8954
        %v8956 = vshrl.u32 %v8706, 16
        %v8958 = vrot.slane %v8956, 4
        %v8959 = vor.u32 %v8958, %v8954
        %v8960 = vrot.slane %v8959, 4
        %v8962 = vshll.u32 %v8707, 16
        %v8964 = vrot.slane %v8962, 5
        %v8965 = vsel %vm1424, %v8960, %v8964
        %v8967 = vshrl.u32 %v8708, 16
        %v8969 = vrot.slane %v8967, 4
        %v8970 = vshll.u32 %v8708, 16
        %v8972 = vrot.slane %v8970, 5
        %v8973 = vor.u32 %v8969, %v8972
        %v8974 = vrot.slane %v8973, 4
        %v8976 = vshll.u32 %v8709, 16
        %v8978 = vrot.slane %v8976, 5
        %v8979 = vsel %vm1424, %v8974, %v8978
        %v8980 = vshrl.u32 %v8709, 16
        %v8982 = vrot.slane %v8980, 4
        %v8983 = vor.u32 %v8982, %v8978
        %v8984 = vrot.slane %v8983, 4
        %v8986 = vshll.u32 %v8710, 16
        %v8988 = vrot.slane %v8986, 5
        %v8989 = vsel %vm1424, %v8984, %v8988
        %v8991 = vshrl.u32 %v8711, 16
        %v8993 = vrot.slane %v8991, 4
        %v8994 = vshll.u32 %v8711, 16
        %v8996 = vrot.slane %v8994, 5
        %v8997 = vor.u32 %v8993, %v8996
        %v8998 = vrot.slane %v8997, 4
        %v9000 = vshll.u32 %v8712, 16
        %v9002 = vrot.slane %v9000, 5
        %v9003 = vsel %vm1424, %v8998, %v9002
        %v9004 = vshrl.u32 %v8712, 16
        %v9006 = vrot.slane %v9004, 4
        %v9007 = vor.u32 %v9006, %v9002
        %v9008 = vrot.slane %v9007, 4
        %v9010 = vshll.u32 %v8713, 16
        %v9012 = vrot.slane %v9010, 5
        %v9013 = vsel %vm1424, %v9008, %v9012
        %v9015 = vshrl.u32 %v8714, 16
        %v9017 = vrot.slane %v9015, 4
        %v9018 = vshll.u32 %v8714, 16
        %v9020 = vrot.slane %v9018, 5
        %v9021 = vor.u32 %v9017, %v9020
        %v9022 = vrot.slane %v9021, 4
        %v9024 = vshll.u32 %v8715, 16
        %v9026 = vrot.slane %v9024, 5
        %v9027 = vsel %vm1424, %v9022, %v9026
        %v9028 = vshrl.u32 %v8715, 16
        %v9030 = vrot.slane %v9028, 4
        %v9031 = vor.u32 %v9030, %v9026
        %v9032 = vrot.slane %v9031, 4
        %v9034 = vshll.u32 %v8716, 16
        %v9036 = vrot.slane %v9034, 5
        %v9037 = vsel %vm1424, %v9032, %v9036
        %v9039 = vshrl.u32 %v8717, 16
        %v9041 = vrot.slane %v9039, 4
        %v9042 = vshll.u32 %v8717, 16
        %v9044 = vrot.slane %v9042, 5
        %v9045 = vor.u32 %v9041, %v9044
        %v9046 = vrot.slane %v9045, 4
        %v9048 = vshll.u32 %v8718, 16
        %v9050 = vrot.slane %v9048, 5
        %v9051 = vsel %vm1424, %v9046, %v9050
        %v9052 = vshrl.u32 %v8718, 16
        %v9054 = vrot.slane %v9052, 4
        %v9055 = vor.u32 %v9054, %v9050
        %v9056 = vrot.slane %v9055, 4
        %v9058 = vshll.u32 %v8719, 16
        %v9060 = vrot.slane %v9058, 5
        %v9061 = vsel %vm1424, %v9056, %v9060
        %v9063 = vshrl.u32 %v8720, 16
        %v9065 = vrot.slane %v9063, 4
        %v9066 = vshll.u32 %v8720, 16
        %v9068 = vrot.slane %v9066, 5
        %v9069 = vor.u32 %v9065, %v9068
        %v9070 = vrot.slane %v9069, 4
        %v9072 = vshll.u32 %v8721, 16
        %v9074 = vrot.slane %v9072, 5
        %v9075 = vsel %vm1424, %v9070, %v9074
        %v9076 = vshrl.u32 %v8721, 16
        %v9078 = vrot.slane %v9076, 4
        %v9079 = vor.u32 %v9078, %v9074
        %v9080 = vrot.slane %v9079, 4
        %v9082 = vshll.u32 %v8722, 16
        %v9084 = vrot.slane %v9082, 5
        %v9085 = vsel %vm1424, %v9080, %v9084
        %v9087 = vshrl.u32 %v8723, 16
        %v9089 = vrot.slane %v9087, 4
        %v9090 = vshll.u32 %v8723, 16
        %v9092 = vrot.slane %v9090, 5
        %v9093 = vor.u32 %v9089, %v9092
        %v9094 = vrot.slane %v9093, 4
        %v9096 = vshll.u32 %v8724, 16
        %v9098 = vrot.slane %v9096, 5
        %v9099 = vsel %vm1424, %v9094, %v9098
        %v9100 = vshrl.u32 %v8724, 16
        %v9102 = vrot.slane %v9100, 4
        %v9103 = vor.u32 %v9102, %v9098
        %v9104 = vrot.slane %v9103, 4
        %v9106 = vshll.u32 %v8725, 16
        %v9108 = vrot.slane %v9106, 5
        %v9109 = vsel %vm1424, %v9104, %v9108
        %s9110 = scalar_lea.vmem %s4, 64
        %v9111 = vld [vmem:[%s9110] sm:$0xf]
        %v9112 = vld [vmem:[%s9110 + $0x4] sm:$0xf]
        %v9113 = vld [vmem:[%s9110 + $0x8] sm:$0xf]
        %v9114 = vld [vmem:[%s9110 + $0xc] sm:$0xf]
        %v9115 = vunpack.c.l.b16 %v8739
        %v9116 = vunpack.c.l.b16 %v8749
        %v9117 = vunpack.c.l.b16 %v8763
        %v9118 = vunpack.c.l.b16 %v8773
        %v9119 = vunpack.c.l.b16 %v8787
        %v9120 = vunpack.c.l.b16 %v8797
        %v9121 = vunpack.c.l.b16 %v8811
        %v9122 = vunpack.c.l.b16 %v8821
        %v9123 = vunpack.c.l.b16 %v8835
        %v9124 = vunpack.c.l.b16 %v8845
        %v9125 = vunpack.c.l.b16 %v8859
        %v9126 = vunpack.c.l.b16 %v8869
        %v9127 = vunpack.c.l.b16 %v8883
        %v9128 = vunpack.c.l.b16 %v8893
        %v9129 = vunpack.c.l.b16 %v8907
        %v9130 = vunpack.c.l.b16 %v8917
        %v9131 = vunpack.c.l.b16 %v8931
        %v9132 = vunpack.c.l.b16 %v8941
        %v9133 = vunpack.c.l.b16 %v8955
        %v9134 = vunpack.c.l.b16 %v8965
        %v9135 = vunpack.c.l.b16 %v8979
        %v9136 = vunpack.c.l.b16 %v8989
        %v9137 = vunpack.c.l.b16 %v9003
        %v9138 = vunpack.c.l.b16 %v9013
        %v9139 = vunpack.c.l.b16 %v9027
        %v9140 = vunpack.c.l.b16 %v9037
        %v9141 = vunpack.c.l.b16 %v9051
        %v9142 = vunpack.c.l.b16 %v9061
        %v9143 = vunpack.c.l.b16 %v9075
        %v9144 = vunpack.c.l.b16 %v9085
        %v9145 = vunpack.c.l.b16 %v9099
        %v9146 = vunpack.c.l.b16 %v9109
        %v9147 = vpack.c.b16 %v9116, %v9115
        %v9148 = vpack.c.b16 %v9118, %v9117
        %v9149 = vpack.c.b16 %v9120, %v9119
        %v9150 = vpack.c.b16 %v9122, %v9121
        %v9151 = vpack.c.b16 %v9124, %v9123
        %v9152 = vpack.c.b16 %v9126, %v9125
        %v9153 = vpack.c.b16 %v9128, %v9127
        %v9154 = vpack.c.b16 %v9130, %v9129
        %v9155 = vpack.c.b16 %v9132, %v9131
        %v9156 = vpack.c.b16 %v9134, %v9133
        %v9157 = vpack.c.b16 %v9136, %v9135
        %v9158 = vpack.c.b16 %v9138, %v9137
        %v9159 = vpack.c.b16 %v9140, %v9139
        %v9160 = vpack.c.b16 %v9142, %v9141
        %v9161 = vpack.c.b16 %v9144, %v9143
        %v9162 = vpack.c.b16 %v9146, %v9145
        %v9167 = vunpack.c.l.b16 %v9111
        %v9168 = vunpack.c.l.b16 %v9112
        %v9169 = vunpack.c.l.b16 %v9113
        %v9170 = vunpack.c.l.b16 %v9114
        %v9171 = vpack.c.b16 %v9168, %v9167
        %v9172 = vpack.c.b16 %v9170, %v9169
        %v9176 = vsel %vm7331, %v9147, 0
        %v9179 = vsel %vm7331, %v9148, 0
        %v9182 = vsel %vm7331, %v9149, 0
        %v9185 = vsel %vm7331, %v9150, 0
        %v9188 = vsel %vm7331, %v9151, 0
        %v9191 = vsel %vm7331, %v9152, 0
        %v9194 = vsel %vm7331, %v9153, 0
        %v9197 = vsel %vm7331, %v9154, 0
        %v9200 = vsel %vm7331, %v9155, 0
        %v9203 = vsel %vm7331, %v9156, 0
        %v9206 = vsel %vm7331, %v9157, 0
        %v9209 = vsel %vm7331, %v9158, 0
        %v9212 = vsel %vm7331, %v9159, 0
        %v9215 = vsel %vm7331, %v9160, 0
        %v9218 = vsel %vm7331, %v9161, 0
        %v9221 = vsel %vm7331, %v9162, 0
        %9223 = vmatprep.subr.bf16.mxu0 0
        %9224 = vmatpush1.bf16.msra.mxu0 0
        %9225 = vmatprep.subr.bf16.mxu0 0
        %9226 = vmatpush1.bf16.msra.mxu0 0
        %9227 = vmatprep.subr.bf16.mxu0 0
        %9228 = vmatpush1.bf16.msra.mxu0 0
        %9229 = vmatprep.subr.bf16.mxu0 0
        %9230 = vmatpush1.bf16.msra.mxu0 0
        %9231 = vmatprep.subr.bf16.mxu0 0
        %9232 = vmatpush1.bf16.msra.mxu0 0
        %9233 = vmatprep.subr.bf16.mxu0 0
        %9234 = vmatpush1.bf16.msra.mxu0 0
        %9235 = vmatprep.subr.bf16.mxu0 0
        %9236 = vmatpush1.bf16.msra.mxu0 %v9172
        %9237 = vmatprep.subr.bf16.mxu0 0
        %9238 = vmatpush1.bf16.msra.mxu0 %v9171
        %9239 = vmatprep.subr.bf16.mxu0 0
        %9240 = vmatpush2.bf16.msra.mxu0 0
        %9241 = vmatprep.subr.bf16.mxu0 0
        %9242 = vmatpush2.bf16.msra.mxu0 0
        %9243 = vmatprep.subr.bf16.mxu0 0
        %9244 = vmatpush2.bf16.msra.mxu0 0
        %9245 = vmatprep.subr.bf16.mxu0 0
        %9246 = vmatpush2.bf16.msra.mxu0 0
        %9247 = vmatprep.subr.bf16.mxu0 0
        %9248 = vmatpush2.bf16.msra.mxu0 0
        %9249 = vmatprep.subr.bf16.mxu0 0
        %9250 = vmatpush2.bf16.msra.mxu0 0
        %9251 = vmatprep.subr.bf16.mxu0 0
        %9252 = vmatpush2.bf16.msra.mxu0 0
        %9253 = vmatprep.subr.bf16.mxu0 0
        %9254 = vmatpush2.bf16.msra.mxu0 0
        %9255 = vmatprep.mubr.bf16.mxu0 0
        %9256 = vmatmul.mubr.bf16.gmra.mxu0 %v9176
        %v9257 = vpop.f32.mrf.mxu0
        %v9258 = vadd.f32 0.0, %v9257
        %v9259 = vpop.f32.mrf.mxu0
        %v9260 = vpop.f32.mrf.mxu0
        %v9261 = vadd.f32 0.0, %v9260
        %v9262 = vpop.f32.mrf.mxu0
        %9263 = vmatprep.mubr.bf16.mxu0 0
        %9264 = vmatmul.mubr.bf16.gmra.mxu0 %v9179
        %v9265 = vpop.f32.mrf.mxu0
        %v9266 = vadd.f32 0.0, %v9265
        %v9267 = vpop.f32.mrf.mxu0
        %v9268 = vpop.f32.mrf.mxu0
        %v9269 = vadd.f32 0.0, %v9268
        %v9270 = vpop.f32.mrf.mxu0
        %9271 = vmatprep.mubr.bf16.mxu0 0
        %9272 = vmatmul.mubr.bf16.gmra.mxu0 %v9182
        %v9273 = vpop.f32.mrf.mxu0
        %v9274 = vadd.f32 0.0, %v9273
        %v9275 = vpop.f32.mrf.mxu0
        %v9276 = vpop.f32.mrf.mxu0
        %v9277 = vadd.f32 0.0, %v9276
        %v9278 = vpop.f32.mrf.mxu0
        %9279 = vmatprep.mubr.bf16.mxu0 0
        %9280 = vmatmul.mubr.bf16.gmra.mxu0 %v9185
        %v9281 = vpop.f32.mrf.mxu0
        %v9282 = vadd.f32 0.0, %v9281
        %v9283 = vpop.f32.mrf.mxu0
        %v9284 = vpop.f32.mrf.mxu0
        %v9285 = vadd.f32 0.0, %v9284
        %v9286 = vpop.f32.mrf.mxu0
        %9287 = vmatprep.mubr.bf16.mxu0 0
        %9288 = vmatmul.mubr.bf16.gmra.mxu0 %v9188
        %v9289 = vpop.f32.mrf.mxu0
        %v9290 = vadd.f32 0.0, %v9289
        %v9291 = vpop.f32.mrf.mxu0
        %v9292 = vpop.f32.mrf.mxu0
        %v9293 = vadd.f32 0.0, %v9292
        %v9294 = vpop.f32.mrf.mxu0
        %9295 = vmatprep.mubr.bf16.mxu0 0
        %9296 = vmatmul.mubr.bf16.gmra.mxu0 %v9191
        %v9297 = vpop.f32.mrf.mxu0
        %v9298 = vadd.f32 0.0, %v9297
        %v9299 = vpop.f32.mrf.mxu0
        %v9300 = vpop.f32.mrf.mxu0
        %v9301 = vadd.f32 0.0, %v9300
        %v9302 = vpop.f32.mrf.mxu0
        %9303 = vmatprep.mubr.bf16.mxu0 0
        %9304 = vmatmul.mubr.bf16.gmra.mxu0 %v9194
        %v9305 = vpop.f32.mrf.mxu0
        %v9306 = vadd.f32 0.0, %v9305
        %v9307 = vpop.f32.mrf.mxu0
        %v9308 = vpop.f32.mrf.mxu0
        %v9309 = vadd.f32 0.0, %v9308
        %v9310 = vpop.f32.mrf.mxu0
        %9311 = vmatprep.mubr.bf16.mxu0 0
        %9312 = vmatmul.mubr.bf16.gmra.mxu0 %v9197
        %v9313 = vpop.f32.mrf.mxu0
        %v9314 = vadd.f32 0.0, %v9313
        %v9315 = vpop.f32.mrf.mxu0
        %v9316 = vpop.f32.mrf.mxu0
        %v9317 = vadd.f32 0.0, %v9316
        %v9318 = vpop.f32.mrf.mxu0
        %9319 = vmatprep.mubr.bf16.mxu0 0
        %9320 = vmatmul.mubr.bf16.gmra.mxu0 %v9200
        %v9321 = vpop.f32.mrf.mxu0
        %v9322 = vadd.f32 0.0, %v9321
        %v9323 = vpop.f32.mrf.mxu0
        %v9324 = vpop.f32.mrf.mxu0
        %v9325 = vadd.f32 0.0, %v9324
        %v9326 = vpop.f32.mrf.mxu0
        %9327 = vmatprep.mubr.bf16.mxu0 0
        %9328 = vmatmul.mubr.bf16.gmra.mxu0 %v9203
        %v9329 = vpop.f32.mrf.mxu0
        %v9330 = vadd.f32 0.0, %v9329
        %v9331 = vpop.f32.mrf.mxu0
        %v9332 = vpop.f32.mrf.mxu0
        %v9333 = vadd.f32 0.0, %v9332
        %v9334 = vpop.f32.mrf.mxu0
        %9335 = vmatprep.mubr.bf16.mxu0 0
        %9336 = vmatmul.mubr.bf16.gmra.mxu0 %v9206
        %v9337 = vpop.f32.mrf.mxu0
        %v9338 = vadd.f32 0.0, %v9337
        %v9339 = vpop.f32.mrf.mxu0
        %v9340 = vpop.f32.mrf.mxu0
        %v9341 = vadd.f32 0.0, %v9340
        %v9342 = vpop.f32.mrf.mxu0
        %9343 = vmatprep.mubr.bf16.mxu0 0
        %9344 = vmatmul.mubr.bf16.gmra.mxu0 %v9209
        %v9345 = vpop.f32.mrf.mxu0
        %v9346 = vadd.f32 0.0, %v9345
        %v9347 = vpop.f32.mrf.mxu0
        %v9348 = vpop.f32.mrf.mxu0
        %v9349 = vadd.f32 0.0, %v9348
        %v9350 = vpop.f32.mrf.mxu0
        %9351 = vmatprep.mubr.bf16.mxu0 0
        %9352 = vmatmul.mubr.bf16.gmra.mxu0 %v9212
        %v9353 = vpop.f32.mrf.mxu0
        %v9354 = vadd.f32 0.0, %v9353
        %v9355 = vpop.f32.mrf.mxu0
        %v9356 = vpop.f32.mrf.mxu0
        %v9357 = vadd.f32 0.0, %v9356
        %v9358 = vpop.f32.mrf.mxu0
        %9359 = vmatprep.mubr.bf16.mxu0 0
        %9360 = vmatmul.mubr.bf16.gmra.mxu0 %v9215
        %v9361 = vpop.f32.mrf.mxu0
        %v9362 = vadd.f32 0.0, %v9361
        %v9363 = vpop.f32.mrf.mxu0
        %v9364 = vpop.f32.mrf.mxu0
        %v9365 = vadd.f32 0.0, %v9364
        %v9366 = vpop.f32.mrf.mxu0
        %9367 = vmatprep.mubr.bf16.mxu0 0
        %9368 = vmatmul.mubr.bf16.gmra.mxu0 %v9218
        %v9369 = vpop.f32.mrf.mxu0
        %v9370 = vadd.f32 0.0, %v9369
        %v9371 = vpop.f32.mrf.mxu0
        %v9372 = vpop.f32.mrf.mxu0
        %v9373 = vadd.f32 0.0, %v9372
        %v9374 = vpop.f32.mrf.mxu0
        %9375 = vmatprep.mubr.bf16.mxu0 0
        %9376 = vmatmul.mubr.bf16.gmra.mxu0 %v9221
        %v9377 = vpop.f32.mrf.mxu0
        %v9378 = vadd.f32 0.0, %v9377
        %v9379 = vpop.f32.mrf.mxu0
        %v9380 = vpop.f32.mrf.mxu0
        %v9381 = vadd.f32 0.0, %v9380
        %v9382 = vpop.f32.mrf.mxu0
        %9383 = vdwg.mxu0
        %v9384 = vadd.f32 %v8646, %v9258
        %v9385 = vadd.f32 %v8647, %v9261
        %v9386 = vadd.f32 %v8648, %v9266
        %v9387 = vadd.f32 %v8649, %v9269
        %v9388 = vadd.f32 %v8650, %v9274
        %v9389 = vadd.f32 %v8651, %v9277
        %v9390 = vadd.f32 %v8652, %v9282
        %v9391 = vadd.f32 %v8653, %v9285
        %v9392 = vadd.f32 %v8654, %v9290
        %v9393 = vadd.f32 %v8655, %v9293
        %v9394 = vadd.f32 %v8656, %v9298
        %v9395 = vadd.f32 %v8657, %v9301
        %v9396 = vadd.f32 %v8658, %v9306
        %v9397 = vadd.f32 %v8659, %v9309
        %v9398 = vadd.f32 %v8660, %v9314
        %v9399 = vadd.f32 %v8661, %v9317
        %v9400 = vadd.f32 %v8662, %v9322
        %v9401 = vadd.f32 %v8663, %v9325
        %v9402 = vadd.f32 %v8664, %v9330
        %v9403 = vadd.f32 %v8665, %v9333
        %v9404 = vadd.f32 %v8666, %v9338
        %v9405 = vadd.f32 %v8667, %v9341
        %v9406 = vadd.f32 %v8668, %v9346
        %v9407 = vadd.f32 %v8669, %v9349
        %v9408 = vadd.f32 %v8670, %v9354
        %v9409 = vadd.f32 %v8671, %v9357
        %v9410 = vadd.f32 %v8672, %v9362
        %v9411 = vadd.f32 %v8673, %v9365
        %v9412 = vadd.f32 %v8674, %v9370
        %v9413 = vadd.f32 %v8675, %v9373
        %v9414 = vadd.f32 %v8676, %v9378
        %v9415 = vadd.f32 %v8677, %v9381
        %v9416 = vld [vmem:[%s6717] sm:$0xe]
        %v9417 = vld [vmem:[%s6717 + $0xc] sm:$0xe]
        %v9418 = vld [vmem:[%s6717 + $0x18] sm:$0xe]
        %v9419 = vld [vmem:[%s6717 + $0x24] sm:$0xe]
        %v9420 = vld [vmem:[%s6717 + $0x30] sm:$0xe]
        %v9421 = vld [vmem:[%s6717 + $0x3c] sm:$0xe]
        %v9422 = vld [vmem:[%s6717 + $0x48] sm:$0xe]
        %v9423 = vld [vmem:[%s6717 + $0x54] sm:$0xe]
        %v9424 = vld [vmem:[%s6717 + $0x60] sm:$0xe]
        %v9425 = vld [vmem:[%s6717 + $0x6c] sm:$0xe]
        %v9426 = vld [vmem:[%s6717 + $0x78] sm:$0xe]
        %v9427 = vld [vmem:[%s6717 + $0x84] sm:$0xe]
        %v9428 = vld [vmem:[%s6717 + $0x90] sm:$0xe]
        %v9429 = vld [vmem:[%s6717 + $0x9c] sm:$0xe]
        %v9430 = vld [vmem:[%s6717 + $0xa8] sm:$0xe]
        %v9431 = vld [vmem:[%s6717 + $0xb4] sm:$0xe]
        %v9480 = vrot.slane %v9416, 5
        %v9481 = vrot.slane %v9480, 4
        %v9482 = vrot.slane %v8679, 5
        %v9483 = vsel %vm2463, %v9481, %v9482
        %v9484 = vrot.slane %v9482, 4
        %v9485 = vrot.slane %v8680, 5
        %v9486 = vsel %vm2463, %v9484, %v9485
        %v9487 = vrot.slane %v9417, 5
        %v9488 = vrot.slane %v9487, 4
        %v9489 = vrot.slane %v8682, 5
        %v9490 = vsel %vm2463, %v9488, %v9489
        %v9491 = vrot.slane %v9489, 4
        %v9492 = vrot.slane %v8683, 5
        %v9493 = vsel %vm2463, %v9491, %v9492
        %v9494 = vrot.slane %v9418, 5
        %v9495 = vrot.slane %v9494, 4
        %v9496 = vrot.slane %v8685, 5
        %v9497 = vsel %vm2463, %v9495, %v9496
        %v9498 = vrot.slane %v9496, 4
        %v9499 = vrot.slane %v8686, 5
        %v9500 = vsel %vm2463, %v9498, %v9499
        %v9501 = vrot.slane %v9419, 5
        %v9502 = vrot.slane %v9501, 4
        %v9503 = vrot.slane %v8688, 5
        %v9504 = vsel %vm2463, %v9502, %v9503
        %v9505 = vrot.slane %v9503, 4
        %v9506 = vrot.slane %v8689, 5
        %v9507 = vsel %vm2463, %v9505, %v9506
        %v9508 = vrot.slane %v9420, 5
        %v9509 = vrot.slane %v9508, 4
        %v9510 = vrot.slane %v8691, 5
        %v9511 = vsel %vm2463, %v9509, %v9510
        %v9512 = vrot.slane %v9510, 4
        %v9513 = vrot.slane %v8692, 5
        %v9514 = vsel %vm2463, %v9512, %v9513
        %v9515 = vrot.slane %v9421, 5
        %v9516 = vrot.slane %v9515, 4
        %v9517 = vrot.slane %v8694, 5
        %v9518 = vsel %vm2463, %v9516, %v9517
        %v9519 = vrot.slane %v9517, 4
        %v9520 = vrot.slane %v8695, 5
        %v9521 = vsel %vm2463, %v9519, %v9520
        %v9522 = vrot.slane %v9422, 5
        %v9523 = vrot.slane %v9522, 4
        %v9524 = vrot.slane %v8697, 5
        %v9525 = vsel %vm2463, %v9523, %v9524
        %v9526 = vrot.slane %v9524, 4
        %v9527 = vrot.slane %v8698, 5
        %v9528 = vsel %vm2463, %v9526, %v9527
        %v9529 = vrot.slane %v9423, 5
        %v9530 = vrot.slane %v9529, 4
        %v9531 = vrot.slane %v8700, 5
        %v9532 = vsel %vm2463, %v9530, %v9531
        %v9533 = vrot.slane %v9531, 4
        %v9534 = vrot.slane %v8701, 5
        %v9535 = vsel %vm2463, %v9533, %v9534
        %v9536 = vrot.slane %v9424, 5
        %v9537 = vrot.slane %v9536, 4
        %v9538 = vrot.slane %v8703, 5
        %v9539 = vsel %vm2463, %v9537, %v9538
        %v9540 = vrot.slane %v9538, 4
        %v9541 = vrot.slane %v8704, 5
        %v9542 = vsel %vm2463, %v9540, %v9541
        %v9543 = vrot.slane %v9425, 5
        %v9544 = vrot.slane %v9543, 4
        %v9545 = vrot.slane %v8706, 5
        %v9546 = vsel %vm2463, %v9544, %v9545
        %v9547 = vrot.slane %v9545, 4
        %v9548 = vrot.slane %v8707, 5
        %v9549 = vsel %vm2463, %v9547, %v9548
        %v9550 = vrot.slane %v9426, 5
        %v9551 = vrot.slane %v9550, 4
        %v9552 = vrot.slane %v8709, 5
        %v9553 = vsel %vm2463, %v9551, %v9552
        %v9554 = vrot.slane %v9552, 4
        %v9555 = vrot.slane %v8710, 5
        %v9556 = vsel %vm2463, %v9554, %v9555
        %v9557 = vrot.slane %v9427, 5
        %v9558 = vrot.slane %v9557, 4
        %v9559 = vrot.slane %v8712, 5
        %v9560 = vsel %vm2463, %v9558, %v9559
        %v9561 = vrot.slane %v9559, 4
        %v9562 = vrot.slane %v8713, 5
        %v9563 = vsel %vm2463, %v9561, %v9562
        %v9564 = vrot.slane %v9428, 5
        %v9565 = vrot.slane %v9564, 4
        %v9566 = vrot.slane %v8715, 5
        %v9567 = vsel %vm2463, %v9565, %v9566
        %v9568 = vrot.slane %v9566, 4
        %v9569 = vrot.slane %v8716, 5
        %v9570 = vsel %vm2463, %v9568, %v9569
        %v9571 = vrot.slane %v9429, 5
        %v9572 = vrot.slane %v9571, 4
        %v9573 = vrot.slane %v8718, 5
        %v9574 = vsel %vm2463, %v9572, %v9573
        %v9575 = vrot.slane %v9573, 4
        %v9576 = vrot.slane %v8719, 5
        %v9577 = vsel %vm2463, %v9575, %v9576
        %v9578 = vrot.slane %v9430, 5
        %v9579 = vrot.slane %v9578, 4
        %v9580 = vrot.slane %v8721, 5
        %v9581 = vsel %vm2463, %v9579, %v9580
        %v9582 = vrot.slane %v9580, 4
        %v9583 = vrot.slane %v8722, 5
        %v9584 = vsel %vm2463, %v9582, %v9583
        %v9585 = vrot.slane %v9431, 5
        %v9586 = vrot.slane %v9585, 4
        %v9587 = vrot.slane %v8724, 5
        %v9588 = vsel %vm2463, %v9586, %v9587
        %v9589 = vrot.slane %v9587, 4
        %v9590 = vrot.slane %v8725, 5
        %v9591 = vsel %vm2463, %v9589, %v9590
        %s9592 = scalar_lea.vmem %s4, 80
        %v9593 = vld [vmem:[%s9592] sm:$0xf]
        %v9594 = vld [vmem:[%s9592 + $0x4] sm:$0xf]
        %v9595 = vld [vmem:[%s9592 + $0x8] sm:$0xf]
        %v9596 = vld [vmem:[%s9592 + $0xc] sm:$0xf]
        %v9597 = vunpack.c.l.b16 %v9483
        %v9598 = vunpack.c.l.b16 %v9486
        %v9599 = vunpack.c.l.b16 %v9490
        %v9600 = vunpack.c.l.b16 %v9493
        %v9601 = vunpack.c.l.b16 %v9497
        %v9602 = vunpack.c.l.b16 %v9500
        %v9603 = vunpack.c.l.b16 %v9504
        %v9604 = vunpack.c.l.b16 %v9507
        %v9605 = vunpack.c.l.b16 %v9511
        %v9606 = vunpack.c.l.b16 %v9514
        %v9607 = vunpack.c.l.b16 %v9518
        %v9608 = vunpack.c.l.b16 %v9521
        %v9609 = vunpack.c.l.b16 %v9525
        %v9610 = vunpack.c.l.b16 %v9528
        %v9611 = vunpack.c.l.b16 %v9532
        %v9612 = vunpack.c.l.b16 %v9535
        %v9613 = vunpack.c.l.b16 %v9539
        %v9614 = vunpack.c.l.b16 %v9542
        %v9615 = vunpack.c.l.b16 %v9546
        %v9616 = vunpack.c.l.b16 %v9549
        %v9617 = vunpack.c.l.b16 %v9553
        %v9618 = vunpack.c.l.b16 %v9556
        %v9619 = vunpack.c.l.b16 %v9560
        %v9620 = vunpack.c.l.b16 %v9563
        %v9621 = vunpack.c.l.b16 %v9567
        %v9622 = vunpack.c.l.b16 %v9570
        %v9623 = vunpack.c.l.b16 %v9574
        %v9624 = vunpack.c.l.b16 %v9577
        %v9625 = vunpack.c.l.b16 %v9581
        %v9626 = vunpack.c.l.b16 %v9584
        %v9627 = vunpack.c.l.b16 %v9588
        %v9628 = vunpack.c.l.b16 %v9591
        %v9629 = vpack.c.b16 %v9598, %v9597
        %v9630 = vpack.c.b16 %v9600, %v9599
        %v9631 = vpack.c.b16 %v9602, %v9601
        %v9632 = vpack.c.b16 %v9604, %v9603
        %v9633 = vpack.c.b16 %v9606, %v9605
        %v9634 = vpack.c.b16 %v9608, %v9607
        %v9635 = vpack.c.b16 %v9610, %v9609
        %v9636 = vpack.c.b16 %v9612, %v9611
        %v9637 = vpack.c.b16 %v9614, %v9613
        %v9638 = vpack.c.b16 %v9616, %v9615
        %v9639 = vpack.c.b16 %v9618, %v9617
        %v9640 = vpack.c.b16 %v9620, %v9619
        %v9641 = vpack.c.b16 %v9622, %v9621
        %v9642 = vpack.c.b16 %v9624, %v9623
        %v9643 = vpack.c.b16 %v9626, %v9625
        %v9644 = vpack.c.b16 %v9628, %v9627
        %v9649 = vunpack.c.l.b16 %v9593
        %v9650 = vunpack.c.l.b16 %v9594
        %v9651 = vunpack.c.l.b16 %v9595
        %v9652 = vunpack.c.l.b16 %v9596
        %v9653 = vpack.c.b16 %v9650, %v9649
        %v9654 = vpack.c.b16 %v9652, %v9651
        %v9658 = vsel %vm7331, %v9629, 0
        %v9661 = vsel %vm7331, %v9630, 0
        %v9664 = vsel %vm7331, %v9631, 0
        %v9667 = vsel %vm7331, %v9632, 0
        %v9670 = vsel %vm7331, %v9633, 0
        %v9673 = vsel %vm7331, %v9634, 0
        %v9676 = vsel %vm7331, %v9635, 0
        %v9679 = vsel %vm7331, %v9636, 0
        %v9682 = vsel %vm7331, %v9637, 0
        %v9685 = vsel %vm7331, %v9638, 0
        %v9688 = vsel %vm7331, %v9639, 0
        %v9691 = vsel %vm7331, %v9640, 0
        %v9694 = vsel %vm7331, %v9641, 0
        %v9697 = vsel %vm7331, %v9642, 0
        %v9700 = vsel %vm7331, %v9643, 0
        %v9703 = vsel %vm7331, %v9644, 0
        %9705 = vmatprep.subr.bf16.mxu0 0
        %9706 = vmatpush1.bf16.msra.mxu0 0
        %9707 = vmatprep.subr.bf16.mxu0 0
        %9708 = vmatpush1.bf16.msra.mxu0 0
        %9709 = vmatprep.subr.bf16.mxu0 0
        %9710 = vmatpush1.bf16.msra.mxu0 0
        %9711 = vmatprep.subr.bf16.mxu0 0
        %9712 = vmatpush1.bf16.msra.mxu0 0
        %9713 = vmatprep.subr.bf16.mxu0 0
        %9714 = vmatpush1.bf16.msra.mxu0 0
        %9715 = vmatprep.subr.bf16.mxu0 0
        %9716 = vmatpush1.bf16.msra.mxu0 0
        %9717 = vmatprep.subr.bf16.mxu0 0
        %9718 = vmatpush1.bf16.msra.mxu0 %v9654
        %9719 = vmatprep.subr.bf16.mxu0 0
        %9720 = vmatpush1.bf16.msra.mxu0 %v9653
        %9721 = vmatprep.subr.bf16.mxu0 0
        %9722 = vmatpush2.bf16.msra.mxu0 0
        %9723 = vmatprep.subr.bf16.mxu0 0
        %9724 = vmatpush2.bf16.msra.mxu0 0
        %9725 = vmatprep.subr.bf16.mxu0 0
        %9726 = vmatpush2.bf16.msra.mxu0 0
        %9727 = vmatprep.subr.bf16.mxu0 0
        %9728 = vmatpush2.bf16.msra.mxu0 0
        %9729 = vmatprep.subr.bf16.mxu0 0
        %9730 = vmatpush2.bf16.msra.mxu0 0
        %9731 = vmatprep.subr.bf16.mxu0 0
        %9732 = vmatpush2.bf16.msra.mxu0 0
        %9733 = vmatprep.subr.bf16.mxu0 0
        %9734 = vmatpush2.bf16.msra.mxu0 0
        %9735 = vmatprep.subr.bf16.mxu0 0
        %9736 = vmatpush2.bf16.msra.mxu0 0
        %9737 = vmatprep.mubr.bf16.mxu0 0
        %9738 = vmatmul.mubr.bf16.gmra.mxu0 %v9658
        %v9739 = vpop.f32.mrf.mxu0
        %v9740 = vadd.f32 0.0, %v9739
        %v9741 = vpop.f32.mrf.mxu0
        %v9742 = vpop.f32.mrf.mxu0
        %v9743 = vadd.f32 0.0, %v9742
        %v9744 = vpop.f32.mrf.mxu0
        %9745 = vmatprep.mubr.bf16.mxu0 0
        %9746 = vmatmul.mubr.bf16.gmra.mxu0 %v9661
        %v9747 = vpop.f32.mrf.mxu0
        %v9748 = vadd.f32 0.0, %v9747
        %v9749 = vpop.f32.mrf.mxu0
        %v9750 = vpop.f32.mrf.mxu0
        %v9751 = vadd.f32 0.0, %v9750
        %v9752 = vpop.f32.mrf.mxu0
        %9753 = vmatprep.mubr.bf16.mxu0 0
        %9754 = vmatmul.mubr.bf16.gmra.mxu0 %v9664
        %v9755 = vpop.f32.mrf.mxu0
        %v9756 = vadd.f32 0.0, %v9755
        %v9757 = vpop.f32.mrf.mxu0
        %v9758 = vpop.f32.mrf.mxu0
        %v9759 = vadd.f32 0.0, %v9758
        %v9760 = vpop.f32.mrf.mxu0
        %9761 = vmatprep.mubr.bf16.mxu0 0
        %9762 = vmatmul.mubr.bf16.gmra.mxu0 %v9667
        %v9763 = vpop.f32.mrf.mxu0
        %v9764 = vadd.f32 0.0, %v9763
        %v9765 = vpop.f32.mrf.mxu0
        %v9766 = vpop.f32.mrf.mxu0
        %v9767 = vadd.f32 0.0, %v9766
        %v9768 = vpop.f32.mrf.mxu0
        %9769 = vmatprep.mubr.bf16.mxu0 0
        %9770 = vmatmul.mubr.bf16.gmra.mxu0 %v9670
        %v9771 = vpop.f32.mrf.mxu0
        %v9772 = vadd.f32 0.0, %v9771
        %v9773 = vpop.f32.mrf.mxu0
        %v9774 = vpop.f32.mrf.mxu0
        %v9775 = vadd.f32 0.0, %v9774
        %v9776 = vpop.f32.mrf.mxu0
        %9777 = vmatprep.mubr.bf16.mxu0 0
        %9778 = vmatmul.mubr.bf16.gmra.mxu0 %v9673
        %v9779 = vpop.f32.mrf.mxu0
        %v9780 = vadd.f32 0.0, %v9779
        %v9781 = vpop.f32.mrf.mxu0
        %v9782 = vpop.f32.mrf.mxu0
        %v9783 = vadd.f32 0.0, %v9782
        %v9784 = vpop.f32.mrf.mxu0
        %9785 = vmatprep.mubr.bf16.mxu0 0
        %9786 = vmatmul.mubr.bf16.gmra.mxu0 %v9676
        %v9787 = vpop.f32.mrf.mxu0
        %v9788 = vadd.f32 0.0, %v9787
        %v9789 = vpop.f32.mrf.mxu0
        %v9790 = vpop.f32.mrf.mxu0
        %v9791 = vadd.f32 0.0, %v9790
        %v9792 = vpop.f32.mrf.mxu0
        %9793 = vmatprep.mubr.bf16.mxu0 0
        %9794 = vmatmul.mubr.bf16.gmra.mxu0 %v9679
        %v9795 = vpop.f32.mrf.mxu0
        %v9796 = vadd.f32 0.0, %v9795
        %v9797 = vpop.f32.mrf.mxu0
        %v9798 = vpop.f32.mrf.mxu0
        %v9799 = vadd.f32 0.0, %v9798
        %v9800 = vpop.f32.mrf.mxu0
        %9801 = vmatprep.mubr.bf16.mxu0 0
        %9802 = vmatmul.mubr.bf16.gmra.mxu0 %v9682
        %v9803 = vpop.f32.mrf.mxu0
        %v9804 = vadd.f32 0.0, %v9803
        %v9805 = vpop.f32.mrf.mxu0
        %v9806 = vpop.f32.mrf.mxu0
        %v9807 = vadd.f32 0.0, %v9806
        %v9808 = vpop.f32.mrf.mxu0
        %9809 = vmatprep.mubr.bf16.mxu0 0
        %9810 = vmatmul.mubr.bf16.gmra.mxu0 %v9685
        %v9811 = vpop.f32.mrf.mxu0
        %v9812 = vadd.f32 0.0, %v9811
        %v9813 = vpop.f32.mrf.mxu0
        %v9814 = vpop.f32.mrf.mxu0
        %v9815 = vadd.f32 0.0, %v9814
        %v9816 = vpop.f32.mrf.mxu0
        %9817 = vmatprep.mubr.bf16.mxu0 0
        %9818 = vmatmul.mubr.bf16.gmra.mxu0 %v9688
        %v9819 = vpop.f32.mrf.mxu0
        %v9820 = vadd.f32 0.0, %v9819
        %v9821 = vpop.f32.mrf.mxu0
        %v9822 = vpop.f32.mrf.mxu0
        %v9823 = vadd.f32 0.0, %v9822
        %v9824 = vpop.f32.mrf.mxu0
        %9825 = vmatprep.mubr.bf16.mxu0 0
        %9826 = vmatmul.mubr.bf16.gmra.mxu0 %v9691
        %v9827 = vpop.f32.mrf.mxu0
        %v9828 = vadd.f32 0.0, %v9827
        %v9829 = vpop.f32.mrf.mxu0
        %v9830 = vpop.f32.mrf.mxu0
        %v9831 = vadd.f32 0.0, %v9830
        %v9832 = vpop.f32.mrf.mxu0
        %9833 = vmatprep.mubr.bf16.mxu0 0
        %9834 = vmatmul.mubr.bf16.gmra.mxu0 %v9694
        %v9835 = vpop.f32.mrf.mxu0
        %v9836 = vadd.f32 0.0, %v9835
        %v9837 = vpop.f32.mrf.mxu0
        %v9838 = vpop.f32.mrf.mxu0
        %v9839 = vadd.f32 0.0, %v9838
        %v9840 = vpop.f32.mrf.mxu0
        %9841 = vmatprep.mubr.bf16.mxu0 0
        %9842 = vmatmul.mubr.bf16.gmra.mxu0 %v9697
        %v9843 = vpop.f32.mrf.mxu0
        %v9844 = vadd.f32 0.0, %v9843
        %v9845 = vpop.f32.mrf.mxu0
        %v9846 = vpop.f32.mrf.mxu0
        %v9847 = vadd.f32 0.0, %v9846
        %v9848 = vpop.f32.mrf.mxu0
        %9849 = vmatprep.mubr.bf16.mxu0 0
        %9850 = vmatmul.mubr.bf16.gmra.mxu0 %v9700
        %v9851 = vpop.f32.mrf.mxu0
        %v9852 = vadd.f32 0.0, %v9851
        %v9853 = vpop.f32.mrf.mxu0
        %v9854 = vpop.f32.mrf.mxu0
        %v9855 = vadd.f32 0.0, %v9854
        %v9856 = vpop.f32.mrf.mxu0
        %9857 = vmatprep.mubr.bf16.mxu0 0
        %9858 = vmatmul.mubr.bf16.gmra.mxu0 %v9703
        %v9859 = vpop.f32.mrf.mxu0
        %v9860 = vadd.f32 0.0, %v9859
        %v9861 = vpop.f32.mrf.mxu0
        %v9862 = vpop.f32.mrf.mxu0
        %v9863 = vadd.f32 0.0, %v9862
        %v9864 = vpop.f32.mrf.mxu0
        %9865 = vdwg.mxu0
        %v9866 = vadd.f32 %v9384, %v9740
        %v9867 = vadd.f32 %v9385, %v9743
        %v9868 = vadd.f32 %v9386, %v9748
        %v9869 = vadd.f32 %v9387, %v9751
        %v9870 = vadd.f32 %v9388, %v9756
        %v9871 = vadd.f32 %v9389, %v9759
        %v9872 = vadd.f32 %v9390, %v9764
        %v9873 = vadd.f32 %v9391, %v9767
        %v9874 = vadd.f32 %v9392, %v9772
        %v9875 = vadd.f32 %v9393, %v9775
        %v9876 = vadd.f32 %v9394, %v9780
        %v9877 = vadd.f32 %v9395, %v9783
        %v9878 = vadd.f32 %v9396, %v9788
        %v9879 = vadd.f32 %v9397, %v9791
        %v9880 = vadd.f32 %v9398, %v9796
        %v9881 = vadd.f32 %v9399, %v9799
        %v9882 = vadd.f32 %v9400, %v9804
        %v9883 = vadd.f32 %v9401, %v9807
        %v9884 = vadd.f32 %v9402, %v9812
        %v9885 = vadd.f32 %v9403, %v9815
        %v9886 = vadd.f32 %v9404, %v9820
        %v9887 = vadd.f32 %v9405, %v9823
        %v9888 = vadd.f32 %v9406, %v9828
        %v9889 = vadd.f32 %v9407, %v9831
        %v9890 = vadd.f32 %v9408, %v9836
        %v9891 = vadd.f32 %v9409, %v9839
        %v9892 = vadd.f32 %v9410, %v9844
        %v9893 = vadd.f32 %v9411, %v9847
        %v9894 = vadd.f32 %v9412, %v9852
        %v9895 = vadd.f32 %v9413, %v9855
        %v9896 = vadd.f32 %v9414, %v9860
        %v9897 = vadd.f32 %v9415, %v9863
        %s9898 = scalar_lea.vmem [#allocation3], 24
        %v9899 = vld [vmem:[%s9898] sm:$0xf]
        %v9900 = vld [vmem:[%s9898 + $0x4] sm:$0xf]
        %v9901 = vld [vmem:[%s9898 + $0xc] sm:$0xf]
        %v9902 = vld [vmem:[%s9898 + $0x10] sm:$0xf]
        %v9903 = vld [vmem:[%s9898 + $0x18] sm:$0xf]
        %v9904 = vld [vmem:[%s9898 + $0x1c] sm:$0xf]
        %v9905 = vld [vmem:[%s9898 + $0x24] sm:$0xf]
        %v9906 = vld [vmem:[%s9898 + $0x28] sm:$0xf]
        %v9907 = vld [vmem:[%s9898 + $0x30] sm:$0xf]
        %v9908 = vld [vmem:[%s9898 + $0x34] sm:$0xf]
        %v9909 = vld [vmem:[%s9898 + $0x3c] sm:$0xf]
        %v9910 = vld [vmem:[%s9898 + $0x40] sm:$0xf]
        %v9911 = vld [vmem:[%s9898 + $0x48] sm:$0xf]
        %v9912 = vld [vmem:[%s9898 + $0x4c] sm:$0xf]
        %v9913 = vld [vmem:[%s9898 + $0x54] sm:$0xf]
        %v9914 = vld [vmem:[%s9898 + $0x58] sm:$0xf]
        %v9915 = vld [vmem:[%s9898 + $0x60] sm:$0xf]
        %v9916 = vld [vmem:[%s9898 + $0x64] sm:$0xf]
        %v9917 = vld [vmem:[%s9898 + $0x6c] sm:$0xf]
        %v9918 = vld [vmem:[%s9898 + $0x70] sm:$0xf]
        %v9919 = vld [vmem:[%s9898 + $0x78] sm:$0xf]
        %v9920 = vld [vmem:[%s9898 + $0x7c] sm:$0xf]
        %v9921 = vld [vmem:[%s9898 + $0x84] sm:$0xf]
        %v9922 = vld [vmem:[%s9898 + $0x88] sm:$0xf]
        %v9923 = vld [vmem:[%s9898 + $0x90] sm:$0xf]
        %v9924 = vld [vmem:[%s9898 + $0x94] sm:$0xf]
        %v9925 = vld [vmem:[%s9898 + $0x9c] sm:$0xf]
        %v9926 = vld [vmem:[%s9898 + $0xa0] sm:$0xf]
        %v9927 = vld [vmem:[%s9898 + $0xa8] sm:$0xf]
        %v9928 = vld [vmem:[%s9898 + $0xac] sm:$0xf]
        %v9929 = vld [vmem:[%s9898 + $0xb4] sm:$0xf]
        %v9930 = vld [vmem:[%s9898 + $0xb8] sm:$0xf]
        %s9931 = scalar_lea.vmem %s4, 96
        %v9932 = vld [vmem:[%s9931] sm:$0xf]
        %v9933 = vld [vmem:[%s9931 + $0x4] sm:$0xf]
        %v9934 = vld [vmem:[%s9931 + $0x8] sm:$0xf]
        %v9935 = vld [vmem:[%s9931 + $0xc] sm:$0xf]
        %v9968 = vunpack.c.l.b16 %v9899
        %v9969 = vunpack.c.l.b16 %v9900
        %v9970 = vunpack.c.l.b16 %v9901
        %v9971 = vunpack.c.l.b16 %v9902
        %v9972 = vunpack.c.l.b16 %v9903
        %v9973 = vunpack.c.l.b16 %v9904
        %v9974 = vunpack.c.l.b16 %v9905
        %v9975 = vunpack.c.l.b16 %v9906
        %v9976 = vunpack.c.l.b16 %v9907
        %v9977 = vunpack.c.l.b16 %v9908
        %v9978 = vunpack.c.l.b16 %v9909
        %v9979 = vunpack.c.l.b16 %v9910
        %v9980 = vunpack.c.l.b16 %v9911
        %v9981 = vunpack.c.l.b16 %v9912
        %v9982 = vunpack.c.l.b16 %v9913
        %v9983 = vunpack.c.l.b16 %v9914
        %v9984 = vunpack.c.l.b16 %v9915
        %v9985 = vunpack.c.l.b16 %v9916
        %v9986 = vunpack.c.l.b16 %v9917
        %v9987 = vunpack.c.l.b16 %v9918
        %v9988 = vunpack.c.l.b16 %v9919
        %v9989 = vunpack.c.l.b16 %v9920
        %v9990 = vunpack.c.l.b16 %v9921
        %v9991 = vunpack.c.l.b16 %v9922
        %v9992 = vunpack.c.l.b16 %v9923
        %v9993 = vunpack.c.l.b16 %v9924
        %v9994 = vunpack.c.l.b16 %v9925
        %v9995 = vunpack.c.l.b16 %v9926
        %v9996 = vunpack.c.l.b16 %v9927
        %v9997 = vunpack.c.l.b16 %v9928
        %v9998 = vunpack.c.l.b16 %v9929
        %v9999 = vunpack.c.l.b16 %v9930
        %v10000 = vpack.c.b16 %v9969, %v9968
        %v10001 = vpack.c.b16 %v9971, %v9970
        %v10002 = vpack.c.b16 %v9973, %v9972
        %v10003 = vpack.c.b16 %v9975, %v9974
        %v10004 = vpack.c.b16 %v9977, %v9976
        %v10005 = vpack.c.b16 %v9979, %v9978
        %v10006 = vpack.c.b16 %v9981, %v9980
        %v10007 = vpack.c.b16 %v9983, %v9982
        %v10008 = vpack.c.b16 %v9985, %v9984
        %v10009 = vpack.c.b16 %v9987, %v9986
        %v10010 = vpack.c.b16 %v9989, %v9988
        %v10011 = vpack.c.b16 %v9991, %v9990
        %v10012 = vpack.c.b16 %v9993, %v9992
        %v10013 = vpack.c.b16 %v9995, %v9994
        %v10014 = vpack.c.b16 %v9997, %v9996
        %v10015 = vpack.c.b16 %v9999, %v9998
        %v10020 = vunpack.c.l.b16 %v9932
        %v10021 = vunpack.c.l.b16 %v9933
        %v10022 = vunpack.c.l.b16 %v9934
        %v10023 = vunpack.c.l.b16 %v9935
        %v10024 = vpack.c.b16 %v10021, %v10020
        %v10025 = vpack.c.b16 %v10023, %v10022
        %v10029 = vsel %vm7331, %v10000, 0
        %v10032 = vsel %vm7331, %v10001, 0
        %v10035 = vsel %vm7331, %v10002, 0
        %v10038 = vsel %vm7331, %v10003, 0
        %v10041 = vsel %vm7331, %v10004, 0
        %v10044 = vsel %vm7331, %v10005, 0
        %v10047 = vsel %vm7331, %v10006, 0
        %v10050 = vsel %vm7331, %v10007, 0
        %v10053 = vsel %vm7331, %v10008, 0
        %v10056 = vsel %vm7331, %v10009, 0
        %v10059 = vsel %vm7331, %v10010, 0
        %v10062 = vsel %vm7331, %v10011, 0
        %v10065 = vsel %vm7331, %v10012, 0
        %v10068 = vsel %vm7331, %v10013, 0
        %v10071 = vsel %vm7331, %v10014, 0
        %v10074 = vsel %vm7331, %v10015, 0
        %10076 = vmatprep.subr.bf16.mxu0 0
        %10077 = vmatpush1.bf16.msra.mxu0 0
        %10078 = vmatprep.subr.bf16.mxu0 0
        %10079 = vmatpush1.bf16.msra.mxu0 0
        %10080 = vmatprep.subr.bf16.mxu0 0
        %10081 = vmatpush1.bf16.msra.mxu0 0
        %10082 = vmatprep.subr.bf16.mxu0 0
        %10083 = vmatpush1.bf16.msra.mxu0 0
        %10084 = vmatprep.subr.bf16.mxu0 0
        %10085 = vmatpush1.bf16.msra.mxu0 0
        %10086 = vmatprep.subr.bf16.mxu0 0
        %10087 = vmatpush1.bf16.msra.mxu0 0
        %10088 = vmatprep.subr.bf16.mxu0 0
        %10089 = vmatpush1.bf16.msra.mxu0 %v10025
        %10090 = vmatprep.subr.bf16.mxu0 0
        %10091 = vmatpush1.bf16.msra.mxu0 %v10024
        %10092 = vmatprep.subr.bf16.mxu0 0
        %10093 = vmatpush2.bf16.msra.mxu0 0
        %10094 = vmatprep.subr.bf16.mxu0 0
        %10095 = vmatpush2.bf16.msra.mxu0 0
        %10096 = vmatprep.subr.bf16.mxu0 0
        %10097 = vmatpush2.bf16.msra.mxu0 0
        %10098 = vmatprep.subr.bf16.mxu0 0
        %10099 = vmatpush2.bf16.msra.mxu0 0
        %10100 = vmatprep.subr.bf16.mxu0 0
        %10101 = vmatpush2.bf16.msra.mxu0 0
        %10102 = vmatprep.subr.bf16.mxu0 0
        %10103 = vmatpush2.bf16.msra.mxu0 0
        %10104 = vmatprep.subr.bf16.mxu0 0
        %10105 = vmatpush2.bf16.msra.mxu0 0
        %10106 = vmatprep.subr.bf16.mxu0 0
        %10107 = vmatpush2.bf16.msra.mxu0 0
        %10108 = vmatprep.mubr.bf16.mxu0 0
        %10109 = vmatmul.mubr.bf16.gmra.mxu0 %v10029
        %v10110 = vpop.f32.mrf.mxu0
        %v10111 = vadd.f32 0.0, %v10110
        %v10112 = vpop.f32.mrf.mxu0
        %v10113 = vpop.f32.mrf.mxu0
        %v10114 = vadd.f32 0.0, %v10113
        %v10115 = vpop.f32.mrf.mxu0
        %10116 = vmatprep.mubr.bf16.mxu0 0
        %10117 = vmatmul.mubr.bf16.gmra.mxu0 %v10032
        %v10118 = vpop.f32.mrf.mxu0
        %v10119 = vadd.f32 0.0, %v10118
        %v10120 = vpop.f32.mrf.mxu0
        %v10121 = vpop.f32.mrf.mxu0
        %v10122 = vadd.f32 0.0, %v10121
        %v10123 = vpop.f32.mrf.mxu0
        %10124 = vmatprep.mubr.bf16.mxu0 0
        %10125 = vmatmul.mubr.bf16.gmra.mxu0 %v10035
        %v10126 = vpop.f32.mrf.mxu0
        %v10127 = vadd.f32 0.0, %v10126
        %v10128 = vpop.f32.mrf.mxu0
        %v10129 = vpop.f32.mrf.mxu0
        %v10130 = vadd.f32 0.0, %v10129
        %v10131 = vpop.f32.mrf.mxu0
        %10132 = vmatprep.mubr.bf16.mxu0 0
        %10133 = vmatmul.mubr.bf16.gmra.mxu0 %v10038
        %v10134 = vpop.f32.mrf.mxu0
        %v10135 = vadd.f32 0.0, %v10134
        %v10136 = vpop.f32.mrf.mxu0
        %v10137 = vpop.f32.mrf.mxu0
        %v10138 = vadd.f32 0.0, %v10137
        %v10139 = vpop.f32.mrf.mxu0
        %10140 = vmatprep.mubr.bf16.mxu0 0
        %10141 = vmatmul.mubr.bf16.gmra.mxu0 %v10041
        %v10142 = vpop.f32.mrf.mxu0
        %v10143 = vadd.f32 0.0, %v10142
        %v10144 = vpop.f32.mrf.mxu0
        %v10145 = vpop.f32.mrf.mxu0
        %v10146 = vadd.f32 0.0, %v10145
        %v10147 = vpop.f32.mrf.mxu0
        %10148 = vmatprep.mubr.bf16.mxu0 0
        %10149 = vmatmul.mubr.bf16.gmra.mxu0 %v10044
        %v10150 = vpop.f32.mrf.mxu0
        %v10151 = vadd.f32 0.0, %v10150
        %v10152 = vpop.f32.mrf.mxu0
        %v10153 = vpop.f32.mrf.mxu0
        %v10154 = vadd.f32 0.0, %v10153
        %v10155 = vpop.f32.mrf.mxu0
        %10156 = vmatprep.mubr.bf16.mxu0 0
        %10157 = vmatmul.mubr.bf16.gmra.mxu0 %v10047
        %v10158 = vpop.f32.mrf.mxu0
        %v10159 = vadd.f32 0.0, %v10158
        %v10160 = vpop.f32.mrf.mxu0
        %v10161 = vpop.f32.mrf.mxu0
        %v10162 = vadd.f32 0.0, %v10161
        %v10163 = vpop.f32.mrf.mxu0
        %10164 = vmatprep.mubr.bf16.mxu0 0
        %10165 = vmatmul.mubr.bf16.gmra.mxu0 %v10050
        %v10166 = vpop.f32.mrf.mxu0
        %v10167 = vadd.f32 0.0, %v10166
        %v10168 = vpop.f32.mrf.mxu0
        %v10169 = vpop.f32.mrf.mxu0
        %v10170 = vadd.f32 0.0, %v10169
        %v10171 = vpop.f32.mrf.mxu0
        %10172 = vmatprep.mubr.bf16.mxu0 0
        %10173 = vmatmul.mubr.bf16.gmra.mxu0 %v10053
        %v10174 = vpop.f32.mrf.mxu0
        %v10175 = vadd.f32 0.0, %v10174
        %v10176 = vpop.f32.mrf.mxu0
        %v10177 = vpop.f32.mrf.mxu0
        %v10178 = vadd.f32 0.0, %v10177
        %v10179 = vpop.f32.mrf.mxu0
        %10180 = vmatprep.mubr.bf16.mxu0 0
        %10181 = vmatmul.mubr.bf16.gmra.mxu0 %v10056
        %v10182 = vpop.f32.mrf.mxu0
        %v10183 = vadd.f32 0.0, %v10182
        %v10184 = vpop.f32.mrf.mxu0
        %v10185 = vpop.f32.mrf.mxu0
        %v10186 = vadd.f32 0.0, %v10185
        %v10187 = vpop.f32.mrf.mxu0
        %10188 = vmatprep.mubr.bf16.mxu0 0
        %10189 = vmatmul.mubr.bf16.gmra.mxu0 %v10059
        %v10190 = vpop.f32.mrf.mxu0
        %v10191 = vadd.f32 0.0, %v10190
        %v10192 = vpop.f32.mrf.mxu0
        %v10193 = vpop.f32.mrf.mxu0
        %v10194 = vadd.f32 0.0, %v10193
        %v10195 = vpop.f32.mrf.mxu0
        %10196 = vmatprep.mubr.bf16.mxu0 0
        %10197 = vmatmul.mubr.bf16.gmra.mxu0 %v10062
        %v10198 = vpop.f32.mrf.mxu0
        %v10199 = vadd.f32 0.0, %v10198
        %v10200 = vpop.f32.mrf.mxu0
        %v10201 = vpop.f32.mrf.mxu0
        %v10202 = vadd.f32 0.0, %v10201
        %v10203 = vpop.f32.mrf.mxu0
        %10204 = vmatprep.mubr.bf16.mxu0 0
        %10205 = vmatmul.mubr.bf16.gmra.mxu0 %v10065
        %v10206 = vpop.f32.mrf.mxu0
        %v10207 = vadd.f32 0.0, %v10206
        %v10208 = vpop.f32.mrf.mxu0
        %v10209 = vpop.f32.mrf.mxu0
        %v10210 = vadd.f32 0.0, %v10209
        %v10211 = vpop.f32.mrf.mxu0
        %10212 = vmatprep.mubr.bf16.mxu0 0
        %10213 = vmatmul.mubr.bf16.gmra.mxu0 %v10068
        %v10214 = vpop.f32.mrf.mxu0
        %v10215 = vadd.f32 0.0, %v10214
        %v10216 = vpop.f32.mrf.mxu0
        %v10217 = vpop.f32.mrf.mxu0
        %v10218 = vadd.f32 0.0, %v10217
        %v10219 = vpop.f32.mrf.mxu0
        %10220 = vmatprep.mubr.bf16.mxu0 0
        %10221 = vmatmul.mubr.bf16.gmra.mxu0 %v10071
        %v10222 = vpop.f32.mrf.mxu0
        %v10223 = vadd.f32 0.0, %v10222
        %v10224 = vpop.f32.mrf.mxu0
        %v10225 = vpop.f32.mrf.mxu0
        %v10226 = vadd.f32 0.0, %v10225
        %v10227 = vpop.f32.mrf.mxu0
        %10228 = vmatprep.mubr.bf16.mxu0 0
        %10229 = vmatmul.mubr.bf16.gmra.mxu0 %v10074
        %v10230 = vpop.f32.mrf.mxu0
        %v10231 = vadd.f32 0.0, %v10230
        %v10232 = vpop.f32.mrf.mxu0
        %v10233 = vpop.f32.mrf.mxu0
        %v10234 = vadd.f32 0.0, %v10233
        %v10235 = vpop.f32.mrf.mxu0
        %10236 = vdwg.mxu0
        %v10237 = vadd.f32 %v9866, %v10111
        %v10238 = vadd.f32 %v9867, %v10114
        %v10239 = vadd.f32 %v9868, %v10119
        %v10240 = vadd.f32 %v9869, %v10122
        %v10241 = vadd.f32 %v9870, %v10127
        %v10242 = vadd.f32 %v9871, %v10130
        %v10243 = vadd.f32 %v9872, %v10135
        %v10244 = vadd.f32 %v9873, %v10138
        %v10245 = vadd.f32 %v9874, %v10143
        %v10246 = vadd.f32 %v9875, %v10146
        %v10247 = vadd.f32 %v9876, %v10151
        %v10248 = vadd.f32 %v9877, %v10154
        %v10249 = vadd.f32 %v9878, %v10159
        %v10250 = vadd.f32 %v9879, %v10162
        %v10251 = vadd.f32 %v9880, %v10167
        %v10252 = vadd.f32 %v9881, %v10170
        %v10253 = vadd.f32 %v9882, %v10175
        %v10254 = vadd.f32 %v9883, %v10178
        %v10255 = vadd.f32 %v9884, %v10183
        %v10256 = vadd.f32 %v9885, %v10186
        %v10257 = vadd.f32 %v9886, %v10191
        %v10258 = vadd.f32 %v9887, %v10194
        %v10259 = vadd.f32 %v9888, %v10199
        %v10260 = vadd.f32 %v9889, %v10202
        %v10261 = vadd.f32 %v9890, %v10207
        %v10262 = vadd.f32 %v9891, %v10210
        %v10263 = vadd.f32 %v9892, %v10215
        %v10264 = vadd.f32 %v9893, %v10218
        %v10265 = vadd.f32 %v9894, %v10223
        %v10266 = vadd.f32 %v9895, %v10226
        %v10267 = vadd.f32 %v9896, %v10231
        %v10268 = vadd.f32 %v9897, %v10234
        %v10269 = vld [vmem:[%s9898] sm:$0xf]
        %v10270 = vld [vmem:[%s9898 + $0x4] sm:$0xf]
        %v10271 = vld [vmem:[%s9898 + $0x8] sm:$0x1]
        %v10272 = vld [vmem:[%s9898 + $0xc] sm:$0xf]
        %v10273 = vld [vmem:[%s9898 + $0x10] sm:$0xf]
        %v10274 = vld [vmem:[%s9898 + $0x14] sm:$0x1]
        %v10275 = vld [vmem:[%s9898 + $0x18] sm:$0xf]
        %v10276 = vld [vmem:[%s9898 + $0x1c] sm:$0xf]
        %v10277 = vld [vmem:[%s9898 + $0x20] sm:$0x1]
        %v10278 = vld [vmem:[%s9898 + $0x24] sm:$0xf]
        %v10279 = vld [vmem:[%s9898 + $0x28] sm:$0xf]
        %v10280 = vld [vmem:[%s9898 + $0x2c] sm:$0x1]
        %v10281 = vld [vmem:[%s9898 + $0x30] sm:$0xf]
        %v10282 = vld [vmem:[%s9898 + $0x34] sm:$0xf]
        %v10283 = vld [vmem:[%s9898 + $0x38] sm:$0x1]
        %v10284 = vld [vmem:[%s9898 + $0x3c] sm:$0xf]
        %v10285 = vld [vmem:[%s9898 + $0x40] sm:$0xf]
        %v10286 = vld [vmem:[%s9898 + $0x44] sm:$0x1]
        %v10287 = vld [vmem:[%s9898 + $0x48] sm:$0xf]
        %v10288 = vld [vmem:[%s9898 + $0x4c] sm:$0xf]
        %v10289 = vld [vmem:[%s9898 + $0x50] sm:$0x1]
        %v10290 = vld [vmem:[%s9898 + $0x54] sm:$0xf]
        %v10291 = vld [vmem:[%s9898 + $0x58] sm:$0xf]
        %v10292 = vld [vmem:[%s9898 + $0x5c] sm:$0x1]
        %v10293 = vld [vmem:[%s9898 + $0x60] sm:$0xf]
        %v10294 = vld [vmem:[%s9898 + $0x64] sm:$0xf]
        %v10295 = vld [vmem:[%s9898 + $0x68] sm:$0x1]
        %v10296 = vld [vmem:[%s9898 + $0x6c] sm:$0xf]
        %v10297 = vld [vmem:[%s9898 + $0x70] sm:$0xf]
        %v10298 = vld [vmem:[%s9898 + $0x74] sm:$0x1]
        %v10299 = vld [vmem:[%s9898 + $0x78] sm:$0xf]
        %v10300 = vld [vmem:[%s9898 + $0x7c] sm:$0xf]
        %v10301 = vld [vmem:[%s9898 + $0x80] sm:$0x1]
        %v10302 = vld [vmem:[%s9898 + $0x84] sm:$0xf]
        %v10303 = vld [vmem:[%s9898 + $0x88] sm:$0xf]
        %v10304 = vld [vmem:[%s9898 + $0x8c] sm:$0x1]
        %v10305 = vld [vmem:[%s9898 + $0x90] sm:$0xf]
        %v10306 = vld [vmem:[%s9898 + $0x94] sm:$0xf]
        %v10307 = vld [vmem:[%s9898 + $0x98] sm:$0x1]
        %v10308 = vld [vmem:[%s9898 + $0x9c] sm:$0xf]
        %v10309 = vld [vmem:[%s9898 + $0xa0] sm:$0xf]
        %v10310 = vld [vmem:[%s9898 + $0xa4] sm:$0x1]
        %v10311 = vld [vmem:[%s9898 + $0xa8] sm:$0xf]
        %v10312 = vld [vmem:[%s9898 + $0xac] sm:$0xf]
        %v10313 = vld [vmem:[%s9898 + $0xb0] sm:$0x1]
        %v10314 = vld [vmem:[%s9898 + $0xb4] sm:$0xf]
        %v10315 = vld [vmem:[%s9898 + $0xb8] sm:$0xf]
        %v10316 = vld [vmem:[%s9898 + $0xbc] sm:$0x1]
        %v10318 = vshrl.u32 %v10269, 16
        %v10320 = vrot.slane %v10318, 4
        %v10321 = vshll.u32 %v10269, 16
        %v10323 = vrot.slane %v10321, 5
        %v10324 = vor.u32 %v10320, %v10323
        %v10325 = vrot.slane %v10324, 4
        %v10327 = vshll.u32 %v10270, 16
        %v10329 = vrot.slane %v10327, 5
        %v10330 = vsel %vm1424, %v10325, %v10329
        %v10331 = vshrl.u32 %v10270, 16
        %v10333 = vrot.slane %v10331, 4
        %v10334 = vor.u32 %v10333, %v10329
        %v10335 = vrot.slane %v10334, 4
        %v10337 = vshll.u32 %v10271, 16
        %v10339 = vrot.slane %v10337, 5
        %v10340 = vsel %vm1424, %v10335, %v10339
        %v10342 = vshrl.u32 %v10272, 16
        %v10344 = vrot.slane %v10342, 4
        %v10345 = vshll.u32 %v10272, 16
        %v10347 = vrot.slane %v10345, 5
        %v10348 = vor.u32 %v10344, %v10347
        %v10349 = vrot.slane %v10348, 4
        %v10351 = vshll.u32 %v10273, 16
        %v10353 = vrot.slane %v10351, 5
        %v10354 = vsel %vm1424, %v10349, %v10353
        %v10355 = vshrl.u32 %v10273, 16
        %v10357 = vrot.slane %v10355, 4
        %v10358 = vor.u32 %v10357, %v10353
        %v10359 = vrot.slane %v10358, 4
        %v10361 = vshll.u32 %v10274, 16
        %v10363 = vrot.slane %v10361, 5
        %v10364 = vsel %vm1424, %v10359, %v10363
        %v10366 = vshrl.u32 %v10275, 16
        %v10368 = vrot.slane %v10366, 4
        %v10369 = vshll.u32 %v10275, 16
        %v10371 = vrot.slane %v10369, 5
        %v10372 = vor.u32 %v10368, %v10371
        %v10373 = vrot.slane %v10372, 4
        %v10375 = vshll.u32 %v10276, 16
        %v10377 = vrot.slane %v10375, 5
        %v10378 = vsel %vm1424, %v10373, %v10377
        %v10379 = vshrl.u32 %v10276, 16
        %v10381 = vrot.slane %v10379, 4
        %v10382 = vor.u32 %v10381, %v10377
        %v10383 = vrot.slane %v10382, 4
        %v10385 = vshll.u32 %v10277, 16
        %v10387 = vrot.slane %v10385, 5
        %v10388 = vsel %vm1424, %v10383, %v10387
        %v10390 = vshrl.u32 %v10278, 16
        %v10392 = vrot.slane %v10390, 4
        %v10393 = vshll.u32 %v10278, 16
        %v10395 = vrot.slane %v10393, 5
        %v10396 = vor.u32 %v10392, %v10395
        %v10397 = vrot.slane %v10396, 4
        %v10399 = vshll.u32 %v10279, 16
        %v10401 = vrot.slane %v10399, 5
        %v10402 = vsel %vm1424, %v10397, %v10401
        %v10403 = vshrl.u32 %v10279, 16
        %v10405 = vrot.slane %v10403, 4
        %v10406 = vor.u32 %v10405, %v10401
        %v10407 = vrot.slane %v10406, 4
        %v10409 = vshll.u32 %v10280, 16
        %v10411 = vrot.slane %v10409, 5
        %v10412 = vsel %vm1424, %v10407, %v10411
        %v10414 = vshrl.u32 %v10281, 16
        %v10416 = vrot.slane %v10414, 4
        %v10417 = vshll.u32 %v10281, 16
        %v10419 = vrot.slane %v10417, 5
        %v10420 = vor.u32 %v10416, %v10419
        %v10421 = vrot.slane %v10420, 4
        %v10423 = vshll.u32 %v10282, 16
        %v10425 = vrot.slane %v10423, 5
        %v10426 = vsel %vm1424, %v10421, %v10425
        %v10427 = vshrl.u32 %v10282, 16
        %v10429 = vrot.slane %v10427, 4
        %v10430 = vor.u32 %v10429, %v10425
        %v10431 = vrot.slane %v10430, 4
        %v10433 = vshll.u32 %v10283, 16
        %v10435 = vrot.slane %v10433, 5
        %v10436 = vsel %vm1424, %v10431, %v10435
        %v10438 = vshrl.u32 %v10284, 16
        %v10440 = vrot.slane %v10438, 4
        %v10441 = vshll.u32 %v10284, 16
        %v10443 = vrot.slane %v10441, 5
        %v10444 = vor.u32 %v10440, %v10443
        %v10445 = vrot.slane %v10444, 4
        %v10447 = vshll.u32 %v10285, 16
        %v10449 = vrot.slane %v10447, 5
        %v10450 = vsel %vm1424, %v10445, %v10449
        %v10451 = vshrl.u32 %v10285, 16
        %v10453 = vrot.slane %v10451, 4
        %v10454 = vor.u32 %v10453, %v10449
        %v10455 = vrot.slane %v10454, 4
        %v10457 = vshll.u32 %v10286, 16
        %v10459 = vrot.slane %v10457, 5
        %v10460 = vsel %vm1424, %v10455, %v10459
        %v10462 = vshrl.u32 %v10287, 16
        %v10464 = vrot.slane %v10462, 4
        %v10465 = vshll.u32 %v10287, 16
        %v10467 = vrot.slane %v10465, 5
        %v10468 = vor.u32 %v10464, %v10467
        %v10469 = vrot.slane %v10468, 4
        %v10471 = vshll.u32 %v10288, 16
        %v10473 = vrot.slane %v10471, 5
        %v10474 = vsel %vm1424, %v10469, %v10473
        %v10475 = vshrl.u32 %v10288, 16
        %v10477 = vrot.slane %v10475, 4
        %v10478 = vor.u32 %v10477, %v10473
        %v10479 = vrot.slane %v10478, 4
        %v10481 = vshll.u32 %v10289, 16
        %v10483 = vrot.slane %v10481, 5
        %v10484 = vsel %vm1424, %v10479, %v10483
        %v10486 = vshrl.u32 %v10290, 16
        %v10488 = vrot.slane %v10486, 4
        %v10489 = vshll.u32 %v10290, 16
        %v10491 = vrot.slane %v10489, 5
        %v10492 = vor.u32 %v10488, %v10491
        %v10493 = vrot.slane %v10492, 4
        %v10495 = vshll.u32 %v10291, 16
        %v10497 = vrot.slane %v10495, 5
        %v10498 = vsel %vm1424, %v10493, %v10497
        %v10499 = vshrl.u32 %v10291, 16
        %v10501 = vrot.slane %v10499, 4
        %v10502 = vor.u32 %v10501, %v10497
        %v10503 = vrot.slane %v10502, 4
        %v10505 = vshll.u32 %v10292, 16
        %v10507 = vrot.slane %v10505, 5
        %v10508 = vsel %vm1424, %v10503, %v10507
        %v10510 = vshrl.u32 %v10293, 16
        %v10512 = vrot.slane %v10510, 4
        %v10513 = vshll.u32 %v10293, 16
        %v10515 = vrot.slane %v10513, 5
        %v10516 = vor.u32 %v10512, %v10515
        %v10517 = vrot.slane %v10516, 4
        %v10519 = vshll.u32 %v10294, 16
        %v10521 = vrot.slane %v10519, 5
        %v10522 = vsel %vm1424, %v10517, %v10521
        %v10523 = vshrl.u32 %v10294, 16
        %v10525 = vrot.slane %v10523, 4
        %v10526 = vor.u32 %v10525, %v10521
        %v10527 = vrot.slane %v10526, 4
        %v10529 = vshll.u32 %v10295, 16
        %v10531 = vrot.slane %v10529, 5
        %v10532 = vsel %vm1424, %v10527, %v10531
        %v10534 = vshrl.u32 %v10296, 16
        %v10536 = vrot.slane %v10534, 4
        %v10537 = vshll.u32 %v10296, 16
        %v10539 = vrot.slane %v10537, 5
        %v10540 = vor.u32 %v10536, %v10539
        %v10541 = vrot.slane %v10540, 4
        %v10543 = vshll.u32 %v10297, 16
        %v10545 = vrot.slane %v10543, 5
        %v10546 = vsel %vm1424, %v10541, %v10545
        %v10547 = vshrl.u32 %v10297, 16
        %v10549 = vrot.slane %v10547, 4
        %v10550 = vor.u32 %v10549, %v10545
        %v10551 = vrot.slane %v10550, 4
        %v10553 = vshll.u32 %v10298, 16
        %v10555 = vrot.slane %v10553, 5
        %v10556 = vsel %vm1424, %v10551, %v10555
        %v10558 = vshrl.u32 %v10299, 16
        %v10560 = vrot.slane %v10558, 4
        %v10561 = vshll.u32 %v10299, 16
        %v10563 = vrot.slane %v10561, 5
        %v10564 = vor.u32 %v10560, %v10563
        %v10565 = vrot.slane %v10564, 4
        %v10567 = vshll.u32 %v10300, 16
        %v10569 = vrot.slane %v10567, 5
        %v10570 = vsel %vm1424, %v10565, %v10569
        %v10571 = vshrl.u32 %v10300, 16
        %v10573 = vrot.slane %v10571, 4
        %v10574 = vor.u32 %v10573, %v10569
        %v10575 = vrot.slane %v10574, 4
        %v10577 = vshll.u32 %v10301, 16
        %v10579 = vrot.slane %v10577, 5
        %v10580 = vsel %vm1424, %v10575, %v10579
        %v10582 = vshrl.u32 %v10302, 16
        %v10584 = vrot.slane %v10582, 4
        %v10585 = vshll.u32 %v10302, 16
        %v10587 = vrot.slane %v10585, 5
        %v10588 = vor.u32 %v10584, %v10587
        %v10589 = vrot.slane %v10588, 4
        %v10591 = vshll.u32 %v10303, 16
        %v10593 = vrot.slane %v10591, 5
        %v10594 = vsel %vm1424, %v10589, %v10593
        %v10595 = vshrl.u32 %v10303, 16
        %v10597 = vrot.slane %v10595, 4
        %v10598 = vor.u32 %v10597, %v10593
        %v10599 = vrot.slane %v10598, 4
        %v10601 = vshll.u32 %v10304, 16
        %v10603 = vrot.slane %v10601, 5
        %v10604 = vsel %vm1424, %v10599, %v10603
        %v10606 = vshrl.u32 %v10305, 16
        %v10608 = vrot.slane %v10606, 4
        %v10609 = vshll.u32 %v10305, 16
        %v10611 = vrot.slane %v10609, 5
        %v10612 = vor.u32 %v10608, %v10611
        %v10613 = vrot.slane %v10612, 4
        %v10615 = vshll.u32 %v10306, 16
        %v10617 = vrot.slane %v10615, 5
        %v10618 = vsel %vm1424, %v10613, %v10617
        %v10619 = vshrl.u32 %v10306, 16
        %v10621 = vrot.slane %v10619, 4
        %v10622 = vor.u32 %v10621, %v10617
        %v10623 = vrot.slane %v10622, 4
        %v10625 = vshll.u32 %v10307, 16
        %v10627 = vrot.slane %v10625, 5
        %v10628 = vsel %vm1424, %v10623, %v10627
        %v10630 = vshrl.u32 %v10308, 16
        %v10632 = vrot.slane %v10630, 4
        %v10633 = vshll.u32 %v10308, 16
        %v10635 = vrot.slane %v10633, 5
        %v10636 = vor.u32 %v10632, %v10635
        %v10637 = vrot.slane %v10636, 4
        %v10639 = vshll.u32 %v10309, 16
        %v10641 = vrot.slane %v10639, 5
        %v10642 = vsel %vm1424, %v10637, %v10641
        %v10643 = vshrl.u32 %v10309, 16
        %v10645 = vrot.slane %v10643, 4
        %v10646 = vor.u32 %v10645, %v10641
        %v10647 = vrot.slane %v10646, 4
        %v10649 = vshll.u32 %v10310, 16
        %v10651 = vrot.slane %v10649, 5
        %v10652 = vsel %vm1424, %v10647, %v10651
        %v10654 = vshrl.u32 %v10311, 16
        %v10656 = vrot.slane %v10654, 4
        %v10657 = vshll.u32 %v10311, 16
        %v10659 = vrot.slane %v10657, 5
        %v10660 = vor.u32 %v10656, %v10659
        %v10661 = vrot.slane %v10660, 4
        %v10663 = vshll.u32 %v10312, 16
        %v10665 = vrot.slane %v10663, 5
        %v10666 = vsel %vm1424, %v10661, %v10665
        %v10667 = vshrl.u32 %v10312, 16
        %v10669 = vrot.slane %v10667, 4
        %v10670 = vor.u32 %v10669, %v10665
        %v10671 = vrot.slane %v10670, 4
        %v10673 = vshll.u32 %v10313, 16
        %v10675 = vrot.slane %v10673, 5
        %v10676 = vsel %vm1424, %v10671, %v10675
        %v10678 = vshrl.u32 %v10314, 16
        %v10680 = vrot.slane %v10678, 4
        %v10681 = vshll.u32 %v10314, 16
        %v10683 = vrot.slane %v10681, 5
        %v10684 = vor.u32 %v10680, %v10683
        %v10685 = vrot.slane %v10684, 4
        %v10687 = vshll.u32 %v10315, 16
        %v10689 = vrot.slane %v10687, 5
        %v10690 = vsel %vm1424, %v10685, %v10689
        %v10691 = vshrl.u32 %v10315, 16
        %v10693 = vrot.slane %v10691, 4
        %v10694 = vor.u32 %v10693, %v10689
        %v10695 = vrot.slane %v10694, 4
        %v10697 = vshll.u32 %v10316, 16
        %v10699 = vrot.slane %v10697, 5
        %v10700 = vsel %vm1424, %v10695, %v10699
        %s10701 = scalar_lea.vmem %s4, 112
        %v10702 = vld [vmem:[%s10701] sm:$0xf]
        %v10703 = vld [vmem:[%s10701 + $0x4] sm:$0xf]
        %v10704 = vld [vmem:[%s10701 + $0x8] sm:$0xf]
        %v10705 = vld [vmem:[%s10701 + $0xc] sm:$0xf]
        %v10706 = vunpack.c.l.b16 %v10330
        %v10707 = vunpack.c.l.b16 %v10340
        %v10708 = vunpack.c.l.b16 %v10354
        %v10709 = vunpack.c.l.b16 %v10364
        %v10710 = vunpack.c.l.b16 %v10378
        %v10711 = vunpack.c.l.b16 %v10388
        %v10712 = vunpack.c.l.b16 %v10402
        %v10713 = vunpack.c.l.b16 %v10412
        %v10714 = vunpack.c.l.b16 %v10426
        %v10715 = vunpack.c.l.b16 %v10436
        %v10716 = vunpack.c.l.b16 %v10450
        %v10717 = vunpack.c.l.b16 %v10460
        %v10718 = vunpack.c.l.b16 %v10474
        %v10719 = vunpack.c.l.b16 %v10484
        %v10720 = vunpack.c.l.b16 %v10498
        %v10721 = vunpack.c.l.b16 %v10508
        %v10722 = vunpack.c.l.b16 %v10522
        %v10723 = vunpack.c.l.b16 %v10532
        %v10724 = vunpack.c.l.b16 %v10546
        %v10725 = vunpack.c.l.b16 %v10556
        %v10726 = vunpack.c.l.b16 %v10570
        %v10727 = vunpack.c.l.b16 %v10580
        %v10728 = vunpack.c.l.b16 %v10594
        %v10729 = vunpack.c.l.b16 %v10604
        %v10730 = vunpack.c.l.b16 %v10618
        %v10731 = vunpack.c.l.b16 %v10628
        %v10732 = vunpack.c.l.b16 %v10642
        %v10733 = vunpack.c.l.b16 %v10652
        %v10734 = vunpack.c.l.b16 %v10666
        %v10735 = vunpack.c.l.b16 %v10676
        %v10736 = vunpack.c.l.b16 %v10690
        %v10737 = vunpack.c.l.b16 %v10700
        %v10738 = vpack.c.b16 %v10707, %v10706
        %v10739 = vpack.c.b16 %v10709, %v10708
        %v10740 = vpack.c.b16 %v10711, %v10710
        %v10741 = vpack.c.b16 %v10713, %v10712
        %v10742 = vpack.c.b16 %v10715, %v10714
        %v10743 = vpack.c.b16 %v10717, %v10716
        %v10744 = vpack.c.b16 %v10719, %v10718
        %v10745 = vpack.c.b16 %v10721, %v10720
        %v10746 = vpack.c.b16 %v10723, %v10722
        %v10747 = vpack.c.b16 %v10725, %v10724
        %v10748 = vpack.c.b16 %v10727, %v10726
        %v10749 = vpack.c.b16 %v10729, %v10728
        %v10750 = vpack.c.b16 %v10731, %v10730
        %v10751 = vpack.c.b16 %v10733, %v10732
        %v10752 = vpack.c.b16 %v10735, %v10734
        %v10753 = vpack.c.b16 %v10737, %v10736
        %v10758 = vunpack.c.l.b16 %v10702
        %v10759 = vunpack.c.l.b16 %v10703
        %v10760 = vunpack.c.l.b16 %v10704
        %v10761 = vunpack.c.l.b16 %v10705
        %v10762 = vpack.c.b16 %v10759, %v10758
        %v10763 = vpack.c.b16 %v10761, %v10760
        %v10767 = vsel %vm7331, %v10738, 0
        %v10770 = vsel %vm7331, %v10739, 0
        %v10773 = vsel %vm7331, %v10740, 0
        %v10776 = vsel %vm7331, %v10741, 0
        %v10779 = vsel %vm7331, %v10742, 0
        %v10782 = vsel %vm7331, %v10743, 0
        %v10785 = vsel %vm7331, %v10744, 0
        %v10788 = vsel %vm7331, %v10745, 0
        %v10791 = vsel %vm7331, %v10746, 0
        %v10794 = vsel %vm7331, %v10747, 0
        %v10797 = vsel %vm7331, %v10748, 0
        %v10800 = vsel %vm7331, %v10749, 0
        %v10803 = vsel %vm7331, %v10750, 0
        %v10806 = vsel %vm7331, %v10751, 0
        %v10809 = vsel %vm7331, %v10752, 0
        %v10812 = vsel %vm7331, %v10753, 0
        %10814 = vmatprep.subr.bf16.mxu0 0
        %10815 = vmatpush1.bf16.msra.mxu0 0
        %10816 = vmatprep.subr.bf16.mxu0 0
        %10817 = vmatpush1.bf16.msra.mxu0 0
        %10818 = vmatprep.subr.bf16.mxu0 0
        %10819 = vmatpush1.bf16.msra.mxu0 0
        %10820 = vmatprep.subr.bf16.mxu0 0
        %10821 = vmatpush1.bf16.msra.mxu0 0
        %10822 = vmatprep.subr.bf16.mxu0 0
        %10823 = vmatpush1.bf16.msra.mxu0 0
        %10824 = vmatprep.subr.bf16.mxu0 0
        %10825 = vmatpush1.bf16.msra.mxu0 0
        %10826 = vmatprep.subr.bf16.mxu0 0
        %10827 = vmatpush1.bf16.msra.mxu0 %v10763
        %10828 = vmatprep.subr.bf16.mxu0 0
        %10829 = vmatpush1.bf16.msra.mxu0 %v10762
        %10830 = vmatprep.subr.bf16.mxu0 0
        %10831 = vmatpush2.bf16.msra.mxu0 0
        %10832 = vmatprep.subr.bf16.mxu0 0
        %10833 = vmatpush2.bf16.msra.mxu0 0
        %10834 = vmatprep.subr.bf16.mxu0 0
        %10835 = vmatpush2.bf16.msra.mxu0 0
        %10836 = vmatprep.subr.bf16.mxu0 0
        %10837 = vmatpush2.bf16.msra.mxu0 0
        %10838 = vmatprep.subr.bf16.mxu0 0
        %10839 = vmatpush2.bf16.msra.mxu0 0
        %10840 = vmatprep.subr.bf16.mxu0 0
        %10841 = vmatpush2.bf16.msra.mxu0 0
        %10842 = vmatprep.subr.bf16.mxu0 0
        %10843 = vmatpush2.bf16.msra.mxu0 0
        %10844 = vmatprep.subr.bf16.mxu0 0
        %10845 = vmatpush2.bf16.msra.mxu0 0
        %10846 = vmatprep.mubr.bf16.mxu0 0
        %10847 = vmatmul.mubr.bf16.gmra.mxu0 %v10767
        %v10848 = vpop.f32.mrf.mxu0
        %v10849 = vadd.f32 0.0, %v10848
        %v10850 = vpop.f32.mrf.mxu0
        %v10851 = vpop.f32.mrf.mxu0
        %v10852 = vadd.f32 0.0, %v10851
        %v10853 = vpop.f32.mrf.mxu0
        %10854 = vmatprep.mubr.bf16.mxu0 0
        %10855 = vmatmul.mubr.bf16.gmra.mxu0 %v10770
        %v10856 = vpop.f32.mrf.mxu0
        %v10857 = vadd.f32 0.0, %v10856
        %v10858 = vpop.f32.mrf.mxu0
        %v10859 = vpop.f32.mrf.mxu0
        %v10860 = vadd.f32 0.0, %v10859
        %v10861 = vpop.f32.mrf.mxu0
        %10862 = vmatprep.mubr.bf16.mxu0 0
        %10863 = vmatmul.mubr.bf16.gmra.mxu0 %v10773
        %v10864 = vpop.f32.mrf.mxu0
        %v10865 = vadd.f32 0.0, %v10864
        %v10866 = vpop.f32.mrf.mxu0
        %v10867 = vpop.f32.mrf.mxu0
        %v10868 = vadd.f32 0.0, %v10867
        %v10869 = vpop.f32.mrf.mxu0
        %10870 = vmatprep.mubr.bf16.mxu0 0
        %10871 = vmatmul.mubr.bf16.gmra.mxu0 %v10776
        %v10872 = vpop.f32.mrf.mxu0
        %v10873 = vadd.f32 0.0, %v10872
        %v10874 = vpop.f32.mrf.mxu0
        %v10875 = vpop.f32.mrf.mxu0
        %v10876 = vadd.f32 0.0, %v10875
        %v10877 = vpop.f32.mrf.mxu0
        %10878 = vmatprep.mubr.bf16.mxu0 0
        %10879 = vmatmul.mubr.bf16.gmra.mxu0 %v10779
        %v10880 = vpop.f32.mrf.mxu0
        %v10881 = vadd.f32 0.0, %v10880
        %v10882 = vpop.f32.mrf.mxu0
        %v10883 = vpop.f32.mrf.mxu0
        %v10884 = vadd.f32 0.0, %v10883
        %v10885 = vpop.f32.mrf.mxu0
        %10886 = vmatprep.mubr.bf16.mxu0 0
        %10887 = vmatmul.mubr.bf16.gmra.mxu0 %v10782
        %v10888 = vpop.f32.mrf.mxu0
        %v10889 = vadd.f32 0.0, %v10888
        %v10890 = vpop.f32.mrf.mxu0
        %v10891 = vpop.f32.mrf.mxu0
        %v10892 = vadd.f32 0.0, %v10891
        %v10893 = vpop.f32.mrf.mxu0
        %10894 = vmatprep.mubr.bf16.mxu0 0
        %10895 = vmatmul.mubr.bf16.gmra.mxu0 %v10785
        %v10896 = vpop.f32.mrf.mxu0
        %v10897 = vadd.f32 0.0, %v10896
        %v10898 = vpop.f32.mrf.mxu0
        %v10899 = vpop.f32.mrf.mxu0
        %v10900 = vadd.f32 0.0, %v10899
        %v10901 = vpop.f32.mrf.mxu0
        %10902 = vmatprep.mubr.bf16.mxu0 0
        %10903 = vmatmul.mubr.bf16.gmra.mxu0 %v10788
        %v10904 = vpop.f32.mrf.mxu0
        %v10905 = vadd.f32 0.0, %v10904
        %v10906 = vpop.f32.mrf.mxu0
        %v10907 = vpop.f32.mrf.mxu0
        %v10908 = vadd.f32 0.0, %v10907
        %v10909 = vpop.f32.mrf.mxu0
        %10910 = vmatprep.mubr.bf16.mxu0 0
        %10911 = vmatmul.mubr.bf16.gmra.mxu0 %v10791
        %v10912 = vpop.f32.mrf.mxu0
        %v10913 = vadd.f32 0.0, %v10912
        %v10914 = vpop.f32.mrf.mxu0
        %v10915 = vpop.f32.mrf.mxu0
        %v10916 = vadd.f32 0.0, %v10915
        %v10917 = vpop.f32.mrf.mxu0
        %10918 = vmatprep.mubr.bf16.mxu0 0
        %10919 = vmatmul.mubr.bf16.gmra.mxu0 %v10794
        %v10920 = vpop.f32.mrf.mxu0
        %v10921 = vadd.f32 0.0, %v10920
        %v10922 = vpop.f32.mrf.mxu0
        %v10923 = vpop.f32.mrf.mxu0
        %v10924 = vadd.f32 0.0, %v10923
        %v10925 = vpop.f32.mrf.mxu0
        %10926 = vmatprep.mubr.bf16.mxu0 0
        %10927 = vmatmul.mubr.bf16.gmra.mxu0 %v10797
        %v10928 = vpop.f32.mrf.mxu0
        %v10929 = vadd.f32 0.0, %v10928
        %v10930 = vpop.f32.mrf.mxu0
        %v10931 = vpop.f32.mrf.mxu0
        %v10932 = vadd.f32 0.0, %v10931
        %v10933 = vpop.f32.mrf.mxu0
        %10934 = vmatprep.mubr.bf16.mxu0 0
        %10935 = vmatmul.mubr.bf16.gmra.mxu0 %v10800
        %v10936 = vpop.f32.mrf.mxu0
        %v10937 = vadd.f32 0.0, %v10936
        %v10938 = vpop.f32.mrf.mxu0
        %v10939 = vpop.f32.mrf.mxu0
        %v10940 = vadd.f32 0.0, %v10939
        %v10941 = vpop.f32.mrf.mxu0
        %10942 = vmatprep.mubr.bf16.mxu0 0
        %10943 = vmatmul.mubr.bf16.gmra.mxu0 %v10803
        %v10944 = vpop.f32.mrf.mxu0
        %v10945 = vadd.f32 0.0, %v10944
        %v10946 = vpop.f32.mrf.mxu0
        %v10947 = vpop.f32.mrf.mxu0
        %v10948 = vadd.f32 0.0, %v10947
        %v10949 = vpop.f32.mrf.mxu0
        %10950 = vmatprep.mubr.bf16.mxu0 0
        %10951 = vmatmul.mubr.bf16.gmra.mxu0 %v10806
        %v10952 = vpop.f32.mrf.mxu0
        %v10953 = vadd.f32 0.0, %v10952
        %v10954 = vpop.f32.mrf.mxu0
        %v10955 = vpop.f32.mrf.mxu0
        %v10956 = vadd.f32 0.0, %v10955
        %v10957 = vpop.f32.mrf.mxu0
        %10958 = vmatprep.mubr.bf16.mxu0 0
        %10959 = vmatmul.mubr.bf16.gmra.mxu0 %v10809
        %v10960 = vpop.f32.mrf.mxu0
        %v10961 = vadd.f32 0.0, %v10960
        %v10962 = vpop.f32.mrf.mxu0
        %v10963 = vpop.f32.mrf.mxu0
        %v10964 = vadd.f32 0.0, %v10963
        %v10965 = vpop.f32.mrf.mxu0
        %10966 = vmatprep.mubr.bf16.mxu0 0
        %10967 = vmatmul.mubr.bf16.gmra.mxu0 %v10812
        %v10968 = vpop.f32.mrf.mxu0
        %v10969 = vadd.f32 0.0, %v10968
        %v10970 = vpop.f32.mrf.mxu0
        %v10971 = vpop.f32.mrf.mxu0
        %v10972 = vadd.f32 0.0, %v10971
        %v10973 = vpop.f32.mrf.mxu0
        %10974 = vdwg.mxu0
        %v10975 = vadd.f32 %v10237, %v10849
        %v10976 = vadd.f32 %v10238, %v10852
        %v10977 = vadd.f32 %v10239, %v10857
        %v10978 = vadd.f32 %v10240, %v10860
        %v10979 = vadd.f32 %v10241, %v10865
        %v10980 = vadd.f32 %v10242, %v10868
        %v10981 = vadd.f32 %v10243, %v10873
        %v10982 = vadd.f32 %v10244, %v10876
        %v10983 = vadd.f32 %v10245, %v10881
        %v10984 = vadd.f32 %v10246, %v10884
        %v10985 = vadd.f32 %v10247, %v10889
        %v10986 = vadd.f32 %v10248, %v10892
        %v10987 = vadd.f32 %v10249, %v10897
        %v10988 = vadd.f32 %v10250, %v10900
        %v10989 = vadd.f32 %v10251, %v10905
        %v10990 = vadd.f32 %v10252, %v10908
        %v10991 = vadd.f32 %v10253, %v10913
        %v10992 = vadd.f32 %v10254, %v10916
        %v10993 = vadd.f32 %v10255, %v10921
        %v10994 = vadd.f32 %v10256, %v10924
        %v10995 = vadd.f32 %v10257, %v10929
        %v10996 = vadd.f32 %v10258, %v10932
        %v10997 = vadd.f32 %v10259, %v10937
        %v10998 = vadd.f32 %v10260, %v10940
        %v10999 = vadd.f32 %v10261, %v10945
        %v11000 = vadd.f32 %v10262, %v10948
        %v11001 = vadd.f32 %v10263, %v10953
        %v11002 = vadd.f32 %v10264, %v10956
        %v11003 = vadd.f32 %v10265, %v10961
        %v11004 = vadd.f32 %v10266, %v10964
        %v11005 = vadd.f32 %v10267, %v10969
        %v11006 = vadd.f32 %v10268, %v10972
        %v11007 = vld [vmem:[%s9898] sm:$0xe]
        %v11008 = vld [vmem:[%s9898 + $0xc] sm:$0xe]
        %v11009 = vld [vmem:[%s9898 + $0x18] sm:$0xe]
        %v11010 = vld [vmem:[%s9898 + $0x24] sm:$0xe]
        %v11011 = vld [vmem:[%s9898 + $0x30] sm:$0xe]
        %v11012 = vld [vmem:[%s9898 + $0x3c] sm:$0xe]
        %v11013 = vld [vmem:[%s9898 + $0x48] sm:$0xe]
        %v11014 = vld [vmem:[%s9898 + $0x54] sm:$0xe]
        %v11015 = vld [vmem:[%s9898 + $0x60] sm:$0xe]
        %v11016 = vld [vmem:[%s9898 + $0x6c] sm:$0xe]
        %v11017 = vld [vmem:[%s9898 + $0x78] sm:$0xe]
        %v11018 = vld [vmem:[%s9898 + $0x84] sm:$0xe]
        %v11019 = vld [vmem:[%s9898 + $0x90] sm:$0xe]
        %v11020 = vld [vmem:[%s9898 + $0x9c] sm:$0xe]
        %v11021 = vld [vmem:[%s9898 + $0xa8] sm:$0xe]
        %v11022 = vld [vmem:[%s9898 + $0xb4] sm:$0xe]
        %v11071 = vrot.slane %v11007, 5
        %v11072 = vrot.slane %v11071, 4
        %v11073 = vrot.slane %v10270, 5
        %v11074 = vsel %vm2463, %v11072, %v11073
        %v11075 = vrot.slane %v11073, 4
        %v11076 = vrot.slane %v10271, 5
        %v11077 = vsel %vm2463, %v11075, %v11076
        %v11078 = vrot.slane %v11008, 5
        %v11079 = vrot.slane %v11078, 4
        %v11080 = vrot.slane %v10273, 5
        %v11081 = vsel %vm2463, %v11079, %v11080
        %v11082 = vrot.slane %v11080, 4
        %v11083 = vrot.slane %v10274, 5
        %v11084 = vsel %vm2463, %v11082, %v11083
        %v11085 = vrot.slane %v11009, 5
        %v11086 = vrot.slane %v11085, 4
        %v11087 = vrot.slane %v10276, 5
        %v11088 = vsel %vm2463, %v11086, %v11087
        %v11089 = vrot.slane %v11087, 4
        %v11090 = vrot.slane %v10277, 5
        %v11091 = vsel %vm2463, %v11089, %v11090
        %v11092 = vrot.slane %v11010, 5
        %v11093 = vrot.slane %v11092, 4
        %v11094 = vrot.slane %v10279, 5
        %v11095 = vsel %vm2463, %v11093, %v11094
        %v11096 = vrot.slane %v11094, 4
        %v11097 = vrot.slane %v10280, 5
        %v11098 = vsel %vm2463, %v11096, %v11097
        %v11099 = vrot.slane %v11011, 5
        %v11100 = vrot.slane %v11099, 4
        %v11101 = vrot.slane %v10282, 5
        %v11102 = vsel %vm2463, %v11100, %v11101
        %v11103 = vrot.slane %v11101, 4
        %v11104 = vrot.slane %v10283, 5
        %v11105 = vsel %vm2463, %v11103, %v11104
        %v11106 = vrot.slane %v11012, 5
        %v11107 = vrot.slane %v11106, 4
        %v11108 = vrot.slane %v10285, 5
        %v11109 = vsel %vm2463, %v11107, %v11108
        %v11110 = vrot.slane %v11108, 4
        %v11111 = vrot.slane %v10286, 5
        %v11112 = vsel %vm2463, %v11110, %v11111
        %v11113 = vrot.slane %v11013, 5
        %v11114 = vrot.slane %v11113, 4
        %v11115 = vrot.slane %v10288, 5
        %v11116 = vsel %vm2463, %v11114, %v11115
        %v11117 = vrot.slane %v11115, 4
        %v11118 = vrot.slane %v10289, 5
        %v11119 = vsel %vm2463, %v11117, %v11118
        %v11120 = vrot.slane %v11014, 5
        %v11121 = vrot.slane %v11120, 4
        %v11122 = vrot.slane %v10291, 5
        %v11123 = vsel %vm2463, %v11121, %v11122
        %v11124 = vrot.slane %v11122, 4
        %v11125 = vrot.slane %v10292, 5
        %v11126 = vsel %vm2463, %v11124, %v11125
        %v11127 = vrot.slane %v11015, 5
        %v11128 = vrot.slane %v11127, 4
        %v11129 = vrot.slane %v10294, 5
        %v11130 = vsel %vm2463, %v11128, %v11129
        %v11131 = vrot.slane %v11129, 4
        %v11132 = vrot.slane %v10295, 5
        %v11133 = vsel %vm2463, %v11131, %v11132
        %v11134 = vrot.slane %v11016, 5
        %v11135 = vrot.slane %v11134, 4
        %v11136 = vrot.slane %v10297, 5
        %v11137 = vsel %vm2463, %v11135, %v11136
        %v11138 = vrot.slane %v11136, 4
        %v11139 = vrot.slane %v10298, 5
        %v11140 = vsel %vm2463, %v11138, %v11139
        %v11141 = vrot.slane %v11017, 5
        %v11142 = vrot.slane %v11141, 4
        %v11143 = vrot.slane %v10300, 5
        %v11144 = vsel %vm2463, %v11142, %v11143
        %v11145 = vrot.slane %v11143, 4
        %v11146 = vrot.slane %v10301, 5
        %v11147 = vsel %vm2463, %v11145, %v11146
        %v11148 = vrot.slane %v11018, 5
        %v11149 = vrot.slane %v11148, 4
        %v11150 = vrot.slane %v10303, 5
        %v11151 = vsel %vm2463, %v11149, %v11150
        %v11152 = vrot.slane %v11150, 4
        %v11153 = vrot.slane %v10304, 5
        %v11154 = vsel %vm2463, %v11152, %v11153
        %v11155 = vrot.slane %v11019, 5
        %v11156 = vrot.slane %v11155, 4
        %v11157 = vrot.slane %v10306, 5
        %v11158 = vsel %vm2463, %v11156, %v11157
        %v11159 = vrot.slane %v11157, 4
        %v11160 = vrot.slane %v10307, 5
        %v11161 = vsel %vm2463, %v11159, %v11160
        %v11162 = vrot.slane %v11020, 5
        %v11163 = vrot.slane %v11162, 4
        %v11164 = vrot.slane %v10309, 5
        %v11165 = vsel %vm2463, %v11163, %v11164
        %v11166 = vrot.slane %v11164, 4
        %v11167 = vrot.slane %v10310, 5
        %v11168 = vsel %vm2463, %v11166, %v11167
        %v11169 = vrot.slane %v11021, 5
        %v11170 = vrot.slane %v11169, 4
        %v11171 = vrot.slane %v10312, 5
        %v11172 = vsel %vm2463, %v11170, %v11171
        %v11173 = vrot.slane %v11171, 4
        %v11174 = vrot.slane %v10313, 5
        %v11175 = vsel %vm2463, %v11173, %v11174
        %v11176 = vrot.slane %v11022, 5
        %v11177 = vrot.slane %v11176, 4
        %v11178 = vrot.slane %v10315, 5
        %v11179 = vsel %vm2463, %v11177, %v11178
        %v11180 = vrot.slane %v11178, 4
        %v11181 = vrot.slane %v10316, 5
        %v11182 = vsel %vm2463, %v11180, %v11181
        %s11183 = scalar_lea.vmem %s4, 128
        %v11184 = vld [vmem:[%s11183] sm:$0xf]
        %v11185 = vld [vmem:[%s11183 + $0x4] sm:$0xf]
        %v11186 = vld [vmem:[%s11183 + $0x8] sm:$0xf]
        %v11187 = vld [vmem:[%s11183 + $0xc] sm:$0xf]
        %v11188 = vunpack.c.l.b16 %v11074
        %v11189 = vunpack.c.l.b16 %v11077
        %v11190 = vunpack.c.l.b16 %v11081
        %v11191 = vunpack.c.l.b16 %v11084
        %v11192 = vunpack.c.l.b16 %v11088
        %v11193 = vunpack.c.l.b16 %v11091
        %v11194 = vunpack.c.l.b16 %v11095
        %v11195 = vunpack.c.l.b16 %v11098
        %v11196 = vunpack.c.l.b16 %v11102
        %v11197 = vunpack.c.l.b16 %v11105
        %v11198 = vunpack.c.l.b16 %v11109
        %v11199 = vunpack.c.l.b16 %v11112
        %v11200 = vunpack.c.l.b16 %v11116
        %v11201 = vunpack.c.l.b16 %v11119
        %v11202 = vunpack.c.l.b16 %v11123
        %v11203 = vunpack.c.l.b16 %v11126
        %v11204 = vunpack.c.l.b16 %v11130
        %v11205 = vunpack.c.l.b16 %v11133
        %v11206 = vunpack.c.l.b16 %v11137
        %v11207 = vunpack.c.l.b16 %v11140
        %v11208 = vunpack.c.l.b16 %v11144
        %v11209 = vunpack.c.l.b16 %v11147
        %v11210 = vunpack.c.l.b16 %v11151
        %v11211 = vunpack.c.l.b16 %v11154
        %v11212 = vunpack.c.l.b16 %v11158
        %v11213 = vunpack.c.l.b16 %v11161
        %v11214 = vunpack.c.l.b16 %v11165
        %v11215 = vunpack.c.l.b16 %v11168
        %v11216 = vunpack.c.l.b16 %v11172
        %v11217 = vunpack.c.l.b16 %v11175
        %v11218 = vunpack.c.l.b16 %v11179
        %v11219 = vunpack.c.l.b16 %v11182
        %v11220 = vpack.c.b16 %v11189, %v11188
        %v11221 = vpack.c.b16 %v11191, %v11190
        %v11222 = vpack.c.b16 %v11193, %v11192
        %v11223 = vpack.c.b16 %v11195, %v11194
        %v11224 = vpack.c.b16 %v11197, %v11196
        %v11225 = vpack.c.b16 %v11199, %v11198
        %v11226 = vpack.c.b16 %v11201, %v11200
        %v11227 = vpack.c.b16 %v11203, %v11202
        %v11228 = vpack.c.b16 %v11205, %v11204
        %v11229 = vpack.c.b16 %v11207, %v11206
        %v11230 = vpack.c.b16 %v11209, %v11208
        %v11231 = vpack.c.b16 %v11211, %v11210
        %v11232 = vpack.c.b16 %v11213, %v11212
        %v11233 = vpack.c.b16 %v11215, %v11214
        %v11234 = vpack.c.b16 %v11217, %v11216
        %v11235 = vpack.c.b16 %v11219, %v11218
        %v11240 = vunpack.c.l.b16 %v11184
        %v11241 = vunpack.c.l.b16 %v11185
        %v11242 = vunpack.c.l.b16 %v11186
        %v11243 = vunpack.c.l.b16 %v11187
        %v11244 = vpack.c.b16 %v11241, %v11240
        %v11245 = vpack.c.b16 %v11243, %v11242
        %v11249 = vsel %vm7331, %v11220, 0
        %v11252 = vsel %vm7331, %v11221, 0
        %v11255 = vsel %vm7331, %v11222, 0
        %v11258 = vsel %vm7331, %v11223, 0
        %v11261 = vsel %vm7331, %v11224, 0
        %v11264 = vsel %vm7331, %v11225, 0
        %v11267 = vsel %vm7331, %v11226, 0
        %v11270 = vsel %vm7331, %v11227, 0
        %v11273 = vsel %vm7331, %v11228, 0
        %v11276 = vsel %vm7331, %v11229, 0
        %v11279 = vsel %vm7331, %v11230, 0
        %v11282 = vsel %vm7331, %v11231, 0
        %v11285 = vsel %vm7331, %v11232, 0
        %v11288 = vsel %vm7331, %v11233, 0
        %v11291 = vsel %vm7331, %v11234, 0
        %v11294 = vsel %vm7331, %v11235, 0
        %11296 = vmatprep.subr.bf16.mxu0 0
        %11297 = vmatpush1.bf16.msra.mxu0 0
        %11298 = vmatprep.subr.bf16.mxu0 0
        %11299 = vmatpush1.bf16.msra.mxu0 0
        %11300 = vmatprep.subr.bf16.mxu0 0
        %11301 = vmatpush1.bf16.msra.mxu0 0
        %11302 = vmatprep.subr.bf16.mxu0 0
        %11303 = vmatpush1.bf16.msra.mxu0 0
        %11304 = vmatprep.subr.bf16.mxu0 0
        %11305 = vmatpush1.bf16.msra.mxu0 0
        %11306 = vmatprep.subr.bf16.mxu0 0
        %11307 = vmatpush1.bf16.msra.mxu0 0
        %11308 = vmatprep.subr.bf16.mxu0 0
        %11309 = vmatpush1.bf16.msra.mxu0 %v11245
        %11310 = vmatprep.subr.bf16.mxu0 0
        %11311 = vmatpush1.bf16.msra.mxu0 %v11244
        %11312 = vmatprep.subr.bf16.mxu0 0
        %11313 = vmatpush2.bf16.msra.mxu0 0
        %11314 = vmatprep.subr.bf16.mxu0 0
        %11315 = vmatpush2.bf16.msra.mxu0 0
        %11316 = vmatprep.subr.bf16.mxu0 0
        %11317 = vmatpush2.bf16.msra.mxu0 0
        %11318 = vmatprep.subr.bf16.mxu0 0
        %11319 = vmatpush2.bf16.msra.mxu0 0
        %11320 = vmatprep.subr.bf16.mxu0 0
        %11321 = vmatpush2.bf16.msra.mxu0 0
        %11322 = vmatprep.subr.bf16.mxu0 0
        %11323 = vmatpush2.bf16.msra.mxu0 0
        %11324 = vmatprep.subr.bf16.mxu0 0
        %11325 = vmatpush2.bf16.msra.mxu0 0
        %11326 = vmatprep.subr.bf16.mxu0 0
        %11327 = vmatpush2.bf16.msra.mxu0 0
        %11328 = vmatprep.mubr.bf16.mxu0 0
        %11329 = vmatmul.mubr.bf16.gmra.mxu0 %v11249
        %v11330 = vpop.f32.mrf.mxu0
        %v11331 = vadd.f32 0.0, %v11330
        %v11332 = vpop.f32.mrf.mxu0
        %v11333 = vpop.f32.mrf.mxu0
        %v11334 = vadd.f32 0.0, %v11333
        %v11335 = vpop.f32.mrf.mxu0
        %11336 = vmatprep.mubr.bf16.mxu0 0
        %11337 = vmatmul.mubr.bf16.gmra.mxu0 %v11252
        %v11338 = vpop.f32.mrf.mxu0
        %v11339 = vadd.f32 0.0, %v11338
        %v11340 = vpop.f32.mrf.mxu0
        %v11341 = vpop.f32.mrf.mxu0
        %v11342 = vadd.f32 0.0, %v11341
        %v11343 = vpop.f32.mrf.mxu0
        %11344 = vmatprep.mubr.bf16.mxu0 0
        %11345 = vmatmul.mubr.bf16.gmra.mxu0 %v11255
        %v11346 = vpop.f32.mrf.mxu0
        %v11347 = vadd.f32 0.0, %v11346
        %v11348 = vpop.f32.mrf.mxu0
        %v11349 = vpop.f32.mrf.mxu0
        %v11350 = vadd.f32 0.0, %v11349
        %v11351 = vpop.f32.mrf.mxu0
        %11352 = vmatprep.mubr.bf16.mxu0 0
        %11353 = vmatmul.mubr.bf16.gmra.mxu0 %v11258
        %v11354 = vpop.f32.mrf.mxu0
        %v11355 = vadd.f32 0.0, %v11354
        %v11356 = vpop.f32.mrf.mxu0
        %v11357 = vpop.f32.mrf.mxu0
        %v11358 = vadd.f32 0.0, %v11357
        %v11359 = vpop.f32.mrf.mxu0
        %11360 = vmatprep.mubr.bf16.mxu0 0
        %11361 = vmatmul.mubr.bf16.gmra.mxu0 %v11261
        %v11362 = vpop.f32.mrf.mxu0
        %v11363 = vadd.f32 0.0, %v11362
        %v11364 = vpop.f32.mrf.mxu0
        %v11365 = vpop.f32.mrf.mxu0
        %v11366 = vadd.f32 0.0, %v11365
        %v11367 = vpop.f32.mrf.mxu0
        %11368 = vmatprep.mubr.bf16.mxu0 0
        %11369 = vmatmul.mubr.bf16.gmra.mxu0 %v11264
        %v11370 = vpop.f32.mrf.mxu0
        %v11371 = vadd.f32 0.0, %v11370
        %v11372 = vpop.f32.mrf.mxu0
        %v11373 = vpop.f32.mrf.mxu0
        %v11374 = vadd.f32 0.0, %v11373
        %v11375 = vpop.f32.mrf.mxu0
        %11376 = vmatprep.mubr.bf16.mxu0 0
        %11377 = vmatmul.mubr.bf16.gmra.mxu0 %v11267
        %v11378 = vpop.f32.mrf.mxu0
        %v11379 = vadd.f32 0.0, %v11378
        %v11380 = vpop.f32.mrf.mxu0
        %v11381 = vpop.f32.mrf.mxu0
        %v11382 = vadd.f32 0.0, %v11381
        %v11383 = vpop.f32.mrf.mxu0
        %11384 = vmatprep.mubr.bf16.mxu0 0
        %11385 = vmatmul.mubr.bf16.gmra.mxu0 %v11270
        %v11386 = vpop.f32.mrf.mxu0
        %v11387 = vadd.f32 0.0, %v11386
        %v11388 = vpop.f32.mrf.mxu0
        %v11389 = vpop.f32.mrf.mxu0
        %v11390 = vadd.f32 0.0, %v11389
        %v11391 = vpop.f32.mrf.mxu0
        %11392 = vmatprep.mubr.bf16.mxu0 0
        %11393 = vmatmul.mubr.bf16.gmra.mxu0 %v11273
        %v11394 = vpop.f32.mrf.mxu0
        %v11395 = vadd.f32 0.0, %v11394
        %v11396 = vpop.f32.mrf.mxu0
        %v11397 = vpop.f32.mrf.mxu0
        %v11398 = vadd.f32 0.0, %v11397
        %v11399 = vpop.f32.mrf.mxu0
        %11400 = vmatprep.mubr.bf16.mxu0 0
        %11401 = vmatmul.mubr.bf16.gmra.mxu0 %v11276
        %v11402 = vpop.f32.mrf.mxu0
        %v11403 = vadd.f32 0.0, %v11402
        %v11404 = vpop.f32.mrf.mxu0
        %v11405 = vpop.f32.mrf.mxu0
        %v11406 = vadd.f32 0.0, %v11405
        %v11407 = vpop.f32.mrf.mxu0
        %11408 = vmatprep.mubr.bf16.mxu0 0
        %11409 = vmatmul.mubr.bf16.gmra.mxu0 %v11279
        %v11410 = vpop.f32.mrf.mxu0
        %v11411 = vadd.f32 0.0, %v11410
        %v11412 = vpop.f32.mrf.mxu0
        %v11413 = vpop.f32.mrf.mxu0
        %v11414 = vadd.f32 0.0, %v11413
        %v11415 = vpop.f32.mrf.mxu0
        %11416 = vmatprep.mubr.bf16.mxu0 0
        %11417 = vmatmul.mubr.bf16.gmra.mxu0 %v11282
        %v11418 = vpop.f32.mrf.mxu0
        %v11419 = vadd.f32 0.0, %v11418
        %v11420 = vpop.f32.mrf.mxu0
        %v11421 = vpop.f32.mrf.mxu0
        %v11422 = vadd.f32 0.0, %v11421
        %v11423 = vpop.f32.mrf.mxu0
        %11424 = vmatprep.mubr.bf16.mxu0 0
        %11425 = vmatmul.mubr.bf16.gmra.mxu0 %v11285
        %v11426 = vpop.f32.mrf.mxu0
        %v11427 = vadd.f32 0.0, %v11426
        %v11428 = vpop.f32.mrf.mxu0
        %v11429 = vpop.f32.mrf.mxu0
        %v11430 = vadd.f32 0.0, %v11429
        %v11431 = vpop.f32.mrf.mxu0
        %11432 = vmatprep.mubr.bf16.mxu0 0
        %11433 = vmatmul.mubr.bf16.gmra.mxu0 %v11288
        %v11434 = vpop.f32.mrf.mxu0
        %v11435 = vadd.f32 0.0, %v11434
        %v11436 = vpop.f32.mrf.mxu0
        %v11437 = vpop.f32.mrf.mxu0
        %v11438 = vadd.f32 0.0, %v11437
        %v11439 = vpop.f32.mrf.mxu0
        %11440 = vmatprep.mubr.bf16.mxu0 0
        %11441 = vmatmul.mubr.bf16.gmra.mxu0 %v11291
        %v11442 = vpop.f32.mrf.mxu0
        %v11443 = vadd.f32 0.0, %v11442
        %v11444 = vpop.f32.mrf.mxu0
        %v11445 = vpop.f32.mrf.mxu0
        %v11446 = vadd.f32 0.0, %v11445
        %v11447 = vpop.f32.mrf.mxu0
        %11448 = vmatprep.mubr.bf16.mxu0 0
        %11449 = vmatmul.mubr.bf16.gmra.mxu0 %v11294
        %v11450 = vpop.f32.mrf.mxu0
        %v11451 = vadd.f32 0.0, %v11450
        %v11452 = vpop.f32.mrf.mxu0
        %v11453 = vpop.f32.mrf.mxu0
        %v11454 = vadd.f32 0.0, %v11453
        %v11455 = vpop.f32.mrf.mxu0
        %11456 = vdwg.mxu0
        %v11457 = vadd.f32 %v10975, %v11331
        %v11458 = vadd.f32 %v10976, %v11334
        %v11459 = vadd.f32 %v10977, %v11339
        %v11460 = vadd.f32 %v10978, %v11342
        %v11461 = vadd.f32 %v10979, %v11347
        %v11462 = vadd.f32 %v10980, %v11350
        %v11463 = vadd.f32 %v10981, %v11355
        %v11464 = vadd.f32 %v10982, %v11358
        %v11465 = vadd.f32 %v10983, %v11363
        %v11466 = vadd.f32 %v10984, %v11366
        %v11467 = vadd.f32 %v10985, %v11371
        %v11468 = vadd.f32 %v10986, %v11374
        %v11469 = vadd.f32 %v10987, %v11379
        %v11470 = vadd.f32 %v10988, %v11382
        %v11471 = vadd.f32 %v10989, %v11387
        %v11472 = vadd.f32 %v10990, %v11390
        %v11473 = vadd.f32 %v10991, %v11395
        %v11474 = vadd.f32 %v10992, %v11398
        %v11475 = vadd.f32 %v10993, %v11403
        %v11476 = vadd.f32 %v10994, %v11406
        %v11477 = vadd.f32 %v10995, %v11411
        %v11478 = vadd.f32 %v10996, %v11414
        %v11479 = vadd.f32 %v10997, %v11419
        %v11480 = vadd.f32 %v10998, %v11422
        %v11481 = vadd.f32 %v10999, %v11427
        %v11482 = vadd.f32 %v11000, %v11430
        %v11483 = vadd.f32 %v11001, %v11435
        %v11484 = vadd.f32 %v11002, %v11438
        %v11485 = vadd.f32 %v11003, %v11443
        %v11486 = vadd.f32 %v11004, %v11446
        %v11487 = vadd.f32 %v11005, %v11451
        %v11488 = vadd.f32 %v11006, %v11454
        %v11489 = vld [vmem:[%s5] sm:$0x1]
        %v11491 = vlaneseq
        %v11492 = vshrl.u32 %v11491, 7
        %v11493 = vsub.s32 0, %v11492
        %v11494 = vrot.slane %v11489, %v11493
        %v11496 = vadd.f32 %v11457, %v11494
        %v11497 = vadd.f32 %v11458, %v11494
        %v11498 = vadd.f32 %v11459, %v11494
        %v11499 = vadd.f32 %v11460, %v11494
        %v11500 = vadd.f32 %v11461, %v11494
        %v11501 = vadd.f32 %v11462, %v11494
        %v11502 = vadd.f32 %v11463, %v11494
        %v11503 = vadd.f32 %v11464, %v11494
        %v11504 = vadd.f32 %v11465, %v11494
        %v11505 = vadd.f32 %v11466, %v11494
        %v11506 = vadd.f32 %v11467, %v11494
        %v11507 = vadd.f32 %v11468, %v11494
        %v11508 = vadd.f32 %v11469, %v11494
        %v11509 = vadd.f32 %v11470, %v11494
        %v11510 = vadd.f32 %v11471, %v11494
        %v11511 = vadd.f32 %v11472, %v11494
        %v11512 = vadd.f32 %v11473, %v11494
        %v11513 = vadd.f32 %v11474, %v11494
        %v11514 = vadd.f32 %v11475, %v11494
        %v11515 = vadd.f32 %v11476, %v11494
        %v11516 = vadd.f32 %v11477, %v11494
        %v11517 = vadd.f32 %v11478, %v11494
        %v11518 = vadd.f32 %v11479, %v11494
        %v11519 = vadd.f32 %v11480, %v11494
        %v11520 = vadd.f32 %v11481, %v11494
        %v11521 = vadd.f32 %v11482, %v11494
        %v11522 = vadd.f32 %v11483, %v11494
        %v11523 = vadd.f32 %v11484, %v11494
        %v11524 = vadd.f32 %v11485, %v11494
        %v11525 = vadd.f32 %v11486, %v11494
        %v11526 = vadd.f32 %v11487, %v11494
        %v11527 = vadd.f32 %v11488, %v11494
        %v11528 = vmax.f32 %v11496, 0.0
        %v11529 = vmax.f32 %v11497, 0.0
        %v11530 = vmax.f32 %v11498, 0.0
        %v11531 = vmax.f32 %v11499, 0.0
        %v11532 = vmax.f32 %v11500, 0.0
        %v11533 = vmax.f32 %v11501, 0.0
        %v11534 = vmax.f32 %v11502, 0.0
        %v11535 = vmax.f32 %v11503, 0.0
        %v11536 = vmax.f32 %v11504, 0.0
        %v11537 = vmax.f32 %v11505, 0.0
        %v11538 = vmax.f32 %v11506, 0.0
        %v11539 = vmax.f32 %v11507, 0.0
        %v11540 = vmax.f32 %v11508, 0.0
        %v11541 = vmax.f32 %v11509, 0.0
        %v11542 = vmax.f32 %v11510, 0.0
        %v11543 = vmax.f32 %v11511, 0.0
        %v11544 = vmax.f32 %v11512, 0.0
        %v11545 = vmax.f32 %v11513, 0.0
        %v11546 = vmax.f32 %v11514, 0.0
        %v11547 = vmax.f32 %v11515, 0.0
        %v11548 = vmax.f32 %v11516, 0.0
        %v11549 = vmax.f32 %v11517, 0.0
        %v11550 = vmax.f32 %v11518, 0.0
        %v11551 = vmax.f32 %v11519, 0.0
        %v11552 = vmax.f32 %v11520, 0.0
        %v11553 = vmax.f32 %v11521, 0.0
        %v11554 = vmax.f32 %v11522, 0.0
        %v11555 = vmax.f32 %v11523, 0.0
        %v11556 = vmax.f32 %v11524, 0.0
        %v11557 = vmax.f32 %v11525, 0.0
        %v11558 = vmax.f32 %v11526, 0.0
        %v11559 = vmax.f32 %v11527, 0.0
        %11560 = vst.msk [vmem:[%s259] sm:$0xff] %vm7331, %v11528
        %11561 = vst.msk [vmem:[%s259 + $0x8] sm:$0xff] %vm7331, %v11529
        %11562 = vst.msk [vmem:[%s259 + $0x10] sm:$0xff] %vm7331, %v11530
        %11563 = vst.msk [vmem:[%s259 + $0x18] sm:$0xff] %vm7331, %v11531
        %11564 = vst.msk [vmem:[%s259 + $0x20] sm:$0xff] %vm7331, %v11532
        %11565 = vst.msk [vmem:[%s259 + $0x28] sm:$0xff] %vm7331, %v11533
        %11566 = vst.msk [vmem:[%s259 + $0x30] sm:$0xff] %vm7331, %v11534
        %11567 = vst.msk [vmem:[%s259 + $0x38] sm:$0xff] %vm7331, %v11535
        %11568 = vst.msk [vmem:[%s259 + $0x40] sm:$0xff] %vm7331, %v11536
        %11569 = vst.msk [vmem:[%s259 + $0x48] sm:$0xff] %vm7331, %v11537
        %11570 = vst.msk [vmem:[%s259 + $0x50] sm:$0xff] %vm7331, %v11538
        %11571 = vst.msk [vmem:[%s259 + $0x58] sm:$0xff] %vm7331, %v11539
        %11572 = vst.msk [vmem:[%s259 + $0x60] sm:$0xff] %vm7331, %v11540
        %11573 = vst.msk [vmem:[%s259 + $0x68] sm:$0xff] %vm7331, %v11541
        %11574 = vst.msk [vmem:[%s259 + $0x70] sm:$0xff] %vm7331, %v11542
        %11575 = vst.msk [vmem:[%s259 + $0x78] sm:$0xff] %vm7331, %v11543
        %11576 = vst.msk [vmem:[%s259 + $0x80] sm:$0xff] %vm7331, %v11544
        %11577 = vst.msk [vmem:[%s259 + $0x88] sm:$0xff] %vm7331, %v11545
        %11578 = vst.msk [vmem:[%s259 + $0x90] sm:$0xff] %vm7331, %v11546
        %11579 = vst.msk [vmem:[%s259 + $0x98] sm:$0xff] %vm7331, %v11547
        %11580 = vst.msk [vmem:[%s259 + $0xa0] sm:$0xff] %vm7331, %v11548
        %11581 = vst.msk [vmem:[%s259 + $0xa8] sm:$0xff] %vm7331, %v11549
        %11582 = vst.msk [vmem:[%s259 + $0xb0] sm:$0xff] %vm7331, %v11550
        %11583 = vst.msk [vmem:[%s259 + $0xb8] sm:$0xff] %vm7331, %v11551
        %11584 = vst.msk [vmem:[%s259 + $0xc0] sm:$0xff] %vm7331, %v11552
        %11585 = vst.msk [vmem:[%s259 + $0xc8] sm:$0xff] %vm7331, %v11553
        %11586 = vst.msk [vmem:[%s259 + $0xd0] sm:$0xff] %vm7331, %v11554
        %11587 = vst.msk [vmem:[%s259 + $0xd8] sm:$0xff] %vm7331, %v11555
        %11588 = vst.msk [vmem:[%s259 + $0xe0] sm:$0xff] %vm7331, %v11556
        %11589 = vst.msk [vmem:[%s259 + $0xe8] sm:$0xff] %vm7331, %v11557
        %11590 = vst.msk [vmem:[%s259 + $0xf0] sm:$0xff] %vm7331, %v11558
        %11591 = vst.msk [vmem:[%s259 + $0xf8] sm:$0xff] %vm7331, %v11559
        %s11592 = sand.u32 %s164, 1
        %s11593 = scalar_lea.sflag [#allocation5], %s11592
        %s11594 = sand.u32 %s164, 1
        %s11595 = smul.addr %s11594, 256
        %s11596 = scalar_lea.vmem [#allocation4], %s11595
        // Predicated region
        $region45: #{up_block_forward.3} parent=43 // pred_check
          %p11597 = pneg %p174
        $region46: #{up_block_forward.3} parent=43 // pred_check_branch
          %11599 = sbr.rel (%p11597) target = $region48
        $region47: #{up_block_forward.3} parent=43 // pred_region
          %s11601 = ssub.s32 4096, 4096
          %11602 = vsyncadd %s11593, %s11601
          %s11603 = smul.addr %s20, 32
          %s11604 = smul.addr %s11603, 128
          %s11605 = scalar_lea.hbm %s6, %s11604
          %s11606 = sshll.u32 %s11596, 4
          %s11607 = int_to_ptr.vmem [resolvable:$true] %s11606
          %11612 = dma.vmem_to_hbm [thread:$0]  %s11607, 4096, %s11605, %s11593, 128, 128, 8
        $region48: #{up_block_forward.3} parent=43 // pred_fallthru
          _
      $region44: #{up_block_forward.3} parent=5 // pred_fallthru
        _
      %p11613 = scmp.le.s32.totalorder 2, %s15
      // Predicated region
      $region49: #{up_block_forward.3} parent=5 // pred_check
        %p11614 = pneg %p11613
      $region50: #{up_block_forward.3} parent=5 // pred_check_branch
        %11616 = sbr.rel (%p11614) target = $region52
      $region51: #{up_block_forward.3} parent=5 // pred_region
        %s11617 = ssub.s32 %s15, 2
        // Predicated region
        $region53: #{up_block_forward.3} parent=51 // pred_check
          %p11618 = pneg %p180
        $region54: #{up_block_forward.3} parent=51 // pred_check_branch
          %11620 = sbr.rel (%p11618) target = $region56
        $region55: #{up_block_forward.3} parent=51 // pred_region
          %s11621 = sand.u32 %s165, 1
          %s11622 = scalar_lea.sflag [#allocation5], %s11621
          %s11623 = sand.u32 %s165, 1
          %s11624 = smul.addr %s11623, 256
          %s11625 = scalar_lea.vmem [#allocation4], %s11624
          %11626 = dma.done %s11622, 4096
        $region56: #{up_block_forward.3} parent=51 // pred_fallthru
          _
      $region52: #{up_block_forward.3} parent=5 // pred_fallthru
        _
    $region6: #{up_block_forward.3} parent=1 // loop_footer
      %s19 = sadd.s32 1, %s15
    $region7: #{up_block_forward.3} parent=1 // loop_footer_branch
      %14 = sbr.rel target = $region3
    $region8: #{up_block_forward.3} parent=1 // loop_exit
      _
    %11627 = vsyncpa [#allocation5], 1
    %s11628 = scalar_lea.sflag [#allocation5], 1
    %11629 = vsyncpa %s11628, 1

</llo_original>
